<compile_context>
chip_gen: v7x
topology: tpu7x:2x2x1
jax: 0.10.0
libtpu: 0.0.40
codegen_flags: <defaults>
</compile_context>

<pallas_src>
import jax
import jax.numpy as jnp
from jax.experimental import pallas as pl
from jax.experimental.pallas import tpu as pltpu


# ------------------------- fused Pallas kernel -------------------------

def _encoder_kernel(x_ref, w1_ref, b1_ref, w2_ref, b2_ref,
                    w3_ref, b3_ref, wmu_ref, bmu_ref, wsig_ref, bsig_ref,
                    eps_ref, out_ref, acc_ref):
    """Grid axis 0 = time step t.

    x_ref   : (B, H*W)       bf16   frame pixels for time step t
    w1..b2  : frame MLP (Linear(h*w,2000)+ReLU, Linear(2000,200)+ReLU)
    w3_ref  : (200, 1600)    bf16   slice t of the song-encoder weight
    b3..bsig: song encoder bias + mu/sigma heads
    eps_ref : (B, L)         f32    reparametrization noise (std=beta)
    out_ref : (3, B, L)      f32    packed [z, mu, logvar]
    acc_ref : (B, 1600)      f32    VMEM accumulator for the song matmul
    """
    t = pl.program_id(0)

    @pl.when(t == 0)
    def _():
        acc_ref[...] = jnp.zeros_like(acc_ref)

    # ---- TimeDistributed frame encoder for this time step: (B, H*W) -> (B, 200)
    h1 = jnp.dot(x_ref[...], w1_ref[...], preferred_element_type=jnp.float32)
    h1 = jnp.maximum(h1 + b1_ref[...], 0.0)
    h2 = jnp.dot(h1.astype(jnp.bfloat16), w2_ref[...],
                 preferred_element_type=jnp.float32)
    h2 = jnp.maximum(h2 + b2_ref[...], 0.0)

    # ---- Flatten + song Linear(t*200, 1600) expressed as a sum over time steps:
    #      (B, T*200) @ (T*200, 1600) == sum_t  h2_t @ w3[t]
    acc_ref[...] += jnp.dot(h2.astype(jnp.bfloat16), w3_ref[...],
                            preferred_element_type=jnp.float32)

    # ---- finalize on the last time step: ReLU, mu/sigma heads, reparametrization
    @pl.when(t == pl.num_programs(0) - 1)
    def _():
        h3 = jnp.maximum(acc_ref[...] + b3_ref[...], 0.0)
        h3b = h3.astype(jnp.bfloat16)
        mu = jnp.dot(h3b, wmu_ref[...],
                     preferred_element_type=jnp.float32) + bmu_ref[...]
        logvar = jnp.dot(h3b, wsig_ref[...],
                         preferred_element_type=jnp.float32) + bsig_ref[...]
        z = mu + jnp.exp(0.5 * logvar) * eps_ref[...]
        out_ref[0] = z
        out_ref[1] = mu
        out_ref[2] = logvar


# ------------------------- wrapper -------------------------

def encoder_forward(x, params, eps, latent_size):
    """x: (B, T, H, W) float32; returns (z, mu, logvar), each (B, latent_size)."""
    w1, b1, w2, b2, w3, b3, wmu, bmu, wsig, bsig = params
    B, T, H, W = x.shape
    HW = H * W
    L = latent_size

    # Layout glue (XLA side, tiny arrays):
    #   time-major rows so grid step t reads a contiguous (B, H*W) slab,
    #   w3 viewed as (T, 200, 1600) so the song matmul streams one (200,1600) slice per t.
    x_tb = jnp.transpose(x, (1, 0, 2, 3)).reshape(T, B, HW).astype(jnp.bfloat16)
    w3_3d = w3.reshape(T, 200, 1600)

    # bf16 MXU operands; biases / eps / elementwise path stay f32.
    w1b = w1.astype(jnp.bfloat16)
    w2b = w2.astype(jnp.bfloat16)
    w3b = w3_3d.astype(jnp.bfloat16)
    wmub = wmu.astype(jnp.bfloat16)
    wsigb = wsig.astype(jnp.bfloat16)

    out = pl.pallas_call(
        _encoder_kernel,
        out_shape=jax.ShapeDtypeStruct((3, B, L), jnp.float32),
        grid_spec=pltpu.PrefetchScalarGridSpec(
            num_scalar_prefetch=0,
            grid=(T,),
            in_specs=[
                pl.BlockSpec((None, B, HW), lambda t: (t, 0, 0)),      # x_t
                pl.BlockSpec((HW, 2000), lambda t: (0, 0)),            # w1 (pinned)
                pl.BlockSpec((1, 2000), lambda t: (0, 0)),             # b1
                pl.BlockSpec((2000, 200), lambda t: (0, 0)),           # w2 (pinned)
                pl.BlockSpec((1, 200), lambda t: (0, 0)),              # b2
                pl.BlockSpec((None, 200, 1600), lambda t: (t, 0, 0)),  # w3[t] (streamed)
                pl.BlockSpec((1, 1600), lambda t: (0, 0)),             # b3
                pl.BlockSpec((1600, L), lambda t: (0, 0)),             # wmu
                pl.BlockSpec((1, L), lambda t: (0, 0)),                # bmu
                pl.BlockSpec((1600, L), lambda t: (0, 0)),             # wsig
                pl.BlockSpec((1, L), lambda t: (0, 0)),                # bsig
                pl.BlockSpec((B, L), lambda t: (0, 0)),                # eps
            ],
            out_specs=pl.BlockSpec((3, B, L), lambda t: (0, 0, 0)),    # packed z/mu/logvar
            scratch_shapes=[pltpu.VMEM((B, 1600), jnp.float32)],       # song accumulator
        ),
        compiler_params=pltpu.CompilerParams(
            dimension_semantics=("arbitrary",),   # T accumulates into acc/out
            vmem_limit_bytes=32 << 20,            # working set ~6 MiB; valid on v7x (64 MiB)
        ),
    )(x_tb, w1b, b1, w2b, b2, w3b, b3, wmub, bmu, wsigb, bsig, eps)

    z = out[0]
    mu = out[1]
    logvar = out[2]
    return z, mu, logvar


# ------------------------- pure-JAX reference (mirrors bf16 casts) -------------------------

def encoder_reference(x, params, eps):
    w1, b1, w2, b2, w3, b3, wmu, bmu, wsig, bsig = params
    B, T, H, W = x.shape
    bf = jnp.bfloat16
    f32 = jnp.float32
    x2d = x.reshape(B * T, H * W).astype(bf)
    h1 = jnp.maximum(jnp.dot(x2d, w1.astype(bf), preferred_element_type=f32) + b1, 0.0)
    h2 = jnp.maximum(jnp.dot(h1.astype(bf), w2.astype(bf), preferred_element_type=f32) + b2, 0.0)
    y = h2.reshape(B, T * 200)
    h3 = jnp.maximum(jnp.dot(y.astype(bf), w3.astype(bf), preferred_element_type=f32) + b3, 0.0)
    mu = jnp.dot(h3.astype(bf), wmu.astype(bf), preferred_element_type=f32) + bmu
    logvar = jnp.dot(h3.astype(bf), wsig.astype(bf), preferred_element_type=f32) + bsig
    z = mu + jnp.exp(0.5 * logvar) * eps
    return z, mu, logvar


# ------------------------- deterministic params -------------------------

def _linear_params(key, fan_in, fan_out):
    # PyTorch nn.Linear default init: U(-1/sqrt(fan_in), 1/sqrt(fan_in)).
    kw, kb = jax.random.split(key)
    bound = 1.0 / jnp.sqrt(jnp.float32(fan_in))
    w = jax.random.uniform(kw, (fan_in, fan_out), jnp.float32, -bound, bound)
    b = jax.random.uniform(kb, (1, fan_out), jnp.float32, -bound, bound)
    return w, b


def make_encoder_params(key, size, latent_size):
    t, h, w = size
    k1, k2, k3, k4, k5 = jax.random.split(key, 5)
    w1, b1 = _linear_params(k1, h * w, 2000)       # frame Linear 1
    w2, b2 = _linear_params(k2, 2000, 200)         # frame Linear 2
    w3, b3 = _linear_params(k3, t * 200, 1600)     # song encoder
    wmu, bmu = _linear_params(k4, 1600, latent_size)
    wsig, bsig = _linear_params(k5, 1600, latent_size)
    return (w1, b1, w2, b2, w3, b3, wmu, bmu, wsig, bsig)


# ------------------------- main -------------------------

if __name__ == "__main__":
    size = (4, 16, 16)      # (t, h, w)
    beta = 0.5
    latent_size = 32
    B = 2

    root = jax.random.PRNGKey(0)
    k_params, k_x, k_eps = jax.random.split(root, 3)

    params = make_encoder_params(k_params, size, latent_size)
    t, h, w = size
    x = jax.random.normal(k_x, (B, t, h, w), jnp.float32)
    # eps ~ N(0, std=beta), matching torch.randn(...).normal_(mean=0, std=beta)
    # TODO(synk): noise is generated host-side and passed in (the PyTorch module draws it
    # inside forward); an in-kernel pltpu.prng_* draw would change the RNG stream.
    eps = beta * jax.random.normal(k_eps, (B, latent_size), jnp.float32)

    z, mu, logvar = encoder_forward(x, params, eps, latent_size)
    jax.block_until_ready((z, mu, logvar))

    assert z.shape == (B, latent_size)
    assert mu.shape == (B, latent_size)
    assert logvar.shape == (B, latent_size)

    z_ref, mu_ref, lv_ref = encoder_reference(x, params, eps)
    for got, ref in ((z, z_ref), (mu, mu_ref), (logvar, lv_ref)):
        assert jnp.allclose(got, ref, rtol=2e-2, atol=2e-2), float(jnp.max(jnp.abs(got - ref)))

    print("KERNEL_OK")
</pallas_src>

<mosaic_0001>
module attributes {stable_mosaic.version = 11 : i64} {
  func.func @_encoder_kernel(%arg0: i32, %arg1: memref<1x2x256xbf16, #tpu.memory_space<vmem>>, %arg2: memref<256x2000xbf16, #tpu.memory_space<vmem>>, %arg3: memref<1x2000xf32, #tpu.memory_space<vmem>>, %arg4: memref<2000x200xbf16, #tpu.memory_space<vmem>>, %arg5: memref<1x200xf32, #tpu.memory_space<vmem>>, %arg6: memref<1x200x1600xbf16, #tpu.memory_space<vmem>>, %arg7: memref<1x1600xf32, #tpu.memory_space<vmem>>, %arg8: memref<1600x32xbf16, #tpu.memory_space<vmem>>, %arg9: memref<1x32xf32, #tpu.memory_space<vmem>>, %arg10: memref<1600x32xbf16, #tpu.memory_space<vmem>>, %arg11: memref<1x32xf32, #tpu.memory_space<vmem>>, %arg12: memref<2x32xf32, #tpu.memory_space<vmem>>, %arg13: memref<3x2x32xf32, #tpu.memory_space<vmem>>, %arg14: memref<2x1600xf32, #tpu.memory_space<vmem>>) attributes {dimension_semantics = [#tpu.dimension_semantics<arbitrary>], iteration_bounds = array<i64: 4>, scalar_prefetch = 0 : i64, scratch_operands = 1 : i64, tpu.core_type = #tpu.core_type<tc>, window_params = [{transform_indices = @transform_0, window_bounds = array<i64: 1, 2, 256>}, {pipeline_mode = #tpu.pipeline_mode<synchronous>, transform_indices = @transform_1, window_bounds = array<i64: 256, 2000>}, {pipeline_mode = #tpu.pipeline_mode<synchronous>, transform_indices = @transform_2, window_bounds = array<i64: 1, 2000>}, {pipeline_mode = #tpu.pipeline_mode<synchronous>, transform_indices = @transform_3, window_bounds = array<i64: 2000, 200>}, {pipeline_mode = #tpu.pipeline_mode<synchronous>, transform_indices = @transform_4, window_bounds = array<i64: 1, 200>}, {transform_indices = @transform_5, window_bounds = array<i64: 1, 200, 1600>}, {pipeline_mode = #tpu.pipeline_mode<synchronous>, transform_indices = @transform_6, window_bounds = array<i64: 1, 1600>}, {pipeline_mode = #tpu.pipeline_mode<synchronous>, transform_indices = @transform_7, window_bounds = array<i64: 1600, 32>}, {pipeline_mode = #tpu.pipeline_mode<synchronous>, transform_indices = @transform_8, window_bounds = array<i64: 1, 32>}, {pipeline_mode = #tpu.pipeline_mode<synchronous>, transform_indices = @transform_9, window_bounds = array<i64: 1600, 32>}, {pipeline_mode = #tpu.pipeline_mode<synchronous>, transform_indices = @transform_10, window_bounds = array<i64: 1, 32>}, {pipeline_mode = #tpu.pipeline_mode<synchronous>, transform_indices = @transform_11, window_bounds = array<i64: 2, 32>}, {pipeline_mode = #tpu.pipeline_mode<synchronous>, transform_indices = @transform_12, window_bounds = array<i64: 3, 2, 32>}]} {
    %c0_i32 = arith.constant 0 : i32
    %0 = arith.cmpi eq, %arg0, %c0_i32 : i32
    %1 = arith.extui %0 : i1 to i32
    %c0_i32_0 = arith.constant 0 : i32
    %2 = arith.cmpi ne, %1, %c0_i32_0 : i32
    scf.if %2 {
      %cst_23 = arith.constant 0.000000e+00 : f32
      %30 = vector.broadcast %cst_23 : f32 to vector<2x1600xf32>
      %c0_24 = arith.constant 0 : index
      %c0_25 = arith.constant 0 : index
      %31 = vector.load %arg14[%c0_24, %c0_25] : memref<2x1600xf32, #tpu.memory_space<vmem>>, vector<2x1600xf32>
      tpu.vector_store %arg14[%c0_24, %c0_25], %30 {strides = array<i32>} : memref<2x1600xf32, #tpu.memory_space<vmem>>, vector<2x1600xf32>,
    } else {
    }
    %c0 = arith.constant 0 : index
    %c0_1 = arith.constant 0 : index
    %c0_2 = arith.constant 0 : index
    %3 = vector.load %arg1[%c0, %c0_1, %c0_2] : memref<1x2x256xbf16, #tpu.memory_space<vmem>>, vector<1x2x256xbf16>
    %4 = vector.shape_cast %3 : vector<1x2x256xbf16> to vector<2x256xbf16>
    %c0_3 = arith.constant 0 : index
    %c0_4 = arith.constant 0 : index
    %5 = vector.load %arg2[%c0_3, %c0_4] : memref<256x2000xbf16, #tpu.memory_space<vmem>>, vector<256x2000xbf16>
    %cst = arith.constant dense<0.000000e+00> : vector<2x2000xf32>
    %6 = tpu.matmul %4, %5, %cst {dimension_numbers = #tpu.dot_dimension_numbers<[1], [0], [0], [1], [0, 0, 1, 1], [], []>} : vector<2x256xbf16>, vector<256x2000xbf16>, vector<2x2000xf32> -> vector<2x2000xf32>
    %c0_5 = arith.constant 0 : index
    %c0_6 = arith.constant 0 : index
    %7 = vector.load %arg3[%c0_5, %c0_6] : memref<1x2000xf32, #tpu.memory_space<vmem>>, vector<1x2000xf32>
    %8 = vector.broadcast %7 : vector<1x2000xf32> to vector<2x2000xf32>
    %9 = arith.addf %6, %8 : vector<2x2000xf32>
    %cst_7 = arith.constant 0.000000e+00 : f32
    %10 = vector.broadcast %cst_7 : f32 to vector<2x2000xf32>
    %11 = arith.maximumf %9, %10 : vector<2x2000xf32>
    %12 = arith.truncf %11 : vector<2x2000xf32> to vector<2x2000xbf16>
    %c0_8 = arith.constant 0 : index
    %c0_9 = arith.constant 0 : index
    %13 = vector.load %arg4[%c0_8, %c0_9] : memref<2000x200xbf16, #tpu.memory_space<vmem>>, vector<2000x200xbf16>
    %cst_10 = arith.constant dense<0.000000e+00> : vector<2x200xf32>
    %14 = tpu.matmul %12, %13, %cst_10 {dimension_numbers = #tpu.dot_dimension_numbers<[1], [0], [0], [1], [0, 0, 1, 1], [], []>} : vector<2x2000xbf16>, vector<2000x200xbf16>, vector<2x200xf32> -> vector<2x200xf32>
    %c0_11 = arith.constant 0 : index
    %c0_12 = arith.constant 0 : index
    %15 = vector.load %arg5[%c0_11, %c0_12] : memref<1x200xf32, #tpu.memory_space<vmem>>, vector<1x200xf32>
    %16 = vector.broadcast %15 : vector<1x200xf32> to vector<2x200xf32>
    %17 = arith.addf %14, %16 : vector<2x200xf32>
    %cst_13 = arith.constant 0.000000e+00 : f32
    %18 = vector.broadcast %cst_13 : f32 to vector<2x200xf32>
    %19 = arith.maximumf %17, %18 : vector<2x200xf32>
    %c0_14 = arith.constant 0 : index
    %c0_15 = arith.constant 0 : index
    %20 = vector.load %arg14[%c0_14, %c0_15] : memref<2x1600xf32, #tpu.memory_space<vmem>>, vector<2x1600xf32>
    %21 = arith.truncf %19 : vector<2x200xf32> to vector<2x200xbf16>
    %c0_16 = arith.constant 0 : index
    %c0_17 = arith.constant 0 : index
    %c0_18 = arith.constant 0 : index
    %22 = vector.load %arg6[%c0_16, %c0_17, %c0_18] : memref<1x200x1600xbf16, #tpu.memory_space<vmem>>, vector<1x200x1600xbf16>
    %23 = vector.shape_cast %22 : vector<1x200x1600xbf16> to vector<200x1600xbf16>
    %cst_19 = arith.constant dense<0.000000e+00> : vector<2x1600xf32>
    %24 = tpu.matmul %21, %23, %cst_19 {dimension_numbers = #tpu.dot_dimension_numbers<[1], [0], [0], [1], [0, 0, 1, 1], [], []>} : vector<2x200xbf16>, vector<200x1600xbf16>, vector<2x1600xf32> -> vector<2x1600xf32>
    %25 = arith.addf %20, %24 : vector<2x1600xf32>
    %c0_20 = arith.constant 0 : index
    %c0_21 = arith.constant 0 : index
    %26 = vector.load %arg14[%c0_20, %c0_21] : memref<2x1600xf32, #tpu.memory_space<vmem>>, vector<2x1600xf32>
    tpu.vector_store %arg14[%c0_20, %c0_21], %25 {strides = array<i32>} : memref<2x1600xf32, #tpu.memory_space<vmem>>, vector<2x1600xf32>,
    %c3_i32 = arith.constant 3 : i32
    %27 = arith.cmpi eq, %arg0, %c3_i32 : i32
    %28 = arith.extui %27 : i1 to i32
    %c0_i32_22 = arith.constant 0 : i32
    %29 = arith.cmpi ne, %28, %c0_i32_22 : i32
    scf.if %29 {
      %c0_23 = arith.constant 0 : index
      %c0_24 = arith.constant 0 : index
      %30 = vector.load %arg14[%c0_23, %c0_24] : memref<2x1600xf32, #tpu.memory_space<vmem>>, vector<2x1600xf32>
      %c0_25 = arith.constant 0 : index
      %c0_26 = arith.constant 0 : index
      %31 = vector.load %arg7[%c0_25, %c0_26] : memref<1x1600xf32, #tpu.memory_space<vmem>>, vector<1x1600xf32>
      %32 = vector.broadcast %31 : vector<1x1600xf32> to vector<2x1600xf32>
      %33 = arith.addf %30, %32 : vector<2x1600xf32>
      %cst_27 = arith.constant 0.000000e+00 : f32
      %34 = vector.broadcast %cst_27 : f32 to vector<2x1600xf32>
      %35 = arith.maximumf %33, %34 : vector<2x1600xf32>
      %36 = arith.truncf %35 : vector<2x1600xf32> to vector<2x1600xbf16>
      %c0_28 = arith.constant 0 : index
      %c0_29 = arith.constant 0 : index
      %37 = vector.load %arg8[%c0_28, %c0_29] : memref<1600x32xbf16, #tpu.memory_space<vmem>>, vector<1600x32xbf16>
      %cst_30 = arith.constant dense<0.000000e+00> : vector<2x32xf32>
      %38 = tpu.matmul %36, %37, %cst_30 {dimension_numbers = #tpu.dot_dimension_numbers<[1], [0], [0], [1], [0, 0, 1, 1], [], []>} : vector<2x1600xbf16>, vector<1600x32xbf16>, vector<2x32xf32> -> vector<2x32xf32>
      %c0_31 = arith.constant 0 : index
      %c0_32 = arith.constant 0 : index
      %39 = vector.load %arg9[%c0_31, %c0_32] : memref<1x32xf32, #tpu.memory_space<vmem>>, vector<1x32xf32>
      %40 = vector.broadcast %39 : vector<1x32xf32> to vector<2x32xf32>
      %41 = arith.addf %38, %40 : vector<2x32xf32>
      %c0_33 = arith.constant 0 : index
      %c0_34 = arith.constant 0 : index
      %42 = vector.load %arg10[%c0_33, %c0_34] : memref<1600x32xbf16, #tpu.memory_space<vmem>>, vector<1600x32xbf16>
      %cst_35 = arith.constant dense<0.000000e+00> : vector<2x32xf32>
      %43 = tpu.matmul %36, %42, %cst_35 {dimension_numbers = #tpu.dot_dimension_numbers<[1], [0], [0], [1], [0, 0, 1, 1], [], []>} : vector<2x1600xbf16>, vector<1600x32xbf16>, vector<2x32xf32> -> vector<2x32xf32>
      %c0_36 = arith.constant 0 : index
      %c0_37 = arith.constant 0 : index
      %44 = vector.load %arg11[%c0_36, %c0_37] : memref<1x32xf32, #tpu.memory_space<vmem>>, vector<1x32xf32>
      %45 = vector.broadcast %44 : vector<1x32xf32> to vector<2x32xf32>
      %46 = arith.addf %43, %45 : vector<2x32xf32>
      %cst_38 = arith.constant 5.000000e-01 : f32
      %47 = vector.broadcast %cst_38 : f32 to vector<2x32xf32>
      %48 = arith.mulf %47, %46 : vector<2x32xf32>
      %49 = math.exp %48 : vector<2x32xf32>
      %c0_39 = arith.constant 0 : index
      %c0_40 = arith.constant 0 : index
      %50 = vector.load %arg12[%c0_39, %c0_40] : memref<2x32xf32, #tpu.memory_space<vmem>>, vector<2x32xf32>
      %51 = arith.mulf %49, %50 : vector<2x32xf32>
      %52 = arith.addf %41, %51 : vector<2x32xf32>
      %c0_41 = arith.constant 0 : index
      %c0_42 = arith.constant 0 : index
      %c0_43 = arith.constant 0 : index
      %53 = vector.load %arg13[%c0_41, %c0_42, %c0_43] : memref<3x2x32xf32, #tpu.memory_space<vmem>>, vector<1x2x32xf32>
      %54 = vector.shape_cast %53 : vector<1x2x32xf32> to vector<2x32xf32>
      %55 = vector.shape_cast %52 : vector<2x32xf32> to vector<1x2x32xf32>
      tpu.vector_store %arg13[%c0_41, %c0_42, %c0_43], %55 {strides = array<i32>} : memref<3x2x32xf32, #tpu.memory_space<vmem>>, vector<1x2x32xf32>,
      %c1 = arith.constant 1 : index
      %c0_44 = arith.constant 0 : index
      %c0_45 = arith.constant 0 : index
      %56 = vector.load %arg13[%c1, %c0_44, %c0_45] : memref<3x2x32xf32, #tpu.memory_space<vmem>>, vector<1x2x32xf32>
      %57 = vector.shape_cast %56 : vector<1x2x32xf32> to vector<2x32xf32>
      %58 = vector.shape_cast %41 : vector<2x32xf32> to vector<1x2x32xf32>
      tpu.vector_store %arg13[%c1, %c0_44, %c0_45], %58 {strides = array<i32>} : memref<3x2x32xf32, #tpu.memory_space<vmem>>, vector<1x2x32xf32>,
      %c2 = arith.constant 2 : index
      %c0_46 = arith.constant 0 : index
      %c0_47 = arith.constant 0 : index
      %59 = vector.load %arg13[%c2, %c0_46, %c0_47] : memref<3x2x32xf32, #tpu.memory_space<vmem>>, vector<1x2x32xf32>
      %60 = vector.shape_cast %59 : vector<1x2x32xf32> to vector<2x32xf32>
      %61 = vector.shape_cast %46 : vector<2x32xf32> to vector<1x2x32xf32>
      tpu.vector_store %arg13[%c2, %c0_46, %c0_47], %61 {strides = array<i32>} : memref<3x2x32xf32, #tpu.memory_space<vmem>>, vector<1x2x32xf32>,
    } else {
    }
    return
  }
  func.func @transform_0(%arg0: i32) -> (i32, i32, i32) {
    %c0_i32 = arith.constant 0 : i32
    %c0_i32_0 = arith.constant 0 : i32
    %c0_i32_1 = arith.constant 0 : i32
    return %arg0, %c0_i32, %c0_i32_0 : i32, i32, i32
  }
  func.func @transform_1(%arg0: i32) -> (i32, i32) {
    %c0_i32 = arith.constant 0 : i32
    %c0_i32_0 = arith.constant 0 : i32
    %c0_i32_1 = arith.constant 0 : i32
    return %c0_i32, %c0_i32_0 : i32, i32
  }
  func.func @transform_2(%arg0: i32) -> (i32, i32) {
    %c0_i32 = arith.constant 0 : i32
    %c0_i32_0 = arith.constant 0 : i32
    %c0_i32_1 = arith.constant 0 : i32
    return %c0_i32, %c0_i32_0 : i32, i32
  }
  func.func @transform_3(%arg0: i32) -> (i32, i32) {
    %c0_i32 = arith.constant 0 : i32
    %c0_i32_0 = arith.constant 0 : i32
    %c0_i32_1 = arith.constant 0 : i32
    return %c0_i32, %c0_i32_0 : i32, i32
  }
  func.func @transform_4(%arg0: i32) -> (i32, i32) {
    %c0_i32 = arith.constant 0 : i32
    %c0_i32_0 = arith.constant 0 : i32
    %c0_i32_1 = arith.constant 0 : i32
    return %c0_i32, %c0_i32_0 : i32, i32
  }
  func.func @transform_5(%arg0: i32) -> (i32, i32, i32) {
    %c0_i32 = arith.constant 0 : i32
    %c0_i32_0 = arith.constant 0 : i32
    %c0_i32_1 = arith.constant 0 : i32
    return %arg0, %c0_i32, %c0_i32_0 : i32, i32, i32
  }
  func.func @transform_6(%arg0: i32) -> (i32, i32) {
    %c0_i32 = arith.constant 0 : i32
    %c0_i32_0 = arith.constant 0 : i32
    %c0_i32_1 = arith.constant 0 : i32
    return %c0_i32, %c0_i32_0 : i32, i32
  }
  func.func @transform_7(%arg0: i32) -> (i32, i32) {
    %c0_i32 = arith.constant 0 : i32
    %c0_i32_0 = arith.constant 0 : i32
    %c0_i32_1 = arith.constant 0 : i32
    return %c0_i32, %c0_i32_0 : i32, i32
  }
  func.func @transform_8(%arg0: i32) -> (i32, i32) {
    %c0_i32 = arith.constant 0 : i32
    %c0_i32_0 = arith.constant 0 : i32
    %c0_i32_1 = arith.constant 0 : i32
    return %c0_i32, %c0_i32_0 : i32, i32
  }
  func.func @transform_9(%arg0: i32) -> (i32, i32) {
    %c0_i32 = arith.constant 0 : i32
    %c0_i32_0 = arith.constant 0 : i32
    %c0_i32_1 = arith.constant 0 : i32
    return %c0_i32, %c0_i32_0 : i32, i32
  }
  func.func @transform_10(%arg0: i32) -> (i32, i32) {
    %c0_i32 = arith.constant 0 : i32
    %c0_i32_0 = arith.constant 0 : i32
    %c0_i32_1 = arith.constant 0 : i32
    return %c0_i32, %c0_i32_0 : i32, i32
  }
  func.func @transform_11(%arg0: i32) -> (i32, i32) {
    %c0_i32 = arith.constant 0 : i32
    %c0_i32_0 = arith.constant 0 : i32
    %c0_i32_1 = arith.constant 0 : i32
    return %c0_i32, %c0_i32_0 : i32, i32
  }
  func.func @transform_12(%arg0: i32) -> (i32, i32, i32) {
    %c0_i32 = arith.constant 0 : i32
    %c0_i32_0 = arith.constant 0 : i32
    %c0_i32_1 = arith.constant 0 : i32
    %c0_i32_2 = arith.constant 0 : i32
    return %c0_i32, %c0_i32_0, %c0_i32_1 : i32, i32, i32
  }
}

</mosaic_0001>

<llo_original>
// kernel: tpu_custom_call.1
$region0: #{tpu_custom_call.1}
  #allocation0 [shape = 'u32[]', space=smem, size = 0x4, offset = 0x4, fixed_abs, tag = 'smem constant byte address 0x4 - core index']
  #allocation1 [shape = 'u32[144,128]{1,0:T(1,128)}', space=vmem, size = 0x12000, scoped, tag = 'internal scratch']
  #allocation2 [shape = 'f32[2,1600]{1,0:T(2,128)}', space=vmem, size = 0x3400, scoped, tag = 'scratch operand']
  %s0 = inlined_call_operand.vmem [shape: bf16[4,2,256], index: 0, kind: input, shape index: {}]
  %s1 = inlined_call_operand.vmem [shape: bf16[256,2000], index: 1, kind: input, shape index: {}]
  %s2 = inlined_call_operand.vmem [shape: f32[1,2000], index: 2, kind: input, shape index: {}]
  %s3 = inlined_call_operand.vmem [shape: bf16[2000,200], index: 3, kind: input, shape index: {}]
  %s4 = inlined_call_operand.vmem [shape: f32[1,200], index: 4, kind: input, shape index: {}]
  %s5 = inlined_call_operand.vmem [shape: bf16[4,200,1600], index: 5, kind: input, shape index: {}]
  %s6 = inlined_call_operand.vmem [shape: f32[1,1600], index: 6, kind: input, shape index: {}]
  %s7 = inlined_call_operand.vmem [shape: bf16[1600,32], index: 7, kind: input, shape index: {}]
  %s8 = inlined_call_operand.vmem [shape: f32[1,32], index: 8, kind: input, shape index: {}]
  %s9 = inlined_call_operand.vmem [shape: bf16[1600,32], index: 9, kind: input, shape index: {}]
  %s10 = inlined_call_operand.vmem [shape: f32[1,32], index: 10, kind: input, shape index: {}]
  %s11 = inlined_call_operand.vmem [shape: f32[2,32], index: 11, kind: input, shape index: {}]
  %s12 = inlined_call_operand.hbm [shape: f32[3,2,32], index: 12, kind: output, shape index: {}]
  %s13 = sld [smem:[#allocation0]]
  $region89: #{tpu_custom_call.1} parent=0
    _
  %s15 = ssub.s32 1, %s13
  %s16 = scalar_select 0, %s15, %s13
  $region1: #{tpu_custom_call.1} parent=0
    #allocation3 [shape = 'u8[3072]{0}', space=vmem, size = 0xc00, scoped, tag = 'output window, operand 0, single buffered']
    #allocation4 [shape = 's32[2]{0}', space=sflag, size = 0x8, scoped, tag = 'scoped memory for tpu_custom_call.1']
    %17 = vsyncpa [#allocation4], 0
    loop: start=0, step=1, limit=6
    $region2: #{tpu_custom_call.1} parent=1 // loop_pre_header
      _
    $region3: #{tpu_custom_call.1} parent=1 // loop_header
      %s19 = sphi 0, %s23
      %p20 = scmp.ge.s32.totalorder %s19, 6
      %s29 = sphi 0, %s31
      %s32 = sphi 0, %s29
      %s33 = sphi 0, %s32
      %s49 = sphi 0, %s33
      %s53 = sphi 0, %s53
      %s55 = sphi 0, %s53
      %s56 = sphi 0, %s55
      %s70 = sphi 0, %s56
      %s74 = sphi 0, %s74
      %s76 = sphi 0, %s74
      %s77 = sphi 0, %s76
      %s91 = sphi 0, %s77
      %s95 = sphi 0, %s95
      %s97 = sphi 0, %s95
      %s98 = sphi 0, %s97
      %s112 = sphi 0, %s98
      %s116 = sphi 0, %s116
      %s118 = sphi 0, %s116
      %s119 = sphi 0, %s118
      %s133 = sphi 0, %s119
      %s139 = sphi 0, %s141
      %s142 = sphi 0, %s139
      %s143 = sphi 0, %s142
      %s159 = sphi 0, %s143
      %s163 = sphi 0, %s163
      %s165 = sphi 0, %s163
      %s166 = sphi 0, %s165
      %s180 = sphi 0, %s166
      %s184 = sphi 0, %s184
      %s186 = sphi 0, %s184
      %s187 = sphi 0, %s186
      %s201 = sphi 0, %s187
      %s205 = sphi 0, %s205
      %s207 = sphi 0, %s205
      %s208 = sphi 0, %s207
      %s222 = sphi 0, %s208
      %s226 = sphi 0, %s226
      %s228 = sphi 0, %s226
      %s229 = sphi 0, %s228
      %s243 = sphi 0, %s229
      %s247 = sphi 0, %s247
      %s249 = sphi 0, %s247
      %s250 = sphi 0, %s249
      %s264 = sphi 0, %s250
      %s268 = sphi 0, %s268
      %s270 = sphi 0, %s268
      %s271 = sphi 0, %s270
      %s285 = sphi 0, %s271
      %s289 = sphi 0, %s289
      %s291 = sphi 0, %s289
      %s292 = sphi 0, %s291
      %s306 = sphi 0, %s292
    $region4: #{tpu_custom_call.1} parent=1 // loop_header_branch
      %22 = sbr.rel (%p20) target = $region8
    $region5: #{tpu_custom_call.1} parent=1 // loop_body
      %s24 = ssub.s32 %s19, 1
      %s25 = ssub.s32 %s19, 2
      %s26 = sadd.s32 %s19, 1
      %s27 = ssub.s32 %s19, %s26
      %p28 = scmp.eq.s32.totalorder %s27, 0
      %s30 = sadd.s32 %s29, 1
      %s31 = scalar_select %p28, %s29, %s30
      %p34 = pneg %p28
      %p35 = scmp.eq.s32.totalorder %s19, 3
      %p36 = por %p34, %p35
      %p37 = scmp.ne.s32.totalorder %s29, %s32
      %p38 = scmp.eq.s32.totalorder %s19, 0
      %p39 = por %p37, %p38
      %p40 = scmp.ne.s32.totalorder %s29, %s32
      %p41 = scmp.eq.s32.totalorder %s24, 3
      %p42 = por %p40, %p41
      %p43 = scmp.ne.s32.totalorder %s32, %s33
      %p44 = scmp.eq.s32.totalorder %s24, 0
      %p45 = por %p43, %p44
      %p46 = scmp.ne.s32.totalorder %s32, %s33
      %p47 = scmp.eq.s32.totalorder %s25, 3
      %p48 = por %p46, %p47
      %p50 = scmp.ne.s32.totalorder %s33, %s49
      %p51 = scmp.eq.s32.totalorder %s25, 0
      %p52 = por %p50, %p51
      %s54 = sadd.s32 %s53, 1
      %p57 = scmp.eq.s32.totalorder %s19, 3
      %p58 = scmp.ne.s32.totalorder %s53, %s55
      %p59 = scmp.eq.s32.totalorder %s19, 0
      %p60 = por %p58, %p59
      %p61 = scmp.ne.s32.totalorder %s53, %s55
      %p62 = scmp.eq.s32.totalorder %s24, 3
      %p63 = por %p61, %p62
      %p64 = scmp.ne.s32.totalorder %s55, %s56
      %p65 = scmp.eq.s32.totalorder %s24, 0
      %p66 = por %p64, %p65
      %p67 = scmp.ne.s32.totalorder %s55, %s56
      %p68 = scmp.eq.s32.totalorder %s25, 3
      %p69 = por %p67, %p68
      %p71 = scmp.ne.s32.totalorder %s56, %s70
      %p72 = scmp.eq.s32.totalorder %s25, 0
      %p73 = por %p71, %p72
      %s75 = sadd.s32 %s74, 1
      %p78 = scmp.eq.s32.totalorder %s19, 3
      %p79 = scmp.ne.s32.totalorder %s74, %s76
      %p80 = scmp.eq.s32.totalorder %s19, 0
      %p81 = por %p79, %p80
      %p82 = scmp.ne.s32.totalorder %s74, %s76
      %p83 = scmp.eq.s32.totalorder %s24, 3
      %p84 = por %p82, %p83
      %p85 = scmp.ne.s32.totalorder %s76, %s77
      %p86 = scmp.eq.s32.totalorder %s24, 0
      %p87 = por %p85, %p86
      %p88 = scmp.ne.s32.totalorder %s76, %s77
      %p89 = scmp.eq.s32.totalorder %s25, 3
      %p90 = por %p88, %p89
      %p92 = scmp.ne.s32.totalorder %s77, %s91
      %p93 = scmp.eq.s32.totalorder %s25, 0
      %p94 = por %p92, %p93
      %s96 = sadd.s32 %s95, 1
      %p99 = scmp.eq.s32.totalorder %s19, 3
      %p100 = scmp.ne.s32.totalorder %s95, %s97
      %p101 = scmp.eq.s32.totalorder %s19, 0
      %p102 = por %p100, %p101
      %p103 = scmp.ne.s32.totalorder %s95, %s97
      %p104 = scmp.eq.s32.totalorder %s24, 3
      %p105 = por %p103, %p104
      %p106 = scmp.ne.s32.totalorder %s97, %s98
      %p107 = scmp.eq.s32.totalorder %s24, 0
      %p108 = por %p106, %p107
      %p109 = scmp.ne.s32.totalorder %s97, %s98
      %p110 = scmp.eq.s32.totalorder %s25, 3
      %p111 = por %p109, %p110
      %p113 = scmp.ne.s32.totalorder %s98, %s112
      %p114 = scmp.eq.s32.totalorder %s25, 0
      %p115 = por %p113, %p114
      %s117 = sadd.s32 %s116, 1
      %p120 = scmp.eq.s32.totalorder %s19, 3
      %p121 = scmp.ne.s32.totalorder %s116, %s118
      %p122 = scmp.eq.s32.totalorder %s19, 0
      %p123 = por %p121, %p122
      %p124 = scmp.ne.s32.totalorder %s116, %s118
      %p125 = scmp.eq.s32.totalorder %s24, 3
      %p126 = por %p124, %p125
      %p127 = scmp.ne.s32.totalorder %s118, %s119
      %p128 = scmp.eq.s32.totalorder %s24, 0
      %p129 = por %p127, %p128
      %p130 = scmp.ne.s32.totalorder %s118, %s119
      %p131 = scmp.eq.s32.totalorder %s25, 3
      %p132 = por %p130, %p131
      %p134 = scmp.ne.s32.totalorder %s119, %s133
      %p135 = scmp.eq.s32.totalorder %s25, 0
      %p136 = por %p134, %p135
      %s137 = ssub.s32 %s19, %s26
      %p138 = scmp.eq.s32.totalorder %s137, 0
      %s140 = sadd.s32 %s139, 1
      %s141 = scalar_select %p138, %s139, %s140
      %p144 = pneg %p138
      %p145 = scmp.eq.s32.totalorder %s19, 3
      %p146 = por %p144, %p145
      %p147 = scmp.ne.s32.totalorder %s139, %s142
      %p148 = scmp.eq.s32.totalorder %s19, 0
      %p149 = por %p147, %p148
      %p150 = scmp.ne.s32.totalorder %s139, %s142
      %p151 = scmp.eq.s32.totalorder %s24, 3
      %p152 = por %p150, %p151
      %p153 = scmp.ne.s32.totalorder %s142, %s143
      %p154 = scmp.eq.s32.totalorder %s24, 0
      %p155 = por %p153, %p154
      %p156 = scmp.ne.s32.totalorder %s142, %s143
      %p157 = scmp.eq.s32.totalorder %s25, 3
      %p158 = por %p156, %p157
      %p160 = scmp.ne.s32.totalorder %s143, %s159
      %p161 = scmp.eq.s32.totalorder %s25, 0
      %p162 = por %p160, %p161
      %s164 = sadd.s32 %s163, 1
      %p167 = scmp.eq.s32.totalorder %s19, 3
      %p168 = scmp.ne.s32.totalorder %s163, %s165
      %p169 = scmp.eq.s32.totalorder %s19, 0
      %p170 = por %p168, %p169
      %p171 = scmp.ne.s32.totalorder %s163, %s165
      %p172 = scmp.eq.s32.totalorder %s24, 3
      %p173 = por %p171, %p172
      %p174 = scmp.ne.s32.totalorder %s165, %s166
      %p175 = scmp.eq.s32.totalorder %s24, 0
      %p176 = por %p174, %p175
      %p177 = scmp.ne.s32.totalorder %s165, %s166
      %p178 = scmp.eq.s32.totalorder %s25, 3
      %p179 = por %p177, %p178
      %p181 = scmp.ne.s32.totalorder %s166, %s180
      %p182 = scmp.eq.s32.totalorder %s25, 0
      %p183 = por %p181, %p182
      %s185 = sadd.s32 %s184, 1
      %p188 = scmp.eq.s32.totalorder %s19, 3
      %p189 = scmp.ne.s32.totalorder %s184, %s186
      %p190 = scmp.eq.s32.totalorder %s19, 0
      %p191 = por %p189, %p190
      %p192 = scmp.ne.s32.totalorder %s184, %s186
      %p193 = scmp.eq.s32.totalorder %s24, 3
      %p194 = por %p192, %p193
      %p195 = scmp.ne.s32.totalorder %s186, %s187
      %p196 = scmp.eq.s32.totalorder %s24, 0
      %p197 = por %p195, %p196
      %p198 = scmp.ne.s32.totalorder %s186, %s187
      %p199 = scmp.eq.s32.totalorder %s25, 3
      %p200 = por %p198, %p199
      %p202 = scmp.ne.s32.totalorder %s187, %s201
      %p203 = scmp.eq.s32.totalorder %s25, 0
      %p204 = por %p202, %p203
      %s206 = sadd.s32 %s205, 1
      %p209 = scmp.eq.s32.totalorder %s19, 3
      %p210 = scmp.ne.s32.totalorder %s205, %s207
      %p211 = scmp.eq.s32.totalorder %s19, 0
      %p212 = por %p210, %p211
      %p213 = scmp.ne.s32.totalorder %s205, %s207
      %p214 = scmp.eq.s32.totalorder %s24, 3
      %p215 = por %p213, %p214
      %p216 = scmp.ne.s32.totalorder %s207, %s208
      %p217 = scmp.eq.s32.totalorder %s24, 0
      %p218 = por %p216, %p217
      %p219 = scmp.ne.s32.totalorder %s207, %s208
      %p220 = scmp.eq.s32.totalorder %s25, 3
      %p221 = por %p219, %p220
      %p223 = scmp.ne.s32.totalorder %s208, %s222
      %p224 = scmp.eq.s32.totalorder %s25, 0
      %p225 = por %p223, %p224
      %s227 = sadd.s32 %s226, 1
      %p230 = scmp.eq.s32.totalorder %s19, 3
      %p231 = scmp.ne.s32.totalorder %s226, %s228
      %p232 = scmp.eq.s32.totalorder %s19, 0
      %p233 = por %p231, %p232
      %p234 = scmp.ne.s32.totalorder %s226, %s228
      %p235 = scmp.eq.s32.totalorder %s24, 3
      %p236 = por %p234, %p235
      %p237 = scmp.ne.s32.totalorder %s228, %s229
      %p238 = scmp.eq.s32.totalorder %s24, 0
      %p239 = por %p237, %p238
      %p240 = scmp.ne.s32.totalorder %s228, %s229
      %p241 = scmp.eq.s32.totalorder %s25, 3
      %p242 = por %p240, %p241
      %p244 = scmp.ne.s32.totalorder %s229, %s243
      %p245 = scmp.eq.s32.totalorder %s25, 0
      %p246 = por %p244, %p245
      %s248 = sadd.s32 %s247, 1
      %p251 = scmp.eq.s32.totalorder %s19, 3
      %p252 = scmp.ne.s32.totalorder %s247, %s249
      %p253 = scmp.eq.s32.totalorder %s19, 0
      %p254 = por %p252, %p253
      %p255 = scmp.ne.s32.totalorder %s247, %s249
      %p256 = scmp.eq.s32.totalorder %s24, 3
      %p257 = por %p255, %p256
      %p258 = scmp.ne.s32.totalorder %s249, %s250
      %p259 = scmp.eq.s32.totalorder %s24, 0
      %p260 = por %p258, %p259
      %p261 = scmp.ne.s32.totalorder %s249, %s250
      %p262 = scmp.eq.s32.totalorder %s25, 3
      %p263 = por %p261, %p262
      %p265 = scmp.ne.s32.totalorder %s250, %s264
      %p266 = scmp.eq.s32.totalorder %s25, 0
      %p267 = por %p265, %p266
      %s269 = sadd.s32 %s268, 1
      %p272 = scmp.eq.s32.totalorder %s19, 3
      %p273 = scmp.ne.s32.totalorder %s268, %s270
      %p274 = scmp.eq.s32.totalorder %s19, 0
      %p275 = por %p273, %p274
      %p276 = scmp.ne.s32.totalorder %s268, %s270
      %p277 = scmp.eq.s32.totalorder %s24, 3
      %p278 = por %p276, %p277
      %p279 = scmp.ne.s32.totalorder %s270, %s271
      %p280 = scmp.eq.s32.totalorder %s24, 0
      %p281 = por %p279, %p280
      %p282 = scmp.ne.s32.totalorder %s270, %s271
      %p283 = scmp.eq.s32.totalorder %s25, 3
      %p284 = por %p282, %p283
      %p286 = scmp.ne.s32.totalorder %s271, %s285
      %p287 = scmp.eq.s32.totalorder %s25, 0
      %p288 = por %p286, %p287
      %s290 = sadd.s32 %s289, 1
      %p293 = scmp.eq.s32.totalorder %s19, 3
      %p294 = scmp.ne.s32.totalorder %s289, %s291
      %p295 = scmp.eq.s32.totalorder %s19, 0
      %p296 = por %p294, %p295
      %p297 = scmp.ne.s32.totalorder %s289, %s291
      %p298 = scmp.eq.s32.totalorder %s24, 3
      %p299 = por %p297, %p298
      %p300 = scmp.ne.s32.totalorder %s291, %s292
      %p301 = scmp.eq.s32.totalorder %s24, 0
      %p302 = por %p300, %p301
      %p303 = scmp.ne.s32.totalorder %s291, %s292
      %p304 = scmp.eq.s32.totalorder %s25, 3
      %p305 = por %p303, %p304
      %p307 = scmp.ne.s32.totalorder %s292, %s306
      %p308 = scmp.eq.s32.totalorder %s25, 0
      %p309 = por %p307, %p308
      %p310 = scmp.le.s32.totalorder 1, %s19
      %p311 = scmp.lt.s32.totalorder %s19, 5
      %p312 = pnand %p310, %p311
      %p313 = pneg %p312
      // Predicated region
      $region9: #{tpu_custom_call.1} parent=5 // pred_check
        _
      $region10: #{tpu_custom_call.1} parent=5 // pred_check_branch
        %315 = sbr.rel (%p312) target = $region12
      $region11: #{tpu_custom_call.1} parent=5 // pred_region
        %s316 = ssub.s32 %s19, 1
        // Predicated region
        $region13: #{tpu_custom_call.1} parent=11 // pred_check
          %p317 = pneg %p66
        $region14: #{tpu_custom_call.1} parent=11 // pred_check_branch
          %319 = sbr.rel (%p317) target = $region16
        $region15: #{tpu_custom_call.1} parent=11 // pred_region
          _
        $region16: #{tpu_custom_call.1} parent=11 // pred_fallthru
          _
        // Predicated region
        $region17: #{tpu_custom_call.1} parent=11 // pred_check
          %p320 = pneg %p87
        $region18: #{tpu_custom_call.1} parent=11 // pred_check_branch
          %322 = sbr.rel (%p320) target = $region20
        $region19: #{tpu_custom_call.1} parent=11 // pred_region
          _
        $region20: #{tpu_custom_call.1} parent=11 // pred_fallthru
          _
        // Predicated region
        $region21: #{tpu_custom_call.1} parent=11 // pred_check
          %p323 = pneg %p108
        $region22: #{tpu_custom_call.1} parent=11 // pred_check_branch
          %325 = sbr.rel (%p323) target = $region24
        $region23: #{tpu_custom_call.1} parent=11 // pred_region
          _
        $region24: #{tpu_custom_call.1} parent=11 // pred_fallthru
          _
        // Predicated region
        $region25: #{tpu_custom_call.1} parent=11 // pred_check
          %p326 = pneg %p129
        $region26: #{tpu_custom_call.1} parent=11 // pred_check_branch
          %328 = sbr.rel (%p326) target = $region28
        $region27: #{tpu_custom_call.1} parent=11 // pred_region
          _
        $region28: #{tpu_custom_call.1} parent=11 // pred_fallthru
          _
        // Predicated region
        $region29: #{tpu_custom_call.1} parent=11 // pred_check
          %p329 = pneg %p176
        $region30: #{tpu_custom_call.1} parent=11 // pred_check_branch
          %331 = sbr.rel (%p329) target = $region32
        $region31: #{tpu_custom_call.1} parent=11 // pred_region
          _
        $region32: #{tpu_custom_call.1} parent=11 // pred_fallthru
          _
        // Predicated region
        $region33: #{tpu_custom_call.1} parent=11 // pred_check
          %p332 = pneg %p197
        $region34: #{tpu_custom_call.1} parent=11 // pred_check_branch
          %334 = sbr.rel (%p332) target = $region36
        $region35: #{tpu_custom_call.1} parent=11 // pred_region
          _
        $region36: #{tpu_custom_call.1} parent=11 // pred_fallthru
          _
        // Predicated region
        $region37: #{tpu_custom_call.1} parent=11 // pred_check
          %p335 = pneg %p218
        $region38: #{tpu_custom_call.1} parent=11 // pred_check_branch
          %337 = sbr.rel (%p335) target = $region40
        $region39: #{tpu_custom_call.1} parent=11 // pred_region
          _
        $region40: #{tpu_custom_call.1} parent=11 // pred_fallthru
          _
        // Predicated region
        $region41: #{tpu_custom_call.1} parent=11 // pred_check
          %p338 = pneg %p239
        $region42: #{tpu_custom_call.1} parent=11 // pred_check_branch
          %340 = sbr.rel (%p338) target = $region44
        $region43: #{tpu_custom_call.1} parent=11 // pred_region
          _
        $region44: #{tpu_custom_call.1} parent=11 // pred_fallthru
          _
        // Predicated region
        $region45: #{tpu_custom_call.1} parent=11 // pred_check
          %p341 = pneg %p260
        $region46: #{tpu_custom_call.1} parent=11 // pred_check_branch
          %343 = sbr.rel (%p341) target = $region48
        $region47: #{tpu_custom_call.1} parent=11 // pred_region
          _
        $region48: #{tpu_custom_call.1} parent=11 // pred_fallthru
          _
        // Predicated region
        $region49: #{tpu_custom_call.1} parent=11 // pred_check
          %p344 = pneg %p281
        $region50: #{tpu_custom_call.1} parent=11 // pred_check_branch
          %346 = sbr.rel (%p344) target = $region52
        $region51: #{tpu_custom_call.1} parent=11 // pred_region
          _
        $region52: #{tpu_custom_call.1} parent=11 // pred_fallthru
          _
      $region12: #{tpu_custom_call.1} parent=5 // pred_fallthru
        _
      %p347 = scmp.lt.s32.totalorder %s19, 4
      // Predicated region
      $region53: #{tpu_custom_call.1} parent=5 // pred_check
        %p348 = pneg %p347
      $region54: #{tpu_custom_call.1} parent=5 // pred_check_branch
        %350 = sbr.rel (%p348) target = $region56
      $region55: #{tpu_custom_call.1} parent=5 // pred_region
        // Predicated region
        $region57: #{tpu_custom_call.1} parent=55 // pred_check
          %p351 = pneg %p39
        $region58: #{tpu_custom_call.1} parent=55 // pred_check_branch
          %353 = sbr.rel (%p351) target = $region60
        $region59: #{tpu_custom_call.1} parent=55 // pred_region
          %p354 = scmp.lt.s32.totalorder %s19, 3
          %s355 = scalar_select %p354, %s19, 3
          %s356 = smul.addr %s355, 2
          %s357 = scalar_lea.vmem %s0, %s356
        $region60: #{tpu_custom_call.1} parent=55 // pred_fallthru
          _
        // Predicated region
        $region61: #{tpu_custom_call.1} parent=55 // pred_check
          %p358 = pneg %p149
        $region62: #{tpu_custom_call.1} parent=55 // pred_check_branch
          %360 = sbr.rel (%p358) target = $region64
        $region63: #{tpu_custom_call.1} parent=55 // pred_region
          %p361 = scmp.lt.s32.totalorder %s19, 3
          %s362 = scalar_select %p361, %s19, 3
          %s363 = smul.addr %s362, 325
          %s364 = smul.addr %s363, 4
          %s365 = scalar_lea.vmem %s5, %s364
        $region64: #{tpu_custom_call.1} parent=55 // pred_fallthru
          _
      $region56: #{tpu_custom_call.1} parent=5 // pred_fallthru
        _
      %p366 = scmp.le.s32.totalorder 1, %s19
      %p367 = scmp.lt.s32.totalorder %s19, 5
      %p368 = pnand %p366, %p367
      %p369 = pneg %p368
      // Predicated region
      $region65: #{tpu_custom_call.1} parent=5 // pred_check
        _
      $region66: #{tpu_custom_call.1} parent=5 // pred_check_branch
        %371 = sbr.rel (%p368) target = $region68
      $region67: #{tpu_custom_call.1} parent=5 // pred_region
        %s372 = ssub.s32 %s19, 1
        %p373 = scmp.lt.s32.totalorder %s24, 3
        %s374 = scalar_select %p373, %s24, 3
        %s375 = smul.addr %s374, 2
        %s376 = scalar_lea.vmem %s0, %s375
        %p377 = pneg %p45
        %p378 = pneg %p42
        %p379 = pneg %p66
        %p380 = pneg %p63
        %p381 = pneg %p87
        %p382 = pneg %p84
        %p383 = pneg %p108
        %p384 = pneg %p105
        %p385 = pneg %p129
        %p386 = pneg %p126
        %p387 = scmp.lt.s32.totalorder %s24, 3
        %s388 = scalar_select %p387, %s24, 3
        %s389 = smul.addr %s388, 325
        %s390 = smul.addr %s389, 4
        %s391 = scalar_lea.vmem %s5, %s390
        %p392 = pneg %p155
        %p393 = pneg %p152
        %p394 = pneg %p176
        %p395 = pneg %p173
        %p396 = pneg %p197
        %p397 = pneg %p194
        %p398 = pneg %p218
        %p399 = pneg %p215
        %p400 = pneg %p239
        %p401 = pneg %p236
        %p402 = pneg %p260
        %p403 = pneg %p257
        %p404 = pneg %p281
        %p405 = pneg %p278
        %p406 = pneg %p302
        %p407 = pneg %p299
        %p408 = scmp.lt.s32.totalorder %s24, 3
        %s409 = scalar_select %p408, %s24, 3
        %s410 = smul.addr %s409, 2
        %s411 = scalar_lea.vmem %s0, %s410
        %p412 = scmp.lt.s32.totalorder %s24, 3
        %s413 = scalar_select %p412, %s24, 3
        %s414 = smul.addr %s413, 325
        %s415 = smul.addr %s414, 4
        %s416 = scalar_lea.vmem %s5, %s415
        %p418 = scmp.eq.s32.totalorder %s24, 0
        // Predicated region
        $region69: #{tpu_custom_call.1} parent=67 // pred_check
          %p419 = pneg %p418
        $region70: #{tpu_custom_call.1} parent=67 // pred_check_branch
          %421 = sbr.rel (%p419) target = $region72
        $region71: #{tpu_custom_call.1} parent=67 // pred_region
          %422 = vst [vmem:[#allocation2] sm:$0xff] 0.0
          %423 = vst [vmem:[#allocation2 + $0x8] sm:$0xff] 0.0
          %424 = vst [vmem:[#allocation2 + $0x10] sm:$0xff] 0.0
          %vm425 = vcmask 517120
          %426 = vst.msk [vmem:[#allocation2 + $0x18] sm:$0x3] %vm425, 0.0
        $region72: #{tpu_custom_call.1} parent=67 // pred_fallthru
          _
        %v427 = vld [vmem:[%s411] sm:$0x3]
        %v428 = vld [vmem:[%s1] sm:$0xff]
        %v429 = vld [vmem:[%s1 + $0x8] sm:$0xff]
        %v430 = vld [vmem:[%s1 + $0x10] sm:$0xff]
        %v431 = vld [vmem:[%s1 + $0x18] sm:$0xff]
        %v432 = vld [vmem:[%s1 + $0x20] sm:$0xff]
        %v433 = vld [vmem:[%s1 + $0x28] sm:$0xff]
        %v434 = vld [vmem:[%s1 + $0x30] sm:$0xff]
        %v435 = vld [vmem:[%s1 + $0x38] sm:$0xff]
        %v436 = vld [vmem:[%s1 + $0x40] sm:$0xff]
        %v437 = vld [vmem:[%s1 + $0x48] sm:$0xff]
        %v438 = vld [vmem:[%s1 + $0x50] sm:$0xff]
        %v439 = vld [vmem:[%s1 + $0x58] sm:$0xff]
        %v440 = vld [vmem:[%s1 + $0x60] sm:$0xff]
        %v441 = vld [vmem:[%s1 + $0x68] sm:$0xff]
        %v442 = vld [vmem:[%s1 + $0x70] sm:$0xff]
        %v443 = vld [vmem:[%s1 + $0x78] sm:$0xff]
        %v444 = vld [vmem:[%s1 + $0x80] sm:$0xff]
        %v445 = vld [vmem:[%s1 + $0x88] sm:$0xff]
        %v446 = vld [vmem:[%s1 + $0x90] sm:$0xff]
        %v447 = vld [vmem:[%s1 + $0x98] sm:$0xff]
        %v448 = vld [vmem:[%s1 + $0xa0] sm:$0xff]
        %v449 = vld [vmem:[%s1 + $0xa8] sm:$0xff]
        %v450 = vld [vmem:[%s1 + $0xb0] sm:$0xff]
        %v451 = vld [vmem:[%s1 + $0xb8] sm:$0xff]
        %v452 = vld [vmem:[%s1 + $0xc0] sm:$0xff]
        %v453 = vld [vmem:[%s1 + $0xc8] sm:$0xff]
        %v454 = vld [vmem:[%s1 + $0xd0] sm:$0xff]
        %v455 = vld [vmem:[%s1 + $0xd8] sm:$0xff]
        %v456 = vld [vmem:[%s1 + $0xe0] sm:$0xff]
        %v457 = vld [vmem:[%s1 + $0xe8] sm:$0xff]
        %v458 = vld [vmem:[%s1 + $0xf0] sm:$0xff]
        %v459 = vld [vmem:[%s1 + $0xf8] sm:$0xff]
        %v460 = vld [vmem:[%s1 + $0x100] sm:$0xff]
        %v461 = vld [vmem:[%s1 + $0x108] sm:$0xff]
        %v462 = vld [vmem:[%s1 + $0x110] sm:$0xff]
        %v463 = vld [vmem:[%s1 + $0x118] sm:$0xff]
        %v464 = vld [vmem:[%s1 + $0x120] sm:$0xff]
        %v465 = vld [vmem:[%s1 + $0x128] sm:$0xff]
        %v466 = vld [vmem:[%s1 + $0x130] sm:$0xff]
        %v467 = vld [vmem:[%s1 + $0x138] sm:$0xff]
        %v468 = vld [vmem:[%s1 + $0x140] sm:$0xff]
        %v469 = vld [vmem:[%s1 + $0x148] sm:$0xff]
        %v470 = vld [vmem:[%s1 + $0x150] sm:$0xff]
        %v471 = vld [vmem:[%s1 + $0x158] sm:$0xff]
        %v472 = vld [vmem:[%s1 + $0x160] sm:$0xff]
        %v473 = vld [vmem:[%s1 + $0x168] sm:$0xff]
        %v474 = vld [vmem:[%s1 + $0x170] sm:$0xff]
        %v475 = vld [vmem:[%s1 + $0x178] sm:$0xff]
        %v476 = vld [vmem:[%s1 + $0x180] sm:$0xff]
        %v477 = vld [vmem:[%s1 + $0x188] sm:$0xff]
        %v478 = vld [vmem:[%s1 + $0x190] sm:$0xff]
        %v479 = vld [vmem:[%s1 + $0x198] sm:$0xff]
        %v480 = vld [vmem:[%s1 + $0x1a0] sm:$0xff]
        %v481 = vld [vmem:[%s1 + $0x1a8] sm:$0xff]
        %v482 = vld [vmem:[%s1 + $0x1b0] sm:$0xff]
        %v483 = vld [vmem:[%s1 + $0x1b8] sm:$0xff]
        %v484 = vld [vmem:[%s1 + $0x1c0] sm:$0xff]
        %v485 = vld [vmem:[%s1 + $0x1c8] sm:$0xff]
        %v486 = vld [vmem:[%s1 + $0x1d0] sm:$0xff]
        %v487 = vld [vmem:[%s1 + $0x1d8] sm:$0xff]
        %v488 = vld [vmem:[%s1 + $0x1e0] sm:$0xff]
        %v489 = vld [vmem:[%s1 + $0x1e8] sm:$0xff]
        %v490 = vld [vmem:[%s1 + $0x1f0] sm:$0xff]
        %v491 = vld [vmem:[%s1 + $0x1f8] sm:$0xff]
        %v492 = vld [vmem:[%s1 + $0x200] sm:$0xff]
        %v493 = vld [vmem:[%s1 + $0x208] sm:$0xff]
        %v494 = vld [vmem:[%s1 + $0x210] sm:$0xff]
        %v495 = vld [vmem:[%s1 + $0x218] sm:$0xff]
        %v496 = vld [vmem:[%s1 + $0x220] sm:$0xff]
        %v497 = vld [vmem:[%s1 + $0x228] sm:$0xff]
        %v498 = vld [vmem:[%s1 + $0x230] sm:$0xff]
        %v499 = vld [vmem:[%s1 + $0x238] sm:$0xff]
        %v500 = vld [vmem:[%s1 + $0x240] sm:$0xff]
        %v501 = vld [vmem:[%s1 + $0x248] sm:$0xff]
        %v502 = vld [vmem:[%s1 + $0x250] sm:$0xff]
        %v503 = vld [vmem:[%s1 + $0x258] sm:$0xff]
        %v504 = vld [vmem:[%s1 + $0x260] sm:$0xff]
        %v505 = vld [vmem:[%s1 + $0x268] sm:$0xff]
        %v506 = vld [vmem:[%s1 + $0x270] sm:$0xff]
        %v507 = vld [vmem:[%s1 + $0x278] sm:$0xff]
        %v508 = vld [vmem:[%s1 + $0x280] sm:$0xff]
        %v509 = vld [vmem:[%s1 + $0x288] sm:$0xff]
        %v510 = vld [vmem:[%s1 + $0x290] sm:$0xff]
        %v511 = vld [vmem:[%s1 + $0x298] sm:$0xff]
        %v512 = vld [vmem:[%s1 + $0x2a0] sm:$0xff]
        %v513 = vld [vmem:[%s1 + $0x2a8] sm:$0xff]
        %v514 = vld [vmem:[%s1 + $0x2b0] sm:$0xff]
        %v515 = vld [vmem:[%s1 + $0x2b8] sm:$0xff]
        %v516 = vld [vmem:[%s1 + $0x2c0] sm:$0xff]
        %v517 = vld [vmem:[%s1 + $0x2c8] sm:$0xff]
        %v518 = vld [vmem:[%s1 + $0x2d0] sm:$0xff]
        %v519 = vld [vmem:[%s1 + $0x2d8] sm:$0xff]
        %v520 = vld [vmem:[%s1 + $0x2e0] sm:$0xff]
        %v521 = vld [vmem:[%s1 + $0x2e8] sm:$0xff]
        %v522 = vld [vmem:[%s1 + $0x2f0] sm:$0xff]
        %v523 = vld [vmem:[%s1 + $0x2f8] sm:$0xff]
        %v524 = vld [vmem:[%s1 + $0x300] sm:$0xff]
        %v525 = vld [vmem:[%s1 + $0x308] sm:$0xff]
        %v526 = vld [vmem:[%s1 + $0x310] sm:$0xff]
        %v527 = vld [vmem:[%s1 + $0x318] sm:$0xff]
        %v528 = vld [vmem:[%s1 + $0x320] sm:$0xff]
        %v529 = vld [vmem:[%s1 + $0x328] sm:$0xff]
        %v530 = vld [vmem:[%s1 + $0x330] sm:$0xff]
        %v531 = vld [vmem:[%s1 + $0x338] sm:$0xff]
        %v532 = vld [vmem:[%s1 + $0x340] sm:$0xff]
        %v533 = vld [vmem:[%s1 + $0x348] sm:$0xff]
        %v534 = vld [vmem:[%s1 + $0x350] sm:$0xff]
        %v535 = vld [vmem:[%s1 + $0x358] sm:$0xff]
        %v536 = vld [vmem:[%s1 + $0x360] sm:$0xff]
        %v537 = vld [vmem:[%s1 + $0x368] sm:$0xff]
        %v538 = vld [vmem:[%s1 + $0x370] sm:$0xff]
        %v539 = vld [vmem:[%s1 + $0x378] sm:$0xff]
        %v540 = vld [vmem:[%s1 + $0x380] sm:$0xff]
        %v541 = vld [vmem:[%s1 + $0x388] sm:$0xff]
        %v542 = vld [vmem:[%s1 + $0x390] sm:$0xff]
        %v543 = vld [vmem:[%s1 + $0x398] sm:$0xff]
        %v544 = vld [vmem:[%s1 + $0x3a0] sm:$0xff]
        %v545 = vld [vmem:[%s1 + $0x3a8] sm:$0xff]
        %v546 = vld [vmem:[%s1 + $0x3b0] sm:$0xff]
        %v547 = vld [vmem:[%s1 + $0x3b8] sm:$0xff]
        %v548 = vld [vmem:[%s1 + $0x3c0] sm:$0xff]
        %v549 = vld [vmem:[%s1 + $0x3c8] sm:$0xff]
        %v550 = vld [vmem:[%s1 + $0x3d0] sm:$0xff]
        %v551 = vld [vmem:[%s1 + $0x3d8] sm:$0xff]
        %v552 = vld [vmem:[%s1 + $0x3e0] sm:$0xff]
        %v553 = vld [vmem:[%s1 + $0x3e8] sm:$0xff]
        %v554 = vld [vmem:[%s1 + $0x3f0] sm:$0xff]
        %v555 = vld [vmem:[%s1 + $0x3f8] sm:$0xff]
        %v556 = vld [vmem:[%s1 + $0x400] sm:$0xff]
        %v557 = vld [vmem:[%s1 + $0x408] sm:$0xff]
        %v558 = vld [vmem:[%s1 + $0x410] sm:$0xff]
        %v559 = vld [vmem:[%s1 + $0x418] sm:$0xff]
        %v560 = vld [vmem:[%s1 + $0x420] sm:$0xff]
        %v561 = vld [vmem:[%s1 + $0x428] sm:$0xff]
        %v562 = vld [vmem:[%s1 + $0x430] sm:$0xff]
        %v563 = vld [vmem:[%s1 + $0x438] sm:$0xff]
        %v564 = vld [vmem:[%s1 + $0x440] sm:$0xff]
        %v565 = vld [vmem:[%s1 + $0x448] sm:$0xff]
        %v566 = vld [vmem:[%s1 + $0x450] sm:$0xff]
        %v567 = vld [vmem:[%s1 + $0x458] sm:$0xff]
        %v568 = vld [vmem:[%s1 + $0x460] sm:$0xff]
        %v569 = vld [vmem:[%s1 + $0x468] sm:$0xff]
        %v570 = vld [vmem:[%s1 + $0x470] sm:$0xff]
        %v571 = vld [vmem:[%s1 + $0x478] sm:$0xff]
        %v572 = vld [vmem:[%s1 + $0x480] sm:$0xff]
        %v573 = vld [vmem:[%s1 + $0x488] sm:$0xff]
        %v574 = vld [vmem:[%s1 + $0x490] sm:$0xff]
        %v575 = vld [vmem:[%s1 + $0x498] sm:$0xff]
        %v576 = vld [vmem:[%s1 + $0x4a0] sm:$0xff]
        %v577 = vld [vmem:[%s1 + $0x4a8] sm:$0xff]
        %v578 = vld [vmem:[%s1 + $0x4b0] sm:$0xff]
        %v579 = vld [vmem:[%s1 + $0x4b8] sm:$0xff]
        %v580 = vld [vmem:[%s1 + $0x4c0] sm:$0xff]
        %v581 = vld [vmem:[%s1 + $0x4c8] sm:$0xff]
        %v582 = vld [vmem:[%s1 + $0x4d0] sm:$0xff]
        %v583 = vld [vmem:[%s1 + $0x4d8] sm:$0xff]
        %v584 = vld [vmem:[%s1 + $0x4e0] sm:$0xff]
        %v585 = vld [vmem:[%s1 + $0x4e8] sm:$0xff]
        %v586 = vld [vmem:[%s1 + $0x4f0] sm:$0xff]
        %v587 = vld [vmem:[%s1 + $0x4f8] sm:$0xff]
        %v588 = vld [vmem:[%s1 + $0x500] sm:$0xff]
        %v589 = vld [vmem:[%s1 + $0x508] sm:$0xff]
        %v590 = vld [vmem:[%s1 + $0x510] sm:$0xff]
        %v591 = vld [vmem:[%s1 + $0x518] sm:$0xff]
        %v592 = vld [vmem:[%s1 + $0x520] sm:$0xff]
        %v593 = vld [vmem:[%s1 + $0x528] sm:$0xff]
        %v594 = vld [vmem:[%s1 + $0x530] sm:$0xff]
        %v595 = vld [vmem:[%s1 + $0x538] sm:$0xff]
        %v596 = vld [vmem:[%s1 + $0x540] sm:$0xff]
        %v597 = vld [vmem:[%s1 + $0x548] sm:$0xff]
        %v598 = vld [vmem:[%s1 + $0x550] sm:$0xff]
        %v599 = vld [vmem:[%s1 + $0x558] sm:$0xff]
        %v600 = vld [vmem:[%s1 + $0x560] sm:$0xff]
        %v601 = vld [vmem:[%s1 + $0x568] sm:$0xff]
        %v602 = vld [vmem:[%s1 + $0x570] sm:$0xff]
        %v603 = vld [vmem:[%s1 + $0x578] sm:$0xff]
        %v604 = vld [vmem:[%s1 + $0x580] sm:$0xff]
        %v605 = vld [vmem:[%s1 + $0x588] sm:$0xff]
        %v606 = vld [vmem:[%s1 + $0x590] sm:$0xff]
        %v607 = vld [vmem:[%s1 + $0x598] sm:$0xff]
        %v608 = vld [vmem:[%s1 + $0x5a0] sm:$0xff]
        %v609 = vld [vmem:[%s1 + $0x5a8] sm:$0xff]
        %v610 = vld [vmem:[%s1 + $0x5b0] sm:$0xff]
        %v611 = vld [vmem:[%s1 + $0x5b8] sm:$0xff]
        %v612 = vld [vmem:[%s1 + $0x5c0] sm:$0xff]
        %v613 = vld [vmem:[%s1 + $0x5c8] sm:$0xff]
        %v614 = vld [vmem:[%s1 + $0x5d0] sm:$0xff]
        %v615 = vld [vmem:[%s1 + $0x5d8] sm:$0xff]
        %v616 = vld [vmem:[%s1 + $0x5e0] sm:$0xff]
        %v617 = vld [vmem:[%s1 + $0x5e8] sm:$0xff]
        %v618 = vld [vmem:[%s1 + $0x5f0] sm:$0xff]
        %v619 = vld [vmem:[%s1 + $0x5f8] sm:$0xff]
        %v620 = vld [vmem:[%s1 + $0x600] sm:$0xff]
        %v621 = vld [vmem:[%s1 + $0x608] sm:$0xff]
        %v622 = vld [vmem:[%s1 + $0x610] sm:$0xff]
        %v623 = vld [vmem:[%s1 + $0x618] sm:$0xff]
        %v624 = vld [vmem:[%s1 + $0x620] sm:$0xff]
        %v625 = vld [vmem:[%s1 + $0x628] sm:$0xff]
        %v626 = vld [vmem:[%s1 + $0x630] sm:$0xff]
        %v627 = vld [vmem:[%s1 + $0x638] sm:$0xff]
        %v628 = vld [vmem:[%s1 + $0x640] sm:$0xff]
        %v629 = vld [vmem:[%s1 + $0x648] sm:$0xff]
        %v630 = vld [vmem:[%s1 + $0x650] sm:$0xff]
        %v631 = vld [vmem:[%s1 + $0x658] sm:$0xff]
        %v632 = vld [vmem:[%s1 + $0x660] sm:$0xff]
        %v633 = vld [vmem:[%s1 + $0x668] sm:$0xff]
        %v634 = vld [vmem:[%s1 + $0x670] sm:$0xff]
        %v635 = vld [vmem:[%s1 + $0x678] sm:$0xff]
        %v636 = vld [vmem:[%s1 + $0x680] sm:$0xff]
        %v637 = vld [vmem:[%s1 + $0x688] sm:$0xff]
        %v638 = vld [vmem:[%s1 + $0x690] sm:$0xff]
        %v639 = vld [vmem:[%s1 + $0x698] sm:$0xff]
        %v640 = vld [vmem:[%s1 + $0x6a0] sm:$0xff]
        %v641 = vld [vmem:[%s1 + $0x6a8] sm:$0xff]
        %v642 = vld [vmem:[%s1 + $0x6b0] sm:$0xff]
        %v643 = vld [vmem:[%s1 + $0x6b8] sm:$0xff]
        %v644 = vld [vmem:[%s1 + $0x6c0] sm:$0xff]
        %v645 = vld [vmem:[%s1 + $0x6c8] sm:$0xff]
        %v646 = vld [vmem:[%s1 + $0x6d0] sm:$0xff]
        %v647 = vld [vmem:[%s1 + $0x6d8] sm:$0xff]
        %v648 = vld [vmem:[%s1 + $0x6e0] sm:$0xff]
        %v649 = vld [vmem:[%s1 + $0x6e8] sm:$0xff]
        %v650 = vld [vmem:[%s1 + $0x6f0] sm:$0xff]
        %v651 = vld [vmem:[%s1 + $0x6f8] sm:$0xff]
        %v652 = vld [vmem:[%s1 + $0x700] sm:$0xff]
        %v653 = vld [vmem:[%s1 + $0x708] sm:$0xff]
        %v654 = vld [vmem:[%s1 + $0x710] sm:$0xff]
        %v655 = vld [vmem:[%s1 + $0x718] sm:$0xff]
        %v656 = vld [vmem:[%s1 + $0x720] sm:$0xff]
        %v657 = vld [vmem:[%s1 + $0x728] sm:$0xff]
        %v658 = vld [vmem:[%s1 + $0x730] sm:$0xff]
        %v659 = vld [vmem:[%s1 + $0x738] sm:$0xff]
        %v660 = vld [vmem:[%s1 + $0x740] sm:$0xff]
        %v661 = vld [vmem:[%s1 + $0x748] sm:$0xff]
        %v662 = vld [vmem:[%s1 + $0x750] sm:$0xff]
        %v663 = vld [vmem:[%s1 + $0x758] sm:$0xff]
        %v664 = vld [vmem:[%s1 + $0x760] sm:$0xff]
        %v665 = vld [vmem:[%s1 + $0x768] sm:$0xff]
        %v666 = vld [vmem:[%s1 + $0x770] sm:$0xff]
        %v667 = vld [vmem:[%s1 + $0x778] sm:$0xff]
        %v668 = vld [vmem:[%s1 + $0x780] sm:$0xff]
        %v669 = vld [vmem:[%s1 + $0x788] sm:$0xff]
        %v670 = vld [vmem:[%s1 + $0x790] sm:$0xff]
        %v671 = vld [vmem:[%s1 + $0x798] sm:$0xff]
        %v672 = vld [vmem:[%s1 + $0x7a0] sm:$0xff]
        %v673 = vld [vmem:[%s1 + $0x7a8] sm:$0xff]
        %v674 = vld [vmem:[%s1 + $0x7b0] sm:$0xff]
        %v675 = vld [vmem:[%s1 + $0x7b8] sm:$0xff]
        %v676 = vld [vmem:[%s1 + $0x7c0] sm:$0xff]
        %v677 = vld [vmem:[%s1 + $0x7c8] sm:$0xff]
        %v678 = vld [vmem:[%s1 + $0x7d0] sm:$0xff]
        %v679 = vld [vmem:[%s1 + $0x7d8] sm:$0xff]
        %v680 = vld [vmem:[%s1 + $0x7e0] sm:$0xff]
        %v681 = vld [vmem:[%s1 + $0x7e8] sm:$0xff]
        %v682 = vld [vmem:[%s1 + $0x7f0] sm:$0xff]
        %v683 = vld [vmem:[%s1 + $0x7f8] sm:$0xff]
        %v684 = vld [vmem:[%s2] sm:$0xff]
        %v685 = vld [vmem:[%s2 + $0x8] sm:$0xff]
        %v688 = vlaneseq
        %v689 = vshrl.u32 %v688, 7
        %v690 = vsub.s32 0, %v689
        %v691 = vrot.slane %v684, %v690
        %v692 = vlaneseq
        %v693 = vshrl.u32 %v692, 7
        %v694 = vsub.s32 1, %v693
        %v695 = vrot.slane %v684, %v694
        %v696 = vlaneseq
        %v697 = vshrl.u32 %v696, 7
        %v698 = vsub.s32 2, %v697
        %v699 = vrot.slane %v684, %v698
        %v700 = vlaneseq
        %v701 = vshrl.u32 %v700, 7
        %v702 = vsub.s32 3, %v701
        %v703 = vrot.slane %v684, %v702
        %v704 = vlaneseq
        %v705 = vshrl.u32 %v704, 7
        %v706 = vsub.s32 4, %v705
        %v707 = vrot.slane %v684, %v706
        %v708 = vlaneseq
        %v709 = vshrl.u32 %v708, 7
        %v710 = vsub.s32 5, %v709
        %v711 = vrot.slane %v684, %v710
        %v712 = vlaneseq
        %v713 = vshrl.u32 %v712, 7
        %v714 = vsub.s32 6, %v713
        %v715 = vrot.slane %v684, %v714
        %v716 = vlaneseq
        %v717 = vshrl.u32 %v716, 7
        %v718 = vsub.s32 7, %v717
        %v719 = vrot.slane %v684, %v718
        %v720 = vlaneseq
        %v721 = vshrl.u32 %v720, 7
        %v722 = vsub.s32 0, %v721
        %v723 = vrot.slane %v685, %v722
        %v724 = vlaneseq
        %v725 = vshrl.u32 %v724, 7
        %v726 = vsub.s32 1, %v725
        %v727 = vrot.slane %v685, %v726
        %v728 = vlaneseq
        %v729 = vshrl.u32 %v728, 7
        %v730 = vsub.s32 2, %v729
        %v731 = vrot.slane %v685, %v730
        %v732 = vlaneseq
        %v733 = vshrl.u32 %v732, 7
        %v734 = vsub.s32 3, %v733
        %v735 = vrot.slane %v685, %v734
        %v736 = vlaneseq
        %v737 = vshrl.u32 %v736, 7
        %v738 = vsub.s32 4, %v737
        %v739 = vrot.slane %v685, %v738
        %v740 = vlaneseq
        %v741 = vshrl.u32 %v740, 7
        %v742 = vsub.s32 5, %v741
        %v743 = vrot.slane %v685, %v742
        %v744 = vlaneseq
        %v745 = vshrl.u32 %v744, 7
        %v746 = vsub.s32 6, %v745
        %v747 = vrot.slane %v685, %v746
        %v748 = vlaneseq
        %v749 = vshrl.u32 %v748, 7
        %v750 = vsub.s32 7, %v749
        %v751 = vrot.slane %v685, %v750
        %v770 = vunpack.c.l.s4 1966171168
        %v771 = vunpack.c.0.s8 %v770
        %v772 = vlaneseq
        %v773 = vshrl.u32 %v772, 7
        %v774 = vsub.s32 %v771, %v773
        %v775 = vrot.slane %v427, %v774
        %v776 = vcombine.high %v775, %v775
        %v778 = vunpack.c.l.s4 1966171168
        %v779 = vunpack.c.0.s8 %v778
        %v780 = vlaneseq
        %v781 = vshrl.u32 %v780, 7
        %v782 = vsub.s32 %v779, %v781
        %v783 = vrot.slane %v775, %v782
        %v785 = vunpack.c.l.s4 1966171168
        %v786 = vunpack.c.0.s8 %v785
        %v787 = vlaneseq
        %v788 = vshrl.u32 %v787, 7
        %v789 = vsub.s32 %v786, %v788
        %v790 = vrot.slane %v776, %v789
        %v1049 = vunpack.c.l.b16 %v428
        %v1050 = vunpack.c.h.b16 %v428
        %v1051 = vunpack.c.l.b16 %v429
        %v1052 = vunpack.c.h.b16 %v429
        %v1053 = vunpack.c.l.b16 %v430
        %v1054 = vunpack.c.h.b16 %v430
        %v1055 = vunpack.c.l.b16 %v431
        %v1056 = vunpack.c.h.b16 %v431
        %v1057 = vunpack.c.l.b16 %v432
        %v1058 = vunpack.c.h.b16 %v432
        %v1059 = vunpack.c.l.b16 %v433
        %v1060 = vunpack.c.h.b16 %v433
        %v1061 = vunpack.c.l.b16 %v434
        %v1062 = vunpack.c.h.b16 %v434
        %v1063 = vunpack.c.l.b16 %v435
        %v1064 = vunpack.c.h.b16 %v435
        %v1065 = vunpack.c.l.b16 %v436
        %v1066 = vunpack.c.h.b16 %v436
        %v1067 = vunpack.c.l.b16 %v437
        %v1068 = vunpack.c.h.b16 %v437
        %v1069 = vunpack.c.l.b16 %v438
        %v1070 = vunpack.c.h.b16 %v438
        %v1071 = vunpack.c.l.b16 %v439
        %v1072 = vunpack.c.h.b16 %v439
        %v1073 = vunpack.c.l.b16 %v440
        %v1074 = vunpack.c.h.b16 %v440
        %v1075 = vunpack.c.l.b16 %v441
        %v1076 = vunpack.c.h.b16 %v441
        %v1077 = vunpack.c.l.b16 %v442
        %v1078 = vunpack.c.h.b16 %v442
        %v1079 = vunpack.c.l.b16 %v443
        %v1080 = vunpack.c.h.b16 %v443
        %v1081 = vunpack.c.l.b16 %v444
        %v1082 = vunpack.c.h.b16 %v444
        %v1083 = vunpack.c.l.b16 %v445
        %v1084 = vunpack.c.h.b16 %v445
        %v1085 = vunpack.c.l.b16 %v446
        %v1086 = vunpack.c.h.b16 %v446
        %v1087 = vunpack.c.l.b16 %v447
        %v1088 = vunpack.c.h.b16 %v447
        %v1089 = vunpack.c.l.b16 %v448
        %v1090 = vunpack.c.h.b16 %v448
        %v1091 = vunpack.c.l.b16 %v449
        %v1092 = vunpack.c.h.b16 %v449
        %v1093 = vunpack.c.l.b16 %v450
        %v1094 = vunpack.c.h.b16 %v450
        %v1095 = vunpack.c.l.b16 %v451
        %v1096 = vunpack.c.h.b16 %v451
        %v1097 = vunpack.c.l.b16 %v452
        %v1098 = vunpack.c.h.b16 %v452
        %v1099 = vunpack.c.l.b16 %v453
        %v1100 = vunpack.c.h.b16 %v453
        %v1101 = vunpack.c.l.b16 %v454
        %v1102 = vunpack.c.h.b16 %v454
        %v1103 = vunpack.c.l.b16 %v455
        %v1104 = vunpack.c.h.b16 %v455
        %v1105 = vunpack.c.l.b16 %v456
        %v1106 = vunpack.c.h.b16 %v456
        %v1107 = vunpack.c.l.b16 %v457
        %v1108 = vunpack.c.h.b16 %v457
        %v1109 = vunpack.c.l.b16 %v458
        %v1110 = vunpack.c.h.b16 %v458
        %v1111 = vunpack.c.l.b16 %v459
        %v1112 = vunpack.c.h.b16 %v459
        %v1113 = vunpack.c.l.b16 %v460
        %v1114 = vunpack.c.h.b16 %v460
        %v1115 = vunpack.c.l.b16 %v461
        %v1116 = vunpack.c.h.b16 %v461
        %v1117 = vunpack.c.l.b16 %v462
        %v1118 = vunpack.c.h.b16 %v462
        %v1119 = vunpack.c.l.b16 %v463
        %v1120 = vunpack.c.h.b16 %v463
        %v1121 = vunpack.c.l.b16 %v464
        %v1122 = vunpack.c.h.b16 %v464
        %v1123 = vunpack.c.l.b16 %v465
        %v1124 = vunpack.c.h.b16 %v465
        %v1125 = vunpack.c.l.b16 %v466
        %v1126 = vunpack.c.h.b16 %v466
        %v1127 = vunpack.c.l.b16 %v467
        %v1128 = vunpack.c.h.b16 %v467
        %v1129 = vunpack.c.l.b16 %v468
        %v1130 = vunpack.c.h.b16 %v468
        %v1131 = vunpack.c.l.b16 %v469
        %v1132 = vunpack.c.h.b16 %v469
        %v1133 = vunpack.c.l.b16 %v470
        %v1134 = vunpack.c.h.b16 %v470
        %v1135 = vunpack.c.l.b16 %v471
        %v1136 = vunpack.c.h.b16 %v471
        %v1137 = vunpack.c.l.b16 %v472
        %v1138 = vunpack.c.h.b16 %v472
        %v1139 = vunpack.c.l.b16 %v473
        %v1140 = vunpack.c.h.b16 %v473
        %v1141 = vunpack.c.l.b16 %v474
        %v1142 = vunpack.c.h.b16 %v474
        %v1143 = vunpack.c.l.b16 %v475
        %v1144 = vunpack.c.h.b16 %v475
        %v1145 = vunpack.c.l.b16 %v476
        %v1146 = vunpack.c.h.b16 %v476
        %v1147 = vunpack.c.l.b16 %v477
        %v1148 = vunpack.c.h.b16 %v477
        %v1149 = vunpack.c.l.b16 %v478
        %v1150 = vunpack.c.h.b16 %v478
        %v1151 = vunpack.c.l.b16 %v479
        %v1152 = vunpack.c.h.b16 %v479
        %v1153 = vunpack.c.l.b16 %v480
        %v1154 = vunpack.c.h.b16 %v480
        %v1155 = vunpack.c.l.b16 %v481
        %v1156 = vunpack.c.h.b16 %v481
        %v1157 = vunpack.c.l.b16 %v482
        %v1158 = vunpack.c.h.b16 %v482
        %v1159 = vunpack.c.l.b16 %v483
        %v1160 = vunpack.c.h.b16 %v483
        %v1161 = vunpack.c.l.b16 %v484
        %v1162 = vunpack.c.h.b16 %v484
        %v1163 = vunpack.c.l.b16 %v485
        %v1164 = vunpack.c.h.b16 %v485
        %v1165 = vunpack.c.l.b16 %v486
        %v1166 = vunpack.c.h.b16 %v486
        %v1167 = vunpack.c.l.b16 %v487
        %v1168 = vunpack.c.h.b16 %v487
        %v1169 = vunpack.c.l.b16 %v488
        %v1170 = vunpack.c.h.b16 %v488
        %v1171 = vunpack.c.l.b16 %v489
        %v1172 = vunpack.c.h.b16 %v489
        %v1173 = vunpack.c.l.b16 %v490
        %v1174 = vunpack.c.h.b16 %v490
        %v1175 = vunpack.c.l.b16 %v491
        %v1176 = vunpack.c.h.b16 %v491
        %v1177 = vunpack.c.l.b16 %v492
        %v1178 = vunpack.c.h.b16 %v492
        %v1179 = vunpack.c.l.b16 %v493
        %v1180 = vunpack.c.h.b16 %v493
        %v1181 = vunpack.c.l.b16 %v494
        %v1182 = vunpack.c.h.b16 %v494
        %v1183 = vunpack.c.l.b16 %v495
        %v1184 = vunpack.c.h.b16 %v495
        %v1185 = vunpack.c.l.b16 %v496
        %v1186 = vunpack.c.h.b16 %v496
        %v1187 = vunpack.c.l.b16 %v497
        %v1188 = vunpack.c.h.b16 %v497
        %v1189 = vunpack.c.l.b16 %v498
        %v1190 = vunpack.c.h.b16 %v498
        %v1191 = vunpack.c.l.b16 %v499
        %v1192 = vunpack.c.h.b16 %v499
        %v1193 = vunpack.c.l.b16 %v500
        %v1194 = vunpack.c.h.b16 %v500
        %v1195 = vunpack.c.l.b16 %v501
        %v1196 = vunpack.c.h.b16 %v501
        %v1197 = vunpack.c.l.b16 %v502
        %v1198 = vunpack.c.h.b16 %v502
        %v1199 = vunpack.c.l.b16 %v503
        %v1200 = vunpack.c.h.b16 %v503
        %v1201 = vunpack.c.l.b16 %v504
        %v1202 = vunpack.c.h.b16 %v504
        %v1203 = vunpack.c.l.b16 %v505
        %v1204 = vunpack.c.h.b16 %v505
        %v1205 = vunpack.c.l.b16 %v506
        %v1206 = vunpack.c.h.b16 %v506
        %v1207 = vunpack.c.l.b16 %v507
        %v1208 = vunpack.c.h.b16 %v507
        %v1209 = vunpack.c.l.b16 %v508
        %v1210 = vunpack.c.h.b16 %v508
        %v1211 = vunpack.c.l.b16 %v509
        %v1212 = vunpack.c.h.b16 %v509
        %v1213 = vunpack.c.l.b16 %v510
        %v1214 = vunpack.c.h.b16 %v510
        %v1215 = vunpack.c.l.b16 %v511
        %v1216 = vunpack.c.h.b16 %v511
        %v1217 = vunpack.c.l.b16 %v512
        %v1218 = vunpack.c.h.b16 %v512
        %v1219 = vunpack.c.l.b16 %v513
        %v1220 = vunpack.c.h.b16 %v513
        %v1221 = vunpack.c.l.b16 %v514
        %v1222 = vunpack.c.h.b16 %v514
        %v1223 = vunpack.c.l.b16 %v515
        %v1224 = vunpack.c.h.b16 %v515
        %v1225 = vunpack.c.l.b16 %v516
        %v1226 = vunpack.c.h.b16 %v516
        %v1227 = vunpack.c.l.b16 %v517
        %v1228 = vunpack.c.h.b16 %v517
        %v1229 = vunpack.c.l.b16 %v518
        %v1230 = vunpack.c.h.b16 %v518
        %v1231 = vunpack.c.l.b16 %v519
        %v1232 = vunpack.c.h.b16 %v519
        %v1233 = vunpack.c.l.b16 %v520
        %v1234 = vunpack.c.h.b16 %v520
        %v1235 = vunpack.c.l.b16 %v521
        %v1236 = vunpack.c.h.b16 %v521
        %v1237 = vunpack.c.l.b16 %v522
        %v1238 = vunpack.c.h.b16 %v522
        %v1239 = vunpack.c.l.b16 %v523
        %v1240 = vunpack.c.h.b16 %v523
        %v1241 = vunpack.c.l.b16 %v524
        %v1242 = vunpack.c.h.b16 %v524
        %v1243 = vunpack.c.l.b16 %v525
        %v1244 = vunpack.c.h.b16 %v525
        %v1245 = vunpack.c.l.b16 %v526
        %v1246 = vunpack.c.h.b16 %v526
        %v1247 = vunpack.c.l.b16 %v527
        %v1248 = vunpack.c.h.b16 %v527
        %v1249 = vunpack.c.l.b16 %v528
        %v1250 = vunpack.c.h.b16 %v528
        %v1251 = vunpack.c.l.b16 %v529
        %v1252 = vunpack.c.h.b16 %v529
        %v1253 = vunpack.c.l.b16 %v530
        %v1254 = vunpack.c.h.b16 %v530
        %v1255 = vunpack.c.l.b16 %v531
        %v1256 = vunpack.c.h.b16 %v531
        %v1257 = vunpack.c.l.b16 %v532
        %v1258 = vunpack.c.h.b16 %v532
        %v1259 = vunpack.c.l.b16 %v533
        %v1260 = vunpack.c.h.b16 %v533
        %v1261 = vunpack.c.l.b16 %v534
        %v1262 = vunpack.c.h.b16 %v534
        %v1263 = vunpack.c.l.b16 %v535
        %v1264 = vunpack.c.h.b16 %v535
        %v1265 = vunpack.c.l.b16 %v536
        %v1266 = vunpack.c.h.b16 %v536
        %v1267 = vunpack.c.l.b16 %v537
        %v1268 = vunpack.c.h.b16 %v537
        %v1269 = vunpack.c.l.b16 %v538
        %v1270 = vunpack.c.h.b16 %v538
        %v1271 = vunpack.c.l.b16 %v539
        %v1272 = vunpack.c.h.b16 %v539
        %v1273 = vunpack.c.l.b16 %v540
        %v1274 = vunpack.c.h.b16 %v540
        %v1275 = vunpack.c.l.b16 %v541
        %v1276 = vunpack.c.h.b16 %v541
        %v1277 = vunpack.c.l.b16 %v542
        %v1278 = vunpack.c.h.b16 %v542
        %v1279 = vunpack.c.l.b16 %v543
        %v1280 = vunpack.c.h.b16 %v543
        %v1281 = vunpack.c.l.b16 %v544
        %v1282 = vunpack.c.h.b16 %v544
        %v1283 = vunpack.c.l.b16 %v545
        %v1284 = vunpack.c.h.b16 %v545
        %v1285 = vunpack.c.l.b16 %v546
        %v1286 = vunpack.c.h.b16 %v546
        %v1287 = vunpack.c.l.b16 %v547
        %v1288 = vunpack.c.h.b16 %v547
        %v1289 = vunpack.c.l.b16 %v548
        %v1290 = vunpack.c.h.b16 %v548
        %v1291 = vunpack.c.l.b16 %v549
        %v1292 = vunpack.c.h.b16 %v549
        %v1293 = vunpack.c.l.b16 %v550
        %v1294 = vunpack.c.h.b16 %v550
        %v1295 = vunpack.c.l.b16 %v551
        %v1296 = vunpack.c.h.b16 %v551
        %v1297 = vunpack.c.l.b16 %v552
        %v1298 = vunpack.c.h.b16 %v552
        %v1299 = vunpack.c.l.b16 %v553
        %v1300 = vunpack.c.h.b16 %v553
        %v1301 = vunpack.c.l.b16 %v554
        %v1302 = vunpack.c.h.b16 %v554
        %v1303 = vunpack.c.l.b16 %v555
        %v1304 = vunpack.c.h.b16 %v555
        %v1305 = vunpack.c.l.b16 %v556
        %v1306 = vunpack.c.h.b16 %v556
        %v1307 = vunpack.c.l.b16 %v557
        %v1308 = vunpack.c.h.b16 %v557
        %v1309 = vunpack.c.l.b16 %v558
        %v1310 = vunpack.c.h.b16 %v558
        %v1311 = vunpack.c.l.b16 %v559
        %v1312 = vunpack.c.h.b16 %v559
        %v1313 = vunpack.c.l.b16 %v560
        %v1314 = vunpack.c.h.b16 %v560
        %v1315 = vunpack.c.l.b16 %v561
        %v1316 = vunpack.c.h.b16 %v561
        %v1317 = vunpack.c.l.b16 %v562
        %v1318 = vunpack.c.h.b16 %v562
        %v1319 = vunpack.c.l.b16 %v563
        %v1320 = vunpack.c.h.b16 %v563
        %v1321 = vunpack.c.l.b16 %v564
        %v1322 = vunpack.c.h.b16 %v564
        %v1323 = vunpack.c.l.b16 %v565
        %v1324 = vunpack.c.h.b16 %v565
        %v1325 = vunpack.c.l.b16 %v566
        %v1326 = vunpack.c.h.b16 %v566
        %v1327 = vunpack.c.l.b16 %v567
        %v1328 = vunpack.c.h.b16 %v567
        %v1329 = vunpack.c.l.b16 %v568
        %v1330 = vunpack.c.h.b16 %v568
        %v1331 = vunpack.c.l.b16 %v569
        %v1332 = vunpack.c.h.b16 %v569
        %v1333 = vunpack.c.l.b16 %v570
        %v1334 = vunpack.c.h.b16 %v570
        %v1335 = vunpack.c.l.b16 %v571
        %v1336 = vunpack.c.h.b16 %v571
        %v1337 = vunpack.c.l.b16 %v572
        %v1338 = vunpack.c.h.b16 %v572
        %v1339 = vunpack.c.l.b16 %v573
        %v1340 = vunpack.c.h.b16 %v573
        %v1341 = vunpack.c.l.b16 %v574
        %v1342 = vunpack.c.h.b16 %v574
        %v1343 = vunpack.c.l.b16 %v575
        %v1344 = vunpack.c.h.b16 %v575
        %v1345 = vunpack.c.l.b16 %v576
        %v1346 = vunpack.c.h.b16 %v576
        %v1347 = vunpack.c.l.b16 %v577
        %v1348 = vunpack.c.h.b16 %v577
        %v1349 = vunpack.c.l.b16 %v578
        %v1350 = vunpack.c.h.b16 %v578
        %v1351 = vunpack.c.l.b16 %v579
        %v1352 = vunpack.c.h.b16 %v579
        %v1353 = vunpack.c.l.b16 %v580
        %v1354 = vunpack.c.h.b16 %v580
        %v1355 = vunpack.c.l.b16 %v581
        %v1356 = vunpack.c.h.b16 %v581
        %v1357 = vunpack.c.l.b16 %v582
        %v1358 = vunpack.c.h.b16 %v582
        %v1359 = vunpack.c.l.b16 %v583
        %v1360 = vunpack.c.h.b16 %v583
        %v1361 = vunpack.c.l.b16 %v584
        %v1362 = vunpack.c.h.b16 %v584
        %v1363 = vunpack.c.l.b16 %v585
        %v1364 = vunpack.c.h.b16 %v585
        %v1365 = vunpack.c.l.b16 %v586
        %v1366 = vunpack.c.h.b16 %v586
        %v1367 = vunpack.c.l.b16 %v587
        %v1368 = vunpack.c.h.b16 %v587
        %v1369 = vunpack.c.l.b16 %v588
        %v1370 = vunpack.c.h.b16 %v588
        %v1371 = vunpack.c.l.b16 %v589
        %v1372 = vunpack.c.h.b16 %v589
        %v1373 = vunpack.c.l.b16 %v590
        %v1374 = vunpack.c.h.b16 %v590
        %v1375 = vunpack.c.l.b16 %v591
        %v1376 = vunpack.c.h.b16 %v591
        %v1377 = vunpack.c.l.b16 %v592
        %v1378 = vunpack.c.h.b16 %v592
        %v1379 = vunpack.c.l.b16 %v593
        %v1380 = vunpack.c.h.b16 %v593
        %v1381 = vunpack.c.l.b16 %v594
        %v1382 = vunpack.c.h.b16 %v594
        %v1383 = vunpack.c.l.b16 %v595
        %v1384 = vunpack.c.h.b16 %v595
        %v1385 = vunpack.c.l.b16 %v596
        %v1386 = vunpack.c.h.b16 %v596
        %v1387 = vunpack.c.l.b16 %v597
        %v1388 = vunpack.c.h.b16 %v597
        %v1389 = vunpack.c.l.b16 %v598
        %v1390 = vunpack.c.h.b16 %v598
        %v1391 = vunpack.c.l.b16 %v599
        %v1392 = vunpack.c.h.b16 %v599
        %v1393 = vunpack.c.l.b16 %v600
        %v1394 = vunpack.c.h.b16 %v600
        %v1395 = vunpack.c.l.b16 %v601
        %v1396 = vunpack.c.h.b16 %v601
        %v1397 = vunpack.c.l.b16 %v602
        %v1398 = vunpack.c.h.b16 %v602
        %v1399 = vunpack.c.l.b16 %v603
        %v1400 = vunpack.c.h.b16 %v603
        %v1401 = vunpack.c.l.b16 %v604
        %v1402 = vunpack.c.h.b16 %v604
        %v1403 = vunpack.c.l.b16 %v605
        %v1404 = vunpack.c.h.b16 %v605
        %v1405 = vunpack.c.l.b16 %v606
        %v1406 = vunpack.c.h.b16 %v606
        %v1407 = vunpack.c.l.b16 %v607
        %v1408 = vunpack.c.h.b16 %v607
        %v1409 = vunpack.c.l.b16 %v608
        %v1410 = vunpack.c.h.b16 %v608
        %v1411 = vunpack.c.l.b16 %v609
        %v1412 = vunpack.c.h.b16 %v609
        %v1413 = vunpack.c.l.b16 %v610
        %v1414 = vunpack.c.h.b16 %v610
        %v1415 = vunpack.c.l.b16 %v611
        %v1416 = vunpack.c.h.b16 %v611
        %v1417 = vunpack.c.l.b16 %v612
        %v1418 = vunpack.c.h.b16 %v612
        %v1419 = vunpack.c.l.b16 %v613
        %v1420 = vunpack.c.h.b16 %v613
        %v1421 = vunpack.c.l.b16 %v614
        %v1422 = vunpack.c.h.b16 %v614
        %v1423 = vunpack.c.l.b16 %v615
        %v1424 = vunpack.c.h.b16 %v615
        %v1425 = vunpack.c.l.b16 %v616
        %v1426 = vunpack.c.h.b16 %v616
        %v1427 = vunpack.c.l.b16 %v617
        %v1428 = vunpack.c.h.b16 %v617
        %v1429 = vunpack.c.l.b16 %v618
        %v1430 = vunpack.c.h.b16 %v618
        %v1431 = vunpack.c.l.b16 %v619
        %v1432 = vunpack.c.h.b16 %v619
        %v1433 = vunpack.c.l.b16 %v620
        %v1434 = vunpack.c.h.b16 %v620
        %v1435 = vunpack.c.l.b16 %v621
        %v1436 = vunpack.c.h.b16 %v621
        %v1437 = vunpack.c.l.b16 %v622
        %v1438 = vunpack.c.h.b16 %v622
        %v1439 = vunpack.c.l.b16 %v623
        %v1440 = vunpack.c.h.b16 %v623
        %v1441 = vunpack.c.l.b16 %v624
        %v1442 = vunpack.c.h.b16 %v624
        %v1443 = vunpack.c.l.b16 %v625
        %v1444 = vunpack.c.h.b16 %v625
        %v1445 = vunpack.c.l.b16 %v626
        %v1446 = vunpack.c.h.b16 %v626
        %v1447 = vunpack.c.l.b16 %v627
        %v1448 = vunpack.c.h.b16 %v627
        %v1449 = vunpack.c.l.b16 %v628
        %v1450 = vunpack.c.h.b16 %v628
        %v1451 = vunpack.c.l.b16 %v629
        %v1452 = vunpack.c.h.b16 %v629
        %v1453 = vunpack.c.l.b16 %v630
        %v1454 = vunpack.c.h.b16 %v630
        %v1455 = vunpack.c.l.b16 %v631
        %v1456 = vunpack.c.h.b16 %v631
        %v1457 = vunpack.c.l.b16 %v632
        %v1458 = vunpack.c.h.b16 %v632
        %v1459 = vunpack.c.l.b16 %v633
        %v1460 = vunpack.c.h.b16 %v633
        %v1461 = vunpack.c.l.b16 %v634
        %v1462 = vunpack.c.h.b16 %v634
        %v1463 = vunpack.c.l.b16 %v635
        %v1464 = vunpack.c.h.b16 %v635
        %v1465 = vunpack.c.l.b16 %v636
        %v1466 = vunpack.c.h.b16 %v636
        %v1467 = vunpack.c.l.b16 %v637
        %v1468 = vunpack.c.h.b16 %v637
        %v1469 = vunpack.c.l.b16 %v638
        %v1470 = vunpack.c.h.b16 %v638
        %v1471 = vunpack.c.l.b16 %v639
        %v1472 = vunpack.c.h.b16 %v639
        %v1473 = vunpack.c.l.b16 %v640
        %v1474 = vunpack.c.h.b16 %v640
        %v1475 = vunpack.c.l.b16 %v641
        %v1476 = vunpack.c.h.b16 %v641
        %v1477 = vunpack.c.l.b16 %v642
        %v1478 = vunpack.c.h.b16 %v642
        %v1479 = vunpack.c.l.b16 %v643
        %v1480 = vunpack.c.h.b16 %v643
        %v1481 = vunpack.c.l.b16 %v644
        %v1482 = vunpack.c.h.b16 %v644
        %v1483 = vunpack.c.l.b16 %v645
        %v1484 = vunpack.c.h.b16 %v645
        %v1485 = vunpack.c.l.b16 %v646
        %v1486 = vunpack.c.h.b16 %v646
        %v1487 = vunpack.c.l.b16 %v647
        %v1488 = vunpack.c.h.b16 %v647
        %v1489 = vunpack.c.l.b16 %v648
        %v1490 = vunpack.c.h.b16 %v648
        %v1491 = vunpack.c.l.b16 %v649
        %v1492 = vunpack.c.h.b16 %v649
        %v1493 = vunpack.c.l.b16 %v650
        %v1494 = vunpack.c.h.b16 %v650
        %v1495 = vunpack.c.l.b16 %v651
        %v1496 = vunpack.c.h.b16 %v651
        %v1497 = vunpack.c.l.b16 %v652
        %v1498 = vunpack.c.h.b16 %v652
        %v1499 = vunpack.c.l.b16 %v653
        %v1500 = vunpack.c.h.b16 %v653
        %v1501 = vunpack.c.l.b16 %v654
        %v1502 = vunpack.c.h.b16 %v654
        %v1503 = vunpack.c.l.b16 %v655
        %v1504 = vunpack.c.h.b16 %v655
        %v1505 = vunpack.c.l.b16 %v656
        %v1506 = vunpack.c.h.b16 %v656
        %v1507 = vunpack.c.l.b16 %v657
        %v1508 = vunpack.c.h.b16 %v657
        %v1509 = vunpack.c.l.b16 %v658
        %v1510 = vunpack.c.h.b16 %v658
        %v1511 = vunpack.c.l.b16 %v659
        %v1512 = vunpack.c.h.b16 %v659
        %v1513 = vunpack.c.l.b16 %v660
        %v1514 = vunpack.c.h.b16 %v660
        %v1515 = vunpack.c.l.b16 %v661
        %v1516 = vunpack.c.h.b16 %v661
        %v1517 = vunpack.c.l.b16 %v662
        %v1518 = vunpack.c.h.b16 %v662
        %v1519 = vunpack.c.l.b16 %v663
        %v1520 = vunpack.c.h.b16 %v663
        %v1521 = vunpack.c.l.b16 %v664
        %v1522 = vunpack.c.h.b16 %v664
        %v1523 = vunpack.c.l.b16 %v665
        %v1524 = vunpack.c.h.b16 %v665
        %v1525 = vunpack.c.l.b16 %v666
        %v1526 = vunpack.c.h.b16 %v666
        %v1527 = vunpack.c.l.b16 %v667
        %v1528 = vunpack.c.h.b16 %v667
        %v1529 = vunpack.c.l.b16 %v668
        %v1530 = vunpack.c.h.b16 %v668
        %v1531 = vunpack.c.l.b16 %v669
        %v1532 = vunpack.c.h.b16 %v669
        %v1533 = vunpack.c.l.b16 %v670
        %v1534 = vunpack.c.h.b16 %v670
        %v1535 = vunpack.c.l.b16 %v671
        %v1536 = vunpack.c.h.b16 %v671
        %v1537 = vunpack.c.l.b16 %v672
        %v1538 = vunpack.c.h.b16 %v672
        %v1539 = vunpack.c.l.b16 %v673
        %v1540 = vunpack.c.h.b16 %v673
        %v1541 = vunpack.c.l.b16 %v674
        %v1542 = vunpack.c.h.b16 %v674
        %v1543 = vunpack.c.l.b16 %v675
        %v1544 = vunpack.c.h.b16 %v675
        %v1545 = vunpack.c.l.b16 %v676
        %v1546 = vunpack.c.h.b16 %v676
        %v1547 = vunpack.c.l.b16 %v677
        %v1548 = vunpack.c.h.b16 %v677
        %v1549 = vunpack.c.l.b16 %v678
        %v1550 = vunpack.c.h.b16 %v678
        %v1551 = vunpack.c.l.b16 %v679
        %v1552 = vunpack.c.h.b16 %v679
        %v1553 = vunpack.c.l.b16 %v680
        %v1554 = vunpack.c.h.b16 %v680
        %v1555 = vunpack.c.l.b16 %v681
        %v1556 = vunpack.c.h.b16 %v681
        %v1557 = vunpack.c.l.b16 %v682
        %v1558 = vunpack.c.h.b16 %v682
        %v1559 = vunpack.c.l.b16 %v683
        %v1560 = vunpack.c.h.b16 %v683
        %v1561 = vpack.c.b16 %v1065, %v1049
        %v1562 = vpack.c.b16 %v1066, %v1050
        %v1563 = vpack.c.b16 %v1067, %v1051
        %v1564 = vpack.c.b16 %v1068, %v1052
        %v1565 = vpack.c.b16 %v1069, %v1053
        %v1566 = vpack.c.b16 %v1070, %v1054
        %v1567 = vpack.c.b16 %v1071, %v1055
        %v1568 = vpack.c.b16 %v1072, %v1056
        %v1569 = vpack.c.b16 %v1073, %v1057
        %v1570 = vpack.c.b16 %v1074, %v1058
        %v1571 = vpack.c.b16 %v1075, %v1059
        %v1572 = vpack.c.b16 %v1076, %v1060
        %v1573 = vpack.c.b16 %v1077, %v1061
        %v1574 = vpack.c.b16 %v1078, %v1062
        %v1575 = vpack.c.b16 %v1079, %v1063
        %v1576 = vpack.c.b16 %v1080, %v1064
        %v1577 = vpack.c.b16 %v1097, %v1081
        %v1578 = vpack.c.b16 %v1098, %v1082
        %v1579 = vpack.c.b16 %v1099, %v1083
        %v1580 = vpack.c.b16 %v1100, %v1084
        %v1581 = vpack.c.b16 %v1101, %v1085
        %v1582 = vpack.c.b16 %v1102, %v1086
        %v1583 = vpack.c.b16 %v1103, %v1087
        %v1584 = vpack.c.b16 %v1104, %v1088
        %v1585 = vpack.c.b16 %v1105, %v1089
        %v1586 = vpack.c.b16 %v1106, %v1090
        %v1587 = vpack.c.b16 %v1107, %v1091
        %v1588 = vpack.c.b16 %v1108, %v1092
        %v1589 = vpack.c.b16 %v1109, %v1093
        %v1590 = vpack.c.b16 %v1110, %v1094
        %v1591 = vpack.c.b16 %v1111, %v1095
        %v1592 = vpack.c.b16 %v1112, %v1096
        %v1593 = vpack.c.b16 %v1129, %v1113
        %v1594 = vpack.c.b16 %v1130, %v1114
        %v1595 = vpack.c.b16 %v1131, %v1115
        %v1596 = vpack.c.b16 %v1132, %v1116
        %v1597 = vpack.c.b16 %v1133, %v1117
        %v1598 = vpack.c.b16 %v1134, %v1118
        %v1599 = vpack.c.b16 %v1135, %v1119
        %v1600 = vpack.c.b16 %v1136, %v1120
        %v1601 = vpack.c.b16 %v1137, %v1121
        %v1602 = vpack.c.b16 %v1138, %v1122
        %v1603 = vpack.c.b16 %v1139, %v1123
        %v1604 = vpack.c.b16 %v1140, %v1124
        %v1605 = vpack.c.b16 %v1141, %v1125
        %v1606 = vpack.c.b16 %v1142, %v1126
        %v1607 = vpack.c.b16 %v1143, %v1127
        %v1608 = vpack.c.b16 %v1144, %v1128
        %v1609 = vpack.c.b16 %v1161, %v1145
        %v1610 = vpack.c.b16 %v1162, %v1146
        %v1611 = vpack.c.b16 %v1163, %v1147
        %v1612 = vpack.c.b16 %v1164, %v1148
        %v1613 = vpack.c.b16 %v1165, %v1149
        %v1614 = vpack.c.b16 %v1166, %v1150
        %v1615 = vpack.c.b16 %v1167, %v1151
        %v1616 = vpack.c.b16 %v1168, %v1152
        %v1617 = vpack.c.b16 %v1169, %v1153
        %v1618 = vpack.c.b16 %v1170, %v1154
        %v1619 = vpack.c.b16 %v1171, %v1155
        %v1620 = vpack.c.b16 %v1172, %v1156
        %v1621 = vpack.c.b16 %v1173, %v1157
        %v1622 = vpack.c.b16 %v1174, %v1158
        %v1623 = vpack.c.b16 %v1175, %v1159
        %v1624 = vpack.c.b16 %v1176, %v1160
        %v1625 = vpack.c.b16 %v1193, %v1177
        %v1626 = vpack.c.b16 %v1194, %v1178
        %v1627 = vpack.c.b16 %v1195, %v1179
        %v1628 = vpack.c.b16 %v1196, %v1180
        %v1629 = vpack.c.b16 %v1197, %v1181
        %v1630 = vpack.c.b16 %v1198, %v1182
        %v1631 = vpack.c.b16 %v1199, %v1183
        %v1632 = vpack.c.b16 %v1200, %v1184
        %v1633 = vpack.c.b16 %v1201, %v1185
        %v1634 = vpack.c.b16 %v1202, %v1186
        %v1635 = vpack.c.b16 %v1203, %v1187
        %v1636 = vpack.c.b16 %v1204, %v1188
        %v1637 = vpack.c.b16 %v1205, %v1189
        %v1638 = vpack.c.b16 %v1206, %v1190
        %v1639 = vpack.c.b16 %v1207, %v1191
        %v1640 = vpack.c.b16 %v1208, %v1192
        %v1641 = vpack.c.b16 %v1225, %v1209
        %v1642 = vpack.c.b16 %v1226, %v1210
        %v1643 = vpack.c.b16 %v1227, %v1211
        %v1644 = vpack.c.b16 %v1228, %v1212
        %v1645 = vpack.c.b16 %v1229, %v1213
        %v1646 = vpack.c.b16 %v1230, %v1214
        %v1647 = vpack.c.b16 %v1231, %v1215
        %v1648 = vpack.c.b16 %v1232, %v1216
        %v1649 = vpack.c.b16 %v1233, %v1217
        %v1650 = vpack.c.b16 %v1234, %v1218
        %v1651 = vpack.c.b16 %v1235, %v1219
        %v1652 = vpack.c.b16 %v1236, %v1220
        %v1653 = vpack.c.b16 %v1237, %v1221
        %v1654 = vpack.c.b16 %v1238, %v1222
        %v1655 = vpack.c.b16 %v1239, %v1223
        %v1656 = vpack.c.b16 %v1240, %v1224
        %v1657 = vpack.c.b16 %v1257, %v1241
        %v1658 = vpack.c.b16 %v1258, %v1242
        %v1659 = vpack.c.b16 %v1259, %v1243
        %v1660 = vpack.c.b16 %v1260, %v1244
        %v1661 = vpack.c.b16 %v1261, %v1245
        %v1662 = vpack.c.b16 %v1262, %v1246
        %v1663 = vpack.c.b16 %v1263, %v1247
        %v1664 = vpack.c.b16 %v1264, %v1248
        %v1665 = vpack.c.b16 %v1265, %v1249
        %v1666 = vpack.c.b16 %v1266, %v1250
        %v1667 = vpack.c.b16 %v1267, %v1251
        %v1668 = vpack.c.b16 %v1268, %v1252
        %v1669 = vpack.c.b16 %v1269, %v1253
        %v1670 = vpack.c.b16 %v1270, %v1254
        %v1671 = vpack.c.b16 %v1271, %v1255
        %v1672 = vpack.c.b16 %v1272, %v1256
        %v1673 = vpack.c.b16 %v1289, %v1273
        %v1674 = vpack.c.b16 %v1290, %v1274
        %v1675 = vpack.c.b16 %v1291, %v1275
        %v1676 = vpack.c.b16 %v1292, %v1276
        %v1677 = vpack.c.b16 %v1293, %v1277
        %v1678 = vpack.c.b16 %v1294, %v1278
        %v1679 = vpack.c.b16 %v1295, %v1279
        %v1680 = vpack.c.b16 %v1296, %v1280
        %v1681 = vpack.c.b16 %v1297, %v1281
        %v1682 = vpack.c.b16 %v1298, %v1282
        %v1683 = vpack.c.b16 %v1299, %v1283
        %v1684 = vpack.c.b16 %v1300, %v1284
        %v1685 = vpack.c.b16 %v1301, %v1285
        %v1686 = vpack.c.b16 %v1302, %v1286
        %v1687 = vpack.c.b16 %v1303, %v1287
        %v1688 = vpack.c.b16 %v1304, %v1288
        %v1689 = vpack.c.b16 %v1321, %v1305
        %v1690 = vpack.c.b16 %v1322, %v1306
        %v1691 = vpack.c.b16 %v1323, %v1307
        %v1692 = vpack.c.b16 %v1324, %v1308
        %v1693 = vpack.c.b16 %v1325, %v1309
        %v1694 = vpack.c.b16 %v1326, %v1310
        %v1695 = vpack.c.b16 %v1327, %v1311
        %v1696 = vpack.c.b16 %v1328, %v1312
        %v1697 = vpack.c.b16 %v1329, %v1313
        %v1698 = vpack.c.b16 %v1330, %v1314
        %v1699 = vpack.c.b16 %v1331, %v1315
        %v1700 = vpack.c.b16 %v1332, %v1316
        %v1701 = vpack.c.b16 %v1333, %v1317
        %v1702 = vpack.c.b16 %v1334, %v1318
        %v1703 = vpack.c.b16 %v1335, %v1319
        %v1704 = vpack.c.b16 %v1336, %v1320
        %v1705 = vpack.c.b16 %v1353, %v1337
        %v1706 = vpack.c.b16 %v1354, %v1338
        %v1707 = vpack.c.b16 %v1355, %v1339
        %v1708 = vpack.c.b16 %v1356, %v1340
        %v1709 = vpack.c.b16 %v1357, %v1341
        %v1710 = vpack.c.b16 %v1358, %v1342
        %v1711 = vpack.c.b16 %v1359, %v1343
        %v1712 = vpack.c.b16 %v1360, %v1344
        %v1713 = vpack.c.b16 %v1361, %v1345
        %v1714 = vpack.c.b16 %v1362, %v1346
        %v1715 = vpack.c.b16 %v1363, %v1347
        %v1716 = vpack.c.b16 %v1364, %v1348
        %v1717 = vpack.c.b16 %v1365, %v1349
        %v1718 = vpack.c.b16 %v1366, %v1350
        %v1719 = vpack.c.b16 %v1367, %v1351
        %v1720 = vpack.c.b16 %v1368, %v1352
        %v1721 = vpack.c.b16 %v1385, %v1369
        %v1722 = vpack.c.b16 %v1386, %v1370
        %v1723 = vpack.c.b16 %v1387, %v1371
        %v1724 = vpack.c.b16 %v1388, %v1372
        %v1725 = vpack.c.b16 %v1389, %v1373
        %v1726 = vpack.c.b16 %v1390, %v1374
        %v1727 = vpack.c.b16 %v1391, %v1375
        %v1728 = vpack.c.b16 %v1392, %v1376
        %v1729 = vpack.c.b16 %v1393, %v1377
        %v1730 = vpack.c.b16 %v1394, %v1378
        %v1731 = vpack.c.b16 %v1395, %v1379
        %v1732 = vpack.c.b16 %v1396, %v1380
        %v1733 = vpack.c.b16 %v1397, %v1381
        %v1734 = vpack.c.b16 %v1398, %v1382
        %v1735 = vpack.c.b16 %v1399, %v1383
        %v1736 = vpack.c.b16 %v1400, %v1384
        %v1737 = vpack.c.b16 %v1417, %v1401
        %v1738 = vpack.c.b16 %v1418, %v1402
        %v1739 = vpack.c.b16 %v1419, %v1403
        %v1740 = vpack.c.b16 %v1420, %v1404
        %v1741 = vpack.c.b16 %v1421, %v1405
        %v1742 = vpack.c.b16 %v1422, %v1406
        %v1743 = vpack.c.b16 %v1423, %v1407
        %v1744 = vpack.c.b16 %v1424, %v1408
        %v1745 = vpack.c.b16 %v1425, %v1409
        %v1746 = vpack.c.b16 %v1426, %v1410
        %v1747 = vpack.c.b16 %v1427, %v1411
        %v1748 = vpack.c.b16 %v1428, %v1412
        %v1749 = vpack.c.b16 %v1429, %v1413
        %v1750 = vpack.c.b16 %v1430, %v1414
        %v1751 = vpack.c.b16 %v1431, %v1415
        %v1752 = vpack.c.b16 %v1432, %v1416
        %v1753 = vpack.c.b16 %v1449, %v1433
        %v1754 = vpack.c.b16 %v1450, %v1434
        %v1755 = vpack.c.b16 %v1451, %v1435
        %v1756 = vpack.c.b16 %v1452, %v1436
        %v1757 = vpack.c.b16 %v1453, %v1437
        %v1758 = vpack.c.b16 %v1454, %v1438
        %v1759 = vpack.c.b16 %v1455, %v1439
        %v1760 = vpack.c.b16 %v1456, %v1440
        %v1761 = vpack.c.b16 %v1457, %v1441
        %v1762 = vpack.c.b16 %v1458, %v1442
        %v1763 = vpack.c.b16 %v1459, %v1443
        %v1764 = vpack.c.b16 %v1460, %v1444
        %v1765 = vpack.c.b16 %v1461, %v1445
        %v1766 = vpack.c.b16 %v1462, %v1446
        %v1767 = vpack.c.b16 %v1463, %v1447
        %v1768 = vpack.c.b16 %v1464, %v1448
        %v1769 = vpack.c.b16 %v1481, %v1465
        %v1770 = vpack.c.b16 %v1482, %v1466
        %v1771 = vpack.c.b16 %v1483, %v1467
        %v1772 = vpack.c.b16 %v1484, %v1468
        %v1773 = vpack.c.b16 %v1485, %v1469
        %v1774 = vpack.c.b16 %v1486, %v1470
        %v1775 = vpack.c.b16 %v1487, %v1471
        %v1776 = vpack.c.b16 %v1488, %v1472
        %v1777 = vpack.c.b16 %v1489, %v1473
        %v1778 = vpack.c.b16 %v1490, %v1474
        %v1779 = vpack.c.b16 %v1491, %v1475
        %v1780 = vpack.c.b16 %v1492, %v1476
        %v1781 = vpack.c.b16 %v1493, %v1477
        %v1782 = vpack.c.b16 %v1494, %v1478
        %v1783 = vpack.c.b16 %v1495, %v1479
        %v1784 = vpack.c.b16 %v1496, %v1480
        %v1785 = vpack.c.b16 %v1513, %v1497
        %v1786 = vpack.c.b16 %v1514, %v1498
        %v1787 = vpack.c.b16 %v1515, %v1499
        %v1788 = vpack.c.b16 %v1516, %v1500
        %v1789 = vpack.c.b16 %v1517, %v1501
        %v1790 = vpack.c.b16 %v1518, %v1502
        %v1791 = vpack.c.b16 %v1519, %v1503
        %v1792 = vpack.c.b16 %v1520, %v1504
        %v1793 = vpack.c.b16 %v1521, %v1505
        %v1794 = vpack.c.b16 %v1522, %v1506
        %v1795 = vpack.c.b16 %v1523, %v1507
        %v1796 = vpack.c.b16 %v1524, %v1508
        %v1797 = vpack.c.b16 %v1525, %v1509
        %v1798 = vpack.c.b16 %v1526, %v1510
        %v1799 = vpack.c.b16 %v1527, %v1511
        %v1800 = vpack.c.b16 %v1528, %v1512
        %v1801 = vpack.c.b16 %v1545, %v1529
        %v1802 = vpack.c.b16 %v1546, %v1530
        %v1803 = vpack.c.b16 %v1547, %v1531
        %v1804 = vpack.c.b16 %v1548, %v1532
        %v1805 = vpack.c.b16 %v1549, %v1533
        %v1806 = vpack.c.b16 %v1550, %v1534
        %v1807 = vpack.c.b16 %v1551, %v1535
        %v1808 = vpack.c.b16 %v1552, %v1536
        %v1809 = vpack.c.b16 %v1553, %v1537
        %v1810 = vpack.c.b16 %v1554, %v1538
        %v1811 = vpack.c.b16 %v1555, %v1539
        %v1812 = vpack.c.b16 %v1556, %v1540
        %v1813 = vpack.c.b16 %v1557, %v1541
        %v1814 = vpack.c.b16 %v1558, %v1542
        %v1815 = vpack.c.b16 %v1559, %v1543
        %v1816 = vpack.c.b16 %v1560, %v1544
        %2073 = vmatprep.subr.bf16.mxu0 %v1562
        %2074 = vmatpush1.bf16.msra.mxu0 %v1561
        %2075 = vmatprep.subr.bf16.mxu0 %v1578
        %2076 = vmatpush1.bf16.msra.mxu0 %v1577
        %2077 = vmatprep.subr.bf16.mxu0 %v1594
        %2078 = vmatpush1.bf16.msra.mxu0 %v1593
        %2079 = vmatprep.subr.bf16.mxu0 %v1610
        %2080 = vmatpush1.bf16.msra.mxu0 %v1609
        %2081 = vmatprep.subr.bf16.mxu0 %v1626
        %2082 = vmatpush1.bf16.msra.mxu0 %v1625
        %2083 = vmatprep.subr.bf16.mxu0 %v1642
        %2084 = vmatpush1.bf16.msra.mxu0 %v1641
        %2085 = vmatprep.subr.bf16.mxu0 %v1658
        %2086 = vmatpush1.bf16.msra.mxu0 %v1657
        %2087 = vmatprep.subr.bf16.mxu0 %v1674
        %2088 = vmatpush1.bf16.msra.mxu0 %v1673
        %2089 = vmatprep.subr.bf16.mxu0 %v1690
        %2090 = vmatpush1.bf16.msra.mxu0 %v1689
        %2091 = vmatprep.subr.bf16.mxu0 %v1706
        %2092 = vmatpush1.bf16.msra.mxu0 %v1705
        %2093 = vmatprep.subr.bf16.mxu0 %v1722
        %2094 = vmatpush1.bf16.msra.mxu0 %v1721
        %2095 = vmatprep.subr.bf16.mxu0 %v1738
        %2096 = vmatpush1.bf16.msra.mxu0 %v1737
        %2097 = vmatprep.subr.bf16.mxu0 %v1754
        %2098 = vmatpush1.bf16.msra.mxu0 %v1753
        %2099 = vmatprep.subr.bf16.mxu0 %v1770
        %2100 = vmatpush1.bf16.msra.mxu0 %v1769
        %2101 = vmatprep.subr.bf16.mxu0 %v1786
        %2102 = vmatpush1.bf16.msra.mxu0 %v1785
        %2103 = vmatprep.subr.bf16.mxu0 %v1802
        %2104 = vmatpush1.bf16.msra.mxu0 %v1801
        %2105 = vmatprep.mubr.bf16.mxu0 %v790
        %2106 = vmatmul.mubr.bf16.gmra.mrb[0].mxu0 %v783
        %v2107 = vpop.f32.mrb[0].mxu0
        %v2108 = vadd.f32 %v691, %v2107
        %v2109 = vpop.f32.mrb[0].mxu0
        %v2110 = vadd.f32 %v695, %v2109
        %v2111 = vpop.f32.mrb[0].mxu0
        %v2112 = vpop.f32.mrb[0].mxu0
        %2113 = vdwg.mxu0
        %2114 = vmatprep.subr.bf16.mxu0 %v1564
        %2115 = vmatpush1.bf16.msra.mxu0 %v1563
        %2116 = vmatprep.subr.bf16.mxu0 %v1580
        %2117 = vmatpush1.bf16.msra.mxu0 %v1579
        %2118 = vmatprep.subr.bf16.mxu0 %v1596
        %2119 = vmatpush1.bf16.msra.mxu0 %v1595
        %2120 = vmatprep.subr.bf16.mxu0 %v1612
        %2121 = vmatpush1.bf16.msra.mxu0 %v1611
        %2122 = vmatprep.subr.bf16.mxu0 %v1628
        %2123 = vmatpush1.bf16.msra.mxu0 %v1627
        %2124 = vmatprep.subr.bf16.mxu0 %v1644
        %2125 = vmatpush1.bf16.msra.mxu0 %v1643
        %2126 = vmatprep.subr.bf16.mxu0 %v1660
        %2127 = vmatpush1.bf16.msra.mxu0 %v1659
        %2128 = vmatprep.subr.bf16.mxu0 %v1676
        %2129 = vmatpush1.bf16.msra.mxu0 %v1675
        %2130 = vmatprep.subr.bf16.mxu0 %v1692
        %2131 = vmatpush1.bf16.msra.mxu0 %v1691
        %2132 = vmatprep.subr.bf16.mxu0 %v1708
        %2133 = vmatpush1.bf16.msra.mxu0 %v1707
        %2134 = vmatprep.subr.bf16.mxu0 %v1724
        %2135 = vmatpush1.bf16.msra.mxu0 %v1723
        %2136 = vmatprep.subr.bf16.mxu0 %v1740
        %2137 = vmatpush1.bf16.msra.mxu0 %v1739
        %2138 = vmatprep.subr.bf16.mxu0 %v1756
        %2139 = vmatpush1.bf16.msra.mxu0 %v1755
        %2140 = vmatprep.subr.bf16.mxu0 %v1772
        %2141 = vmatpush1.bf16.msra.mxu0 %v1771
        %2142 = vmatprep.subr.bf16.mxu0 %v1788
        %2143 = vmatpush1.bf16.msra.mxu0 %v1787
        %2144 = vmatprep.subr.bf16.mxu0 %v1804
        %2145 = vmatpush1.bf16.msra.mxu0 %v1803
        %2146 = vmatprep.mubr.bf16.mxu0 %v790
        %2147 = vmatmul.mubr.bf16.gmra.mrb[0].mxu0 %v783
        %v2148 = vpop.f32.mrb[0].mxu0
        %v2149 = vadd.f32 %v699, %v2148
        %v2150 = vpop.f32.mrb[0].mxu0
        %v2151 = vadd.f32 %v703, %v2150
        %v2152 = vpop.f32.mrb[0].mxu0
        %v2153 = vpop.f32.mrb[0].mxu0
        %2154 = vdwg.mxu0
        %2155 = vmatprep.subr.bf16.mxu0 %v1566
        %2156 = vmatpush1.bf16.msra.mxu0 %v1565
        %2157 = vmatprep.subr.bf16.mxu0 %v1582
        %2158 = vmatpush1.bf16.msra.mxu0 %v1581
        %2159 = vmatprep.subr.bf16.mxu0 %v1598
        %2160 = vmatpush1.bf16.msra.mxu0 %v1597
        %2161 = vmatprep.subr.bf16.mxu0 %v1614
        %2162 = vmatpush1.bf16.msra.mxu0 %v1613
        %2163 = vmatprep.subr.bf16.mxu0 %v1630
        %2164 = vmatpush1.bf16.msra.mxu0 %v1629
        %2165 = vmatprep.subr.bf16.mxu0 %v1646
        %2166 = vmatpush1.bf16.msra.mxu0 %v1645
        %2167 = vmatprep.subr.bf16.mxu0 %v1662
        %2168 = vmatpush1.bf16.msra.mxu0 %v1661
        %2169 = vmatprep.subr.bf16.mxu0 %v1678
        %2170 = vmatpush1.bf16.msra.mxu0 %v1677
        %2171 = vmatprep.subr.bf16.mxu0 %v1694
        %2172 = vmatpush1.bf16.msra.mxu0 %v1693
        %2173 = vmatprep.subr.bf16.mxu0 %v1710
        %2174 = vmatpush1.bf16.msra.mxu0 %v1709
        %2175 = vmatprep.subr.bf16.mxu0 %v1726
        %2176 = vmatpush1.bf16.msra.mxu0 %v1725
        %2177 = vmatprep.subr.bf16.mxu0 %v1742
        %2178 = vmatpush1.bf16.msra.mxu0 %v1741
        %2179 = vmatprep.subr.bf16.mxu0 %v1758
        %2180 = vmatpush1.bf16.msra.mxu0 %v1757
        %2181 = vmatprep.subr.bf16.mxu0 %v1774
        %2182 = vmatpush1.bf16.msra.mxu0 %v1773
        %2183 = vmatprep.subr.bf16.mxu0 %v1790
        %2184 = vmatpush1.bf16.msra.mxu0 %v1789
        %2185 = vmatprep.subr.bf16.mxu0 %v1806
        %2186 = vmatpush1.bf16.msra.mxu0 %v1805
        %2187 = vmatprep.mubr.bf16.mxu0 %v790
        %2188 = vmatmul.mubr.bf16.gmra.mrb[0].mxu0 %v783
        %v2189 = vpop.f32.mrb[0].mxu0
        %v2190 = vadd.f32 %v707, %v2189
        %v2191 = vpop.f32.mrb[0].mxu0
        %v2192 = vadd.f32 %v711, %v2191
        %v2193 = vpop.f32.mrb[0].mxu0
        %v2194 = vpop.f32.mrb[0].mxu0
        %2195 = vdwg.mxu0
        %2196 = vmatprep.subr.bf16.mxu0 %v1568
        %2197 = vmatpush1.bf16.msra.mxu0 %v1567
        %2198 = vmatprep.subr.bf16.mxu0 %v1584
        %2199 = vmatpush1.bf16.msra.mxu0 %v1583
        %2200 = vmatprep.subr.bf16.mxu0 %v1600
        %2201 = vmatpush1.bf16.msra.mxu0 %v1599
        %2202 = vmatprep.subr.bf16.mxu0 %v1616
        %2203 = vmatpush1.bf16.msra.mxu0 %v1615
        %2204 = vmatprep.subr.bf16.mxu0 %v1632
        %2205 = vmatpush1.bf16.msra.mxu0 %v1631
        %2206 = vmatprep.subr.bf16.mxu0 %v1648
        %2207 = vmatpush1.bf16.msra.mxu0 %v1647
        %2208 = vmatprep.subr.bf16.mxu0 %v1664
        %2209 = vmatpush1.bf16.msra.mxu0 %v1663
        %2210 = vmatprep.subr.bf16.mxu0 %v1680
        %2211 = vmatpush1.bf16.msra.mxu0 %v1679
        %2212 = vmatprep.subr.bf16.mxu0 %v1696
        %2213 = vmatpush1.bf16.msra.mxu0 %v1695
        %2214 = vmatprep.subr.bf16.mxu0 %v1712
        %2215 = vmatpush1.bf16.msra.mxu0 %v1711
        %2216 = vmatprep.subr.bf16.mxu0 %v1728
        %2217 = vmatpush1.bf16.msra.mxu0 %v1727
        %2218 = vmatprep.subr.bf16.mxu0 %v1744
        %2219 = vmatpush1.bf16.msra.mxu0 %v1743
        %2220 = vmatprep.subr.bf16.mxu0 %v1760
        %2221 = vmatpush1.bf16.msra.mxu0 %v1759
        %2222 = vmatprep.subr.bf16.mxu0 %v1776
        %2223 = vmatpush1.bf16.msra.mxu0 %v1775
        %2224 = vmatprep.subr.bf16.mxu0 %v1792
        %2225 = vmatpush1.bf16.msra.mxu0 %v1791
        %2226 = vmatprep.subr.bf16.mxu0 %v1808
        %2227 = vmatpush1.bf16.msra.mxu0 %v1807
        %2228 = vmatprep.mubr.bf16.mxu0 %v790
        %2229 = vmatmul.mubr.bf16.gmra.mrb[0].mxu0 %v783
        %v2230 = vpop.f32.mrb[0].mxu0
        %v2231 = vadd.f32 %v715, %v2230
        %v2232 = vpop.f32.mrb[0].mxu0
        %v2233 = vadd.f32 %v719, %v2232
        %v2234 = vpop.f32.mrb[0].mxu0
        %v2235 = vpop.f32.mrb[0].mxu0
        %2236 = vdwg.mxu0
        %2237 = vmatprep.subr.bf16.mxu0 %v1570
        %2238 = vmatpush1.bf16.msra.mxu0 %v1569
        %2239 = vmatprep.subr.bf16.mxu0 %v1586
        %2240 = vmatpush1.bf16.msra.mxu0 %v1585
        %2241 = vmatprep.subr.bf16.mxu0 %v1602
        %2242 = vmatpush1.bf16.msra.mxu0 %v1601
        %2243 = vmatprep.subr.bf16.mxu0 %v1618
        %2244 = vmatpush1.bf16.msra.mxu0 %v1617
        %2245 = vmatprep.subr.bf16.mxu0 %v1634
        %2246 = vmatpush1.bf16.msra.mxu0 %v1633
        %2247 = vmatprep.subr.bf16.mxu0 %v1650
        %2248 = vmatpush1.bf16.msra.mxu0 %v1649
        %2249 = vmatprep.subr.bf16.mxu0 %v1666
        %2250 = vmatpush1.bf16.msra.mxu0 %v1665
        %2251 = vmatprep.subr.bf16.mxu0 %v1682
        %2252 = vmatpush1.bf16.msra.mxu0 %v1681
        %2253 = vmatprep.subr.bf16.mxu0 %v1698
        %2254 = vmatpush1.bf16.msra.mxu0 %v1697
        %2255 = vmatprep.subr.bf16.mxu0 %v1714
        %2256 = vmatpush1.bf16.msra.mxu0 %v1713
        %2257 = vmatprep.subr.bf16.mxu0 %v1730
        %2258 = vmatpush1.bf16.msra.mxu0 %v1729
        %2259 = vmatprep.subr.bf16.mxu0 %v1746
        %2260 = vmatpush1.bf16.msra.mxu0 %v1745
        %2261 = vmatprep.subr.bf16.mxu0 %v1762
        %2262 = vmatpush1.bf16.msra.mxu0 %v1761
        %2263 = vmatprep.subr.bf16.mxu0 %v1778
        %2264 = vmatpush1.bf16.msra.mxu0 %v1777
        %2265 = vmatprep.subr.bf16.mxu0 %v1794
        %2266 = vmatpush1.bf16.msra.mxu0 %v1793
        %2267 = vmatprep.subr.bf16.mxu0 %v1810
        %2268 = vmatpush1.bf16.msra.mxu0 %v1809
        %2269 = vmatprep.mubr.bf16.mxu0 %v790
        %2270 = vmatmul.mubr.bf16.gmra.mrb[0].mxu0 %v783
        %v2271 = vpop.f32.mrb[0].mxu0
        %v2272 = vadd.f32 %v723, %v2271
        %v2273 = vpop.f32.mrb[0].mxu0
        %v2274 = vadd.f32 %v727, %v2273
        %v2275 = vpop.f32.mrb[0].mxu0
        %v2276 = vpop.f32.mrb[0].mxu0
        %2277 = vdwg.mxu0
        %2278 = vmatprep.subr.bf16.mxu0 %v1572
        %2279 = vmatpush1.bf16.msra.mxu0 %v1571
        %2280 = vmatprep.subr.bf16.mxu0 %v1588
        %2281 = vmatpush1.bf16.msra.mxu0 %v1587
        %2282 = vmatprep.subr.bf16.mxu0 %v1604
        %2283 = vmatpush1.bf16.msra.mxu0 %v1603
        %2284 = vmatprep.subr.bf16.mxu0 %v1620
        %2285 = vmatpush1.bf16.msra.mxu0 %v1619
        %2286 = vmatprep.subr.bf16.mxu0 %v1636
        %2287 = vmatpush1.bf16.msra.mxu0 %v1635
        %2288 = vmatprep.subr.bf16.mxu0 %v1652
        %2289 = vmatpush1.bf16.msra.mxu0 %v1651
        %2290 = vmatprep.subr.bf16.mxu0 %v1668
        %2291 = vmatpush1.bf16.msra.mxu0 %v1667
        %2292 = vmatprep.subr.bf16.mxu0 %v1684
        %2293 = vmatpush1.bf16.msra.mxu0 %v1683
        %2294 = vmatprep.subr.bf16.mxu0 %v1700
        %2295 = vmatpush1.bf16.msra.mxu0 %v1699
        %2296 = vmatprep.subr.bf16.mxu0 %v1716
        %2297 = vmatpush1.bf16.msra.mxu0 %v1715
        %2298 = vmatprep.subr.bf16.mxu0 %v1732
        %2299 = vmatpush1.bf16.msra.mxu0 %v1731
        %2300 = vmatprep.subr.bf16.mxu0 %v1748
        %2301 = vmatpush1.bf16.msra.mxu0 %v1747
        %2302 = vmatprep.subr.bf16.mxu0 %v1764
        %2303 = vmatpush1.bf16.msra.mxu0 %v1763
        %2304 = vmatprep.subr.bf16.mxu0 %v1780
        %2305 = vmatpush1.bf16.msra.mxu0 %v1779
        %2306 = vmatprep.subr.bf16.mxu0 %v1796
        %2307 = vmatpush1.bf16.msra.mxu0 %v1795
        %2308 = vmatprep.subr.bf16.mxu0 %v1812
        %2309 = vmatpush1.bf16.msra.mxu0 %v1811
        %2310 = vmatprep.mubr.bf16.mxu0 %v790
        %2311 = vmatmul.mubr.bf16.gmra.mrb[0].mxu0 %v783
        %v2312 = vpop.f32.mrb[0].mxu0
        %v2313 = vadd.f32 %v731, %v2312
        %v2314 = vpop.f32.mrb[0].mxu0
        %v2315 = vadd.f32 %v735, %v2314
        %v2316 = vpop.f32.mrb[0].mxu0
        %v2317 = vpop.f32.mrb[0].mxu0
        %2318 = vdwg.mxu0
        %2319 = vmatprep.subr.bf16.mxu0 %v1574
        %2320 = vmatpush1.bf16.msra.mxu0 %v1573
        %2321 = vmatprep.subr.bf16.mxu0 %v1590
        %2322 = vmatpush1.bf16.msra.mxu0 %v1589
        %2323 = vmatprep.subr.bf16.mxu0 %v1606
        %2324 = vmatpush1.bf16.msra.mxu0 %v1605
        %2325 = vmatprep.subr.bf16.mxu0 %v1622
        %2326 = vmatpush1.bf16.msra.mxu0 %v1621
        %2327 = vmatprep.subr.bf16.mxu0 %v1638
        %2328 = vmatpush1.bf16.msra.mxu0 %v1637
        %2329 = vmatprep.subr.bf16.mxu0 %v1654
        %2330 = vmatpush1.bf16.msra.mxu0 %v1653
        %2331 = vmatprep.subr.bf16.mxu0 %v1670
        %2332 = vmatpush1.bf16.msra.mxu0 %v1669
        %2333 = vmatprep.subr.bf16.mxu0 %v1686
        %2334 = vmatpush1.bf16.msra.mxu0 %v1685
        %2335 = vmatprep.subr.bf16.mxu0 %v1702
        %2336 = vmatpush1.bf16.msra.mxu0 %v1701
        %2337 = vmatprep.subr.bf16.mxu0 %v1718
        %2338 = vmatpush1.bf16.msra.mxu0 %v1717
        %2339 = vmatprep.subr.bf16.mxu0 %v1734
        %2340 = vmatpush1.bf16.msra.mxu0 %v1733
        %2341 = vmatprep.subr.bf16.mxu0 %v1750
        %2342 = vmatpush1.bf16.msra.mxu0 %v1749
        %2343 = vmatprep.subr.bf16.mxu0 %v1766
        %2344 = vmatpush1.bf16.msra.mxu0 %v1765
        %2345 = vmatprep.subr.bf16.mxu0 %v1782
        %2346 = vmatpush1.bf16.msra.mxu0 %v1781
        %2347 = vmatprep.subr.bf16.mxu0 %v1798
        %2348 = vmatpush1.bf16.msra.mxu0 %v1797
        %2349 = vmatprep.subr.bf16.mxu0 %v1814
        %2350 = vmatpush1.bf16.msra.mxu0 %v1813
        %2351 = vmatprep.mubr.bf16.mxu0 %v790
        %2352 = vmatmul.mubr.bf16.gmra.mrb[0].mxu0 %v783
        %v2353 = vpop.f32.mrb[0].mxu0
        %v2354 = vadd.f32 %v739, %v2353
        %v2355 = vpop.f32.mrb[0].mxu0
        %v2356 = vadd.f32 %v743, %v2355
        %v2357 = vpop.f32.mrb[0].mxu0
        %v2358 = vpop.f32.mrb[0].mxu0
        %2359 = vdwg.mxu0
        %2360 = vmatprep.subr.bf16.mxu0 %v1576
        %2361 = vmatpush1.bf16.msra.mxu0 %v1575
        %2362 = vmatprep.subr.bf16.mxu0 %v1592
        %2363 = vmatpush1.bf16.msra.mxu0 %v1591
        %2364 = vmatprep.subr.bf16.mxu0 %v1608
        %2365 = vmatpush1.bf16.msra.mxu0 %v1607
        %2366 = vmatprep.subr.bf16.mxu0 %v1624
        %2367 = vmatpush1.bf16.msra.mxu0 %v1623
        %2368 = vmatprep.subr.bf16.mxu0 %v1640
        %2369 = vmatpush1.bf16.msra.mxu0 %v1639
        %2370 = vmatprep.subr.bf16.mxu0 %v1656
        %2371 = vmatpush1.bf16.msra.mxu0 %v1655
        %2372 = vmatprep.subr.bf16.mxu0 %v1672
        %2373 = vmatpush1.bf16.msra.mxu0 %v1671
        %2374 = vmatprep.subr.bf16.mxu0 %v1688
        %2375 = vmatpush1.bf16.msra.mxu0 %v1687
        %2376 = vmatprep.subr.bf16.mxu0 %v1704
        %2377 = vmatpush1.bf16.msra.mxu0 %v1703
        %2378 = vmatprep.subr.bf16.mxu0 %v1720
        %2379 = vmatpush1.bf16.msra.mxu0 %v1719
        %2380 = vmatprep.subr.bf16.mxu0 %v1736
        %2381 = vmatpush1.bf16.msra.mxu0 %v1735
        %2382 = vmatprep.subr.bf16.mxu0 %v1752
        %2383 = vmatpush1.bf16.msra.mxu0 %v1751
        %2384 = vmatprep.subr.bf16.mxu0 %v1768
        %2385 = vmatpush1.bf16.msra.mxu0 %v1767
        %2386 = vmatprep.subr.bf16.mxu0 %v1784
        %2387 = vmatpush1.bf16.msra.mxu0 %v1783
        %2388 = vmatprep.subr.bf16.mxu0 %v1800
        %2389 = vmatpush1.bf16.msra.mxu0 %v1799
        %2390 = vmatprep.subr.bf16.mxu0 %v1816
        %2391 = vmatpush1.bf16.msra.mxu0 %v1815
        %2392 = vmatprep.mubr.bf16.mxu0 %v790
        %2393 = vmatmul.mubr.bf16.gmra.mrb[0].mxu0 %v783
        %v2394 = vpop.f32.mrb[0].mxu0
        %v2395 = vadd.f32 %v747, %v2394
        %v2396 = vpop.f32.mrb[0].mxu0
        %v2397 = vadd.f32 %v751, %v2396
        %v2398 = vpop.f32.mrb[0].mxu0
        %v2399 = vpop.f32.mrb[0].mxu0
        %2400 = vdwg.mxu0
        %v2401 = vmax.f32 %v2108, 0.0
        %v2402 = vmax.f32 %v2110, 0.0
        %v2403 = vmax.f32 %v2149, 0.0
        %v2404 = vmax.f32 %v2151, 0.0
        %v2405 = vmax.f32 %v2190, 0.0
        %v2406 = vmax.f32 %v2192, 0.0
        %v2407 = vmax.f32 %v2231, 0.0
        %v2408 = vmax.f32 %v2233, 0.0
        %v2409 = vmax.f32 %v2272, 0.0
        %v2410 = vmax.f32 %v2274, 0.0
        %v2411 = vmax.f32 %v2313, 0.0
        %v2412 = vmax.f32 %v2315, 0.0
        %v2413 = vmax.f32 %v2354, 0.0
        %v2414 = vmax.f32 %v2356, 0.0
        %v2415 = vmax.f32 %v2395, 0.0
        %v2416 = vmax.f32 %v2397, 0.0
        %v2417 = vpack.c.bf16 %v2401, %v2401
        %v2418 = vpack.c.bf16 %v2402, %v2402
        %v2419 = vpack.c.bf16 %v2403, %v2403
        %v2420 = vpack.c.bf16 %v2404, %v2404
        %v2421 = vpack.c.bf16 %v2405, %v2405
        %v2422 = vpack.c.bf16 %v2406, %v2406
        %v2423 = vpack.c.bf16 %v2407, %v2407
        %v2424 = vpack.c.bf16 %v2408, %v2408
        %v2425 = vpack.c.bf16 %v2409, %v2409
        %v2426 = vpack.c.bf16 %v2410, %v2410
        %v2427 = vpack.c.bf16 %v2411, %v2411
        %v2428 = vpack.c.bf16 %v2412, %v2412
        %v2429 = vpack.c.bf16 %v2413, %v2413
        %v2430 = vpack.c.bf16 %v2414, %v2414
        %v2431 = vpack.c.bf16 %v2415, %v2415
        %v2432 = vpack.c.bf16 %v2416, %v2416
        %v2433 = vld [vmem:[%s3] sm:$0xff]
        %v2434 = vld [vmem:[%s3 + $0x8] sm:$0xff]
        %v2435 = vld [vmem:[%s3 + $0x10] sm:$0xff]
        %v2436 = vld [vmem:[%s3 + $0x18] sm:$0xff]
        %v2437 = vld [vmem:[%s3 + $0x20] sm:$0xff]
        %v2438 = vld [vmem:[%s3 + $0x28] sm:$0xff]
        %v2439 = vld [vmem:[%s3 + $0x30] sm:$0xff]
        %v2440 = vld [vmem:[%s3 + $0x38] sm:$0xff]
        %v2441 = vld [vmem:[%s3 + $0x40] sm:$0xff]
        %v2442 = vld [vmem:[%s3 + $0x48] sm:$0xff]
        %v2443 = vld [vmem:[%s3 + $0x50] sm:$0xff]
        %v2444 = vld [vmem:[%s3 + $0x58] sm:$0xff]
        %v2445 = vld [vmem:[%s3 + $0x60] sm:$0xff]
        %v2446 = vld [vmem:[%s3 + $0x68] sm:$0xff]
        %v2447 = vld [vmem:[%s3 + $0x70] sm:$0xff]
        %v2448 = vld [vmem:[%s3 + $0x78] sm:$0xff]
        %v2449 = vld [vmem:[%s3 + $0x80] sm:$0xff]
        %v2450 = vld [vmem:[%s3 + $0x88] sm:$0xff]
        %v2451 = vld [vmem:[%s3 + $0x90] sm:$0xff]
        %v2452 = vld [vmem:[%s3 + $0x98] sm:$0xff]
        %v2453 = vld [vmem:[%s3 + $0xa0] sm:$0xff]
        %v2454 = vld [vmem:[%s3 + $0xa8] sm:$0xff]
        %v2455 = vld [vmem:[%s3 + $0xb0] sm:$0xff]
        %v2456 = vld [vmem:[%s3 + $0xb8] sm:$0xff]
        %v2457 = vld [vmem:[%s3 + $0xc0] sm:$0xff]
        %v2458 = vld [vmem:[%s3 + $0xc8] sm:$0xff]
        %v2459 = vld [vmem:[%s3 + $0xd0] sm:$0xff]
        %v2460 = vld [vmem:[%s3 + $0xd8] sm:$0xff]
        %v2461 = vld [vmem:[%s3 + $0xe0] sm:$0xff]
        %v2462 = vld [vmem:[%s3 + $0xe8] sm:$0xff]
        %v2463 = vld [vmem:[%s3 + $0xf0] sm:$0xff]
        %v2464 = vld [vmem:[%s3 + $0xf8] sm:$0xff]
        %v2465 = vld [vmem:[%s3 + $0x100] sm:$0xff]
        %v2466 = vld [vmem:[%s3 + $0x108] sm:$0xff]
        %v2467 = vld [vmem:[%s3 + $0x110] sm:$0xff]
        %v2468 = vld [vmem:[%s3 + $0x118] sm:$0xff]
        %v2469 = vld [vmem:[%s3 + $0x120] sm:$0xff]
        %v2470 = vld [vmem:[%s3 + $0x128] sm:$0xff]
        %v2471 = vld [vmem:[%s3 + $0x130] sm:$0xff]
        %v2472 = vld [vmem:[%s3 + $0x138] sm:$0xff]
        %v2473 = vld [vmem:[%s3 + $0x140] sm:$0xff]
        %v2474 = vld [vmem:[%s3 + $0x148] sm:$0xff]
        %v2475 = vld [vmem:[%s3 + $0x150] sm:$0xff]
        %v2476 = vld [vmem:[%s3 + $0x158] sm:$0xff]
        %v2477 = vld [vmem:[%s3 + $0x160] sm:$0xff]
        %v2478 = vld [vmem:[%s3 + $0x168] sm:$0xff]
        %v2479 = vld [vmem:[%s3 + $0x170] sm:$0xff]
        %v2480 = vld [vmem:[%s3 + $0x178] sm:$0xff]
        %v2481 = vld [vmem:[%s3 + $0x180] sm:$0xff]
        %v2482 = vld [vmem:[%s3 + $0x188] sm:$0xff]
        %v2483 = vld [vmem:[%s3 + $0x190] sm:$0xff]
        %v2484 = vld [vmem:[%s3 + $0x198] sm:$0xff]
        %v2485 = vld [vmem:[%s3 + $0x1a0] sm:$0xff]
        %v2486 = vld [vmem:[%s3 + $0x1a8] sm:$0xff]
        %v2487 = vld [vmem:[%s3 + $0x1b0] sm:$0xff]
        %v2488 = vld [vmem:[%s3 + $0x1b8] sm:$0xff]
        %v2489 = vld [vmem:[%s3 + $0x1c0] sm:$0xff]
        %v2490 = vld [vmem:[%s3 + $0x1c8] sm:$0xff]
        %v2491 = vld [vmem:[%s3 + $0x1d0] sm:$0xff]
        %v2492 = vld [vmem:[%s3 + $0x1d8] sm:$0xff]
        %v2493 = vld [vmem:[%s3 + $0x1e0] sm:$0xff]
        %v2494 = vld [vmem:[%s3 + $0x1e8] sm:$0xff]
        %v2495 = vld [vmem:[%s3 + $0x1f0] sm:$0xff]
        %v2496 = vld [vmem:[%s3 + $0x1f8] sm:$0xff]
        %v2497 = vld [vmem:[%s3 + $0x200] sm:$0xff]
        %v2498 = vld [vmem:[%s3 + $0x208] sm:$0xff]
        %v2499 = vld [vmem:[%s3 + $0x210] sm:$0xff]
        %v2500 = vld [vmem:[%s3 + $0x218] sm:$0xff]
        %v2501 = vld [vmem:[%s3 + $0x220] sm:$0xff]
        %v2502 = vld [vmem:[%s3 + $0x228] sm:$0xff]
        %v2503 = vld [vmem:[%s3 + $0x230] sm:$0xff]
        %v2504 = vld [vmem:[%s3 + $0x238] sm:$0xff]
        %v2505 = vld [vmem:[%s3 + $0x240] sm:$0xff]
        %v2506 = vld [vmem:[%s3 + $0x248] sm:$0xff]
        %v2507 = vld [vmem:[%s3 + $0x250] sm:$0xff]
        %v2508 = vld [vmem:[%s3 + $0x258] sm:$0xff]
        %v2509 = vld [vmem:[%s3 + $0x260] sm:$0xff]
        %v2510 = vld [vmem:[%s3 + $0x268] sm:$0xff]
        %v2511 = vld [vmem:[%s3 + $0x270] sm:$0xff]
        %v2512 = vld [vmem:[%s3 + $0x278] sm:$0xff]
        %v2513 = vld [vmem:[%s3 + $0x280] sm:$0xff]
        %v2514 = vld [vmem:[%s3 + $0x288] sm:$0xff]
        %v2515 = vld [vmem:[%s3 + $0x290] sm:$0xff]
        %v2516 = vld [vmem:[%s3 + $0x298] sm:$0xff]
        %v2517 = vld [vmem:[%s3 + $0x2a0] sm:$0xff]
        %v2518 = vld [vmem:[%s3 + $0x2a8] sm:$0xff]
        %v2519 = vld [vmem:[%s3 + $0x2b0] sm:$0xff]
        %v2520 = vld [vmem:[%s3 + $0x2b8] sm:$0xff]
        %v2521 = vld [vmem:[%s3 + $0x2c0] sm:$0xff]
        %v2522 = vld [vmem:[%s3 + $0x2c8] sm:$0xff]
        %v2523 = vld [vmem:[%s3 + $0x2d0] sm:$0xff]
        %v2524 = vld [vmem:[%s3 + $0x2d8] sm:$0xff]
        %v2525 = vld [vmem:[%s3 + $0x2e0] sm:$0xff]
        %v2526 = vld [vmem:[%s3 + $0x2e8] sm:$0xff]
        %v2527 = vld [vmem:[%s3 + $0x2f0] sm:$0xff]
        %v2528 = vld [vmem:[%s3 + $0x2f8] sm:$0xff]
        %v2529 = vld [vmem:[%s3 + $0x300] sm:$0xff]
        %v2530 = vld [vmem:[%s3 + $0x308] sm:$0xff]
        %v2531 = vld [vmem:[%s3 + $0x310] sm:$0xff]
        %v2532 = vld [vmem:[%s3 + $0x318] sm:$0xff]
        %v2533 = vld [vmem:[%s3 + $0x320] sm:$0xff]
        %v2534 = vld [vmem:[%s3 + $0x328] sm:$0xff]
        %v2535 = vld [vmem:[%s3 + $0x330] sm:$0xff]
        %v2536 = vld [vmem:[%s3 + $0x338] sm:$0xff]
        %v2537 = vld [vmem:[%s3 + $0x340] sm:$0xff]
        %v2538 = vld [vmem:[%s3 + $0x348] sm:$0xff]
        %v2539 = vld [vmem:[%s3 + $0x350] sm:$0xff]
        %v2540 = vld [vmem:[%s3 + $0x358] sm:$0xff]
        %v2541 = vld [vmem:[%s3 + $0x360] sm:$0xff]
        %v2542 = vld [vmem:[%s3 + $0x368] sm:$0xff]
        %v2543 = vld [vmem:[%s3 + $0x370] sm:$0xff]
        %v2544 = vld [vmem:[%s3 + $0x378] sm:$0xff]
        %v2545 = vld [vmem:[%s3 + $0x380] sm:$0xff]
        %v2546 = vld [vmem:[%s3 + $0x388] sm:$0xff]
        %v2547 = vld [vmem:[%s3 + $0x390] sm:$0xff]
        %v2548 = vld [vmem:[%s3 + $0x398] sm:$0xff]
        %v2549 = vld [vmem:[%s3 + $0x3a0] sm:$0xff]
        %v2550 = vld [vmem:[%s3 + $0x3a8] sm:$0xff]
        %v2551 = vld [vmem:[%s3 + $0x3b0] sm:$0xff]
        %v2552 = vld [vmem:[%s3 + $0x3b8] sm:$0xff]
        %v2553 = vld [vmem:[%s3 + $0x3c0] sm:$0xff]
        %v2554 = vld [vmem:[%s3 + $0x3c8] sm:$0xff]
        %v2555 = vld [vmem:[%s3 + $0x3d0] sm:$0xff]
        %v2556 = vld [vmem:[%s3 + $0x3d8] sm:$0xff]
        %v2557 = vld [vmem:[%s3 + $0x3e0] sm:$0xff]
        %v2558 = vld [vmem:[%s3 + $0x3e8] sm:$0xff]
        %v2559 = vld [vmem:[%s3 + $0x3f0] sm:$0xff]
        %v2560 = vld [vmem:[%s3 + $0x3f8] sm:$0xff]
        %v2561 = vld [vmem:[%s3 + $0x400] sm:$0xff]
        %v2562 = vld [vmem:[%s3 + $0x408] sm:$0xff]
        %v2563 = vld [vmem:[%s3 + $0x410] sm:$0xff]
        %v2564 = vld [vmem:[%s3 + $0x418] sm:$0xff]
        %v2565 = vld [vmem:[%s3 + $0x420] sm:$0xff]
        %v2566 = vld [vmem:[%s3 + $0x428] sm:$0xff]
        %v2567 = vld [vmem:[%s3 + $0x430] sm:$0xff]
        %v2568 = vld [vmem:[%s3 + $0x438] sm:$0xff]
        %v2569 = vld [vmem:[%s3 + $0x440] sm:$0xff]
        %v2570 = vld [vmem:[%s3 + $0x448] sm:$0xff]
        %v2571 = vld [vmem:[%s3 + $0x450] sm:$0xff]
        %v2572 = vld [vmem:[%s3 + $0x458] sm:$0xff]
        %v2573 = vld [vmem:[%s3 + $0x460] sm:$0xff]
        %v2574 = vld [vmem:[%s3 + $0x468] sm:$0xff]
        %v2575 = vld [vmem:[%s3 + $0x470] sm:$0xff]
        %v2576 = vld [vmem:[%s3 + $0x478] sm:$0xff]
        %v2577 = vld [vmem:[%s3 + $0x480] sm:$0xff]
        %v2578 = vld [vmem:[%s3 + $0x488] sm:$0xff]
        %v2579 = vld [vmem:[%s3 + $0x490] sm:$0xff]
        %v2580 = vld [vmem:[%s3 + $0x498] sm:$0xff]
        %v2581 = vld [vmem:[%s3 + $0x4a0] sm:$0xff]
        %v2582 = vld [vmem:[%s3 + $0x4a8] sm:$0xff]
        %v2583 = vld [vmem:[%s3 + $0x4b0] sm:$0xff]
        %v2584 = vld [vmem:[%s3 + $0x4b8] sm:$0xff]
        %v2585 = vld [vmem:[%s3 + $0x4c0] sm:$0xff]
        %v2586 = vld [vmem:[%s3 + $0x4c8] sm:$0xff]
        %v2587 = vld [vmem:[%s3 + $0x4d0] sm:$0xff]
        %v2588 = vld [vmem:[%s3 + $0x4d8] sm:$0xff]
        %v2589 = vld [vmem:[%s3 + $0x4e0] sm:$0xff]
        %v2590 = vld [vmem:[%s3 + $0x4e8] sm:$0xff]
        %v2591 = vld [vmem:[%s3 + $0x4f0] sm:$0xff]
        %v2592 = vld [vmem:[%s3 + $0x4f8] sm:$0xff]
        %v2593 = vld [vmem:[%s3 + $0x500] sm:$0xff]
        %v2594 = vld [vmem:[%s3 + $0x508] sm:$0xff]
        %v2595 = vld [vmem:[%s3 + $0x510] sm:$0xff]
        %v2596 = vld [vmem:[%s3 + $0x518] sm:$0xff]
        %v2597 = vld [vmem:[%s3 + $0x520] sm:$0xff]
        %v2598 = vld [vmem:[%s3 + $0x528] sm:$0xff]
        %v2599 = vld [vmem:[%s3 + $0x530] sm:$0xff]
        %v2600 = vld [vmem:[%s3 + $0x538] sm:$0xff]
        %v2601 = vld [vmem:[%s3 + $0x540] sm:$0xff]
        %v2602 = vld [vmem:[%s3 + $0x548] sm:$0xff]
        %v2603 = vld [vmem:[%s3 + $0x550] sm:$0xff]
        %v2604 = vld [vmem:[%s3 + $0x558] sm:$0xff]
        %v2605 = vld [vmem:[%s3 + $0x560] sm:$0xff]
        %v2606 = vld [vmem:[%s3 + $0x568] sm:$0xff]
        %v2607 = vld [vmem:[%s3 + $0x570] sm:$0xff]
        %v2608 = vld [vmem:[%s3 + $0x578] sm:$0xff]
        %v2609 = vld [vmem:[%s3 + $0x580] sm:$0xff]
        %v2610 = vld [vmem:[%s3 + $0x588] sm:$0xff]
        %v2611 = vld [vmem:[%s3 + $0x590] sm:$0xff]
        %v2612 = vld [vmem:[%s3 + $0x598] sm:$0xff]
        %v2613 = vld [vmem:[%s3 + $0x5a0] sm:$0xff]
        %v2614 = vld [vmem:[%s3 + $0x5a8] sm:$0xff]
        %v2615 = vld [vmem:[%s3 + $0x5b0] sm:$0xff]
        %v2616 = vld [vmem:[%s3 + $0x5b8] sm:$0xff]
        %v2617 = vld [vmem:[%s3 + $0x5c0] sm:$0xff]
        %v2618 = vld [vmem:[%s3 + $0x5c8] sm:$0xff]
        %v2619 = vld [vmem:[%s3 + $0x5d0] sm:$0xff]
        %v2620 = vld [vmem:[%s3 + $0x5d8] sm:$0xff]
        %v2621 = vld [vmem:[%s3 + $0x5e0] sm:$0xff]
        %v2622 = vld [vmem:[%s3 + $0x5e8] sm:$0xff]
        %v2623 = vld [vmem:[%s3 + $0x5f0] sm:$0xff]
        %v2624 = vld [vmem:[%s3 + $0x5f8] sm:$0xff]
        %v2625 = vld [vmem:[%s3 + $0x600] sm:$0xff]
        %v2626 = vld [vmem:[%s3 + $0x608] sm:$0xff]
        %v2627 = vld [vmem:[%s3 + $0x610] sm:$0xff]
        %v2628 = vld [vmem:[%s3 + $0x618] sm:$0xff]
        %v2629 = vld [vmem:[%s3 + $0x620] sm:$0xff]
        %v2630 = vld [vmem:[%s3 + $0x628] sm:$0xff]
        %v2631 = vld [vmem:[%s3 + $0x630] sm:$0xff]
        %v2632 = vld [vmem:[%s3 + $0x638] sm:$0xff]
        %v2633 = vld [vmem:[%s3 + $0x640] sm:$0xff]
        %v2634 = vld [vmem:[%s3 + $0x648] sm:$0xff]
        %v2635 = vld [vmem:[%s3 + $0x650] sm:$0xff]
        %v2636 = vld [vmem:[%s3 + $0x658] sm:$0xff]
        %v2637 = vld [vmem:[%s3 + $0x660] sm:$0xff]
        %v2638 = vld [vmem:[%s3 + $0x668] sm:$0xff]
        %v2639 = vld [vmem:[%s3 + $0x670] sm:$0xff]
        %v2640 = vld [vmem:[%s3 + $0x678] sm:$0xff]
        %v2641 = vld [vmem:[%s3 + $0x680] sm:$0xff]
        %v2642 = vld [vmem:[%s3 + $0x688] sm:$0xff]
        %v2643 = vld [vmem:[%s3 + $0x690] sm:$0xff]
        %v2644 = vld [vmem:[%s3 + $0x698] sm:$0xff]
        %v2645 = vld [vmem:[%s3 + $0x6a0] sm:$0xff]
        %v2646 = vld [vmem:[%s3 + $0x6a8] sm:$0xff]
        %v2647 = vld [vmem:[%s3 + $0x6b0] sm:$0xff]
        %v2648 = vld [vmem:[%s3 + $0x6b8] sm:$0xff]
        %v2649 = vld [vmem:[%s3 + $0x6c0] sm:$0xff]
        %v2650 = vld [vmem:[%s3 + $0x6c8] sm:$0xff]
        %v2651 = vld [vmem:[%s3 + $0x6d0] sm:$0xff]
        %v2652 = vld [vmem:[%s3 + $0x6d8] sm:$0xff]
        %v2653 = vld [vmem:[%s3 + $0x6e0] sm:$0xff]
        %v2654 = vld [vmem:[%s3 + $0x6e8] sm:$0xff]
        %v2655 = vld [vmem:[%s3 + $0x6f0] sm:$0xff]
        %v2656 = vld [vmem:[%s3 + $0x6f8] sm:$0xff]
        %v2657 = vld [vmem:[%s3 + $0x700] sm:$0xff]
        %v2658 = vld [vmem:[%s3 + $0x708] sm:$0xff]
        %v2659 = vld [vmem:[%s3 + $0x710] sm:$0xff]
        %v2660 = vld [vmem:[%s3 + $0x718] sm:$0xff]
        %v2661 = vld [vmem:[%s3 + $0x720] sm:$0xff]
        %v2662 = vld [vmem:[%s3 + $0x728] sm:$0xff]
        %v2663 = vld [vmem:[%s3 + $0x730] sm:$0xff]
        %v2664 = vld [vmem:[%s3 + $0x738] sm:$0xff]
        %v2665 = vld [vmem:[%s3 + $0x740] sm:$0xff]
        %v2666 = vld [vmem:[%s3 + $0x748] sm:$0xff]
        %v2667 = vld [vmem:[%s3 + $0x750] sm:$0xff]
        %v2668 = vld [vmem:[%s3 + $0x758] sm:$0xff]
        %v2669 = vld [vmem:[%s3 + $0x760] sm:$0xff]
        %v2670 = vld [vmem:[%s3 + $0x768] sm:$0xff]
        %v2671 = vld [vmem:[%s3 + $0x770] sm:$0xff]
        %v2672 = vld [vmem:[%s3 + $0x778] sm:$0xff]
        %v2673 = vld [vmem:[%s3 + $0x780] sm:$0xff]
        %v2674 = vld [vmem:[%s3 + $0x788] sm:$0xff]
        %v2675 = vld [vmem:[%s3 + $0x790] sm:$0xff]
        %v2676 = vld [vmem:[%s3 + $0x798] sm:$0xff]
        %v2677 = vld [vmem:[%s3 + $0x7a0] sm:$0xff]
        %v2678 = vld [vmem:[%s3 + $0x7a8] sm:$0xff]
        %v2679 = vld [vmem:[%s3 + $0x7b0] sm:$0xff]
        %v2680 = vld [vmem:[%s3 + $0x7b8] sm:$0xff]
        %v2681 = vld [vmem:[%s3 + $0x7c0] sm:$0xff]
        %v2682 = vld [vmem:[%s3 + $0x7c8] sm:$0xff]
        %v2683 = vld [vmem:[%s4] sm:$0x3]
        %v2685 = vlaneseq
        %v2686 = vshrl.u32 %v2685, 7
        %v2687 = vsub.s32 0, %v2686
        %v2688 = vrot.slane %v2683, %v2687
        %v2689 = vlaneseq
        %v2690 = vshrl.u32 %v2689, 7
        %v2691 = vsub.s32 1, %v2690
        %v2692 = vrot.slane %v2683, %v2691
        %v2945 = vunpack.c.l.b16 %v2433
        %v2946 = vunpack.c.h.b16 %v2433
        %v2947 = vunpack.c.l.b16 %v2434
        %v2948 = vunpack.c.h.b16 %v2434
        %v2949 = vunpack.c.l.b16 %v2435
        %v2950 = vunpack.c.h.b16 %v2435
        %v2951 = vunpack.c.l.b16 %v2436
        %v2952 = vunpack.c.h.b16 %v2436
        %v2953 = vunpack.c.l.b16 %v2437
        %v2954 = vunpack.c.h.b16 %v2437
        %v2955 = vunpack.c.l.b16 %v2438
        %v2956 = vunpack.c.h.b16 %v2438
        %v2957 = vunpack.c.l.b16 %v2439
        %v2958 = vunpack.c.h.b16 %v2439
        %v2959 = vunpack.c.l.b16 %v2440
        %v2960 = vunpack.c.h.b16 %v2440
        %v2961 = vunpack.c.l.b16 %v2441
        %v2962 = vunpack.c.h.b16 %v2441
        %v2963 = vunpack.c.l.b16 %v2442
        %v2964 = vunpack.c.h.b16 %v2442
        %v2965 = vunpack.c.l.b16 %v2443
        %v2966 = vunpack.c.h.b16 %v2443
        %v2967 = vunpack.c.l.b16 %v2444
        %v2968 = vunpack.c.h.b16 %v2444
        %v2969 = vunpack.c.l.b16 %v2445
        %v2970 = vunpack.c.h.b16 %v2445
        %v2971 = vunpack.c.l.b16 %v2446
        %v2972 = vunpack.c.h.b16 %v2446
        %v2973 = vunpack.c.l.b16 %v2447
        %v2974 = vunpack.c.h.b16 %v2447
        %v2975 = vunpack.c.l.b16 %v2448
        %v2976 = vunpack.c.h.b16 %v2448
        %v2977 = vunpack.c.l.b16 %v2449
        %v2978 = vunpack.c.h.b16 %v2449
        %v2979 = vunpack.c.l.b16 %v2450
        %v2980 = vunpack.c.h.b16 %v2450
        %v2981 = vunpack.c.l.b16 %v2451
        %v2982 = vunpack.c.h.b16 %v2451
        %v2983 = vunpack.c.l.b16 %v2452
        %v2984 = vunpack.c.h.b16 %v2452
        %v2985 = vunpack.c.l.b16 %v2453
        %v2986 = vunpack.c.h.b16 %v2453
        %v2987 = vunpack.c.l.b16 %v2454
        %v2988 = vunpack.c.h.b16 %v2454
        %v2989 = vunpack.c.l.b16 %v2455
        %v2990 = vunpack.c.h.b16 %v2455
        %v2991 = vunpack.c.l.b16 %v2456
        %v2992 = vunpack.c.h.b16 %v2456
        %v2993 = vunpack.c.l.b16 %v2457
        %v2994 = vunpack.c.h.b16 %v2457
        %v2995 = vunpack.c.l.b16 %v2458
        %v2996 = vunpack.c.h.b16 %v2458
        %v2997 = vunpack.c.l.b16 %v2459
        %v2998 = vunpack.c.h.b16 %v2459
        %v2999 = vunpack.c.l.b16 %v2460
        %v3000 = vunpack.c.h.b16 %v2460
        %v3001 = vunpack.c.l.b16 %v2461
        %v3002 = vunpack.c.h.b16 %v2461
        %v3003 = vunpack.c.l.b16 %v2462
        %v3004 = vunpack.c.h.b16 %v2462
        %v3005 = vunpack.c.l.b16 %v2463
        %v3006 = vunpack.c.h.b16 %v2463
        %v3007 = vunpack.c.l.b16 %v2464
        %v3008 = vunpack.c.h.b16 %v2464
        %v3009 = vunpack.c.l.b16 %v2465
        %v3010 = vunpack.c.h.b16 %v2465
        %v3011 = vunpack.c.l.b16 %v2466
        %v3012 = vunpack.c.h.b16 %v2466
        %v3013 = vunpack.c.l.b16 %v2467
        %v3014 = vunpack.c.h.b16 %v2467
        %v3015 = vunpack.c.l.b16 %v2468
        %v3016 = vunpack.c.h.b16 %v2468
        %v3017 = vunpack.c.l.b16 %v2469
        %v3018 = vunpack.c.h.b16 %v2469
        %v3019 = vunpack.c.l.b16 %v2470
        %v3020 = vunpack.c.h.b16 %v2470
        %v3021 = vunpack.c.l.b16 %v2471
        %v3022 = vunpack.c.h.b16 %v2471
        %v3023 = vunpack.c.l.b16 %v2472
        %v3024 = vunpack.c.h.b16 %v2472
        %v3025 = vunpack.c.l.b16 %v2473
        %v3026 = vunpack.c.h.b16 %v2473
        %v3027 = vunpack.c.l.b16 %v2474
        %v3028 = vunpack.c.h.b16 %v2474
        %v3029 = vunpack.c.l.b16 %v2475
        %v3030 = vunpack.c.h.b16 %v2475
        %v3031 = vunpack.c.l.b16 %v2476
        %v3032 = vunpack.c.h.b16 %v2476
        %v3033 = vunpack.c.l.b16 %v2477
        %v3034 = vunpack.c.h.b16 %v2477
        %v3035 = vunpack.c.l.b16 %v2478
        %v3036 = vunpack.c.h.b16 %v2478
        %v3037 = vunpack.c.l.b16 %v2479
        %v3038 = vunpack.c.h.b16 %v2479
        %v3039 = vunpack.c.l.b16 %v2480
        %v3040 = vunpack.c.h.b16 %v2480
        %v3041 = vunpack.c.l.b16 %v2481
        %v3042 = vunpack.c.h.b16 %v2481
        %v3043 = vunpack.c.l.b16 %v2482
        %v3044 = vunpack.c.h.b16 %v2482
        %v3045 = vunpack.c.l.b16 %v2483
        %v3046 = vunpack.c.h.b16 %v2483
        %v3047 = vunpack.c.l.b16 %v2484
        %v3048 = vunpack.c.h.b16 %v2484
        %v3049 = vunpack.c.l.b16 %v2485
        %v3050 = vunpack.c.h.b16 %v2485
        %v3051 = vunpack.c.l.b16 %v2486
        %v3052 = vunpack.c.h.b16 %v2486
        %v3053 = vunpack.c.l.b16 %v2487
        %v3054 = vunpack.c.h.b16 %v2487
        %v3055 = vunpack.c.l.b16 %v2488
        %v3056 = vunpack.c.h.b16 %v2488
        %v3057 = vunpack.c.l.b16 %v2489
        %v3058 = vunpack.c.h.b16 %v2489
        %v3059 = vunpack.c.l.b16 %v2490
        %v3060 = vunpack.c.h.b16 %v2490
        %v3061 = vunpack.c.l.b16 %v2491
        %v3062 = vunpack.c.h.b16 %v2491
        %v3063 = vunpack.c.l.b16 %v2492
        %v3064 = vunpack.c.h.b16 %v2492
        %v3065 = vunpack.c.l.b16 %v2493
        %v3066 = vunpack.c.h.b16 %v2493
        %v3067 = vunpack.c.l.b16 %v2494
        %v3068 = vunpack.c.h.b16 %v2494
        %v3069 = vunpack.c.l.b16 %v2495
        %v3070 = vunpack.c.h.b16 %v2495
        %v3071 = vunpack.c.l.b16 %v2496
        %v3072 = vunpack.c.h.b16 %v2496
        %v3073 = vunpack.c.l.b16 %v2497
        %v3074 = vunpack.c.h.b16 %v2497
        %v3075 = vunpack.c.l.b16 %v2498
        %v3076 = vunpack.c.h.b16 %v2498
        %v3077 = vunpack.c.l.b16 %v2499
        %v3078 = vunpack.c.h.b16 %v2499
        %v3079 = vunpack.c.l.b16 %v2500
        %v3080 = vunpack.c.h.b16 %v2500
        %v3081 = vunpack.c.l.b16 %v2501
        %v3082 = vunpack.c.h.b16 %v2501
        %v3083 = vunpack.c.l.b16 %v2502
        %v3084 = vunpack.c.h.b16 %v2502
        %v3085 = vunpack.c.l.b16 %v2503
        %v3086 = vunpack.c.h.b16 %v2503
        %v3087 = vunpack.c.l.b16 %v2504
        %v3088 = vunpack.c.h.b16 %v2504
        %v3089 = vunpack.c.l.b16 %v2505
        %v3090 = vunpack.c.h.b16 %v2505
        %v3091 = vunpack.c.l.b16 %v2506
        %v3092 = vunpack.c.h.b16 %v2506
        %v3093 = vunpack.c.l.b16 %v2507
        %v3094 = vunpack.c.h.b16 %v2507
        %v3095 = vunpack.c.l.b16 %v2508
        %v3096 = vunpack.c.h.b16 %v2508
        %v3097 = vunpack.c.l.b16 %v2509
        %v3098 = vunpack.c.h.b16 %v2509
        %v3099 = vunpack.c.l.b16 %v2510
        %v3100 = vunpack.c.h.b16 %v2510
        %v3101 = vunpack.c.l.b16 %v2511
        %v3102 = vunpack.c.h.b16 %v2511
        %v3103 = vunpack.c.l.b16 %v2512
        %v3104 = vunpack.c.h.b16 %v2512
        %v3105 = vunpack.c.l.b16 %v2513
        %v3106 = vunpack.c.h.b16 %v2513
        %v3107 = vunpack.c.l.b16 %v2514
        %v3108 = vunpack.c.h.b16 %v2514
        %v3109 = vunpack.c.l.b16 %v2515
        %v3110 = vunpack.c.h.b16 %v2515
        %v3111 = vunpack.c.l.b16 %v2516
        %v3112 = vunpack.c.h.b16 %v2516
        %v3113 = vunpack.c.l.b16 %v2517
        %v3114 = vunpack.c.h.b16 %v2517
        %v3115 = vunpack.c.l.b16 %v2518
        %v3116 = vunpack.c.h.b16 %v2518
        %v3117 = vunpack.c.l.b16 %v2519
        %v3118 = vunpack.c.h.b16 %v2519
        %v3119 = vunpack.c.l.b16 %v2520
        %v3120 = vunpack.c.h.b16 %v2520
        %v3121 = vunpack.c.l.b16 %v2521
        %v3122 = vunpack.c.h.b16 %v2521
        %v3123 = vunpack.c.l.b16 %v2522
        %v3124 = vunpack.c.h.b16 %v2522
        %v3125 = vunpack.c.l.b16 %v2523
        %v3126 = vunpack.c.h.b16 %v2523
        %v3127 = vunpack.c.l.b16 %v2524
        %v3128 = vunpack.c.h.b16 %v2524
        %v3129 = vunpack.c.l.b16 %v2525
        %v3130 = vunpack.c.h.b16 %v2525
        %v3131 = vunpack.c.l.b16 %v2526
        %v3132 = vunpack.c.h.b16 %v2526
        %v3133 = vunpack.c.l.b16 %v2527
        %v3134 = vunpack.c.h.b16 %v2527
        %v3135 = vunpack.c.l.b16 %v2528
        %v3136 = vunpack.c.h.b16 %v2528
        %v3137 = vunpack.c.l.b16 %v2529
        %v3138 = vunpack.c.h.b16 %v2529
        %v3139 = vunpack.c.l.b16 %v2530
        %v3140 = vunpack.c.h.b16 %v2530
        %v3141 = vunpack.c.l.b16 %v2531
        %v3142 = vunpack.c.h.b16 %v2531
        %v3143 = vunpack.c.l.b16 %v2532
        %v3144 = vunpack.c.h.b16 %v2532
        %v3145 = vunpack.c.l.b16 %v2533
        %v3146 = vunpack.c.h.b16 %v2533
        %v3147 = vunpack.c.l.b16 %v2534
        %v3148 = vunpack.c.h.b16 %v2534
        %v3149 = vunpack.c.l.b16 %v2535
        %v3150 = vunpack.c.h.b16 %v2535
        %v3151 = vunpack.c.l.b16 %v2536
        %v3152 = vunpack.c.h.b16 %v2536
        %v3153 = vunpack.c.l.b16 %v2537
        %v3154 = vunpack.c.h.b16 %v2537
        %v3155 = vunpack.c.l.b16 %v2538
        %v3156 = vunpack.c.h.b16 %v2538
        %v3157 = vunpack.c.l.b16 %v2539
        %v3158 = vunpack.c.h.b16 %v2539
        %v3159 = vunpack.c.l.b16 %v2540
        %v3160 = vunpack.c.h.b16 %v2540
        %v3161 = vunpack.c.l.b16 %v2541
        %v3162 = vunpack.c.h.b16 %v2541
        %v3163 = vunpack.c.l.b16 %v2542
        %v3164 = vunpack.c.h.b16 %v2542
        %v3165 = vunpack.c.l.b16 %v2543
        %v3166 = vunpack.c.h.b16 %v2543
        %v3167 = vunpack.c.l.b16 %v2544
        %v3168 = vunpack.c.h.b16 %v2544
        %v3169 = vunpack.c.l.b16 %v2545
        %v3170 = vunpack.c.h.b16 %v2545
        %v3171 = vunpack.c.l.b16 %v2546
        %v3172 = vunpack.c.h.b16 %v2546
        %v3173 = vunpack.c.l.b16 %v2547
        %v3174 = vunpack.c.h.b16 %v2547
        %v3175 = vunpack.c.l.b16 %v2548
        %v3176 = vunpack.c.h.b16 %v2548
        %v3177 = vunpack.c.l.b16 %v2549
        %v3178 = vunpack.c.h.b16 %v2549
        %v3179 = vunpack.c.l.b16 %v2550
        %v3180 = vunpack.c.h.b16 %v2550
        %v3181 = vunpack.c.l.b16 %v2551
        %v3182 = vunpack.c.h.b16 %v2551
        %v3183 = vunpack.c.l.b16 %v2552
        %v3184 = vunpack.c.h.b16 %v2552
        %v3185 = vunpack.c.l.b16 %v2553
        %v3186 = vunpack.c.h.b16 %v2553
        %v3187 = vunpack.c.l.b16 %v2554
        %v3188 = vunpack.c.h.b16 %v2554
        %v3189 = vunpack.c.l.b16 %v2555
        %v3190 = vunpack.c.h.b16 %v2555
        %v3191 = vunpack.c.l.b16 %v2556
        %v3192 = vunpack.c.h.b16 %v2556
        %v3193 = vunpack.c.l.b16 %v2557
        %v3194 = vunpack.c.h.b16 %v2557
        %v3195 = vunpack.c.l.b16 %v2558
        %v3196 = vunpack.c.h.b16 %v2558
        %v3197 = vunpack.c.l.b16 %v2559
        %v3198 = vunpack.c.h.b16 %v2559
        %v3199 = vunpack.c.l.b16 %v2560
        %v3200 = vunpack.c.h.b16 %v2560
        %v3201 = vunpack.c.l.b16 %v2561
        %v3202 = vunpack.c.h.b16 %v2561
        %v3203 = vunpack.c.l.b16 %v2562
        %v3204 = vunpack.c.h.b16 %v2562
        %v3205 = vunpack.c.l.b16 %v2563
        %v3206 = vunpack.c.h.b16 %v2563
        %v3207 = vunpack.c.l.b16 %v2564
        %v3208 = vunpack.c.h.b16 %v2564
        %v3209 = vunpack.c.l.b16 %v2565
        %v3210 = vunpack.c.h.b16 %v2565
        %v3211 = vunpack.c.l.b16 %v2566
        %v3212 = vunpack.c.h.b16 %v2566
        %v3213 = vunpack.c.l.b16 %v2567
        %v3214 = vunpack.c.h.b16 %v2567
        %v3215 = vunpack.c.l.b16 %v2568
        %v3216 = vunpack.c.h.b16 %v2568
        %v3217 = vunpack.c.l.b16 %v2569
        %v3218 = vunpack.c.h.b16 %v2569
        %v3219 = vunpack.c.l.b16 %v2570
        %v3220 = vunpack.c.h.b16 %v2570
        %v3221 = vunpack.c.l.b16 %v2571
        %v3222 = vunpack.c.h.b16 %v2571
        %v3223 = vunpack.c.l.b16 %v2572
        %v3224 = vunpack.c.h.b16 %v2572
        %v3225 = vunpack.c.l.b16 %v2573
        %v3226 = vunpack.c.h.b16 %v2573
        %v3227 = vunpack.c.l.b16 %v2574
        %v3228 = vunpack.c.h.b16 %v2574
        %v3229 = vunpack.c.l.b16 %v2575
        %v3230 = vunpack.c.h.b16 %v2575
        %v3231 = vunpack.c.l.b16 %v2576
        %v3232 = vunpack.c.h.b16 %v2576
        %v3233 = vunpack.c.l.b16 %v2577
        %v3234 = vunpack.c.h.b16 %v2577
        %v3235 = vunpack.c.l.b16 %v2578
        %v3236 = vunpack.c.h.b16 %v2578
        %v3237 = vunpack.c.l.b16 %v2579
        %v3238 = vunpack.c.h.b16 %v2579
        %v3239 = vunpack.c.l.b16 %v2580
        %v3240 = vunpack.c.h.b16 %v2580
        %v3241 = vunpack.c.l.b16 %v2581
        %v3242 = vunpack.c.h.b16 %v2581
        %v3243 = vunpack.c.l.b16 %v2582
        %v3244 = vunpack.c.h.b16 %v2582
        %v3245 = vunpack.c.l.b16 %v2583
        %v3246 = vunpack.c.h.b16 %v2583
        %v3247 = vunpack.c.l.b16 %v2584
        %v3248 = vunpack.c.h.b16 %v2584
        %v3249 = vunpack.c.l.b16 %v2585
        %v3250 = vunpack.c.h.b16 %v2585
        %v3251 = vunpack.c.l.b16 %v2586
        %v3252 = vunpack.c.h.b16 %v2586
        %v3253 = vunpack.c.l.b16 %v2587
        %v3254 = vunpack.c.h.b16 %v2587
        %v3255 = vunpack.c.l.b16 %v2588
        %v3256 = vunpack.c.h.b16 %v2588
        %v3257 = vunpack.c.l.b16 %v2589
        %v3258 = vunpack.c.h.b16 %v2589
        %v3259 = vunpack.c.l.b16 %v2590
        %v3260 = vunpack.c.h.b16 %v2590
        %v3261 = vunpack.c.l.b16 %v2591
        %v3262 = vunpack.c.h.b16 %v2591
        %v3263 = vunpack.c.l.b16 %v2592
        %v3264 = vunpack.c.h.b16 %v2592
        %v3265 = vunpack.c.l.b16 %v2593
        %v3266 = vunpack.c.h.b16 %v2593
        %v3267 = vunpack.c.l.b16 %v2594
        %v3268 = vunpack.c.h.b16 %v2594
        %v3269 = vunpack.c.l.b16 %v2595
        %v3270 = vunpack.c.h.b16 %v2595
        %v3271 = vunpack.c.l.b16 %v2596
        %v3272 = vunpack.c.h.b16 %v2596
        %v3273 = vunpack.c.l.b16 %v2597
        %v3274 = vunpack.c.h.b16 %v2597
        %v3275 = vunpack.c.l.b16 %v2598
        %v3276 = vunpack.c.h.b16 %v2598
        %v3277 = vunpack.c.l.b16 %v2599
        %v3278 = vunpack.c.h.b16 %v2599
        %v3279 = vunpack.c.l.b16 %v2600
        %v3280 = vunpack.c.h.b16 %v2600
        %v3281 = vunpack.c.l.b16 %v2601
        %v3282 = vunpack.c.h.b16 %v2601
        %v3283 = vunpack.c.l.b16 %v2602
        %v3284 = vunpack.c.h.b16 %v2602
        %v3285 = vunpack.c.l.b16 %v2603
        %v3286 = vunpack.c.h.b16 %v2603
        %v3287 = vunpack.c.l.b16 %v2604
        %v3288 = vunpack.c.h.b16 %v2604
        %v3289 = vunpack.c.l.b16 %v2605
        %v3290 = vunpack.c.h.b16 %v2605
        %v3291 = vunpack.c.l.b16 %v2606
        %v3292 = vunpack.c.h.b16 %v2606
        %v3293 = vunpack.c.l.b16 %v2607
        %v3294 = vunpack.c.h.b16 %v2607
        %v3295 = vunpack.c.l.b16 %v2608
        %v3296 = vunpack.c.h.b16 %v2608
        %v3297 = vunpack.c.l.b16 %v2609
        %v3298 = vunpack.c.h.b16 %v2609
        %v3299 = vunpack.c.l.b16 %v2610
        %v3300 = vunpack.c.h.b16 %v2610
        %v3301 = vunpack.c.l.b16 %v2611
        %v3302 = vunpack.c.h.b16 %v2611
        %v3303 = vunpack.c.l.b16 %v2612
        %v3304 = vunpack.c.h.b16 %v2612
        %v3305 = vunpack.c.l.b16 %v2613
        %v3306 = vunpack.c.h.b16 %v2613
        %v3307 = vunpack.c.l.b16 %v2614
        %v3308 = vunpack.c.h.b16 %v2614
        %v3309 = vunpack.c.l.b16 %v2615
        %v3310 = vunpack.c.h.b16 %v2615
        %v3311 = vunpack.c.l.b16 %v2616
        %v3312 = vunpack.c.h.b16 %v2616
        %v3313 = vunpack.c.l.b16 %v2617
        %v3314 = vunpack.c.h.b16 %v2617
        %v3315 = vunpack.c.l.b16 %v2618
        %v3316 = vunpack.c.h.b16 %v2618
        %v3317 = vunpack.c.l.b16 %v2619
        %v3318 = vunpack.c.h.b16 %v2619
        %v3319 = vunpack.c.l.b16 %v2620
        %v3320 = vunpack.c.h.b16 %v2620
        %v3321 = vunpack.c.l.b16 %v2621
        %v3322 = vunpack.c.h.b16 %v2621
        %v3323 = vunpack.c.l.b16 %v2622
        %v3324 = vunpack.c.h.b16 %v2622
        %v3325 = vunpack.c.l.b16 %v2623
        %v3326 = vunpack.c.h.b16 %v2623
        %v3327 = vunpack.c.l.b16 %v2624
        %v3328 = vunpack.c.h.b16 %v2624
        %v3329 = vunpack.c.l.b16 %v2625
        %v3330 = vunpack.c.h.b16 %v2625
        %v3331 = vunpack.c.l.b16 %v2626
        %v3332 = vunpack.c.h.b16 %v2626
        %v3333 = vunpack.c.l.b16 %v2627
        %v3334 = vunpack.c.h.b16 %v2627
        %v3335 = vunpack.c.l.b16 %v2628
        %v3336 = vunpack.c.h.b16 %v2628
        %v3337 = vunpack.c.l.b16 %v2629
        %v3338 = vunpack.c.h.b16 %v2629
        %v3339 = vunpack.c.l.b16 %v2630
        %v3340 = vunpack.c.h.b16 %v2630
        %v3341 = vunpack.c.l.b16 %v2631
        %v3342 = vunpack.c.h.b16 %v2631
        %v3343 = vunpack.c.l.b16 %v2632
        %v3344 = vunpack.c.h.b16 %v2632
        %v3345 = vunpack.c.l.b16 %v2633
        %v3346 = vunpack.c.h.b16 %v2633
        %v3347 = vunpack.c.l.b16 %v2634
        %v3348 = vunpack.c.h.b16 %v2634
        %v3349 = vunpack.c.l.b16 %v2635
        %v3350 = vunpack.c.h.b16 %v2635
        %v3351 = vunpack.c.l.b16 %v2636
        %v3352 = vunpack.c.h.b16 %v2636
        %v3353 = vunpack.c.l.b16 %v2637
        %v3354 = vunpack.c.h.b16 %v2637
        %v3355 = vunpack.c.l.b16 %v2638
        %v3356 = vunpack.c.h.b16 %v2638
        %v3357 = vunpack.c.l.b16 %v2639
        %v3358 = vunpack.c.h.b16 %v2639
        %v3359 = vunpack.c.l.b16 %v2640
        %v3360 = vunpack.c.h.b16 %v2640
        %v3361 = vunpack.c.l.b16 %v2641
        %v3362 = vunpack.c.h.b16 %v2641
        %v3363 = vunpack.c.l.b16 %v2642
        %v3364 = vunpack.c.h.b16 %v2642
        %v3365 = vunpack.c.l.b16 %v2643
        %v3366 = vunpack.c.h.b16 %v2643
        %v3367 = vunpack.c.l.b16 %v2644
        %v3368 = vunpack.c.h.b16 %v2644
        %v3369 = vunpack.c.l.b16 %v2645
        %v3370 = vunpack.c.h.b16 %v2645
        %v3371 = vunpack.c.l.b16 %v2646
        %v3372 = vunpack.c.h.b16 %v2646
        %v3373 = vunpack.c.l.b16 %v2647
        %v3374 = vunpack.c.h.b16 %v2647
        %v3375 = vunpack.c.l.b16 %v2648
        %v3376 = vunpack.c.h.b16 %v2648
        %v3377 = vunpack.c.l.b16 %v2649
        %v3378 = vunpack.c.h.b16 %v2649
        %v3379 = vunpack.c.l.b16 %v2650
        %v3380 = vunpack.c.h.b16 %v2650
        %v3381 = vunpack.c.l.b16 %v2651
        %v3382 = vunpack.c.h.b16 %v2651
        %v3383 = vunpack.c.l.b16 %v2652
        %v3384 = vunpack.c.h.b16 %v2652
        %v3385 = vunpack.c.l.b16 %v2653
        %v3386 = vunpack.c.h.b16 %v2653
        %v3387 = vunpack.c.l.b16 %v2654
        %v3388 = vunpack.c.h.b16 %v2654
        %v3389 = vunpack.c.l.b16 %v2655
        %v3390 = vunpack.c.h.b16 %v2655
        %v3391 = vunpack.c.l.b16 %v2656
        %v3392 = vunpack.c.h.b16 %v2656
        %v3393 = vunpack.c.l.b16 %v2657
        %v3394 = vunpack.c.h.b16 %v2657
        %v3395 = vunpack.c.l.b16 %v2658
        %v3396 = vunpack.c.h.b16 %v2658
        %v3397 = vunpack.c.l.b16 %v2659
        %v3398 = vunpack.c.h.b16 %v2659
        %v3399 = vunpack.c.l.b16 %v2660
        %v3400 = vunpack.c.h.b16 %v2660
        %v3401 = vunpack.c.l.b16 %v2661
        %v3402 = vunpack.c.h.b16 %v2661
        %v3403 = vunpack.c.l.b16 %v2662
        %v3404 = vunpack.c.h.b16 %v2662
        %v3405 = vunpack.c.l.b16 %v2663
        %v3406 = vunpack.c.h.b16 %v2663
        %v3407 = vunpack.c.l.b16 %v2664
        %v3408 = vunpack.c.h.b16 %v2664
        %v3409 = vunpack.c.l.b16 %v2665
        %v3410 = vunpack.c.h.b16 %v2665
        %v3411 = vunpack.c.l.b16 %v2666
        %v3412 = vunpack.c.h.b16 %v2666
        %v3413 = vunpack.c.l.b16 %v2667
        %v3414 = vunpack.c.h.b16 %v2667
        %v3415 = vunpack.c.l.b16 %v2668
        %v3416 = vunpack.c.h.b16 %v2668
        %v3417 = vunpack.c.l.b16 %v2669
        %v3418 = vunpack.c.h.b16 %v2669
        %v3419 = vunpack.c.l.b16 %v2670
        %v3420 = vunpack.c.h.b16 %v2670
        %v3421 = vunpack.c.l.b16 %v2671
        %v3422 = vunpack.c.h.b16 %v2671
        %v3423 = vunpack.c.l.b16 %v2672
        %v3424 = vunpack.c.h.b16 %v2672
        %v3425 = vunpack.c.l.b16 %v2673
        %v3426 = vunpack.c.h.b16 %v2673
        %v3427 = vunpack.c.l.b16 %v2674
        %v3428 = vunpack.c.h.b16 %v2674
        %v3429 = vunpack.c.l.b16 %v2675
        %v3430 = vunpack.c.h.b16 %v2675
        %v3431 = vunpack.c.l.b16 %v2676
        %v3432 = vunpack.c.h.b16 %v2676
        %v3433 = vunpack.c.l.b16 %v2677
        %v3434 = vunpack.c.h.b16 %v2677
        %v3435 = vunpack.c.l.b16 %v2678
        %v3436 = vunpack.c.h.b16 %v2678
        %v3437 = vunpack.c.l.b16 %v2679
        %v3438 = vunpack.c.h.b16 %v2679
        %v3439 = vunpack.c.l.b16 %v2680
        %v3440 = vunpack.c.h.b16 %v2680
        %v3441 = vunpack.c.l.b16 %v2681
        %v3442 = vunpack.c.h.b16 %v2681
        %v3443 = vunpack.c.l.b16 %v2682
        %v3444 = vunpack.c.h.b16 %v2682
        %v3445 = vpack.c.b16 %v2947, %v2945
        %v3446 = vpack.c.b16 %v2948, %v2946
        %v3447 = vpack.c.b16 %v2951, %v2949
        %v3448 = vpack.c.b16 %v2952, %v2950
        %v3449 = vpack.c.b16 %v2955, %v2953
        %v3450 = vpack.c.b16 %v2956, %v2954
        %v3451 = vpack.c.b16 %v2959, %v2957
        %v3452 = vpack.c.b16 %v2960, %v2958
        %v3453 = vpack.c.b16 %v2963, %v2961
        %v3454 = vpack.c.b16 %v2964, %v2962
        %v3455 = vpack.c.b16 %v2967, %v2965
        %v3456 = vpack.c.b16 %v2968, %v2966
        %v3457 = vpack.c.b16 %v2971, %v2969
        %v3458 = vpack.c.b16 %v2972, %v2970
        %v3459 = vpack.c.b16 %v2975, %v2973
        %v3460 = vpack.c.b16 %v2976, %v2974
        %v3461 = vpack.c.b16 %v2979, %v2977
        %v3462 = vpack.c.b16 %v2980, %v2978
        %v3463 = vpack.c.b16 %v2983, %v2981
        %v3464 = vpack.c.b16 %v2984, %v2982
        %v3465 = vpack.c.b16 %v2987, %v2985
        %v3466 = vpack.c.b16 %v2988, %v2986
        %v3467 = vpack.c.b16 %v2991, %v2989
        %v3468 = vpack.c.b16 %v2992, %v2990
        %v3469 = vpack.c.b16 %v2995, %v2993
        %v3470 = vpack.c.b16 %v2996, %v2994
        %v3471 = vpack.c.b16 %v2999, %v2997
        %v3472 = vpack.c.b16 %v3000, %v2998
        %v3473 = vpack.c.b16 %v3003, %v3001
        %v3474 = vpack.c.b16 %v3004, %v3002
        %v3475 = vpack.c.b16 %v3007, %v3005
        %v3476 = vpack.c.b16 %v3008, %v3006
        %v3477 = vpack.c.b16 %v3011, %v3009
        %v3478 = vpack.c.b16 %v3012, %v3010
        %v3479 = vpack.c.b16 %v3015, %v3013
        %v3480 = vpack.c.b16 %v3016, %v3014
        %v3481 = vpack.c.b16 %v3019, %v3017
        %v3482 = vpack.c.b16 %v3020, %v3018
        %v3483 = vpack.c.b16 %v3023, %v3021
        %v3484 = vpack.c.b16 %v3024, %v3022
        %v3485 = vpack.c.b16 %v3027, %v3025
        %v3486 = vpack.c.b16 %v3028, %v3026
        %v3487 = vpack.c.b16 %v3031, %v3029
        %v3488 = vpack.c.b16 %v3032, %v3030
        %v3489 = vpack.c.b16 %v3035, %v3033
        %v3490 = vpack.c.b16 %v3036, %v3034
        %v3491 = vpack.c.b16 %v3039, %v3037
        %v3492 = vpack.c.b16 %v3040, %v3038
        %v3493 = vpack.c.b16 %v3043, %v3041
        %v3494 = vpack.c.b16 %v3044, %v3042
        %v3495 = vpack.c.b16 %v3047, %v3045
        %v3496 = vpack.c.b16 %v3048, %v3046
        %v3497 = vpack.c.b16 %v3051, %v3049
        %v3498 = vpack.c.b16 %v3052, %v3050
        %v3499 = vpack.c.b16 %v3055, %v3053
        %v3500 = vpack.c.b16 %v3056, %v3054
        %v3501 = vpack.c.b16 %v3059, %v3057
        %v3502 = vpack.c.b16 %v3060, %v3058
        %v3503 = vpack.c.b16 %v3063, %v3061
        %v3504 = vpack.c.b16 %v3064, %v3062
        %v3505 = vpack.c.b16 %v3067, %v3065
        %v3506 = vpack.c.b16 %v3068, %v3066
        %v3507 = vpack.c.b16 %v3071, %v3069
        %v3508 = vpack.c.b16 %v3072, %v3070
        %v3509 = vpack.c.b16 %v3075, %v3073
        %v3510 = vpack.c.b16 %v3076, %v3074
        %v3511 = vpack.c.b16 %v3079, %v3077
        %v3512 = vpack.c.b16 %v3080, %v3078
        %v3513 = vpack.c.b16 %v3083, %v3081
        %v3514 = vpack.c.b16 %v3084, %v3082
        %v3515 = vpack.c.b16 %v3087, %v3085
        %v3516 = vpack.c.b16 %v3088, %v3086
        %v3517 = vpack.c.b16 %v3091, %v3089
        %v3518 = vpack.c.b16 %v3092, %v3090
        %v3519 = vpack.c.b16 %v3095, %v3093
        %v3520 = vpack.c.b16 %v3096, %v3094
        %v3521 = vpack.c.b16 %v3099, %v3097
        %v3522 = vpack.c.b16 %v3100, %v3098
        %v3523 = vpack.c.b16 %v3103, %v3101
        %v3524 = vpack.c.b16 %v3104, %v3102
        %v3525 = vpack.c.b16 %v3107, %v3105
        %v3526 = vpack.c.b16 %v3108, %v3106
        %v3527 = vpack.c.b16 %v3111, %v3109
        %v3528 = vpack.c.b16 %v3112, %v3110
        %v3529 = vpack.c.b16 %v3115, %v3113
        %v3530 = vpack.c.b16 %v3116, %v3114
        %v3531 = vpack.c.b16 %v3119, %v3117
        %v3532 = vpack.c.b16 %v3120, %v3118
        %v3533 = vpack.c.b16 %v3123, %v3121
        %v3534 = vpack.c.b16 %v3124, %v3122
        %v3535 = vpack.c.b16 %v3127, %v3125
        %v3536 = vpack.c.b16 %v3128, %v3126
        %v3537 = vpack.c.b16 %v3131, %v3129
        %v3538 = vpack.c.b16 %v3132, %v3130
        %v3539 = vpack.c.b16 %v3135, %v3133
        %v3540 = vpack.c.b16 %v3136, %v3134
        %v3541 = vpack.c.b16 %v3139, %v3137
        %v3542 = vpack.c.b16 %v3140, %v3138
        %v3543 = vpack.c.b16 %v3143, %v3141
        %v3544 = vpack.c.b16 %v3144, %v3142
        %v3545 = vpack.c.b16 %v3147, %v3145
        %v3546 = vpack.c.b16 %v3148, %v3146
        %v3547 = vpack.c.b16 %v3151, %v3149
        %v3548 = vpack.c.b16 %v3152, %v3150
        %v3549 = vpack.c.b16 %v3155, %v3153
        %v3550 = vpack.c.b16 %v3156, %v3154
        %v3551 = vpack.c.b16 %v3159, %v3157
        %v3552 = vpack.c.b16 %v3160, %v3158
        %v3553 = vpack.c.b16 %v3163, %v3161
        %v3554 = vpack.c.b16 %v3164, %v3162
        %v3555 = vpack.c.b16 %v3167, %v3165
        %v3556 = vpack.c.b16 %v3168, %v3166
        %v3557 = vpack.c.b16 %v3171, %v3169
        %v3558 = vpack.c.b16 %v3172, %v3170
        %v3559 = vpack.c.b16 %v3175, %v3173
        %v3560 = vpack.c.b16 %v3176, %v3174
        %v3561 = vpack.c.b16 %v3179, %v3177
        %v3562 = vpack.c.b16 %v3180, %v3178
        %v3563 = vpack.c.b16 %v3183, %v3181
        %v3564 = vpack.c.b16 %v3184, %v3182
        %v3565 = vpack.c.b16 %v3187, %v3185
        %v3566 = vpack.c.b16 %v3188, %v3186
        %v3567 = vpack.c.b16 %v3191, %v3189
        %v3568 = vpack.c.b16 %v3192, %v3190
        %v3569 = vpack.c.b16 %v3195, %v3193
        %v3570 = vpack.c.b16 %v3196, %v3194
        %v3571 = vpack.c.b16 %v3199, %v3197
        %v3572 = vpack.c.b16 %v3200, %v3198
        %v3573 = vpack.c.b16 %v3203, %v3201
        %v3574 = vpack.c.b16 %v3204, %v3202
        %v3575 = vpack.c.b16 %v3207, %v3205
        %v3576 = vpack.c.b16 %v3208, %v3206
        %v3577 = vpack.c.b16 %v3211, %v3209
        %v3578 = vpack.c.b16 %v3212, %v3210
        %v3579 = vpack.c.b16 %v3215, %v3213
        %v3580 = vpack.c.b16 %v3216, %v3214
        %v3581 = vpack.c.b16 %v3219, %v3217
        %v3582 = vpack.c.b16 %v3220, %v3218
        %v3583 = vpack.c.b16 %v3223, %v3221
        %v3584 = vpack.c.b16 %v3224, %v3222
        %v3585 = vpack.c.b16 %v3227, %v3225
        %v3586 = vpack.c.b16 %v3228, %v3226
        %v3587 = vpack.c.b16 %v3231, %v3229
        %v3588 = vpack.c.b16 %v3232, %v3230
        %v3589 = vpack.c.b16 %v3235, %v3233
        %v3590 = vpack.c.b16 %v3236, %v3234
        %v3591 = vpack.c.b16 %v3239, %v3237
        %v3592 = vpack.c.b16 %v3240, %v3238
        %v3593 = vpack.c.b16 %v3243, %v3241
        %v3594 = vpack.c.b16 %v3244, %v3242
        %v3595 = vpack.c.b16 %v3247, %v3245
        %v3596 = vpack.c.b16 %v3248, %v3246
        %v3597 = vpack.c.b16 %v3251, %v3249
        %v3598 = vpack.c.b16 %v3252, %v3250
        %v3599 = vpack.c.b16 %v3255, %v3253
        %v3600 = vpack.c.b16 %v3256, %v3254
        %v3601 = vpack.c.b16 %v3259, %v3257
        %v3602 = vpack.c.b16 %v3260, %v3258
        %v3603 = vpack.c.b16 %v3263, %v3261
        %v3604 = vpack.c.b16 %v3264, %v3262
        %v3605 = vpack.c.b16 %v3267, %v3265
        %v3606 = vpack.c.b16 %v3268, %v3266
        %v3607 = vpack.c.b16 %v3271, %v3269
        %v3608 = vpack.c.b16 %v3272, %v3270
        %v3609 = vpack.c.b16 %v3275, %v3273
        %v3610 = vpack.c.b16 %v3276, %v3274
        %v3611 = vpack.c.b16 %v3279, %v3277
        %v3612 = vpack.c.b16 %v3280, %v3278
        %v3613 = vpack.c.b16 %v3283, %v3281
        %v3614 = vpack.c.b16 %v3284, %v3282
        %v3615 = vpack.c.b16 %v3287, %v3285
        %v3616 = vpack.c.b16 %v3288, %v3286
        %v3617 = vpack.c.b16 %v3291, %v3289
        %v3618 = vpack.c.b16 %v3292, %v3290
        %v3619 = vpack.c.b16 %v3295, %v3293
        %v3620 = vpack.c.b16 %v3296, %v3294
        %v3621 = vpack.c.b16 %v3299, %v3297
        %v3622 = vpack.c.b16 %v3300, %v3298
        %v3623 = vpack.c.b16 %v3303, %v3301
        %v3624 = vpack.c.b16 %v3304, %v3302
        %v3625 = vpack.c.b16 %v3307, %v3305
        %v3626 = vpack.c.b16 %v3308, %v3306
        %v3627 = vpack.c.b16 %v3311, %v3309
        %v3628 = vpack.c.b16 %v3312, %v3310
        %v3629 = vpack.c.b16 %v3315, %v3313
        %v3630 = vpack.c.b16 %v3316, %v3314
        %v3631 = vpack.c.b16 %v3319, %v3317
        %v3632 = vpack.c.b16 %v3320, %v3318
        %v3633 = vpack.c.b16 %v3323, %v3321
        %v3634 = vpack.c.b16 %v3324, %v3322
        %v3635 = vpack.c.b16 %v3327, %v3325
        %v3636 = vpack.c.b16 %v3328, %v3326
        %v3637 = vpack.c.b16 %v3331, %v3329
        %v3638 = vpack.c.b16 %v3332, %v3330
        %v3639 = vpack.c.b16 %v3335, %v3333
        %v3640 = vpack.c.b16 %v3336, %v3334
        %v3641 = vpack.c.b16 %v3339, %v3337
        %v3642 = vpack.c.b16 %v3340, %v3338
        %v3643 = vpack.c.b16 %v3343, %v3341
        %v3644 = vpack.c.b16 %v3344, %v3342
        %v3645 = vpack.c.b16 %v3347, %v3345
        %v3646 = vpack.c.b16 %v3348, %v3346
        %v3647 = vpack.c.b16 %v3351, %v3349
        %v3648 = vpack.c.b16 %v3352, %v3350
        %v3649 = vpack.c.b16 %v3355, %v3353
        %v3650 = vpack.c.b16 %v3356, %v3354
        %v3651 = vpack.c.b16 %v3359, %v3357
        %v3652 = vpack.c.b16 %v3360, %v3358
        %v3653 = vpack.c.b16 %v3363, %v3361
        %v3654 = vpack.c.b16 %v3364, %v3362
        %v3655 = vpack.c.b16 %v3367, %v3365
        %v3656 = vpack.c.b16 %v3368, %v3366
        %v3657 = vpack.c.b16 %v3371, %v3369
        %v3658 = vpack.c.b16 %v3372, %v3370
        %v3659 = vpack.c.b16 %v3375, %v3373
        %v3660 = vpack.c.b16 %v3376, %v3374
        %v3661 = vpack.c.b16 %v3379, %v3377
        %v3662 = vpack.c.b16 %v3380, %v3378
        %v3663 = vpack.c.b16 %v3383, %v3381
        %v3664 = vpack.c.b16 %v3384, %v3382
        %v3665 = vpack.c.b16 %v3387, %v3385
        %v3666 = vpack.c.b16 %v3388, %v3386
        %v3667 = vpack.c.b16 %v3391, %v3389
        %v3668 = vpack.c.b16 %v3392, %v3390
        %v3669 = vpack.c.b16 %v3395, %v3393
        %v3670 = vpack.c.b16 %v3396, %v3394
        %v3671 = vpack.c.b16 %v3399, %v3397
        %v3672 = vpack.c.b16 %v3400, %v3398
        %v3673 = vpack.c.b16 %v3403, %v3401
        %v3674 = vpack.c.b16 %v3404, %v3402
        %v3675 = vpack.c.b16 %v3407, %v3405
        %v3676 = vpack.c.b16 %v3408, %v3406
        %v3677 = vpack.c.b16 %v3411, %v3409
        %v3678 = vpack.c.b16 %v3412, %v3410
        %v3679 = vpack.c.b16 %v3415, %v3413
        %v3680 = vpack.c.b16 %v3416, %v3414
        %v3681 = vpack.c.b16 %v3419, %v3417
        %v3682 = vpack.c.b16 %v3420, %v3418
        %v3683 = vpack.c.b16 %v3423, %v3421
        %v3684 = vpack.c.b16 %v3424, %v3422
        %v3685 = vpack.c.b16 %v3427, %v3425
        %v3686 = vpack.c.b16 %v3428, %v3426
        %v3687 = vpack.c.b16 %v3431, %v3429
        %v3688 = vpack.c.b16 %v3432, %v3430
        %v3689 = vpack.c.b16 %v3435, %v3433
        %v3690 = vpack.c.b16 %v3436, %v3434
        %v3691 = vpack.c.b16 %v3439, %v3437
        %v3692 = vpack.c.b16 %v3440, %v3438
        %v3693 = vpack.c.b16 %v3443, %v3441
        %v3694 = vpack.c.b16 %v3444, %v3442
        %vm3945 = vcmask 654336
        %v3947 = vsel %vm3945, %v2432, 0
        %3949 = vmatprep.subr.bf16.mxu0 %v3446
        %3950 = vmatpush1.bf16.msra.mxu0 %v3445
        %3951 = vmatprep.subr.bf16.mxu0 %v3448
        %3952 = vmatpush1.bf16.msra.mxu0 %v3447
        %3953 = vmatprep.subr.bf16.mxu0 %v3450
        %3954 = vmatpush1.bf16.msra.mxu0 %v3449
        %3955 = vmatprep.subr.bf16.mxu0 %v3452
        %3956 = vmatpush1.bf16.msra.mxu0 %v3451
        %3957 = vmatprep.subr.bf16.mxu0 %v3454
        %3958 = vmatpush1.bf16.msra.mxu0 %v3453
        %3959 = vmatprep.subr.bf16.mxu0 %v3456
        %3960 = vmatpush1.bf16.msra.mxu0 %v3455
        %3961 = vmatprep.subr.bf16.mxu0 %v3458
        %3962 = vmatpush1.bf16.msra.mxu0 %v3457
        %3963 = vmatprep.subr.bf16.mxu0 %v3460
        %3964 = vmatpush1.bf16.msra.mxu0 %v3459
        %3965 = vmatprep.subr.bf16.mxu0 %v3462
        %3966 = vmatpush1.bf16.msra.mxu0 %v3461
        %3967 = vmatprep.subr.bf16.mxu0 %v3464
        %3968 = vmatpush1.bf16.msra.mxu0 %v3463
        %3969 = vmatprep.subr.bf16.mxu0 %v3466
        %3970 = vmatpush1.bf16.msra.mxu0 %v3465
        %3971 = vmatprep.subr.bf16.mxu0 %v3468
        %3972 = vmatpush1.bf16.msra.mxu0 %v3467
        %3973 = vmatprep.subr.bf16.mxu0 %v3470
        %3974 = vmatpush1.bf16.msra.mxu0 %v3469
        %3975 = vmatprep.subr.bf16.mxu0 %v3472
        %3976 = vmatpush1.bf16.msra.mxu0 %v3471
        %3977 = vmatprep.subr.bf16.mxu0 %v3474
        %3978 = vmatpush1.bf16.msra.mxu0 %v3473
        %3979 = vmatprep.subr.bf16.mxu0 %v3476
        %3980 = vmatpush1.bf16.msra.mxu0 %v3475
        %3981 = vmatprep.mubr.bf16.mxu0 %v2418
        %3982 = vmatmul.mubr.bf16.gmra.mrb[0].mxu0 %v2417
        %v3983 = vpop.f32.mrb[0].mxu0
        %v3984 = vadd.f32 %v2688, %v3983
        %v3985 = vpop.f32.mrb[0].mxu0
        %v3986 = vadd.f32 %v2692, %v3985
        %v3987 = vpop.f32.mrb[0].mxu0
        %v3988 = vpop.f32.mrb[0].mxu0
        %3989 = vdwg.mxu0
        %3990 = vmatprep.subr.bf16.mxu0 %v3478
        %3991 = vmatpush1.bf16.msra.mxu0 %v3477
        %3992 = vmatprep.subr.bf16.mxu0 %v3480
        %3993 = vmatpush1.bf16.msra.mxu0 %v3479
        %3994 = vmatprep.subr.bf16.mxu0 %v3482
        %3995 = vmatpush1.bf16.msra.mxu0 %v3481
        %3996 = vmatprep.subr.bf16.mxu0 %v3484
        %3997 = vmatpush1.bf16.msra.mxu0 %v3483
        %3998 = vmatprep.subr.bf16.mxu0 %v3486
        %3999 = vmatpush1.bf16.msra.mxu0 %v3485
        %4000 = vmatprep.subr.bf16.mxu0 %v3488
        %4001 = vmatpush1.bf16.msra.mxu0 %v3487
        %4002 = vmatprep.subr.bf16.mxu0 %v3490
        %4003 = vmatpush1.bf16.msra.mxu0 %v3489
        %4004 = vmatprep.subr.bf16.mxu0 %v3492
        %4005 = vmatpush1.bf16.msra.mxu0 %v3491
        %4006 = vmatprep.subr.bf16.mxu0 %v3494
        %4007 = vmatpush1.bf16.msra.mxu0 %v3493
        %4008 = vmatprep.subr.bf16.mxu0 %v3496
        %4009 = vmatpush1.bf16.msra.mxu0 %v3495
        %4010 = vmatprep.subr.bf16.mxu0 %v3498
        %4011 = vmatpush1.bf16.msra.mxu0 %v3497
        %4012 = vmatprep.subr.bf16.mxu0 %v3500
        %4013 = vmatpush1.bf16.msra.mxu0 %v3499
        %4014 = vmatprep.subr.bf16.mxu0 %v3502
        %4015 = vmatpush1.bf16.msra.mxu0 %v3501
        %4016 = vmatprep.subr.bf16.mxu0 %v3504
        %4017 = vmatpush1.bf16.msra.mxu0 %v3503
        %4018 = vmatprep.subr.bf16.mxu0 %v3506
        %4019 = vmatpush1.bf16.msra.mxu0 %v3505
        %4020 = vmatprep.subr.bf16.mxu0 %v3508
        %4021 = vmatpush1.bf16.msra.mxu0 %v3507
        %4022 = vmatprep.mubr.bf16.mxu0 %v2420
        %4023 = vmatmul.mubr.bf16.gmra.mrb[0].mxu0 %v2419
        %v4024 = vpop.f32.mrb[0].mxu0
        %v4025 = vadd.f32 %v3984, %v4024
        %v4026 = vpop.f32.mrb[0].mxu0
        %v4027 = vadd.f32 %v3986, %v4026
        %v4028 = vpop.f32.mrb[0].mxu0
        %v4029 = vpop.f32.mrb[0].mxu0
        %4030 = vdwg.mxu0
        %4031 = vmatprep.subr.bf16.mxu0 %v3510
        %4032 = vmatpush1.bf16.msra.mxu0 %v3509
        %4033 = vmatprep.subr.bf16.mxu0 %v3512
        %4034 = vmatpush1.bf16.msra.mxu0 %v3511
        %4035 = vmatprep.subr.bf16.mxu0 %v3514
        %4036 = vmatpush1.bf16.msra.mxu0 %v3513
        %4037 = vmatprep.subr.bf16.mxu0 %v3516
        %4038 = vmatpush1.bf16.msra.mxu0 %v3515
        %4039 = vmatprep.subr.bf16.mxu0 %v3518
        %4040 = vmatpush1.bf16.msra.mxu0 %v3517
        %4041 = vmatprep.subr.bf16.mxu0 %v3520
        %4042 = vmatpush1.bf16.msra.mxu0 %v3519
        %4043 = vmatprep.subr.bf16.mxu0 %v3522
        %4044 = vmatpush1.bf16.msra.mxu0 %v3521
        %4045 = vmatprep.subr.bf16.mxu0 %v3524
        %4046 = vmatpush1.bf16.msra.mxu0 %v3523
        %4047 = vmatprep.subr.bf16.mxu0 %v3526
        %4048 = vmatpush1.bf16.msra.mxu0 %v3525
        %4049 = vmatprep.subr.bf16.mxu0 %v3528
        %4050 = vmatpush1.bf16.msra.mxu0 %v3527
        %4051 = vmatprep.subr.bf16.mxu0 %v3530
        %4052 = vmatpush1.bf16.msra.mxu0 %v3529
        %4053 = vmatprep.subr.bf16.mxu0 %v3532
        %4054 = vmatpush1.bf16.msra.mxu0 %v3531
        %4055 = vmatprep.subr.bf16.mxu0 %v3534
        %4056 = vmatpush1.bf16.msra.mxu0 %v3533
        %4057 = vmatprep.subr.bf16.mxu0 %v3536
        %4058 = vmatpush1.bf16.msra.mxu0 %v3535
        %4059 = vmatprep.subr.bf16.mxu0 %v3538
        %4060 = vmatpush1.bf16.msra.mxu0 %v3537
        %4061 = vmatprep.subr.bf16.mxu0 %v3540
        %4062 = vmatpush1.bf16.msra.mxu0 %v3539
        %4063 = vmatprep.mubr.bf16.mxu0 %v2422
        %4064 = vmatmul.mubr.bf16.gmra.mrb[0].mxu0 %v2421
        %v4065 = vpop.f32.mrb[0].mxu0
        %v4066 = vadd.f32 %v4025, %v4065
        %v4067 = vpop.f32.mrb[0].mxu0
        %v4068 = vadd.f32 %v4027, %v4067
        %v4069 = vpop.f32.mrb[0].mxu0
        %v4070 = vpop.f32.mrb[0].mxu0
        %4071 = vdwg.mxu0
        %4072 = vmatprep.subr.bf16.mxu0 %v3542
        %4073 = vmatpush1.bf16.msra.mxu0 %v3541
        %4074 = vmatprep.subr.bf16.mxu0 %v3544
        %4075 = vmatpush1.bf16.msra.mxu0 %v3543
        %4076 = vmatprep.subr.bf16.mxu0 %v3546
        %4077 = vmatpush1.bf16.msra.mxu0 %v3545
        %4078 = vmatprep.subr.bf16.mxu0 %v3548
        %4079 = vmatpush1.bf16.msra.mxu0 %v3547
        %4080 = vmatprep.subr.bf16.mxu0 %v3550
        %4081 = vmatpush1.bf16.msra.mxu0 %v3549
        %4082 = vmatprep.subr.bf16.mxu0 %v3552
        %4083 = vmatpush1.bf16.msra.mxu0 %v3551
        %4084 = vmatprep.subr.bf16.mxu0 %v3554
        %4085 = vmatpush1.bf16.msra.mxu0 %v3553
        %4086 = vmatprep.subr.bf16.mxu0 %v3556
        %4087 = vmatpush1.bf16.msra.mxu0 %v3555
        %4088 = vmatprep.subr.bf16.mxu0 %v3558
        %4089 = vmatpush1.bf16.msra.mxu0 %v3557
        %4090 = vmatprep.subr.bf16.mxu0 %v3560
        %4091 = vmatpush1.bf16.msra.mxu0 %v3559
        %4092 = vmatprep.subr.bf16.mxu0 %v3562
        %4093 = vmatpush1.bf16.msra.mxu0 %v3561
        %4094 = vmatprep.subr.bf16.mxu0 %v3564
        %4095 = vmatpush1.bf16.msra.mxu0 %v3563
        %4096 = vmatprep.subr.bf16.mxu0 %v3566
        %4097 = vmatpush1.bf16.msra.mxu0 %v3565
        %4098 = vmatprep.subr.bf16.mxu0 %v3568
        %4099 = vmatpush1.bf16.msra.mxu0 %v3567
        %4100 = vmatprep.subr.bf16.mxu0 %v3570
        %4101 = vmatpush1.bf16.msra.mxu0 %v3569
        %4102 = vmatprep.subr.bf16.mxu0 %v3572
        %4103 = vmatpush1.bf16.msra.mxu0 %v3571
        %4104 = vmatprep.mubr.bf16.mxu0 %v2424
        %4105 = vmatmul.mubr.bf16.gmra.mrb[0].mxu0 %v2423
        %v4106 = vpop.f32.mrb[0].mxu0
        %v4107 = vadd.f32 %v4066, %v4106
        %v4108 = vpop.f32.mrb[0].mxu0
        %v4109 = vadd.f32 %v4068, %v4108
        %v4110 = vpop.f32.mrb[0].mxu0
        %v4111 = vpop.f32.mrb[0].mxu0
        %4112 = vdwg.mxu0
        %4113 = vmatprep.subr.bf16.mxu0 %v3574
        %4114 = vmatpush1.bf16.msra.mxu0 %v3573
        %4115 = vmatprep.subr.bf16.mxu0 %v3576
        %4116 = vmatpush1.bf16.msra.mxu0 %v3575
        %4117 = vmatprep.subr.bf16.mxu0 %v3578
        %4118 = vmatpush1.bf16.msra.mxu0 %v3577
        %4119 = vmatprep.subr.bf16.mxu0 %v3580
        %4120 = vmatpush1.bf16.msra.mxu0 %v3579
        %4121 = vmatprep.subr.bf16.mxu0 %v3582
        %4122 = vmatpush1.bf16.msra.mxu0 %v3581
        %4123 = vmatprep.subr.bf16.mxu0 %v3584
        %4124 = vmatpush1.bf16.msra.mxu0 %v3583
        %4125 = vmatprep.subr.bf16.mxu0 %v3586
        %4126 = vmatpush1.bf16.msra.mxu0 %v3585
        %4127 = vmatprep.subr.bf16.mxu0 %v3588
        %4128 = vmatpush1.bf16.msra.mxu0 %v3587
        %4129 = vmatprep.subr.bf16.mxu0 %v3590
        %4130 = vmatpush1.bf16.msra.mxu0 %v3589
        %4131 = vmatprep.subr.bf16.mxu0 %v3592
        %4132 = vmatpush1.bf16.msra.mxu0 %v3591
        %4133 = vmatprep.subr.bf16.mxu0 %v3594
        %4134 = vmatpush1.bf16.msra.mxu0 %v3593
        %4135 = vmatprep.subr.bf16.mxu0 %v3596
        %4136 = vmatpush1.bf16.msra.mxu0 %v3595
        %4137 = vmatprep.subr.bf16.mxu0 %v3598
        %4138 = vmatpush1.bf16.msra.mxu0 %v3597
        %4139 = vmatprep.subr.bf16.mxu0 %v3600
        %4140 = vmatpush1.bf16.msra.mxu0 %v3599
        %4141 = vmatprep.subr.bf16.mxu0 %v3602
        %4142 = vmatpush1.bf16.msra.mxu0 %v3601
        %4143 = vmatprep.subr.bf16.mxu0 %v3604
        %4144 = vmatpush1.bf16.msra.mxu0 %v3603
        %4145 = vmatprep.mubr.bf16.mxu0 %v2426
        %4146 = vmatmul.mubr.bf16.gmra.mrb[0].mxu0 %v2425
        %v4147 = vpop.f32.mrb[0].mxu0
        %v4148 = vadd.f32 %v4107, %v4147
        %v4149 = vpop.f32.mrb[0].mxu0
        %v4150 = vadd.f32 %v4109, %v4149
        %v4151 = vpop.f32.mrb[0].mxu0
        %v4152 = vpop.f32.mrb[0].mxu0
        %4153 = vdwg.mxu0
        %4154 = vmatprep.subr.bf16.mxu0 %v3606
        %4155 = vmatpush1.bf16.msra.mxu0 %v3605
        %4156 = vmatprep.subr.bf16.mxu0 %v3608
        %4157 = vmatpush1.bf16.msra.mxu0 %v3607
        %4158 = vmatprep.subr.bf16.mxu0 %v3610
        %4159 = vmatpush1.bf16.msra.mxu0 %v3609
        %4160 = vmatprep.subr.bf16.mxu0 %v3612
        %4161 = vmatpush1.bf16.msra.mxu0 %v3611
        %4162 = vmatprep.subr.bf16.mxu0 %v3614
        %4163 = vmatpush1.bf16.msra.mxu0 %v3613
        %4164 = vmatprep.subr.bf16.mxu0 %v3616
        %4165 = vmatpush1.bf16.msra.mxu0 %v3615
        %4166 = vmatprep.subr.bf16.mxu0 %v3618
        %4167 = vmatpush1.bf16.msra.mxu0 %v3617
        %4168 = vmatprep.subr.bf16.mxu0 %v3620
        %4169 = vmatpush1.bf16.msra.mxu0 %v3619
        %4170 = vmatprep.subr.bf16.mxu0 %v3622
        %4171 = vmatpush1.bf16.msra.mxu0 %v3621
        %4172 = vmatprep.subr.bf16.mxu0 %v3624
        %4173 = vmatpush1.bf16.msra.mxu0 %v3623
        %4174 = vmatprep.subr.bf16.mxu0 %v3626
        %4175 = vmatpush1.bf16.msra.mxu0 %v3625
        %4176 = vmatprep.subr.bf16.mxu0 %v3628
        %4177 = vmatpush1.bf16.msra.mxu0 %v3627
        %4178 = vmatprep.subr.bf16.mxu0 %v3630
        %4179 = vmatpush1.bf16.msra.mxu0 %v3629
        %4180 = vmatprep.subr.bf16.mxu0 %v3632
        %4181 = vmatpush1.bf16.msra.mxu0 %v3631
        %4182 = vmatprep.subr.bf16.mxu0 %v3634
        %4183 = vmatpush1.bf16.msra.mxu0 %v3633
        %4184 = vmatprep.subr.bf16.mxu0 %v3636
        %4185 = vmatpush1.bf16.msra.mxu0 %v3635
        %4186 = vmatprep.mubr.bf16.mxu0 %v2428
        %4187 = vmatmul.mubr.bf16.gmra.mrb[0].mxu0 %v2427
        %v4188 = vpop.f32.mrb[0].mxu0
        %v4189 = vadd.f32 %v4148, %v4188
        %v4190 = vpop.f32.mrb[0].mxu0
        %v4191 = vadd.f32 %v4150, %v4190
        %v4192 = vpop.f32.mrb[0].mxu0
        %v4193 = vpop.f32.mrb[0].mxu0
        %4194 = vdwg.mxu0
        %4195 = vmatprep.subr.bf16.mxu0 %v3638
        %4196 = vmatpush1.bf16.msra.mxu0 %v3637
        %4197 = vmatprep.subr.bf16.mxu0 %v3640
        %4198 = vmatpush1.bf16.msra.mxu0 %v3639
        %4199 = vmatprep.subr.bf16.mxu0 %v3642
        %4200 = vmatpush1.bf16.msra.mxu0 %v3641
        %4201 = vmatprep.subr.bf16.mxu0 %v3644
        %4202 = vmatpush1.bf16.msra.mxu0 %v3643
        %4203 = vmatprep.subr.bf16.mxu0 %v3646
        %4204 = vmatpush1.bf16.msra.mxu0 %v3645
        %4205 = vmatprep.subr.bf16.mxu0 %v3648
        %4206 = vmatpush1.bf16.msra.mxu0 %v3647
        %4207 = vmatprep.subr.bf16.mxu0 %v3650
        %4208 = vmatpush1.bf16.msra.mxu0 %v3649
        %4209 = vmatprep.subr.bf16.mxu0 %v3652
        %4210 = vmatpush1.bf16.msra.mxu0 %v3651
        %4211 = vmatprep.subr.bf16.mxu0 %v3654
        %4212 = vmatpush1.bf16.msra.mxu0 %v3653
        %4213 = vmatprep.subr.bf16.mxu0 %v3656
        %4214 = vmatpush1.bf16.msra.mxu0 %v3655
        %4215 = vmatprep.subr.bf16.mxu0 %v3658
        %4216 = vmatpush1.bf16.msra.mxu0 %v3657
        %4217 = vmatprep.subr.bf16.mxu0 %v3660
        %4218 = vmatpush1.bf16.msra.mxu0 %v3659
        %4219 = vmatprep.subr.bf16.mxu0 %v3662
        %4220 = vmatpush1.bf16.msra.mxu0 %v3661
        %4221 = vmatprep.subr.bf16.mxu0 %v3664
        %4222 = vmatpush1.bf16.msra.mxu0 %v3663
        %4223 = vmatprep.subr.bf16.mxu0 %v3666
        %4224 = vmatpush1.bf16.msra.mxu0 %v3665
        %4225 = vmatprep.subr.bf16.mxu0 %v3668
        %4226 = vmatpush1.bf16.msra.mxu0 %v3667
        %4227 = vmatprep.mubr.bf16.mxu0 %v2430
        %4228 = vmatmul.mubr.bf16.gmra.mrb[0].mxu0 %v2429
        %v4229 = vpop.f32.mrb[0].mxu0
        %v4230 = vadd.f32 %v4189, %v4229
        %v4231 = vpop.f32.mrb[0].mxu0
        %v4232 = vadd.f32 %v4191, %v4231
        %v4233 = vpop.f32.mrb[0].mxu0
        %v4234 = vpop.f32.mrb[0].mxu0
        %4235 = vdwg.mxu0
        %4236 = vmatprep.subr.bf16.mxu0 %v3670
        %4237 = vmatpush1.bf16.msra.mxu0 %v3669
        %4238 = vmatprep.subr.bf16.mxu0 %v3672
        %4239 = vmatpush1.bf16.msra.mxu0 %v3671
        %4240 = vmatprep.subr.bf16.mxu0 %v3674
        %4241 = vmatpush1.bf16.msra.mxu0 %v3673
        %4242 = vmatprep.subr.bf16.mxu0 %v3676
        %4243 = vmatpush1.bf16.msra.mxu0 %v3675
        %4244 = vmatprep.subr.bf16.mxu0 %v3678
        %4245 = vmatpush1.bf16.msra.mxu0 %v3677
        %4246 = vmatprep.subr.bf16.mxu0 %v3680
        %4247 = vmatpush1.bf16.msra.mxu0 %v3679
        %4248 = vmatprep.subr.bf16.mxu0 %v3682
        %4249 = vmatpush1.bf16.msra.mxu0 %v3681
        %4250 = vmatprep.subr.bf16.mxu0 %v3684
        %4251 = vmatpush1.bf16.msra.mxu0 %v3683
        %4252 = vmatprep.subr.bf16.mxu0 %v3686
        %4253 = vmatpush1.bf16.msra.mxu0 %v3685
        %4254 = vmatprep.subr.bf16.mxu0 %v3688
        %4255 = vmatpush1.bf16.msra.mxu0 %v3687
        %4256 = vmatprep.subr.bf16.mxu0 %v3690
        %4257 = vmatpush1.bf16.msra.mxu0 %v3689
        %4258 = vmatprep.subr.bf16.mxu0 %v3692
        %4259 = vmatpush1.bf16.msra.mxu0 %v3691
        %4260 = vmatprep.subr.bf16.mxu0 %v3694
        %4261 = vmatpush1.bf16.msra.mxu0 %v3693
        %4262 = vmatprep.subr.bf16.mxu0 0
        %4263 = vmatpush1.bf16.msra.mxu0 0
        %4264 = vmatprep.subr.bf16.mxu0 0
        %4265 = vmatpush1.bf16.msra.mxu0 0
        %4266 = vmatprep.subr.bf16.mxu0 0
        %4267 = vmatpush1.bf16.msra.mxu0 0
        %4268 = vmatprep.mubr.bf16.mxu0 %v3947
        %4269 = vmatmul.mubr.bf16.gmra.mrb[0].mxu0 %v2431
        %v4270 = vpop.f32.mrb[0].mxu0
        %v4271 = vadd.f32 %v4230, %v4270
        %v4272 = vpop.f32.mrb[0].mxu0
        %v4273 = vadd.f32 %v4232, %v4272
        %v4274 = vpop.f32.mrb[0].mxu0
        %v4275 = vpop.f32.mrb[0].mxu0
        %4276 = vdwg.mxu0
        %v4277 = vmax.f32 %v4271, 0.0
        %v4278 = vmax.f32 %v4273, 0.0
        %v4279 = vld [vmem:[#allocation2] sm:$0xff]
        %v4280 = vld [vmem:[#allocation2 + $0x8] sm:$0xff]
        %v4281 = vld [vmem:[#allocation2 + $0x10] sm:$0xff]
        %v4282 = vld [vmem:[#allocation2 + $0x18] sm:$0x3]
        %v4283 = vpack.c.bf16 %v4277, %v4277
        %v4284 = vpack.c.bf16 %v4278, %v4278
        %v4285 = vld [vmem:[%s416] sm:$0xff]
        %v4286 = vld [vmem:[%s416 + $0x8] sm:$0xff]
        %v4287 = vld [vmem:[%s416 + $0x10] sm:$0xff]
        %v4288 = vld [vmem:[%s416 + $0x18] sm:$0xff]
        %v4289 = vld [vmem:[%s416 + $0x20] sm:$0xff]
        %v4290 = vld [vmem:[%s416 + $0x28] sm:$0xff]
        %v4291 = vld [vmem:[%s416 + $0x30] sm:$0xf]
        %v4292 = vld [vmem:[%s416 + $0x34] sm:$0xff]
        %v4293 = vld [vmem:[%s416 + $0x3c] sm:$0xff]
        %v4294 = vld [vmem:[%s416 + $0x44] sm:$0xff]
        %v4295 = vld [vmem:[%s416 + $0x4c] sm:$0xff]
        %v4296 = vld [vmem:[%s416 + $0x54] sm:$0xff]
        %v4297 = vld [vmem:[%s416 + $0x5c] sm:$0xff]
        %v4298 = vld [vmem:[%s416 + $0x64] sm:$0xf]
        %v4299 = vld [vmem:[%s416 + $0x68] sm:$0xff]
        %v4300 = vld [vmem:[%s416 + $0x70] sm:$0xff]
        %v4301 = vld [vmem:[%s416 + $0x78] sm:$0xff]
        %v4302 = vld [vmem:[%s416 + $0x80] sm:$0xff]
        %v4303 = vld [vmem:[%s416 + $0x88] sm:$0xff]
        %v4304 = vld [vmem:[%s416 + $0x90] sm:$0xff]
        %v4305 = vld [vmem:[%s416 + $0x98] sm:$0xf]
        %v4306 = vld [vmem:[%s416 + $0x9c] sm:$0xff]
        %v4307 = vld [vmem:[%s416 + $0xa4] sm:$0xff]
        %v4308 = vld [vmem:[%s416 + $0xac] sm:$0xff]
        %v4309 = vld [vmem:[%s416 + $0xb4] sm:$0xff]
        %v4310 = vld [vmem:[%s416 + $0xbc] sm:$0xff]
        %v4311 = vld [vmem:[%s416 + $0xc4] sm:$0xff]
        %v4312 = vld [vmem:[%s416 + $0xcc] sm:$0xf]
        %v4313 = vld [vmem:[%s416 + $0xd0] sm:$0xff]
        %v4314 = vld [vmem:[%s416 + $0xd8] sm:$0xff]
        %v4315 = vld [vmem:[%s416 + $0xe0] sm:$0xff]
        %v4316 = vld [vmem:[%s416 + $0xe8] sm:$0xff]
        %v4317 = vld [vmem:[%s416 + $0xf0] sm:$0xff]
        %v4318 = vld [vmem:[%s416 + $0xf8] sm:$0xff]
        %v4319 = vld [vmem:[%s416 + $0x100] sm:$0xf]
        %v4320 = vld [vmem:[%s416 + $0x104] sm:$0xff]
        %v4321 = vld [vmem:[%s416 + $0x10c] sm:$0xff]
        %v4322 = vld [vmem:[%s416 + $0x114] sm:$0xff]
        %v4323 = vld [vmem:[%s416 + $0x11c] sm:$0xff]
        %v4324 = vld [vmem:[%s416 + $0x124] sm:$0xff]
        %v4325 = vld [vmem:[%s416 + $0x12c] sm:$0xff]
        %v4326 = vld [vmem:[%s416 + $0x134] sm:$0xf]
        %v4327 = vld [vmem:[%s416 + $0x138] sm:$0xff]
        %v4328 = vld [vmem:[%s416 + $0x140] sm:$0xff]
        %v4329 = vld [vmem:[%s416 + $0x148] sm:$0xff]
        %v4330 = vld [vmem:[%s416 + $0x150] sm:$0xff]
        %v4331 = vld [vmem:[%s416 + $0x158] sm:$0xff]
        %v4332 = vld [vmem:[%s416 + $0x160] sm:$0xff]
        %v4333 = vld [vmem:[%s416 + $0x168] sm:$0xf]
        %v4334 = vld [vmem:[%s416 + $0x16c] sm:$0xff]
        %v4335 = vld [vmem:[%s416 + $0x174] sm:$0xff]
        %v4336 = vld [vmem:[%s416 + $0x17c] sm:$0xff]
        %v4337 = vld [vmem:[%s416 + $0x184] sm:$0xff]
        %v4338 = vld [vmem:[%s416 + $0x18c] sm:$0xff]
        %v4339 = vld [vmem:[%s416 + $0x194] sm:$0xff]
        %v4340 = vld [vmem:[%s416 + $0x19c] sm:$0xf]
        %v4341 = vld [vmem:[%s416 + $0x1a0] sm:$0xff]
        %v4342 = vld [vmem:[%s416 + $0x1a8] sm:$0xff]
        %v4343 = vld [vmem:[%s416 + $0x1b0] sm:$0xff]
        %v4344 = vld [vmem:[%s416 + $0x1b8] sm:$0xff]
        %v4345 = vld [vmem:[%s416 + $0x1c0] sm:$0xff]
        %v4346 = vld [vmem:[%s416 + $0x1c8] sm:$0xff]
        %v4347 = vld [vmem:[%s416 + $0x1d0] sm:$0xf]
        %v4348 = vld [vmem:[%s416 + $0x1d4] sm:$0xff]
        %v4349 = vld [vmem:[%s416 + $0x1dc] sm:$0xff]
        %v4350 = vld [vmem:[%s416 + $0x1e4] sm:$0xff]
        %v4351 = vld [vmem:[%s416 + $0x1ec] sm:$0xff]
        %v4352 = vld [vmem:[%s416 + $0x1f4] sm:$0xff]
        %v4353 = vld [vmem:[%s416 + $0x1fc] sm:$0xff]
        %v4354 = vld [vmem:[%s416 + $0x204] sm:$0xf]
        %v4355 = vld [vmem:[%s416 + $0x208] sm:$0xff]
        %v4356 = vld [vmem:[%s416 + $0x210] sm:$0xff]
        %v4357 = vld [vmem:[%s416 + $0x218] sm:$0xff]
        %v4358 = vld [vmem:[%s416 + $0x220] sm:$0xff]
        %v4359 = vld [vmem:[%s416 + $0x228] sm:$0xff]
        %v4360 = vld [vmem:[%s416 + $0x230] sm:$0xff]
        %v4361 = vld [vmem:[%s416 + $0x238] sm:$0xf]
        %v4362 = vld [vmem:[%s416 + $0x23c] sm:$0xff]
        %v4363 = vld [vmem:[%s416 + $0x244] sm:$0xff]
        %v4364 = vld [vmem:[%s416 + $0x24c] sm:$0xff]
        %v4365 = vld [vmem:[%s416 + $0x254] sm:$0xff]
        %v4366 = vld [vmem:[%s416 + $0x25c] sm:$0xff]
        %v4367 = vld [vmem:[%s416 + $0x264] sm:$0xff]
        %v4368 = vld [vmem:[%s416 + $0x26c] sm:$0xf]
        %v4369 = vld [vmem:[%s416 + $0x270] sm:$0xff]
        %v4370 = vld [vmem:[%s416 + $0x278] sm:$0xff]
        %v4371 = vld [vmem:[%s416 + $0x280] sm:$0xff]
        %v4372 = vld [vmem:[%s416 + $0x288] sm:$0xff]
        %v4373 = vld [vmem:[%s416 + $0x290] sm:$0xff]
        %v4374 = vld [vmem:[%s416 + $0x298] sm:$0xff]
        %v4375 = vld [vmem:[%s416 + $0x2a0] sm:$0xf]
        %v4376 = vld [vmem:[%s416 + $0x2a4] sm:$0xff]
        %v4377 = vld [vmem:[%s416 + $0x2ac] sm:$0xff]
        %v4378 = vld [vmem:[%s416 + $0x2b4] sm:$0xff]
        %v4379 = vld [vmem:[%s416 + $0x2bc] sm:$0xff]
        %v4380 = vld [vmem:[%s416 + $0x2c4] sm:$0xff]
        %v4381 = vld [vmem:[%s416 + $0x2cc] sm:$0xff]
        %v4382 = vld [vmem:[%s416 + $0x2d4] sm:$0xf]
        %v4383 = vld [vmem:[%s416 + $0x2d8] sm:$0xff]
        %v4384 = vld [vmem:[%s416 + $0x2e0] sm:$0xff]
        %v4385 = vld [vmem:[%s416 + $0x2e8] sm:$0xff]
        %v4386 = vld [vmem:[%s416 + $0x2f0] sm:$0xff]
        %v4387 = vld [vmem:[%s416 + $0x2f8] sm:$0xff]
        %v4388 = vld [vmem:[%s416 + $0x300] sm:$0xff]
        %v4389 = vld [vmem:[%s416 + $0x308] sm:$0xf]
        %v4390 = vld [vmem:[%s416 + $0x30c] sm:$0xff]
        %v4391 = vld [vmem:[%s416 + $0x314] sm:$0xff]
        %v4392 = vld [vmem:[%s416 + $0x31c] sm:$0xff]
        %v4393 = vld [vmem:[%s416 + $0x324] sm:$0xff]
        %v4394 = vld [vmem:[%s416 + $0x32c] sm:$0xff]
        %v4395 = vld [vmem:[%s416 + $0x334] sm:$0xff]
        %v4396 = vld [vmem:[%s416 + $0x33c] sm:$0xf]
        %v4397 = vld [vmem:[%s416 + $0x340] sm:$0xff]
        %v4398 = vld [vmem:[%s416 + $0x348] sm:$0xff]
        %v4399 = vld [vmem:[%s416 + $0x350] sm:$0xff]
        %v4400 = vld [vmem:[%s416 + $0x358] sm:$0xff]
        %v4401 = vld [vmem:[%s416 + $0x360] sm:$0xff]
        %v4402 = vld [vmem:[%s416 + $0x368] sm:$0xff]
        %v4403 = vld [vmem:[%s416 + $0x370] sm:$0xf]
        %v4404 = vld [vmem:[%s416 + $0x374] sm:$0xff]
        %v4405 = vld [vmem:[%s416 + $0x37c] sm:$0xff]
        %v4406 = vld [vmem:[%s416 + $0x384] sm:$0xff]
        %v4407 = vld [vmem:[%s416 + $0x38c] sm:$0xff]
        %v4408 = vld [vmem:[%s416 + $0x394] sm:$0xff]
        %v4409 = vld [vmem:[%s416 + $0x39c] sm:$0xff]
        %v4410 = vld [vmem:[%s416 + $0x3a4] sm:$0xf]
        %v4411 = vld [vmem:[%s416 + $0x3a8] sm:$0xff]
        %v4412 = vld [vmem:[%s416 + $0x3b0] sm:$0xff]
        %v4413 = vld [vmem:[%s416 + $0x3b8] sm:$0xff]
        %v4414 = vld [vmem:[%s416 + $0x3c0] sm:$0xff]
        %v4415 = vld [vmem:[%s416 + $0x3c8] sm:$0xff]
        %v4416 = vld [vmem:[%s416 + $0x3d0] sm:$0xff]
        %v4417 = vld [vmem:[%s416 + $0x3d8] sm:$0xf]
        %v4418 = vld [vmem:[%s416 + $0x3dc] sm:$0xff]
        %v4419 = vld [vmem:[%s416 + $0x3e4] sm:$0xff]
        %v4420 = vld [vmem:[%s416 + $0x3ec] sm:$0xff]
        %v4421 = vld [vmem:[%s416 + $0x3f4] sm:$0xff]
        %v4422 = vld [vmem:[%s416 + $0x3fc] sm:$0xff]
        %v4423 = vld [vmem:[%s416 + $0x404] sm:$0xff]
        %v4424 = vld [vmem:[%s416 + $0x40c] sm:$0xf]
        %v4425 = vld [vmem:[%s416 + $0x410] sm:$0xff]
        %v4426 = vld [vmem:[%s416 + $0x418] sm:$0xff]
        %v4427 = vld [vmem:[%s416 + $0x420] sm:$0xff]
        %v4428 = vld [vmem:[%s416 + $0x428] sm:$0xff]
        %v4429 = vld [vmem:[%s416 + $0x430] sm:$0xff]
        %v4430 = vld [vmem:[%s416 + $0x438] sm:$0xff]
        %v4431 = vld [vmem:[%s416 + $0x440] sm:$0xf]
        %v4432 = vld [vmem:[%s416 + $0x444] sm:$0xff]
        %v4433 = vld [vmem:[%s416 + $0x44c] sm:$0xff]
        %v4434 = vld [vmem:[%s416 + $0x454] sm:$0xff]
        %v4435 = vld [vmem:[%s416 + $0x45c] sm:$0xff]
        %v4436 = vld [vmem:[%s416 + $0x464] sm:$0xff]
        %v4437 = vld [vmem:[%s416 + $0x46c] sm:$0xff]
        %v4438 = vld [vmem:[%s416 + $0x474] sm:$0xf]
        %v4439 = vld [vmem:[%s416 + $0x478] sm:$0xff]
        %v4440 = vld [vmem:[%s416 + $0x480] sm:$0xff]
        %v4441 = vld [vmem:[%s416 + $0x488] sm:$0xff]
        %v4442 = vld [vmem:[%s416 + $0x490] sm:$0xff]
        %v4443 = vld [vmem:[%s416 + $0x498] sm:$0xff]
        %v4444 = vld [vmem:[%s416 + $0x4a0] sm:$0xff]
        %v4445 = vld [vmem:[%s416 + $0x4a8] sm:$0xf]
        %v4446 = vld [vmem:[%s416 + $0x4ac] sm:$0xff]
        %v4447 = vld [vmem:[%s416 + $0x4b4] sm:$0xff]
        %v4448 = vld [vmem:[%s416 + $0x4bc] sm:$0xff]
        %v4449 = vld [vmem:[%s416 + $0x4c4] sm:$0xff]
        %v4450 = vld [vmem:[%s416 + $0x4cc] sm:$0xff]
        %v4451 = vld [vmem:[%s416 + $0x4d4] sm:$0xff]
        %v4452 = vld [vmem:[%s416 + $0x4dc] sm:$0xf]
        %v4453 = vld [vmem:[%s416 + $0x4e0] sm:$0xff]
        %v4454 = vld [vmem:[%s416 + $0x4e8] sm:$0xff]
        %v4455 = vld [vmem:[%s416 + $0x4f0] sm:$0xff]
        %v4456 = vld [vmem:[%s416 + $0x4f8] sm:$0xff]
        %v4457 = vld [vmem:[%s416 + $0x500] sm:$0xff]
        %v4458 = vld [vmem:[%s416 + $0x508] sm:$0xff]
        %v4459 = vld [vmem:[%s416 + $0x510] sm:$0xf]
        %v4635 = vunpack.c.l.b16 %v4285
        %v4636 = vunpack.c.h.b16 %v4285
        %v4637 = vunpack.c.l.b16 %v4286
        %v4638 = vunpack.c.h.b16 %v4286
        %v4639 = vunpack.c.l.b16 %v4287
        %v4640 = vunpack.c.h.b16 %v4287
        %v4641 = vunpack.c.l.b16 %v4288
        %v4642 = vunpack.c.h.b16 %v4288
        %v4643 = vunpack.c.l.b16 %v4289
        %v4644 = vunpack.c.h.b16 %v4289
        %v4645 = vunpack.c.l.b16 %v4290
        %v4646 = vunpack.c.h.b16 %v4290
        %v4647 = vunpack.c.l.b16 %v4291
        %v4648 = vunpack.c.l.b16 %v4292
        %v4649 = vunpack.c.h.b16 %v4292
        %v4650 = vunpack.c.l.b16 %v4293
        %v4651 = vunpack.c.h.b16 %v4293
        %v4652 = vunpack.c.l.b16 %v4294
        %v4653 = vunpack.c.h.b16 %v4294
        %v4654 = vunpack.c.l.b16 %v4295
        %v4655 = vunpack.c.h.b16 %v4295
        %v4656 = vunpack.c.l.b16 %v4296
        %v4657 = vunpack.c.h.b16 %v4296
        %v4658 = vunpack.c.l.b16 %v4297
        %v4659 = vunpack.c.h.b16 %v4297
        %v4660 = vunpack.c.l.b16 %v4298
        %v4661 = vunpack.c.l.b16 %v4299
        %v4662 = vunpack.c.h.b16 %v4299
        %v4663 = vunpack.c.l.b16 %v4300
        %v4664 = vunpack.c.h.b16 %v4300
        %v4665 = vunpack.c.l.b16 %v4301
        %v4666 = vunpack.c.h.b16 %v4301
        %v4667 = vunpack.c.l.b16 %v4302
        %v4668 = vunpack.c.h.b16 %v4302
        %v4669 = vunpack.c.l.b16 %v4303
        %v4670 = vunpack.c.h.b16 %v4303
        %v4671 = vunpack.c.l.b16 %v4304
        %v4672 = vunpack.c.h.b16 %v4304
        %v4673 = vunpack.c.l.b16 %v4305
        %v4674 = vunpack.c.l.b16 %v4306
        %v4675 = vunpack.c.h.b16 %v4306
        %v4676 = vunpack.c.l.b16 %v4307
        %v4677 = vunpack.c.h.b16 %v4307
        %v4678 = vunpack.c.l.b16 %v4308
        %v4679 = vunpack.c.h.b16 %v4308
        %v4680 = vunpack.c.l.b16 %v4309
        %v4681 = vunpack.c.h.b16 %v4309
        %v4682 = vunpack.c.l.b16 %v4310
        %v4683 = vunpack.c.h.b16 %v4310
        %v4684 = vunpack.c.l.b16 %v4311
        %v4685 = vunpack.c.h.b16 %v4311
        %v4686 = vunpack.c.l.b16 %v4312
        %v4687 = vunpack.c.l.b16 %v4313
        %v4688 = vunpack.c.h.b16 %v4313
        %v4689 = vunpack.c.l.b16 %v4314
        %v4690 = vunpack.c.h.b16 %v4314
        %v4691 = vunpack.c.l.b16 %v4315
        %v4692 = vunpack.c.h.b16 %v4315
        %v4693 = vunpack.c.l.b16 %v4316
        %v4694 = vunpack.c.h.b16 %v4316
        %v4695 = vunpack.c.l.b16 %v4317
        %v4696 = vunpack.c.h.b16 %v4317
        %v4697 = vunpack.c.l.b16 %v4318
        %v4698 = vunpack.c.h.b16 %v4318
        %v4699 = vunpack.c.l.b16 %v4319
        %v4700 = vunpack.c.l.b16 %v4320
        %v4701 = vunpack.c.h.b16 %v4320
        %v4702 = vunpack.c.l.b16 %v4321
        %v4703 = vunpack.c.h.b16 %v4321
        %v4704 = vunpack.c.l.b16 %v4322
        %v4705 = vunpack.c.h.b16 %v4322
        %v4706 = vunpack.c.l.b16 %v4323
        %v4707 = vunpack.c.h.b16 %v4323
        %v4708 = vunpack.c.l.b16 %v4324
        %v4709 = vunpack.c.h.b16 %v4324
        %v4710 = vunpack.c.l.b16 %v4325
        %v4711 = vunpack.c.h.b16 %v4325
        %v4712 = vunpack.c.l.b16 %v4326
        %v4713 = vunpack.c.l.b16 %v4327
        %v4714 = vunpack.c.h.b16 %v4327
        %v4715 = vunpack.c.l.b16 %v4328
        %v4716 = vunpack.c.h.b16 %v4328
        %v4717 = vunpack.c.l.b16 %v4329
        %v4718 = vunpack.c.h.b16 %v4329
        %v4719 = vunpack.c.l.b16 %v4330
        %v4720 = vunpack.c.h.b16 %v4330
        %v4721 = vunpack.c.l.b16 %v4331
        %v4722 = vunpack.c.h.b16 %v4331
        %v4723 = vunpack.c.l.b16 %v4332
        %v4724 = vunpack.c.h.b16 %v4332
        %v4725 = vunpack.c.l.b16 %v4333
        %v4726 = vunpack.c.l.b16 %v4334
        %v4727 = vunpack.c.h.b16 %v4334
        %v4728 = vunpack.c.l.b16 %v4335
        %v4729 = vunpack.c.h.b16 %v4335
        %v4730 = vunpack.c.l.b16 %v4336
        %v4731 = vunpack.c.h.b16 %v4336
        %v4732 = vunpack.c.l.b16 %v4337
        %v4733 = vunpack.c.h.b16 %v4337
        %v4734 = vunpack.c.l.b16 %v4338
        %v4735 = vunpack.c.h.b16 %v4338
        %v4736 = vunpack.c.l.b16 %v4339
        %v4737 = vunpack.c.h.b16 %v4339
        %v4738 = vunpack.c.l.b16 %v4340
        %v4739 = vunpack.c.l.b16 %v4341
        %v4740 = vunpack.c.h.b16 %v4341
        %v4741 = vunpack.c.l.b16 %v4342
        %v4742 = vunpack.c.h.b16 %v4342
        %v4743 = vunpack.c.l.b16 %v4343
        %v4744 = vunpack.c.h.b16 %v4343
        %v4745 = vunpack.c.l.b16 %v4344
        %v4746 = vunpack.c.h.b16 %v4344
        %v4747 = vunpack.c.l.b16 %v4345
        %v4748 = vunpack.c.h.b16 %v4345
        %v4749 = vunpack.c.l.b16 %v4346
        %v4750 = vunpack.c.h.b16 %v4346
        %v4751 = vunpack.c.l.b16 %v4347
        %v4752 = vunpack.c.l.b16 %v4348
        %v4753 = vunpack.c.h.b16 %v4348
        %v4754 = vunpack.c.l.b16 %v4349
        %v4755 = vunpack.c.h.b16 %v4349
        %v4756 = vunpack.c.l.b16 %v4350
        %v4757 = vunpack.c.h.b16 %v4350
        %v4758 = vunpack.c.l.b16 %v4351
        %v4759 = vunpack.c.h.b16 %v4351
        %v4760 = vunpack.c.l.b16 %v4352
        %v4761 = vunpack.c.h.b16 %v4352
        %v4762 = vunpack.c.l.b16 %v4353
        %v4763 = vunpack.c.h.b16 %v4353
        %v4764 = vunpack.c.l.b16 %v4354
        %v4765 = vunpack.c.l.b16 %v4355
        %v4766 = vunpack.c.h.b16 %v4355
        %v4767 = vunpack.c.l.b16 %v4356
        %v4768 = vunpack.c.h.b16 %v4356
        %v4769 = vunpack.c.l.b16 %v4357
        %v4770 = vunpack.c.h.b16 %v4357
        %v4771 = vunpack.c.l.b16 %v4358
        %v4772 = vunpack.c.h.b16 %v4358
        %v4773 = vunpack.c.l.b16 %v4359
        %v4774 = vunpack.c.h.b16 %v4359
        %v4775 = vunpack.c.l.b16 %v4360
        %v4776 = vunpack.c.h.b16 %v4360
        %v4777 = vunpack.c.l.b16 %v4361
        %v4778 = vunpack.c.l.b16 %v4362
        %v4779 = vunpack.c.h.b16 %v4362
        %v4780 = vunpack.c.l.b16 %v4363
        %v4781 = vunpack.c.h.b16 %v4363
        %v4782 = vunpack.c.l.b16 %v4364
        %v4783 = vunpack.c.h.b16 %v4364
        %v4784 = vunpack.c.l.b16 %v4365
        %v4785 = vunpack.c.h.b16 %v4365
        %v4786 = vunpack.c.l.b16 %v4366
        %v4787 = vunpack.c.h.b16 %v4366
        %v4788 = vunpack.c.l.b16 %v4367
        %v4789 = vunpack.c.h.b16 %v4367
        %v4790 = vunpack.c.l.b16 %v4368
        %v4791 = vunpack.c.l.b16 %v4369
        %v4792 = vunpack.c.h.b16 %v4369
        %v4793 = vunpack.c.l.b16 %v4370
        %v4794 = vunpack.c.h.b16 %v4370
        %v4795 = vunpack.c.l.b16 %v4371
        %v4796 = vunpack.c.h.b16 %v4371
        %v4797 = vunpack.c.l.b16 %v4372
        %v4798 = vunpack.c.h.b16 %v4372
        %v4799 = vunpack.c.l.b16 %v4373
        %v4800 = vunpack.c.h.b16 %v4373
        %v4801 = vunpack.c.l.b16 %v4374
        %v4802 = vunpack.c.h.b16 %v4374
        %v4803 = vunpack.c.l.b16 %v4375
        %v4804 = vunpack.c.l.b16 %v4376
        %v4805 = vunpack.c.h.b16 %v4376
        %v4806 = vunpack.c.l.b16 %v4377
        %v4807 = vunpack.c.h.b16 %v4377
        %v4808 = vunpack.c.l.b16 %v4378
        %v4809 = vunpack.c.h.b16 %v4378
        %v4810 = vunpack.c.l.b16 %v4379
        %v4811 = vunpack.c.h.b16 %v4379
        %v4812 = vunpack.c.l.b16 %v4380
        %v4813 = vunpack.c.h.b16 %v4380
        %v4814 = vunpack.c.l.b16 %v4381
        %v4815 = vunpack.c.h.b16 %v4381
        %v4816 = vunpack.c.l.b16 %v4382
        %v4817 = vunpack.c.l.b16 %v4383
        %v4818 = vunpack.c.h.b16 %v4383
        %v4819 = vunpack.c.l.b16 %v4384
        %v4820 = vunpack.c.h.b16 %v4384
        %v4821 = vunpack.c.l.b16 %v4385
        %v4822 = vunpack.c.h.b16 %v4385
        %v4823 = vunpack.c.l.b16 %v4386
        %v4824 = vunpack.c.h.b16 %v4386
        %v4825 = vunpack.c.l.b16 %v4387
        %v4826 = vunpack.c.h.b16 %v4387
        %v4827 = vunpack.c.l.b16 %v4388
        %v4828 = vunpack.c.h.b16 %v4388
        %v4829 = vunpack.c.l.b16 %v4389
        %v4830 = vunpack.c.l.b16 %v4390
        %v4831 = vunpack.c.h.b16 %v4390
        %v4832 = vunpack.c.l.b16 %v4391
        %v4833 = vunpack.c.h.b16 %v4391
        %v4834 = vunpack.c.l.b16 %v4392
        %v4835 = vunpack.c.h.b16 %v4392
        %v4836 = vunpack.c.l.b16 %v4393
        %v4837 = vunpack.c.h.b16 %v4393
        %v4838 = vunpack.c.l.b16 %v4394
        %v4839 = vunpack.c.h.b16 %v4394
        %v4840 = vunpack.c.l.b16 %v4395
        %v4841 = vunpack.c.h.b16 %v4395
        %v4842 = vunpack.c.l.b16 %v4396
        %v4843 = vunpack.c.l.b16 %v4397
        %v4844 = vunpack.c.h.b16 %v4397
        %v4845 = vunpack.c.l.b16 %v4398
        %v4846 = vunpack.c.h.b16 %v4398
        %v4847 = vunpack.c.l.b16 %v4399
        %v4848 = vunpack.c.h.b16 %v4399
        %v4849 = vunpack.c.l.b16 %v4400
        %v4850 = vunpack.c.h.b16 %v4400
        %v4851 = vunpack.c.l.b16 %v4401
        %v4852 = vunpack.c.h.b16 %v4401
        %v4853 = vunpack.c.l.b16 %v4402
        %v4854 = vunpack.c.h.b16 %v4402
        %v4855 = vunpack.c.l.b16 %v4403
        %v4856 = vunpack.c.l.b16 %v4404
        %v4857 = vunpack.c.h.b16 %v4404
        %v4858 = vunpack.c.l.b16 %v4405
        %v4859 = vunpack.c.h.b16 %v4405
        %v4860 = vunpack.c.l.b16 %v4406
        %v4861 = vunpack.c.h.b16 %v4406
        %v4862 = vunpack.c.l.b16 %v4407
        %v4863 = vunpack.c.h.b16 %v4407
        %v4864 = vunpack.c.l.b16 %v4408
        %v4865 = vunpack.c.h.b16 %v4408
        %v4866 = vunpack.c.l.b16 %v4409
        %v4867 = vunpack.c.h.b16 %v4409
        %v4868 = vunpack.c.l.b16 %v4410
        %v4869 = vunpack.c.l.b16 %v4411
        %v4870 = vunpack.c.h.b16 %v4411
        %v4871 = vunpack.c.l.b16 %v4412
        %v4872 = vunpack.c.h.b16 %v4412
        %v4873 = vunpack.c.l.b16 %v4413
        %v4874 = vunpack.c.h.b16 %v4413
        %v4875 = vunpack.c.l.b16 %v4414
        %v4876 = vunpack.c.h.b16 %v4414
        %v4877 = vunpack.c.l.b16 %v4415
        %v4878 = vunpack.c.h.b16 %v4415
        %v4879 = vunpack.c.l.b16 %v4416
        %v4880 = vunpack.c.h.b16 %v4416
        %v4881 = vunpack.c.l.b16 %v4417
        %v4882 = vunpack.c.l.b16 %v4418
        %v4883 = vunpack.c.h.b16 %v4418
        %v4884 = vunpack.c.l.b16 %v4419
        %v4885 = vunpack.c.h.b16 %v4419
        %v4886 = vunpack.c.l.b16 %v4420
        %v4887 = vunpack.c.h.b16 %v4420
        %v4888 = vunpack.c.l.b16 %v4421
        %v4889 = vunpack.c.h.b16 %v4421
        %v4890 = vunpack.c.l.b16 %v4422
        %v4891 = vunpack.c.h.b16 %v4422
        %v4892 = vunpack.c.l.b16 %v4423
        %v4893 = vunpack.c.h.b16 %v4423
        %v4894 = vunpack.c.l.b16 %v4424
        %v4895 = vunpack.c.l.b16 %v4425
        %v4896 = vunpack.c.h.b16 %v4425
        %v4897 = vunpack.c.l.b16 %v4426
        %v4898 = vunpack.c.h.b16 %v4426
        %v4899 = vunpack.c.l.b16 %v4427
        %v4900 = vunpack.c.h.b16 %v4427
        %v4901 = vunpack.c.l.b16 %v4428
        %v4902 = vunpack.c.h.b16 %v4428
        %v4903 = vunpack.c.l.b16 %v4429
        %v4904 = vunpack.c.h.b16 %v4429
        %v4905 = vunpack.c.l.b16 %v4430
        %v4906 = vunpack.c.h.b16 %v4430
        %v4907 = vunpack.c.l.b16 %v4431
        %v4908 = vunpack.c.l.b16 %v4432
        %v4909 = vunpack.c.h.b16 %v4432
        %v4910 = vunpack.c.l.b16 %v4433
        %v4911 = vunpack.c.h.b16 %v4433
        %v4912 = vunpack.c.l.b16 %v4434
        %v4913 = vunpack.c.h.b16 %v4434
        %v4914 = vunpack.c.l.b16 %v4435
        %v4915 = vunpack.c.h.b16 %v4435
        %v4916 = vunpack.c.l.b16 %v4436
        %v4917 = vunpack.c.h.b16 %v4436
        %v4918 = vunpack.c.l.b16 %v4437
        %v4919 = vunpack.c.h.b16 %v4437
        %v4920 = vunpack.c.l.b16 %v4438
        %v4921 = vunpack.c.l.b16 %v4439
        %v4922 = vunpack.c.h.b16 %v4439
        %v4923 = vunpack.c.l.b16 %v4440
        %v4924 = vunpack.c.h.b16 %v4440
        %v4925 = vunpack.c.l.b16 %v4441
        %v4926 = vunpack.c.h.b16 %v4441
        %v4927 = vunpack.c.l.b16 %v4442
        %v4928 = vunpack.c.h.b16 %v4442
        %v4929 = vunpack.c.l.b16 %v4443
        %v4930 = vunpack.c.h.b16 %v4443
        %v4931 = vunpack.c.l.b16 %v4444
        %v4932 = vunpack.c.h.b16 %v4444
        %v4933 = vunpack.c.l.b16 %v4445
        %v4934 = vunpack.c.l.b16 %v4446
        %v4935 = vunpack.c.h.b16 %v4446
        %v4936 = vunpack.c.l.b16 %v4447
        %v4937 = vunpack.c.h.b16 %v4447
        %v4938 = vunpack.c.l.b16 %v4448
        %v4939 = vunpack.c.h.b16 %v4448
        %v4940 = vunpack.c.l.b16 %v4449
        %v4941 = vunpack.c.h.b16 %v4449
        %v4942 = vunpack.c.l.b16 %v4450
        %v4943 = vunpack.c.h.b16 %v4450
        %v4944 = vunpack.c.l.b16 %v4451
        %v4945 = vunpack.c.h.b16 %v4451
        %v4946 = vunpack.c.l.b16 %v4452
        %v4947 = vunpack.c.l.b16 %v4453
        %v4948 = vunpack.c.h.b16 %v4453
        %v4949 = vunpack.c.l.b16 %v4454
        %v4950 = vunpack.c.h.b16 %v4454
        %v4951 = vunpack.c.l.b16 %v4455
        %v4952 = vunpack.c.h.b16 %v4455
        %v4953 = vunpack.c.l.b16 %v4456
        %v4954 = vunpack.c.h.b16 %v4456
        %v4955 = vunpack.c.l.b16 %v4457
        %v4956 = vunpack.c.h.b16 %v4457
        %v4957 = vunpack.c.l.b16 %v4458
        %v4958 = vunpack.c.h.b16 %v4458
        %v4959 = vunpack.c.l.b16 %v4459
        %v4960 = vpack.c.b16 %v4648, %v4635
        %v4961 = vpack.c.b16 %v4649, %v4636
        %v4962 = vpack.c.b16 %v4650, %v4637
        %v4963 = vpack.c.b16 %v4651, %v4638
        %v4964 = vpack.c.b16 %v4652, %v4639
        %v4965 = vpack.c.b16 %v4653, %v4640
        %v4966 = vpack.c.b16 %v4654, %v4641
        %v4967 = vpack.c.b16 %v4655, %v4642
        %v4968 = vpack.c.b16 %v4656, %v4643
        %v4969 = vpack.c.b16 %v4657, %v4644
        %v4970 = vpack.c.b16 %v4658, %v4645
        %v4971 = vpack.c.b16 %v4659, %v4646
        %v4972 = vpack.c.b16 %v4660, %v4647
        %v4973 = vpack.c.b16 %v4674, %v4661
        %v4974 = vpack.c.b16 %v4675, %v4662
        %v4975 = vpack.c.b16 %v4676, %v4663
        %v4976 = vpack.c.b16 %v4677, %v4664
        %v4977 = vpack.c.b16 %v4678, %v4665
        %v4978 = vpack.c.b16 %v4679, %v4666
        %v4979 = vpack.c.b16 %v4680, %v4667
        %v4980 = vpack.c.b16 %v4681, %v4668
        %v4981 = vpack.c.b16 %v4682, %v4669
        %v4982 = vpack.c.b16 %v4683, %v4670
        %v4983 = vpack.c.b16 %v4684, %v4671
        %v4984 = vpack.c.b16 %v4685, %v4672
        %v4985 = vpack.c.b16 %v4686, %v4673
        %v4986 = vpack.c.b16 %v4700, %v4687
        %v4987 = vpack.c.b16 %v4701, %v4688
        %v4988 = vpack.c.b16 %v4702, %v4689
        %v4989 = vpack.c.b16 %v4703, %v4690
        %v4990 = vpack.c.b16 %v4704, %v4691
        %v4991 = vpack.c.b16 %v4705, %v4692
        %v4992 = vpack.c.b16 %v4706, %v4693
        %v4993 = vpack.c.b16 %v4707, %v4694
        %v4994 = vpack.c.b16 %v4708, %v4695
        %v4995 = vpack.c.b16 %v4709, %v4696
        %v4996 = vpack.c.b16 %v4710, %v4697
        %v4997 = vpack.c.b16 %v4711, %v4698
        %v4998 = vpack.c.b16 %v4712, %v4699
        %v4999 = vpack.c.b16 %v4726, %v4713
        %v5000 = vpack.c.b16 %v4727, %v4714
        %v5001 = vpack.c.b16 %v4728, %v4715
        %v5002 = vpack.c.b16 %v4729, %v4716
        %v5003 = vpack.c.b16 %v4730, %v4717
        %v5004 = vpack.c.b16 %v4731, %v4718
        %v5005 = vpack.c.b16 %v4732, %v4719
        %v5006 = vpack.c.b16 %v4733, %v4720
        %v5007 = vpack.c.b16 %v4734, %v4721
        %v5008 = vpack.c.b16 %v4735, %v4722
        %v5009 = vpack.c.b16 %v4736, %v4723
        %v5010 = vpack.c.b16 %v4737, %v4724
        %v5011 = vpack.c.b16 %v4738, %v4725
        %v5012 = vpack.c.b16 %v4752, %v4739
        %v5013 = vpack.c.b16 %v4753, %v4740
        %v5014 = vpack.c.b16 %v4754, %v4741
        %v5015 = vpack.c.b16 %v4755, %v4742
        %v5016 = vpack.c.b16 %v4756, %v4743
        %v5017 = vpack.c.b16 %v4757, %v4744
        %v5018 = vpack.c.b16 %v4758, %v4745
        %v5019 = vpack.c.b16 %v4759, %v4746
        %v5020 = vpack.c.b16 %v4760, %v4747
        %v5021 = vpack.c.b16 %v4761, %v4748
        %v5022 = vpack.c.b16 %v4762, %v4749
        %v5023 = vpack.c.b16 %v4763, %v4750
        %v5024 = vpack.c.b16 %v4764, %v4751
        %v5025 = vpack.c.b16 %v4778, %v4765
        %v5026 = vpack.c.b16 %v4779, %v4766
        %v5027 = vpack.c.b16 %v4780, %v4767
        %v5028 = vpack.c.b16 %v4781, %v4768
        %v5029 = vpack.c.b16 %v4782, %v4769
        %v5030 = vpack.c.b16 %v4783, %v4770
        %v5031 = vpack.c.b16 %v4784, %v4771
        %v5032 = vpack.c.b16 %v4785, %v4772
        %v5033 = vpack.c.b16 %v4786, %v4773
        %v5034 = vpack.c.b16 %v4787, %v4774
        %v5035 = vpack.c.b16 %v4788, %v4775
        %v5036 = vpack.c.b16 %v4789, %v4776
        %v5037 = vpack.c.b16 %v4790, %v4777
        %v5038 = vpack.c.b16 %v4804, %v4791
        %v5039 = vpack.c.b16 %v4805, %v4792
        %v5040 = vpack.c.b16 %v4806, %v4793
        %v5041 = vpack.c.b16 %v4807, %v4794
        %v5042 = vpack.c.b16 %v4808, %v4795
        %v5043 = vpack.c.b16 %v4809, %v4796
        %v5044 = vpack.c.b16 %v4810, %v4797
        %v5045 = vpack.c.b16 %v4811, %v4798
        %v5046 = vpack.c.b16 %v4812, %v4799
        %v5047 = vpack.c.b16 %v4813, %v4800
        %v5048 = vpack.c.b16 %v4814, %v4801
        %v5049 = vpack.c.b16 %v4815, %v4802
        %v5050 = vpack.c.b16 %v4816, %v4803
        %v5051 = vpack.c.b16 %v4830, %v4817
        %v5052 = vpack.c.b16 %v4831, %v4818
        %v5053 = vpack.c.b16 %v4832, %v4819
        %v5054 = vpack.c.b16 %v4833, %v4820
        %v5055 = vpack.c.b16 %v4834, %v4821
        %v5056 = vpack.c.b16 %v4835, %v4822
        %v5057 = vpack.c.b16 %v4836, %v4823
        %v5058 = vpack.c.b16 %v4837, %v4824
        %v5059 = vpack.c.b16 %v4838, %v4825
        %v5060 = vpack.c.b16 %v4839, %v4826
        %v5061 = vpack.c.b16 %v4840, %v4827
        %v5062 = vpack.c.b16 %v4841, %v4828
        %v5063 = vpack.c.b16 %v4842, %v4829
        %v5064 = vpack.c.b16 %v4856, %v4843
        %v5065 = vpack.c.b16 %v4857, %v4844
        %v5066 = vpack.c.b16 %v4858, %v4845
        %v5067 = vpack.c.b16 %v4859, %v4846
        %v5068 = vpack.c.b16 %v4860, %v4847
        %v5069 = vpack.c.b16 %v4861, %v4848
        %v5070 = vpack.c.b16 %v4862, %v4849
        %v5071 = vpack.c.b16 %v4863, %v4850
        %v5072 = vpack.c.b16 %v4864, %v4851
        %v5073 = vpack.c.b16 %v4865, %v4852
        %v5074 = vpack.c.b16 %v4866, %v4853
        %v5075 = vpack.c.b16 %v4867, %v4854
        %v5076 = vpack.c.b16 %v4868, %v4855
        %v5077 = vpack.c.b16 %v4882, %v4869
        %v5078 = vpack.c.b16 %v4883, %v4870
        %v5079 = vpack.c.b16 %v4884, %v4871
        %v5080 = vpack.c.b16 %v4885, %v4872
        %v5081 = vpack.c.b16 %v4886, %v4873
        %v5082 = vpack.c.b16 %v4887, %v4874
        %v5083 = vpack.c.b16 %v4888, %v4875
        %v5084 = vpack.c.b16 %v4889, %v4876
        %v5085 = vpack.c.b16 %v4890, %v4877
        %v5086 = vpack.c.b16 %v4891, %v4878
        %v5087 = vpack.c.b16 %v4892, %v4879
        %v5088 = vpack.c.b16 %v4893, %v4880
        %v5089 = vpack.c.b16 %v4894, %v4881
        %v5090 = vpack.c.b16 %v4908, %v4895
        %v5091 = vpack.c.b16 %v4909, %v4896
        %v5092 = vpack.c.b16 %v4910, %v4897
        %v5093 = vpack.c.b16 %v4911, %v4898
        %v5094 = vpack.c.b16 %v4912, %v4899
        %v5095 = vpack.c.b16 %v4913, %v4900
        %v5096 = vpack.c.b16 %v4914, %v4901
        %v5097 = vpack.c.b16 %v4915, %v4902
        %v5098 = vpack.c.b16 %v4916, %v4903
        %v5099 = vpack.c.b16 %v4917, %v4904
        %v5100 = vpack.c.b16 %v4918, %v4905
        %v5101 = vpack.c.b16 %v4919, %v4906
        %v5102 = vpack.c.b16 %v4920, %v4907
        %v5103 = vpack.c.b16 %v4934, %v4921
        %v5104 = vpack.c.b16 %v4935, %v4922
        %v5105 = vpack.c.b16 %v4936, %v4923
        %v5106 = vpack.c.b16 %v4937, %v4924
        %v5107 = vpack.c.b16 %v4938, %v4925
        %v5108 = vpack.c.b16 %v4939, %v4926
        %v5109 = vpack.c.b16 %v4940, %v4927
        %v5110 = vpack.c.b16 %v4941, %v4928
        %v5111 = vpack.c.b16 %v4942, %v4929
        %v5112 = vpack.c.b16 %v4943, %v4930
        %v5113 = vpack.c.b16 %v4944, %v4931
        %v5114 = vpack.c.b16 %v4945, %v4932
        %v5115 = vpack.c.b16 %v4946, %v4933
        %v5116 = vpack.c.b16 %v4947, %v4947
        %v5117 = vpack.c.b16 %v4948, %v4948
        %v5118 = vpack.c.b16 %v4949, %v4949
        %v5119 = vpack.c.b16 %v4950, %v4950
        %v5120 = vpack.c.b16 %v4951, %v4951
        %v5121 = vpack.c.b16 %v4952, %v4952
        %v5122 = vpack.c.b16 %v4953, %v4953
        %v5123 = vpack.c.b16 %v4954, %v4954
        %v5124 = vpack.c.b16 %v4955, %v4955
        %v5125 = vpack.c.b16 %v4956, %v4956
        %v5126 = vpack.c.b16 %v4957, %v4957
        %v5127 = vpack.c.b16 %v4958, %v4958
        %v5128 = vpack.c.b16 %v4959, %v4959
        %vm5285 = vcmask 588800
        %v5287 = vsel %vm5285, %v4284, 0
        %vm5289 = vcmask 1043456
        %v5291 = vsel %vm5289, %v5116, 0
        %v5294 = vsel %vm5289, %v5117, 0
        %v5297 = vsel %vm5289, %v5118, 0
        %v5300 = vsel %vm5289, %v5119, 0
        %v5303 = vsel %vm5289, %v5120, 0
        %v5306 = vsel %vm5289, %v5121, 0
        %v5309 = vsel %vm5289, %v5122, 0
        %v5312 = vsel %vm5289, %v5123, 0
        %v5315 = vsel %vm5289, %v5124, 0
        %v5318 = vsel %vm5289, %v5125, 0
        %v5321 = vsel %vm5289, %v5126, 0
        %v5324 = vsel %vm5289, %v5127, 0
        %v5327 = vsel %vm5289, %v5128, 0
        %5329 = vmatprep.subr.bf16.mxu0 %v4961
        %5330 = vmatpush1.bf16.msra.mxu0 %v4960
        %5331 = vmatprep.subr.bf16.mxu0 %v4974
        %5332 = vmatpush1.bf16.msra.mxu0 %v4973
        %5333 = vmatprep.subr.bf16.mxu0 %v4987
        %5334 = vmatpush1.bf16.msra.mxu0 %v4986
        %5335 = vmatprep.subr.bf16.mxu0 %v5000
        %5336 = vmatpush1.bf16.msra.mxu0 %v4999
        %5337 = vmatprep.subr.bf16.mxu0 %v5013
        %5338 = vmatpush1.bf16.msra.mxu0 %v5012
        %5339 = vmatprep.subr.bf16.mxu0 %v5026
        %5340 = vmatpush1.bf16.msra.mxu0 %v5025
        %5341 = vmatprep.subr.bf16.mxu0 %v5039
        %5342 = vmatpush1.bf16.msra.mxu0 %v5038
        %5343 = vmatprep.subr.bf16.mxu0 %v5052
        %5344 = vmatpush1.bf16.msra.mxu0 %v5051
        %5345 = vmatprep.subr.bf16.mxu0 %v5065
        %5346 = vmatpush1.bf16.msra.mxu0 %v5064
        %5347 = vmatprep.subr.bf16.mxu0 %v5078
        %5348 = vmatpush1.bf16.msra.mxu0 %v5077
        %5349 = vmatprep.subr.bf16.mxu0 %v5091
        %5350 = vmatpush1.bf16.msra.mxu0 %v5090
        %5351 = vmatprep.subr.bf16.mxu0 %v5104
        %5352 = vmatpush1.bf16.msra.mxu0 %v5103
        %5353 = vmatprep.subr.bf16.mxu0 %v5294
        %5354 = vmatpush1.bf16.msra.mxu0 %v5291
        %5355 = vmatprep.subr.bf16.mxu0 0
        %5356 = vmatpush1.bf16.msra.mxu0 0
        %5357 = vmatprep.subr.bf16.mxu0 0
        %5358 = vmatpush1.bf16.msra.mxu0 0
        %5359 = vmatprep.subr.bf16.mxu0 0
        %5360 = vmatpush1.bf16.msra.mxu0 0
        %5361 = vmatprep.mubr.bf16.mxu0 %v5287
        %5362 = vmatmul.mubr.bf16.gmra.mrb[0].mxu0 %v4283
        %v5363 = vpop.f32.mrb[0].mxu0
        %v5364 = vadd.f32 0.0, %v5363
        %v5365 = vpop.f32.mrb[0].mxu0
        %v5366 = vadd.f32 0.0, %v5365
        %v5367 = vpop.f32.mrb[0].mxu0
        %v5368 = vpop.f32.mrb[0].mxu0
        %5369 = vdwg.mxu0
        %5370 = vmatprep.subr.bf16.mxu0 %v4963
        %5371 = vmatpush1.bf16.msra.mxu0 %v4962
        %5372 = vmatprep.subr.bf16.mxu0 %v4976
        %5373 = vmatpush1.bf16.msra.mxu0 %v4975
        %5374 = vmatprep.subr.bf16.mxu0 %v4989
        %5375 = vmatpush1.bf16.msra.mxu0 %v4988
        %5376 = vmatprep.subr.bf16.mxu0 %v5002
        %5377 = vmatpush1.bf16.msra.mxu0 %v5001
        %5378 = vmatprep.subr.bf16.mxu0 %v5015
        %5379 = vmatpush1.bf16.msra.mxu0 %v5014
        %5380 = vmatprep.subr.bf16.mxu0 %v5028
        %5381 = vmatpush1.bf16.msra.mxu0 %v5027
        %5382 = vmatprep.subr.bf16.mxu0 %v5041
        %5383 = vmatpush1.bf16.msra.mxu0 %v5040
        %5384 = vmatprep.subr.bf16.mxu0 %v5054
        %5385 = vmatpush1.bf16.msra.mxu0 %v5053
        %5386 = vmatprep.subr.bf16.mxu0 %v5067
        %5387 = vmatpush1.bf16.msra.mxu0 %v5066
        %5388 = vmatprep.subr.bf16.mxu0 %v5080
        %5389 = vmatpush1.bf16.msra.mxu0 %v5079
        %5390 = vmatprep.subr.bf16.mxu0 %v5093
        %5391 = vmatpush1.bf16.msra.mxu0 %v5092
        %5392 = vmatprep.subr.bf16.mxu0 %v5106
        %5393 = vmatpush1.bf16.msra.mxu0 %v5105
        %5394 = vmatprep.subr.bf16.mxu0 %v5300
        %5395 = vmatpush1.bf16.msra.mxu0 %v5297
        %5396 = vmatprep.subr.bf16.mxu0 0
        %5397 = vmatpush1.bf16.msra.mxu0 0
        %5398 = vmatprep.subr.bf16.mxu0 0
        %5399 = vmatpush1.bf16.msra.mxu0 0
        %5400 = vmatprep.subr.bf16.mxu0 0
        %5401 = vmatpush1.bf16.msra.mxu0 0
        %5402 = vmatprep.mubr.bf16.mxu0 %v5287
        %5403 = vmatmul.mubr.bf16.gmra.mrb[0].mxu0 %v4283
        %v5404 = vpop.f32.mrb[0].mxu0
        %v5405 = vadd.f32 0.0, %v5404
        %v5406 = vpop.f32.mrb[0].mxu0
        %v5407 = vadd.f32 0.0, %v5406
        %v5408 = vpop.f32.mrb[0].mxu0
        %v5409 = vpop.f32.mrb[0].mxu0
        %5410 = vdwg.mxu0
        %5411 = vmatprep.subr.bf16.mxu0 %v4965
        %5412 = vmatpush1.bf16.msra.mxu0 %v4964
        %5413 = vmatprep.subr.bf16.mxu0 %v4978
        %5414 = vmatpush1.bf16.msra.mxu0 %v4977
        %5415 = vmatprep.subr.bf16.mxu0 %v4991
        %5416 = vmatpush1.bf16.msra.mxu0 %v4990
        %5417 = vmatprep.subr.bf16.mxu0 %v5004
        %5418 = vmatpush1.bf16.msra.mxu0 %v5003
        %5419 = vmatprep.subr.bf16.mxu0 %v5017
        %5420 = vmatpush1.bf16.msra.mxu0 %v5016
        %5421 = vmatprep.subr.bf16.mxu0 %v5030
        %5422 = vmatpush1.bf16.msra.mxu0 %v5029
        %5423 = vmatprep.subr.bf16.mxu0 %v5043
        %5424 = vmatpush1.bf16.msra.mxu0 %v5042
        %5425 = vmatprep.subr.bf16.mxu0 %v5056
        %5426 = vmatpush1.bf16.msra.mxu0 %v5055
        %5427 = vmatprep.subr.bf16.mxu0 %v5069
        %5428 = vmatpush1.bf16.msra.mxu0 %v5068
        %5429 = vmatprep.subr.bf16.mxu0 %v5082
        %5430 = vmatpush1.bf16.msra.mxu0 %v5081
        %5431 = vmatprep.subr.bf16.mxu0 %v5095
        %5432 = vmatpush1.bf16.msra.mxu0 %v5094
        %5433 = vmatprep.subr.bf16.mxu0 %v5108
        %5434 = vmatpush1.bf16.msra.mxu0 %v5107
        %5435 = vmatprep.subr.bf16.mxu0 %v5306
        %5436 = vmatpush1.bf16.msra.mxu0 %v5303
        %5437 = vmatprep.subr.bf16.mxu0 0
        %5438 = vmatpush1.bf16.msra.mxu0 0
        %5439 = vmatprep.subr.bf16.mxu0 0
        %5440 = vmatpush1.bf16.msra.mxu0 0
        %5441 = vmatprep.subr.bf16.mxu0 0
        %5442 = vmatpush1.bf16.msra.mxu0 0
        %5443 = vmatprep.mubr.bf16.mxu0 %v5287
        %5444 = vmatmul.mubr.bf16.gmra.mrb[0].mxu0 %v4283
        %v5445 = vpop.f32.mrb[0].mxu0
        %v5446 = vadd.f32 0.0, %v5445
        %v5447 = vpop.f32.mrb[0].mxu0
        %v5448 = vadd.f32 0.0, %v5447
        %v5449 = vpop.f32.mrb[0].mxu0
        %v5450 = vpop.f32.mrb[0].mxu0
        %5451 = vdwg.mxu0
        %5452 = vmatprep.subr.bf16.mxu0 %v4967
        %5453 = vmatpush1.bf16.msra.mxu0 %v4966
        %5454 = vmatprep.subr.bf16.mxu0 %v4980
        %5455 = vmatpush1.bf16.msra.mxu0 %v4979
        %5456 = vmatprep.subr.bf16.mxu0 %v4993
        %5457 = vmatpush1.bf16.msra.mxu0 %v4992
        %5458 = vmatprep.subr.bf16.mxu0 %v5006
        %5459 = vmatpush1.bf16.msra.mxu0 %v5005
        %5460 = vmatprep.subr.bf16.mxu0 %v5019
        %5461 = vmatpush1.bf16.msra.mxu0 %v5018
        %5462 = vmatprep.subr.bf16.mxu0 %v5032
        %5463 = vmatpush1.bf16.msra.mxu0 %v5031
        %5464 = vmatprep.subr.bf16.mxu0 %v5045
        %5465 = vmatpush1.bf16.msra.mxu0 %v5044
        %5466 = vmatprep.subr.bf16.mxu0 %v5058
        %5467 = vmatpush1.bf16.msra.mxu0 %v5057
        %5468 = vmatprep.subr.bf16.mxu0 %v5071
        %5469 = vmatpush1.bf16.msra.mxu0 %v5070
        %5470 = vmatprep.subr.bf16.mxu0 %v5084
        %5471 = vmatpush1.bf16.msra.mxu0 %v5083
        %5472 = vmatprep.subr.bf16.mxu0 %v5097
        %5473 = vmatpush1.bf16.msra.mxu0 %v5096
        %5474 = vmatprep.subr.bf16.mxu0 %v5110
        %5475 = vmatpush1.bf16.msra.mxu0 %v5109
        %5476 = vmatprep.subr.bf16.mxu0 %v5312
        %5477 = vmatpush1.bf16.msra.mxu0 %v5309
        %5478 = vmatprep.subr.bf16.mxu0 0
        %5479 = vmatpush1.bf16.msra.mxu0 0
        %5480 = vmatprep.subr.bf16.mxu0 0
        %5481 = vmatpush1.bf16.msra.mxu0 0
        %5482 = vmatprep.subr.bf16.mxu0 0
        %5483 = vmatpush1.bf16.msra.mxu0 0
        %5484 = vmatprep.mubr.bf16.mxu0 %v5287
        %5485 = vmatmul.mubr.bf16.gmra.mrb[0].mxu0 %v4283
        %v5486 = vpop.f32.mrb[0].mxu0
        %v5487 = vadd.f32 0.0, %v5486
        %v5488 = vpop.f32.mrb[0].mxu0
        %v5489 = vadd.f32 0.0, %v5488
        %v5490 = vpop.f32.mrb[0].mxu0
        %v5491 = vpop.f32.mrb[0].mxu0
        %5492 = vdwg.mxu0
        %5493 = vmatprep.subr.bf16.mxu0 %v4969
        %5494 = vmatpush1.bf16.msra.mxu0 %v4968
        %5495 = vmatprep.subr.bf16.mxu0 %v4982
        %5496 = vmatpush1.bf16.msra.mxu0 %v4981
        %5497 = vmatprep.subr.bf16.mxu0 %v4995
        %5498 = vmatpush1.bf16.msra.mxu0 %v4994
        %5499 = vmatprep.subr.bf16.mxu0 %v5008
        %5500 = vmatpush1.bf16.msra.mxu0 %v5007
        %5501 = vmatprep.subr.bf16.mxu0 %v5021
        %5502 = vmatpush1.bf16.msra.mxu0 %v5020
        %5503 = vmatprep.subr.bf16.mxu0 %v5034
        %5504 = vmatpush1.bf16.msra.mxu0 %v5033
        %5505 = vmatprep.subr.bf16.mxu0 %v5047
        %5506 = vmatpush1.bf16.msra.mxu0 %v5046
        %5507 = vmatprep.subr.bf16.mxu0 %v5060
        %5508 = vmatpush1.bf16.msra.mxu0 %v5059
        %5509 = vmatprep.subr.bf16.mxu0 %v5073
        %5510 = vmatpush1.bf16.msra.mxu0 %v5072
        %5511 = vmatprep.subr.bf16.mxu0 %v5086
        %5512 = vmatpush1.bf16.msra.mxu0 %v5085
        %5513 = vmatprep.subr.bf16.mxu0 %v5099
        %5514 = vmatpush1.bf16.msra.mxu0 %v5098
        %5515 = vmatprep.subr.bf16.mxu0 %v5112
        %5516 = vmatpush1.bf16.msra.mxu0 %v5111
        %5517 = vmatprep.subr.bf16.mxu0 %v5318
        %5518 = vmatpush1.bf16.msra.mxu0 %v5315
        %5519 = vmatprep.subr.bf16.mxu0 0
        %5520 = vmatpush1.bf16.msra.mxu0 0
        %5521 = vmatprep.subr.bf16.mxu0 0
        %5522 = vmatpush1.bf16.msra.mxu0 0
        %5523 = vmatprep.subr.bf16.mxu0 0
        %5524 = vmatpush1.bf16.msra.mxu0 0
        %5525 = vmatprep.mubr.bf16.mxu0 %v5287
        %5526 = vmatmul.mubr.bf16.gmra.mrb[0].mxu0 %v4283
        %v5527 = vpop.f32.mrb[0].mxu0
        %v5528 = vadd.f32 0.0, %v5527
        %v5529 = vpop.f32.mrb[0].mxu0
        %v5530 = vadd.f32 0.0, %v5529
        %v5531 = vpop.f32.mrb[0].mxu0
        %v5532 = vpop.f32.mrb[0].mxu0
        %5533 = vdwg.mxu0
        %5534 = vmatprep.subr.bf16.mxu0 %v4971
        %5535 = vmatpush1.bf16.msra.mxu0 %v4970
        %5536 = vmatprep.subr.bf16.mxu0 %v4984
        %5537 = vmatpush1.bf16.msra.mxu0 %v4983
        %5538 = vmatprep.subr.bf16.mxu0 %v4997
        %5539 = vmatpush1.bf16.msra.mxu0 %v4996
        %5540 = vmatprep.subr.bf16.mxu0 %v5010
        %5541 = vmatpush1.bf16.msra.mxu0 %v5009
        %5542 = vmatprep.subr.bf16.mxu0 %v5023
        %5543 = vmatpush1.bf16.msra.mxu0 %v5022
        %5544 = vmatprep.subr.bf16.mxu0 %v5036
        %5545 = vmatpush1.bf16.msra.mxu0 %v5035
        %5546 = vmatprep.subr.bf16.mxu0 %v5049
        %5547 = vmatpush1.bf16.msra.mxu0 %v5048
        %5548 = vmatprep.subr.bf16.mxu0 %v5062
        %5549 = vmatpush1.bf16.msra.mxu0 %v5061
        %5550 = vmatprep.subr.bf16.mxu0 %v5075
        %5551 = vmatpush1.bf16.msra.mxu0 %v5074
        %5552 = vmatprep.subr.bf16.mxu0 %v5088
        %5553 = vmatpush1.bf16.msra.mxu0 %v5087
        %5554 = vmatprep.subr.bf16.mxu0 %v5101
        %5555 = vmatpush1.bf16.msra.mxu0 %v5100
        %5556 = vmatprep.subr.bf16.mxu0 %v5114
        %5557 = vmatpush1.bf16.msra.mxu0 %v5113
        %5558 = vmatprep.subr.bf16.mxu0 %v5324
        %5559 = vmatpush1.bf16.msra.mxu0 %v5321
        %5560 = vmatprep.subr.bf16.mxu0 0
        %5561 = vmatpush1.bf16.msra.mxu0 0
        %5562 = vmatprep.subr.bf16.mxu0 0
        %5563 = vmatpush1.bf16.msra.mxu0 0
        %5564 = vmatprep.subr.bf16.mxu0 0
        %5565 = vmatpush1.bf16.msra.mxu0 0
        %5566 = vmatprep.mubr.bf16.mxu0 %v5287
        %5567 = vmatmul.mubr.bf16.gmra.mrb[0].mxu0 %v4283
        %v5568 = vpop.f32.mrb[0].mxu0
        %v5569 = vadd.f32 0.0, %v5568
        %v5570 = vpop.f32.mrb[0].mxu0
        %v5571 = vadd.f32 0.0, %v5570
        %v5572 = vpop.f32.mrb[0].mxu0
        %v5573 = vpop.f32.mrb[0].mxu0
        %5574 = vdwg.mxu0
        %5575 = vmatprep.subr.bf16.mxu0 0
        %5576 = vmatpush1.bf16.msra.mxu0 %v4972
        %5577 = vmatprep.subr.bf16.mxu0 0
        %5578 = vmatpush1.bf16.msra.mxu0 %v4985
        %5579 = vmatprep.subr.bf16.mxu0 0
        %5580 = vmatpush1.bf16.msra.mxu0 %v4998
        %5581 = vmatprep.subr.bf16.mxu0 0
        %5582 = vmatpush1.bf16.msra.mxu0 %v5011
        %5583 = vmatprep.subr.bf16.mxu0 0
        %5584 = vmatpush1.bf16.msra.mxu0 %v5024
        %5585 = vmatprep.subr.bf16.mxu0 0
        %5586 = vmatpush1.bf16.msra.mxu0 %v5037
        %5587 = vmatprep.subr.bf16.mxu0 0
        %5588 = vmatpush1.bf16.msra.mxu0 %v5050
        %5589 = vmatprep.subr.bf16.mxu0 0
        %5590 = vmatpush1.bf16.msra.mxu0 %v5063
        %5591 = vmatprep.subr.bf16.mxu0 0
        %5592 = vmatpush1.bf16.msra.mxu0 %v5076
        %5593 = vmatprep.subr.bf16.mxu0 0
        %5594 = vmatpush1.bf16.msra.mxu0 %v5089
        %5595 = vmatprep.subr.bf16.mxu0 0
        %5596 = vmatpush1.bf16.msra.mxu0 %v5102
        %5597 = vmatprep.subr.bf16.mxu0 0
        %5598 = vmatpush1.bf16.msra.mxu0 %v5115
        %5599 = vmatprep.subr.bf16.mxu0 0
        %5600 = vmatpush1.bf16.msra.mxu0 %v5327
        %5601 = vmatprep.subr.bf16.mxu0 0
        %5602 = vmatpush1.bf16.msra.mxu0 0
        %5603 = vmatprep.subr.bf16.mxu0 0
        %5604 = vmatpush1.bf16.msra.mxu0 0
        %5605 = vmatprep.subr.bf16.mxu0 0
        %5606 = vmatpush1.bf16.msra.mxu0 0
        %5607 = vmatprep.mubr.bf16.mxu0 %v5287
        %5608 = vmatmul.mubr.bf16.gmra.mrb[0].mxu0 %v4283
        %v5609 = vpop.f32.mrb[0].mxu0
        %v5610 = vadd.f32 0.0, %v5609
        %v5611 = vpop.f32.mrb[0].mxu0
        %v5612 = vpop.f32.mrb[0].mxu0
        %v5613 = vpop.f32.mrb[0].mxu0
        %5614 = vdwg.mxu0
        %v5628 = vcombine.low %v5364, %v5366
        %v5629 = vcombine.low %v5405, %v5407
        %v5631 = vunpack.c.l.s4 1983009808
        %v5632 = vunpack.c.0.s8 %v5631
        %v5633 = vlaneseq
        %v5634 = vshrl.u32 %v5633, 7
        %v5635 = vsub.s32 %v5632, %v5634
        %v5636 = vrot.slane %v5628, %v5635
        %v5638 = vunpack.c.l.s4 1983009808
        %v5639 = vunpack.c.0.s8 %v5638
        %v5640 = vlaneseq
        %v5641 = vshrl.u32 %v5640, 7
        %v5642 = vsub.s32 %v5639, %v5641
        %v5643 = vrot.slane %v5629, %v5642
        %v5644 = vcombine.low %v5636, %v5643
        %v5645 = vcombine.low %v5446, %v5448
        %v5646 = vcombine.low %v5487, %v5489
        %v5648 = vunpack.c.l.s4 1983009808
        %v5649 = vunpack.c.0.s8 %v5648
        %v5650 = vlaneseq
        %v5651 = vshrl.u32 %v5650, 7
        %v5652 = vsub.s32 %v5649, %v5651
        %v5653 = vrot.slane %v5645, %v5652
        %v5655 = vunpack.c.l.s4 1983009808
        %v5656 = vunpack.c.0.s8 %v5655
        %v5657 = vlaneseq
        %v5658 = vshrl.u32 %v5657, 7
        %v5659 = vsub.s32 %v5656, %v5658
        %v5660 = vrot.slane %v5646, %v5659
        %v5661 = vcombine.low %v5653, %v5660
        %v5662 = vcombine.low %v5528, %v5530
        %v5663 = vcombine.low %v5569, %v5571
        %v5665 = vunpack.c.l.s4 1983009808
        %v5666 = vunpack.c.0.s8 %v5665
        %v5667 = vlaneseq
        %v5668 = vshrl.u32 %v5667, 7
        %v5669 = vsub.s32 %v5666, %v5668
        %v5670 = vrot.slane %v5662, %v5669
        %v5672 = vunpack.c.l.s4 1983009808
        %v5673 = vunpack.c.0.s8 %v5672
        %v5674 = vlaneseq
        %v5675 = vshrl.u32 %v5674, 7
        %v5676 = vsub.s32 %v5673, %v5675
        %v5677 = vrot.slane %v5663, %v5676
        %v5678 = vcombine.low %v5670, %v5677
        %v5680 = vunpack.c.l.s4 1983009808
        %v5681 = vunpack.c.0.s8 %v5680
        %v5682 = vlaneseq
        %v5683 = vshrl.u32 %v5682, 7
        %v5684 = vsub.s32 %v5681, %v5683
        %v5685 = vrot.slane %v5610, %v5684
        %v5690 = vadd.f32 %v4279, %v5644
        %v5691 = vadd.f32 %v4280, %v5661
        %v5692 = vadd.f32 %v4281, %v5678
        %v5693 = vadd.f32 %v4282, %v5685
        %5694 = vst [vmem:[#allocation2] sm:$0xff] %v5690
        %5695 = vst [vmem:[#allocation2 + $0x8] sm:$0xff] %v5691
        %5696 = vst [vmem:[#allocation2 + $0x10] sm:$0xff] %v5692
        %vm5697 = vcmask 517120
        %5698 = vst.msk [vmem:[#allocation2 + $0x18] sm:$0x3] %vm5697, %v5693
        %p5699 = scmp.eq.s32.totalorder %s24, 3
        // Predicated region
        $region73: #{tpu_custom_call.1} parent=67 // pred_check
          %p5700 = pneg %p5699
        $region74: #{tpu_custom_call.1} parent=67 // pred_check_branch
          %5702 = sbr.rel (%p5700) target = $region76
        $region75: #{tpu_custom_call.1} parent=67 // pred_region
          %v5703 = vld [vmem:[#allocation2] sm:$0xff]
          %v5704 = vld [vmem:[#allocation2 + $0x8] sm:$0xff]
          %v5705 = vld [vmem:[#allocation2 + $0x10] sm:$0xff]
          %v5706 = vld [vmem:[#allocation2 + $0x18] sm:$0x3]
          %v5707 = vld [vmem:[%s6] sm:$0xff]
          %v5708 = vld [vmem:[%s6 + $0x8] sm:$0x1f]
          %v5711 = vlaneseq
          %v5712 = vshrl.u32 %v5711, 7
          %v5713 = vsub.s32 0, %v5712
          %v5714 = vrot.slane %v5707, %v5713
          %v5715 = vlaneseq
          %v5716 = vshrl.u32 %v5715, 7
          %v5717 = vsub.s32 1, %v5716
          %v5718 = vrot.slane %v5707, %v5717
          %v5719 = vlaneseq
          %v5720 = vshrl.u32 %v5719, 7
          %v5721 = vsub.s32 2, %v5720
          %v5722 = vrot.slane %v5707, %v5721
          %v5723 = vlaneseq
          %v5724 = vshrl.u32 %v5723, 7
          %v5725 = vsub.s32 3, %v5724
          %v5726 = vrot.slane %v5707, %v5725
          %v5727 = vlaneseq
          %v5728 = vshrl.u32 %v5727, 7
          %v5729 = vsub.s32 4, %v5728
          %v5730 = vrot.slane %v5707, %v5729
          %v5731 = vlaneseq
          %v5732 = vshrl.u32 %v5731, 7
          %v5733 = vsub.s32 5, %v5732
          %v5734 = vrot.slane %v5707, %v5733
          %v5735 = vlaneseq
          %v5736 = vshrl.u32 %v5735, 7
          %v5737 = vsub.s32 6, %v5736
          %v5738 = vrot.slane %v5707, %v5737
          %v5739 = vlaneseq
          %v5740 = vshrl.u32 %v5739, 7
          %v5741 = vsub.s32 7, %v5740
          %v5742 = vrot.slane %v5707, %v5741
          %v5743 = vlaneseq
          %v5744 = vshrl.u32 %v5743, 7
          %v5745 = vsub.s32 0, %v5744
          %v5746 = vrot.slane %v5708, %v5745
          %v5747 = vlaneseq
          %v5748 = vshrl.u32 %v5747, 7
          %v5749 = vsub.s32 1, %v5748
          %v5750 = vrot.slane %v5708, %v5749
          %v5751 = vlaneseq
          %v5752 = vshrl.u32 %v5751, 7
          %v5753 = vsub.s32 2, %v5752
          %v5754 = vrot.slane %v5708, %v5753
          %v5755 = vlaneseq
          %v5756 = vshrl.u32 %v5755, 7
          %v5757 = vsub.s32 3, %v5756
          %v5758 = vrot.slane %v5708, %v5757
          %v5759 = vlaneseq
          %v5760 = vshrl.u32 %v5759, 7
          %v5761 = vsub.s32 4, %v5760
          %v5762 = vrot.slane %v5708, %v5761
          %v5763 = vcombine.low %v5714, %v5718
          %v5764 = vcombine.low %v5722, %v5726
          %v5766 = vunpack.c.l.s4 1983009808
          %v5767 = vunpack.c.0.s8 %v5766
          %v5768 = vlaneseq
          %v5769 = vshrl.u32 %v5768, 7
          %v5770 = vsub.s32 %v5767, %v5769
          %v5771 = vrot.slane %v5763, %v5770
          %v5773 = vunpack.c.l.s4 1983009808
          %v5774 = vunpack.c.0.s8 %v5773
          %v5775 = vlaneseq
          %v5776 = vshrl.u32 %v5775, 7
          %v5777 = vsub.s32 %v5774, %v5776
          %v5778 = vrot.slane %v5764, %v5777
          %v5779 = vcombine.low %v5771, %v5778
          %v5780 = vcombine.low %v5730, %v5734
          %v5781 = vcombine.low %v5738, %v5742
          %v5783 = vunpack.c.l.s4 1983009808
          %v5784 = vunpack.c.0.s8 %v5783
          %v5785 = vlaneseq
          %v5786 = vshrl.u32 %v5785, 7
          %v5787 = vsub.s32 %v5784, %v5786
          %v5788 = vrot.slane %v5780, %v5787
          %v5790 = vunpack.c.l.s4 1983009808
          %v5791 = vunpack.c.0.s8 %v5790
          %v5792 = vlaneseq
          %v5793 = vshrl.u32 %v5792, 7
          %v5794 = vsub.s32 %v5791, %v5793
          %v5795 = vrot.slane %v5781, %v5794
          %v5796 = vcombine.low %v5788, %v5795
          %v5797 = vcombine.low %v5746, %v5750
          %v5798 = vcombine.low %v5754, %v5758
          %v5800 = vunpack.c.l.s4 1983009808
          %v5801 = vunpack.c.0.s8 %v5800
          %v5802 = vlaneseq
          %v5803 = vshrl.u32 %v5802, 7
          %v5804 = vsub.s32 %v5801, %v5803
          %v5805 = vrot.slane %v5797, %v5804
          %v5807 = vunpack.c.l.s4 1983009808
          %v5808 = vunpack.c.0.s8 %v5807
          %v5809 = vlaneseq
          %v5810 = vshrl.u32 %v5809, 7
          %v5811 = vsub.s32 %v5808, %v5810
          %v5812 = vrot.slane %v5798, %v5811
          %v5813 = vcombine.low %v5805, %v5812
          %v5815 = vunpack.c.l.s4 1983009808
          %v5816 = vunpack.c.0.s8 %v5815
          %v5817 = vlaneseq
          %v5818 = vshrl.u32 %v5817, 7
          %v5819 = vsub.s32 %v5816, %v5818
          %v5820 = vrot.slane %v5762, %v5819
          %v5825 = vadd.f32 %v5703, %v5779
          %v5826 = vadd.f32 %v5704, %v5796
          %v5827 = vadd.f32 %v5705, %v5813
          %v5828 = vadd.f32 %v5706, %v5820
          %v5829 = vmax.f32 %v5825, 0.0
          %v5830 = vmax.f32 %v5826, 0.0
          %v5831 = vmax.f32 %v5827, 0.0
          %v5832 = vmax.f32 %v5828, 0.0
          %v5837 = vcombine.high %v5829, %v5829
          %v5839 = vunpack.c.l.s4 1983009808
          %v5840 = vunpack.c.0.s8 %v5839
          %v5841 = vlaneseq
          %v5842 = vshrl.u32 %v5841, 7
          %v5843 = vsub.s32 %v5840, %v5842
          %v5844 = vrot.slane %v5829, %v5843
          %v5846 = vunpack.c.l.s4 1983009808
          %v5847 = vunpack.c.0.s8 %v5846
          %v5848 = vlaneseq
          %v5849 = vshrl.u32 %v5848, 7
          %v5850 = vsub.s32 %v5847, %v5849
          %v5851 = vrot.slane %v5837, %v5850
          %v5852 = vcombine.high %v5844, %v5844
          %v5853 = vcombine.high %v5851, %v5851
          %v5854 = vcombine.high %v5830, %v5830
          %v5856 = vunpack.c.l.s4 1983009808
          %v5857 = vunpack.c.0.s8 %v5856
          %v5858 = vlaneseq
          %v5859 = vshrl.u32 %v5858, 7
          %v5860 = vsub.s32 %v5857, %v5859
          %v5861 = vrot.slane %v5830, %v5860
          %v5863 = vunpack.c.l.s4 1983009808
          %v5864 = vunpack.c.0.s8 %v5863
          %v5865 = vlaneseq
          %v5866 = vshrl.u32 %v5865, 7
          %v5867 = vsub.s32 %v5864, %v5866
          %v5868 = vrot.slane %v5854, %v5867
          %v5869 = vcombine.high %v5861, %v5861
          %v5870 = vcombine.high %v5868, %v5868
          %v5871 = vcombine.high %v5831, %v5831
          %v5873 = vunpack.c.l.s4 1983009808
          %v5874 = vunpack.c.0.s8 %v5873
          %v5875 = vlaneseq
          %v5876 = vshrl.u32 %v5875, 7
          %v5877 = vsub.s32 %v5874, %v5876
          %v5878 = vrot.slane %v5831, %v5877
          %v5880 = vunpack.c.l.s4 1983009808
          %v5881 = vunpack.c.0.s8 %v5880
          %v5882 = vlaneseq
          %v5883 = vshrl.u32 %v5882, 7
          %v5884 = vsub.s32 %v5881, %v5883
          %v5885 = vrot.slane %v5871, %v5884
          %v5886 = vcombine.high %v5878, %v5878
          %v5887 = vcombine.high %v5885, %v5885
          %v5889 = vunpack.c.l.s4 1983009808
          %v5890 = vunpack.c.0.s8 %v5889
          %v5891 = vlaneseq
          %v5892 = vshrl.u32 %v5891, 7
          %v5893 = vsub.s32 %v5890, %v5892
          %v5894 = vrot.slane %v5832, %v5893
          %v5908 = vpack.c.bf16 %v5844, %v5844
          %v5909 = vpack.c.bf16 %v5852, %v5852
          %v5910 = vpack.c.bf16 %v5851, %v5851
          %v5911 = vpack.c.bf16 %v5853, %v5853
          %v5912 = vpack.c.bf16 %v5861, %v5861
          %v5913 = vpack.c.bf16 %v5869, %v5869
          %v5914 = vpack.c.bf16 %v5868, %v5868
          %v5915 = vpack.c.bf16 %v5870, %v5870
          %v5916 = vpack.c.bf16 %v5878, %v5878
          %v5917 = vpack.c.bf16 %v5886, %v5886
          %v5918 = vpack.c.bf16 %v5885, %v5885
          %v5919 = vpack.c.bf16 %v5887, %v5887
          %v5920 = vpack.c.bf16 %v5894, %v5894
          %v5921 = vld [vmem:[%s7] sm:$0xf]
          %v5922 = vld [vmem:[%s7 + $0x4] sm:$0xf]
          %v5923 = vld [vmem:[%s7 + $0x8] sm:$0xf]
          %v5924 = vld [vmem:[%s7 + $0xc] sm:$0xf]
          %v5925 = vld [vmem:[%s7 + $0x10] sm:$0xf]
          %v5926 = vld [vmem:[%s7 + $0x14] sm:$0xf]
          %v5927 = vld [vmem:[%s7 + $0x18] sm:$0xf]
          %v5928 = vld [vmem:[%s7 + $0x1c] sm:$0xf]
          %v5929 = vld [vmem:[%s7 + $0x20] sm:$0xf]
          %v5930 = vld [vmem:[%s7 + $0x24] sm:$0xf]
          %v5931 = vld [vmem:[%s7 + $0x28] sm:$0xf]
          %v5932 = vld [vmem:[%s7 + $0x2c] sm:$0xf]
          %v5933 = vld [vmem:[%s7 + $0x30] sm:$0xf]
          %v5934 = vld [vmem:[%s7 + $0x34] sm:$0xf]
          %v5935 = vld [vmem:[%s7 + $0x38] sm:$0xf]
          %v5936 = vld [vmem:[%s7 + $0x3c] sm:$0xf]
          %v5937 = vld [vmem:[%s7 + $0x40] sm:$0xf]
          %v5938 = vld [vmem:[%s7 + $0x44] sm:$0xf]
          %v5939 = vld [vmem:[%s7 + $0x48] sm:$0xf]
          %v5940 = vld [vmem:[%s7 + $0x4c] sm:$0xf]
          %v5941 = vld [vmem:[%s7 + $0x50] sm:$0xf]
          %v5942 = vld [vmem:[%s7 + $0x54] sm:$0xf]
          %v5943 = vld [vmem:[%s7 + $0x58] sm:$0xf]
          %v5944 = vld [vmem:[%s7 + $0x5c] sm:$0xf]
          %v5945 = vld [vmem:[%s7 + $0x60] sm:$0xf]
          %v5946 = vld [vmem:[%s7 + $0x64] sm:$0xf]
          %v5947 = vld [vmem:[%s7 + $0x68] sm:$0xf]
          %v5948 = vld [vmem:[%s7 + $0x6c] sm:$0xf]
          %v5949 = vld [vmem:[%s7 + $0x70] sm:$0xf]
          %v5950 = vld [vmem:[%s7 + $0x74] sm:$0xf]
          %v5951 = vld [vmem:[%s7 + $0x78] sm:$0xf]
          %v5952 = vld [vmem:[%s7 + $0x7c] sm:$0xf]
          %v5953 = vld [vmem:[%s7 + $0x80] sm:$0xf]
          %v5954 = vld [vmem:[%s7 + $0x84] sm:$0xf]
          %v5955 = vld [vmem:[%s7 + $0x88] sm:$0xf]
          %v5956 = vld [vmem:[%s7 + $0x8c] sm:$0xf]
          %v5957 = vld [vmem:[%s7 + $0x90] sm:$0xf]
          %v5958 = vld [vmem:[%s7 + $0x94] sm:$0xf]
          %v5959 = vld [vmem:[%s7 + $0x98] sm:$0xf]
          %v5960 = vld [vmem:[%s7 + $0x9c] sm:$0xf]
          %v5961 = vld [vmem:[%s7 + $0xa0] sm:$0xf]
          %v5962 = vld [vmem:[%s7 + $0xa4] sm:$0xf]
          %v5963 = vld [vmem:[%s7 + $0xa8] sm:$0xf]
          %v5964 = vld [vmem:[%s7 + $0xac] sm:$0xf]
          %v5965 = vld [vmem:[%s7 + $0xb0] sm:$0xf]
          %v5966 = vld [vmem:[%s7 + $0xb4] sm:$0xf]
          %v5967 = vld [vmem:[%s7 + $0xb8] sm:$0xf]
          %v5968 = vld [vmem:[%s7 + $0xbc] sm:$0xf]
          %v5969 = vld [vmem:[%s7 + $0xc0] sm:$0xf]
          %v5970 = vld [vmem:[%s7 + $0xc4] sm:$0xf]
          %v5971 = vld [vmem:[%s7 + $0xc8] sm:$0xf]
          %v5972 = vld [vmem:[%s7 + $0xcc] sm:$0xf]
          %v5973 = vld [vmem:[%s7 + $0xd0] sm:$0xf]
          %v5974 = vld [vmem:[%s7 + $0xd4] sm:$0xf]
          %v5975 = vld [vmem:[%s7 + $0xd8] sm:$0xf]
          %v5976 = vld [vmem:[%s7 + $0xdc] sm:$0xf]
          %v5977 = vld [vmem:[%s7 + $0xe0] sm:$0xf]
          %v5978 = vld [vmem:[%s7 + $0xe4] sm:$0xf]
          %v5979 = vld [vmem:[%s7 + $0xe8] sm:$0xf]
          %v5980 = vld [vmem:[%s7 + $0xec] sm:$0xf]
          %v5981 = vld [vmem:[%s7 + $0xf0] sm:$0xf]
          %v5982 = vld [vmem:[%s7 + $0xf4] sm:$0xf]
          %v5983 = vld [vmem:[%s7 + $0xf8] sm:$0xf]
          %v5984 = vld [vmem:[%s7 + $0xfc] sm:$0xf]
          %v5985 = vld [vmem:[%s7 + $0x100] sm:$0xf]
          %v5986 = vld [vmem:[%s7 + $0x104] sm:$0xf]
          %v5987 = vld [vmem:[%s7 + $0x108] sm:$0xf]
          %v5988 = vld [vmem:[%s7 + $0x10c] sm:$0xf]
          %v5989 = vld [vmem:[%s7 + $0x110] sm:$0xf]
          %v5990 = vld [vmem:[%s7 + $0x114] sm:$0xf]
          %v5991 = vld [vmem:[%s7 + $0x118] sm:$0xf]
          %v5992 = vld [vmem:[%s7 + $0x11c] sm:$0xf]
          %v5993 = vld [vmem:[%s7 + $0x120] sm:$0xf]
          %v5994 = vld [vmem:[%s7 + $0x124] sm:$0xf]
          %v5995 = vld [vmem:[%s7 + $0x128] sm:$0xf]
          %v5996 = vld [vmem:[%s7 + $0x12c] sm:$0xf]
          %v5997 = vld [vmem:[%s7 + $0x130] sm:$0xf]
          %v5998 = vld [vmem:[%s7 + $0x134] sm:$0xf]
          %v5999 = vld [vmem:[%s7 + $0x138] sm:$0xf]
          %v6000 = vld [vmem:[%s7 + $0x13c] sm:$0xf]
          %v6001 = vld [vmem:[%s7 + $0x140] sm:$0xf]
          %v6002 = vld [vmem:[%s7 + $0x144] sm:$0xf]
          %v6003 = vld [vmem:[%s7 + $0x148] sm:$0xf]
          %v6004 = vld [vmem:[%s7 + $0x14c] sm:$0xf]
          %v6005 = vld [vmem:[%s7 + $0x150] sm:$0xf]
          %v6006 = vld [vmem:[%s7 + $0x154] sm:$0xf]
          %v6007 = vld [vmem:[%s7 + $0x158] sm:$0xf]
          %v6008 = vld [vmem:[%s7 + $0x15c] sm:$0xf]
          %v6009 = vld [vmem:[%s7 + $0x160] sm:$0xf]
          %v6010 = vld [vmem:[%s7 + $0x164] sm:$0xf]
          %v6011 = vld [vmem:[%s7 + $0x168] sm:$0xf]
          %v6012 = vld [vmem:[%s7 + $0x16c] sm:$0xf]
          %v6013 = vld [vmem:[%s7 + $0x170] sm:$0xf]
          %v6014 = vld [vmem:[%s7 + $0x174] sm:$0xf]
          %v6015 = vld [vmem:[%s7 + $0x178] sm:$0xf]
          %v6016 = vld [vmem:[%s7 + $0x17c] sm:$0xf]
          %v6017 = vld [vmem:[%s7 + $0x180] sm:$0xf]
          %v6018 = vld [vmem:[%s7 + $0x184] sm:$0xf]
          %v6019 = vld [vmem:[%s7 + $0x188] sm:$0xf]
          %v6020 = vld [vmem:[%s7 + $0x18c] sm:$0xf]
          %v6021 = vld [vmem:[%s7 + $0x190] sm:$0xf]
          %v6022 = vld [vmem:[%s7 + $0x194] sm:$0xf]
          %v6023 = vld [vmem:[%s7 + $0x198] sm:$0xf]
          %v6024 = vld [vmem:[%s7 + $0x19c] sm:$0xf]
          %v6025 = vld [vmem:[%s7 + $0x1a0] sm:$0xf]
          %v6026 = vld [vmem:[%s7 + $0x1a4] sm:$0xf]
          %v6027 = vld [vmem:[%s7 + $0x1a8] sm:$0xf]
          %v6028 = vld [vmem:[%s7 + $0x1ac] sm:$0xf]
          %v6029 = vld [vmem:[%s7 + $0x1b0] sm:$0xf]
          %v6030 = vld [vmem:[%s7 + $0x1b4] sm:$0xf]
          %v6031 = vld [vmem:[%s7 + $0x1b8] sm:$0xf]
          %v6032 = vld [vmem:[%s7 + $0x1bc] sm:$0xf]
          %v6033 = vld [vmem:[%s7 + $0x1c0] sm:$0xf]
          %v6034 = vld [vmem:[%s7 + $0x1c4] sm:$0xf]
          %v6035 = vld [vmem:[%s7 + $0x1c8] sm:$0xf]
          %v6036 = vld [vmem:[%s7 + $0x1cc] sm:$0xf]
          %v6037 = vld [vmem:[%s7 + $0x1d0] sm:$0xf]
          %v6038 = vld [vmem:[%s7 + $0x1d4] sm:$0xf]
          %v6039 = vld [vmem:[%s7 + $0x1d8] sm:$0xf]
          %v6040 = vld [vmem:[%s7 + $0x1dc] sm:$0xf]
          %v6041 = vld [vmem:[%s7 + $0x1e0] sm:$0xf]
          %v6042 = vld [vmem:[%s7 + $0x1e4] sm:$0xf]
          %v6043 = vld [vmem:[%s7 + $0x1e8] sm:$0xf]
          %v6044 = vld [vmem:[%s7 + $0x1ec] sm:$0xf]
          %v6045 = vld [vmem:[%s7 + $0x1f0] sm:$0xf]
          %v6046 = vld [vmem:[%s7 + $0x1f4] sm:$0xf]
          %v6047 = vld [vmem:[%s7 + $0x1f8] sm:$0xf]
          %v6048 = vld [vmem:[%s7 + $0x1fc] sm:$0xf]
          %v6049 = vld [vmem:[%s7 + $0x200] sm:$0xf]
          %v6050 = vld [vmem:[%s7 + $0x204] sm:$0xf]
          %v6051 = vld [vmem:[%s7 + $0x208] sm:$0xf]
          %v6052 = vld [vmem:[%s7 + $0x20c] sm:$0xf]
          %v6053 = vld [vmem:[%s7 + $0x210] sm:$0xf]
          %v6054 = vld [vmem:[%s7 + $0x214] sm:$0xf]
          %v6055 = vld [vmem:[%s7 + $0x218] sm:$0xf]
          %v6056 = vld [vmem:[%s7 + $0x21c] sm:$0xf]
          %v6057 = vld [vmem:[%s7 + $0x220] sm:$0xf]
          %v6058 = vld [vmem:[%s7 + $0x224] sm:$0xf]
          %v6059 = vld [vmem:[%s7 + $0x228] sm:$0xf]
          %v6060 = vld [vmem:[%s7 + $0x22c] sm:$0xf]
          %v6061 = vld [vmem:[%s7 + $0x230] sm:$0xf]
          %v6062 = vld [vmem:[%s7 + $0x234] sm:$0xf]
          %v6063 = vld [vmem:[%s7 + $0x238] sm:$0xf]
          %v6064 = vld [vmem:[%s7 + $0x23c] sm:$0xf]
          %v6065 = vld [vmem:[%s7 + $0x240] sm:$0xf]
          %v6066 = vld [vmem:[%s7 + $0x244] sm:$0xf]
          %v6067 = vld [vmem:[%s7 + $0x248] sm:$0xf]
          %v6068 = vld [vmem:[%s7 + $0x24c] sm:$0xf]
          %v6069 = vld [vmem:[%s7 + $0x250] sm:$0xf]
          %v6070 = vld [vmem:[%s7 + $0x254] sm:$0xf]
          %v6071 = vld [vmem:[%s7 + $0x258] sm:$0xf]
          %v6072 = vld [vmem:[%s7 + $0x25c] sm:$0xf]
          %v6073 = vld [vmem:[%s7 + $0x260] sm:$0xf]
          %v6074 = vld [vmem:[%s7 + $0x264] sm:$0xf]
          %v6075 = vld [vmem:[%s7 + $0x268] sm:$0xf]
          %v6076 = vld [vmem:[%s7 + $0x26c] sm:$0xf]
          %v6077 = vld [vmem:[%s7 + $0x270] sm:$0xf]
          %v6078 = vld [vmem:[%s7 + $0x274] sm:$0xf]
          %v6079 = vld [vmem:[%s7 + $0x278] sm:$0xf]
          %v6080 = vld [vmem:[%s7 + $0x27c] sm:$0xf]
          %v6081 = vld [vmem:[%s7 + $0x280] sm:$0xf]
          %v6082 = vld [vmem:[%s7 + $0x284] sm:$0xf]
          %v6083 = vld [vmem:[%s7 + $0x288] sm:$0xf]
          %v6084 = vld [vmem:[%s7 + $0x28c] sm:$0xf]
          %v6085 = vld [vmem:[%s7 + $0x290] sm:$0xf]
          %v6086 = vld [vmem:[%s7 + $0x294] sm:$0xf]
          %v6087 = vld [vmem:[%s7 + $0x298] sm:$0xf]
          %v6088 = vld [vmem:[%s7 + $0x29c] sm:$0xf]
          %v6089 = vld [vmem:[%s7 + $0x2a0] sm:$0xf]
          %v6090 = vld [vmem:[%s7 + $0x2a4] sm:$0xf]
          %v6091 = vld [vmem:[%s7 + $0x2a8] sm:$0xf]
          %v6092 = vld [vmem:[%s7 + $0x2ac] sm:$0xf]
          %v6093 = vld [vmem:[%s7 + $0x2b0] sm:$0xf]
          %v6094 = vld [vmem:[%s7 + $0x2b4] sm:$0xf]
          %v6095 = vld [vmem:[%s7 + $0x2b8] sm:$0xf]
          %v6096 = vld [vmem:[%s7 + $0x2bc] sm:$0xf]
          %v6097 = vld [vmem:[%s7 + $0x2c0] sm:$0xf]
          %v6098 = vld [vmem:[%s7 + $0x2c4] sm:$0xf]
          %v6099 = vld [vmem:[%s7 + $0x2c8] sm:$0xf]
          %v6100 = vld [vmem:[%s7 + $0x2cc] sm:$0xf]
          %v6101 = vld [vmem:[%s7 + $0x2d0] sm:$0xf]
          %v6102 = vld [vmem:[%s7 + $0x2d4] sm:$0xf]
          %v6103 = vld [vmem:[%s7 + $0x2d8] sm:$0xf]
          %v6104 = vld [vmem:[%s7 + $0x2dc] sm:$0xf]
          %v6105 = vld [vmem:[%s7 + $0x2e0] sm:$0xf]
          %v6106 = vld [vmem:[%s7 + $0x2e4] sm:$0xf]
          %v6107 = vld [vmem:[%s7 + $0x2e8] sm:$0xf]
          %v6108 = vld [vmem:[%s7 + $0x2ec] sm:$0xf]
          %v6109 = vld [vmem:[%s7 + $0x2f0] sm:$0xf]
          %v6110 = vld [vmem:[%s7 + $0x2f4] sm:$0xf]
          %v6111 = vld [vmem:[%s7 + $0x2f8] sm:$0xf]
          %v6112 = vld [vmem:[%s7 + $0x2fc] sm:$0xf]
          %v6113 = vld [vmem:[%s7 + $0x300] sm:$0xf]
          %v6114 = vld [vmem:[%s7 + $0x304] sm:$0xf]
          %v6115 = vld [vmem:[%s7 + $0x308] sm:$0xf]
          %v6116 = vld [vmem:[%s7 + $0x30c] sm:$0xf]
          %v6117 = vld [vmem:[%s7 + $0x310] sm:$0xf]
          %v6118 = vld [vmem:[%s7 + $0x314] sm:$0xf]
          %v6119 = vld [vmem:[%s7 + $0x318] sm:$0xf]
          %v6120 = vld [vmem:[%s7 + $0x31c] sm:$0xf]
          %v6121 = vld [vmem:[%s8] sm:$0x1]
          %v6123 = vlaneseq
          %v6124 = vshrl.u32 %v6123, 7
          %v6125 = vsub.s32 0, %v6124
          %v6126 = vrot.slane %v6121, %v6125
          %v6328 = vunpack.c.l.b16 %v5921
          %v6329 = vunpack.c.l.b16 %v5922
          %v6330 = vunpack.c.l.b16 %v5923
          %v6331 = vunpack.c.l.b16 %v5924
          %v6332 = vunpack.c.l.b16 %v5925
          %v6333 = vunpack.c.l.b16 %v5926
          %v6334 = vunpack.c.l.b16 %v5927
          %v6335 = vunpack.c.l.b16 %v5928
          %v6336 = vunpack.c.l.b16 %v5929
          %v6337 = vunpack.c.l.b16 %v5930
          %v6338 = vunpack.c.l.b16 %v5931
          %v6339 = vunpack.c.l.b16 %v5932
          %v6340 = vunpack.c.l.b16 %v5933
          %v6341 = vunpack.c.l.b16 %v5934
          %v6342 = vunpack.c.l.b16 %v5935
          %v6343 = vunpack.c.l.b16 %v5936
          %v6344 = vunpack.c.l.b16 %v5937
          %v6345 = vunpack.c.l.b16 %v5938
          %v6346 = vunpack.c.l.b16 %v5939
          %v6347 = vunpack.c.l.b16 %v5940
          %v6348 = vunpack.c.l.b16 %v5941
          %v6349 = vunpack.c.l.b16 %v5942
          %v6350 = vunpack.c.l.b16 %v5943
          %v6351 = vunpack.c.l.b16 %v5944
          %v6352 = vunpack.c.l.b16 %v5945
          %v6353 = vunpack.c.l.b16 %v5946
          %v6354 = vunpack.c.l.b16 %v5947
          %v6355 = vunpack.c.l.b16 %v5948
          %v6356 = vunpack.c.l.b16 %v5949
          %v6357 = vunpack.c.l.b16 %v5950
          %v6358 = vunpack.c.l.b16 %v5951
          %v6359 = vunpack.c.l.b16 %v5952
          %v6360 = vunpack.c.l.b16 %v5953
          %v6361 = vunpack.c.l.b16 %v5954
          %v6362 = vunpack.c.l.b16 %v5955
          %v6363 = vunpack.c.l.b16 %v5956
          %v6364 = vunpack.c.l.b16 %v5957
          %v6365 = vunpack.c.l.b16 %v5958
          %v6366 = vunpack.c.l.b16 %v5959
          %v6367 = vunpack.c.l.b16 %v5960
          %v6368 = vunpack.c.l.b16 %v5961
          %v6369 = vunpack.c.l.b16 %v5962
          %v6370 = vunpack.c.l.b16 %v5963
          %v6371 = vunpack.c.l.b16 %v5964
          %v6372 = vunpack.c.l.b16 %v5965
          %v6373 = vunpack.c.l.b16 %v5966
          %v6374 = vunpack.c.l.b16 %v5967
          %v6375 = vunpack.c.l.b16 %v5968
          %v6376 = vunpack.c.l.b16 %v5969
          %v6377 = vunpack.c.l.b16 %v5970
          %v6378 = vunpack.c.l.b16 %v5971
          %v6379 = vunpack.c.l.b16 %v5972
          %v6380 = vunpack.c.l.b16 %v5973
          %v6381 = vunpack.c.l.b16 %v5974
          %v6382 = vunpack.c.l.b16 %v5975
          %v6383 = vunpack.c.l.b16 %v5976
          %v6384 = vunpack.c.l.b16 %v5977
          %v6385 = vunpack.c.l.b16 %v5978
          %v6386 = vunpack.c.l.b16 %v5979
          %v6387 = vunpack.c.l.b16 %v5980
          %v6388 = vunpack.c.l.b16 %v5981
          %v6389 = vunpack.c.l.b16 %v5982
          %v6390 = vunpack.c.l.b16 %v5983
          %v6391 = vunpack.c.l.b16 %v5984
          %v6392 = vunpack.c.l.b16 %v5985
          %v6393 = vunpack.c.l.b16 %v5986
          %v6394 = vunpack.c.l.b16 %v5987
          %v6395 = vunpack.c.l.b16 %v5988
          %v6396 = vunpack.c.l.b16 %v5989
          %v6397 = vunpack.c.l.b16 %v5990
          %v6398 = vunpack.c.l.b16 %v5991
          %v6399 = vunpack.c.l.b16 %v5992
          %v6400 = vunpack.c.l.b16 %v5993
          %v6401 = vunpack.c.l.b16 %v5994
          %v6402 = vunpack.c.l.b16 %v5995
          %v6403 = vunpack.c.l.b16 %v5996
          %v6404 = vunpack.c.l.b16 %v5997
          %v6405 = vunpack.c.l.b16 %v5998
          %v6406 = vunpack.c.l.b16 %v5999
          %v6407 = vunpack.c.l.b16 %v6000
          %v6408 = vunpack.c.l.b16 %v6001
          %v6409 = vunpack.c.l.b16 %v6002
          %v6410 = vunpack.c.l.b16 %v6003
          %v6411 = vunpack.c.l.b16 %v6004
          %v6412 = vunpack.c.l.b16 %v6005
          %v6413 = vunpack.c.l.b16 %v6006
          %v6414 = vunpack.c.l.b16 %v6007
          %v6415 = vunpack.c.l.b16 %v6008
          %v6416 = vunpack.c.l.b16 %v6009
          %v6417 = vunpack.c.l.b16 %v6010
          %v6418 = vunpack.c.l.b16 %v6011
          %v6419 = vunpack.c.l.b16 %v6012
          %v6420 = vunpack.c.l.b16 %v6013
          %v6421 = vunpack.c.l.b16 %v6014
          %v6422 = vunpack.c.l.b16 %v6015
          %v6423 = vunpack.c.l.b16 %v6016
          %v6424 = vunpack.c.l.b16 %v6017
          %v6425 = vunpack.c.l.b16 %v6018
          %v6426 = vunpack.c.l.b16 %v6019
          %v6427 = vunpack.c.l.b16 %v6020
          %v6428 = vunpack.c.l.b16 %v6021
          %v6429 = vunpack.c.l.b16 %v6022
          %v6430 = vunpack.c.l.b16 %v6023
          %v6431 = vunpack.c.l.b16 %v6024
          %v6432 = vunpack.c.l.b16 %v6025
          %v6433 = vunpack.c.l.b16 %v6026
          %v6434 = vunpack.c.l.b16 %v6027
          %v6435 = vunpack.c.l.b16 %v6028
          %v6436 = vunpack.c.l.b16 %v6029
          %v6437 = vunpack.c.l.b16 %v6030
          %v6438 = vunpack.c.l.b16 %v6031
          %v6439 = vunpack.c.l.b16 %v6032
          %v6440 = vunpack.c.l.b16 %v6033
          %v6441 = vunpack.c.l.b16 %v6034
          %v6442 = vunpack.c.l.b16 %v6035
          %v6443 = vunpack.c.l.b16 %v6036
          %v6444 = vunpack.c.l.b16 %v6037
          %v6445 = vunpack.c.l.b16 %v6038
          %v6446 = vunpack.c.l.b16 %v6039
          %v6447 = vunpack.c.l.b16 %v6040
          %v6448 = vunpack.c.l.b16 %v6041
          %v6449 = vunpack.c.l.b16 %v6042
          %v6450 = vunpack.c.l.b16 %v6043
          %v6451 = vunpack.c.l.b16 %v6044
          %v6452 = vunpack.c.l.b16 %v6045
          %v6453 = vunpack.c.l.b16 %v6046
          %v6454 = vunpack.c.l.b16 %v6047
          %v6455 = vunpack.c.l.b16 %v6048
          %v6456 = vunpack.c.l.b16 %v6049
          %v6457 = vunpack.c.l.b16 %v6050
          %v6458 = vunpack.c.l.b16 %v6051
          %v6459 = vunpack.c.l.b16 %v6052
          %v6460 = vunpack.c.l.b16 %v6053
          %v6461 = vunpack.c.l.b16 %v6054
          %v6462 = vunpack.c.l.b16 %v6055
          %v6463 = vunpack.c.l.b16 %v6056
          %v6464 = vunpack.c.l.b16 %v6057
          %v6465 = vunpack.c.l.b16 %v6058
          %v6466 = vunpack.c.l.b16 %v6059
          %v6467 = vunpack.c.l.b16 %v6060
          %v6468 = vunpack.c.l.b16 %v6061
          %v6469 = vunpack.c.l.b16 %v6062
          %v6470 = vunpack.c.l.b16 %v6063
          %v6471 = vunpack.c.l.b16 %v6064
          %v6472 = vunpack.c.l.b16 %v6065
          %v6473 = vunpack.c.l.b16 %v6066
          %v6474 = vunpack.c.l.b16 %v6067
          %v6475 = vunpack.c.l.b16 %v6068
          %v6476 = vunpack.c.l.b16 %v6069
          %v6477 = vunpack.c.l.b16 %v6070
          %v6478 = vunpack.c.l.b16 %v6071
          %v6479 = vunpack.c.l.b16 %v6072
          %v6480 = vunpack.c.l.b16 %v6073
          %v6481 = vunpack.c.l.b16 %v6074
          %v6482 = vunpack.c.l.b16 %v6075
          %v6483 = vunpack.c.l.b16 %v6076
          %v6484 = vunpack.c.l.b16 %v6077
          %v6485 = vunpack.c.l.b16 %v6078
          %v6486 = vunpack.c.l.b16 %v6079
          %v6487 = vunpack.c.l.b16 %v6080
          %v6488 = vunpack.c.l.b16 %v6081
          %v6489 = vunpack.c.l.b16 %v6082
          %v6490 = vunpack.c.l.b16 %v6083
          %v6491 = vunpack.c.l.b16 %v6084
          %v6492 = vunpack.c.l.b16 %v6085
          %v6493 = vunpack.c.l.b16 %v6086
          %v6494 = vunpack.c.l.b16 %v6087
          %v6495 = vunpack.c.l.b16 %v6088
          %v6496 = vunpack.c.l.b16 %v6089
          %v6497 = vunpack.c.l.b16 %v6090
          %v6498 = vunpack.c.l.b16 %v6091
          %v6499 = vunpack.c.l.b16 %v6092
          %v6500 = vunpack.c.l.b16 %v6093
          %v6501 = vunpack.c.l.b16 %v6094
          %v6502 = vunpack.c.l.b16 %v6095
          %v6503 = vunpack.c.l.b16 %v6096
          %v6504 = vunpack.c.l.b16 %v6097
          %v6505 = vunpack.c.l.b16 %v6098
          %v6506 = vunpack.c.l.b16 %v6099
          %v6507 = vunpack.c.l.b16 %v6100
          %v6508 = vunpack.c.l.b16 %v6101
          %v6509 = vunpack.c.l.b16 %v6102
          %v6510 = vunpack.c.l.b16 %v6103
          %v6511 = vunpack.c.l.b16 %v6104
          %v6512 = vunpack.c.l.b16 %v6105
          %v6513 = vunpack.c.l.b16 %v6106
          %v6514 = vunpack.c.l.b16 %v6107
          %v6515 = vunpack.c.l.b16 %v6108
          %v6516 = vunpack.c.l.b16 %v6109
          %v6517 = vunpack.c.l.b16 %v6110
          %v6518 = vunpack.c.l.b16 %v6111
          %v6519 = vunpack.c.l.b16 %v6112
          %v6520 = vunpack.c.l.b16 %v6113
          %v6521 = vunpack.c.l.b16 %v6114
          %v6522 = vunpack.c.l.b16 %v6115
          %v6523 = vunpack.c.l.b16 %v6116
          %v6524 = vunpack.c.l.b16 %v6117
          %v6525 = vunpack.c.l.b16 %v6118
          %v6526 = vunpack.c.l.b16 %v6119
          %v6527 = vunpack.c.l.b16 %v6120
          %v6528 = vpack.c.b16 %v6329, %v6328
          %v6529 = vpack.c.b16 %v6331, %v6330
          %v6530 = vpack.c.b16 %v6333, %v6332
          %v6531 = vpack.c.b16 %v6335, %v6334
          %v6532 = vpack.c.b16 %v6337, %v6336
          %v6533 = vpack.c.b16 %v6339, %v6338
          %v6534 = vpack.c.b16 %v6341, %v6340
          %v6535 = vpack.c.b16 %v6343, %v6342
          %v6536 = vpack.c.b16 %v6345, %v6344
          %v6537 = vpack.c.b16 %v6347, %v6346
          %v6538 = vpack.c.b16 %v6349, %v6348
          %v6539 = vpack.c.b16 %v6351, %v6350
          %v6540 = vpack.c.b16 %v6353, %v6352
          %v6541 = vpack.c.b16 %v6355, %v6354
          %v6542 = vpack.c.b16 %v6357, %v6356
          %v6543 = vpack.c.b16 %v6359, %v6358
          %v6544 = vpack.c.b16 %v6361, %v6360
          %v6545 = vpack.c.b16 %v6363, %v6362
          %v6546 = vpack.c.b16 %v6365, %v6364
          %v6547 = vpack.c.b16 %v6367, %v6366
          %v6548 = vpack.c.b16 %v6369, %v6368
          %v6549 = vpack.c.b16 %v6371, %v6370
          %v6550 = vpack.c.b16 %v6373, %v6372
          %v6551 = vpack.c.b16 %v6375, %v6374
          %v6552 = vpack.c.b16 %v6377, %v6376
          %v6553 = vpack.c.b16 %v6379, %v6378
          %v6554 = vpack.c.b16 %v6381, %v6380
          %v6555 = vpack.c.b16 %v6383, %v6382
          %v6556 = vpack.c.b16 %v6385, %v6384
          %v6557 = vpack.c.b16 %v6387, %v6386
          %v6558 = vpack.c.b16 %v6389, %v6388
          %v6559 = vpack.c.b16 %v6391, %v6390
          %v6560 = vpack.c.b16 %v6393, %v6392
          %v6561 = vpack.c.b16 %v6395, %v6394
          %v6562 = vpack.c.b16 %v6397, %v6396
          %v6563 = vpack.c.b16 %v6399, %v6398
          %v6564 = vpack.c.b16 %v6401, %v6400
          %v6565 = vpack.c.b16 %v6403, %v6402
          %v6566 = vpack.c.b16 %v6405, %v6404
          %v6567 = vpack.c.b16 %v6407, %v6406
          %v6568 = vpack.c.b16 %v6409, %v6408
          %v6569 = vpack.c.b16 %v6411, %v6410
          %v6570 = vpack.c.b16 %v6413, %v6412
          %v6571 = vpack.c.b16 %v6415, %v6414
          %v6572 = vpack.c.b16 %v6417, %v6416
          %v6573 = vpack.c.b16 %v6419, %v6418
          %v6574 = vpack.c.b16 %v6421, %v6420
          %v6575 = vpack.c.b16 %v6423, %v6422
          %v6576 = vpack.c.b16 %v6425, %v6424
          %v6577 = vpack.c.b16 %v6427, %v6426
          %v6578 = vpack.c.b16 %v6429, %v6428
          %v6579 = vpack.c.b16 %v6431, %v6430
          %v6580 = vpack.c.b16 %v6433, %v6432
          %v6581 = vpack.c.b16 %v6435, %v6434
          %v6582 = vpack.c.b16 %v6437, %v6436
          %v6583 = vpack.c.b16 %v6439, %v6438
          %v6584 = vpack.c.b16 %v6441, %v6440
          %v6585 = vpack.c.b16 %v6443, %v6442
          %v6586 = vpack.c.b16 %v6445, %v6444
          %v6587 = vpack.c.b16 %v6447, %v6446
          %v6588 = vpack.c.b16 %v6449, %v6448
          %v6589 = vpack.c.b16 %v6451, %v6450
          %v6590 = vpack.c.b16 %v6453, %v6452
          %v6591 = vpack.c.b16 %v6455, %v6454
          %v6592 = vpack.c.b16 %v6457, %v6456
          %v6593 = vpack.c.b16 %v6459, %v6458
          %v6594 = vpack.c.b16 %v6461, %v6460
          %v6595 = vpack.c.b16 %v6463, %v6462
          %v6596 = vpack.c.b16 %v6465, %v6464
          %v6597 = vpack.c.b16 %v6467, %v6466
          %v6598 = vpack.c.b16 %v6469, %v6468
          %v6599 = vpack.c.b16 %v6471, %v6470
          %v6600 = vpack.c.b16 %v6473, %v6472
          %v6601 = vpack.c.b16 %v6475, %v6474
          %v6602 = vpack.c.b16 %v6477, %v6476
          %v6603 = vpack.c.b16 %v6479, %v6478
          %v6604 = vpack.c.b16 %v6481, %v6480
          %v6605 = vpack.c.b16 %v6483, %v6482
          %v6606 = vpack.c.b16 %v6485, %v6484
          %v6607 = vpack.c.b16 %v6487, %v6486
          %v6608 = vpack.c.b16 %v6489, %v6488
          %v6609 = vpack.c.b16 %v6491, %v6490
          %v6610 = vpack.c.b16 %v6493, %v6492
          %v6611 = vpack.c.b16 %v6495, %v6494
          %v6612 = vpack.c.b16 %v6497, %v6496
          %v6613 = vpack.c.b16 %v6499, %v6498
          %v6614 = vpack.c.b16 %v6501, %v6500
          %v6615 = vpack.c.b16 %v6503, %v6502
          %v6616 = vpack.c.b16 %v6505, %v6504
          %v6617 = vpack.c.b16 %v6507, %v6506
          %v6618 = vpack.c.b16 %v6509, %v6508
          %v6619 = vpack.c.b16 %v6511, %v6510
          %v6620 = vpack.c.b16 %v6513, %v6512
          %v6621 = vpack.c.b16 %v6515, %v6514
          %v6622 = vpack.c.b16 %v6517, %v6516
          %v6623 = vpack.c.b16 %v6519, %v6518
          %v6624 = vpack.c.b16 %v6521, %v6520
          %v6625 = vpack.c.b16 %v6523, %v6522
          %v6626 = vpack.c.b16 %v6525, %v6524
          %v6627 = vpack.c.b16 %v6527, %v6526
          %vm6728 = vcmask 523264
          %v6730 = vsel %vm6728, %v5920, 0
          %6732 = vmatprep.subr.bf16.mxu0 0
          %6733 = vmatpush1.bf16.msra.mxu0 %v6528
          %6734 = vmatprep.subr.bf16.mxu0 0
          %6735 = vmatpush1.bf16.msra.mxu0 %v6529
          %6736 = vmatprep.subr.bf16.mxu0 0
          %6737 = vmatpush1.bf16.msra.mxu0 %v6530
          %6738 = vmatprep.subr.bf16.mxu0 0
          %6739 = vmatpush1.bf16.msra.mxu0 %v6531
          %6740 = vmatprep.subr.bf16.mxu0 0
          %6741 = vmatpush1.bf16.msra.mxu0 %v6532
          %6742 = vmatprep.subr.bf16.mxu0 0
          %6743 = vmatpush1.bf16.msra.mxu0 %v6533
          %6744 = vmatprep.subr.bf16.mxu0 0
          %6745 = vmatpush1.bf16.msra.mxu0 %v6534
          %6746 = vmatprep.subr.bf16.mxu0 0
          %6747 = vmatpush1.bf16.msra.mxu0 %v6535
          %6748 = vmatprep.subr.bf16.mxu0 0
          %6749 = vmatpush1.bf16.msra.mxu0 %v6536
          %6750 = vmatprep.subr.bf16.mxu0 0
          %6751 = vmatpush1.bf16.msra.mxu0 %v6537
          %6752 = vmatprep.subr.bf16.mxu0 0
          %6753 = vmatpush1.bf16.msra.mxu0 %v6538
          %6754 = vmatprep.subr.bf16.mxu0 0
          %6755 = vmatpush1.bf16.msra.mxu0 %v6539
          %6756 = vmatprep.subr.bf16.mxu0 0
          %6757 = vmatpush1.bf16.msra.mxu0 %v6540
          %6758 = vmatprep.subr.bf16.mxu0 0
          %6759 = vmatpush1.bf16.msra.mxu0 %v6541
          %6760 = vmatprep.subr.bf16.mxu0 0
          %6761 = vmatpush1.bf16.msra.mxu0 %v6542
          %6762 = vmatprep.subr.bf16.mxu0 0
          %6763 = vmatpush1.bf16.msra.mxu0 %v6543
          %6764 = vmatprep.mubr.bf16.mxu0 %v5909
          %6765 = vmatmul.mubr.bf16.gmra.mrb[0].mxu0 %v5908
          %v6766 = vpop.f32.mrb[0].mxu0
          %v6767 = vadd.f32 %v6126, %v6766
          %v6768 = vpop.f32.mrb[0].mxu0
          %v6769 = vpop.f32.mrb[0].mxu0
          %v6770 = vpop.f32.mrb[0].mxu0
          %6771 = vdwg.mxu0
          %6772 = vmatprep.subr.bf16.mxu0 0
          %6773 = vmatpush1.bf16.msra.mxu0 %v6544
          %6774 = vmatprep.subr.bf16.mxu0 0
          %6775 = vmatpush1.bf16.msra.mxu0 %v6545
          %6776 = vmatprep.subr.bf16.mxu0 0
          %6777 = vmatpush1.bf16.msra.mxu0 %v6546
          %6778 = vmatprep.subr.bf16.mxu0 0
          %6779 = vmatpush1.bf16.msra.mxu0 %v6547
          %6780 = vmatprep.subr.bf16.mxu0 0
          %6781 = vmatpush1.bf16.msra.mxu0 %v6548
          %6782 = vmatprep.subr.bf16.mxu0 0
          %6783 = vmatpush1.bf16.msra.mxu0 %v6549
          %6784 = vmatprep.subr.bf16.mxu0 0
          %6785 = vmatpush1.bf16.msra.mxu0 %v6550
          %6786 = vmatprep.subr.bf16.mxu0 0
          %6787 = vmatpush1.bf16.msra.mxu0 %v6551
          %6788 = vmatprep.subr.bf16.mxu0 0
          %6789 = vmatpush1.bf16.msra.mxu0 %v6552
          %6790 = vmatprep.subr.bf16.mxu0 0
          %6791 = vmatpush1.bf16.msra.mxu0 %v6553
          %6792 = vmatprep.subr.bf16.mxu0 0
          %6793 = vmatpush1.bf16.msra.mxu0 %v6554
          %6794 = vmatprep.subr.bf16.mxu0 0
          %6795 = vmatpush1.bf16.msra.mxu0 %v6555
          %6796 = vmatprep.subr.bf16.mxu0 0
          %6797 = vmatpush1.bf16.msra.mxu0 %v6556
          %6798 = vmatprep.subr.bf16.mxu0 0
          %6799 = vmatpush1.bf16.msra.mxu0 %v6557
          %6800 = vmatprep.subr.bf16.mxu0 0
          %6801 = vmatpush1.bf16.msra.mxu0 %v6558
          %6802 = vmatprep.subr.bf16.mxu0 0
          %6803 = vmatpush1.bf16.msra.mxu0 %v6559
          %6804 = vmatprep.mubr.bf16.mxu0 %v5911
          %6805 = vmatmul.mubr.bf16.gmra.mrb[0].mxu0 %v5910
          %v6806 = vpop.f32.mrb[0].mxu0
          %v6807 = vadd.f32 %v6767, %v6806
          %v6808 = vpop.f32.mrb[0].mxu0
          %v6809 = vpop.f32.mrb[0].mxu0
          %v6810 = vpop.f32.mrb[0].mxu0
          %6811 = vdwg.mxu0
          %6812 = vmatprep.subr.bf16.mxu0 0
          %6813 = vmatpush1.bf16.msra.mxu0 %v6560
          %6814 = vmatprep.subr.bf16.mxu0 0
          %6815 = vmatpush1.bf16.msra.mxu0 %v6561
          %6816 = vmatprep.subr.bf16.mxu0 0
          %6817 = vmatpush1.bf16.msra.mxu0 %v6562
          %6818 = vmatprep.subr.bf16.mxu0 0
          %6819 = vmatpush1.bf16.msra.mxu0 %v6563
          %6820 = vmatprep.subr.bf16.mxu0 0
          %6821 = vmatpush1.bf16.msra.mxu0 %v6564
          %6822 = vmatprep.subr.bf16.mxu0 0
          %6823 = vmatpush1.bf16.msra.mxu0 %v6565
          %6824 = vmatprep.subr.bf16.mxu0 0
          %6825 = vmatpush1.bf16.msra.mxu0 %v6566
          %6826 = vmatprep.subr.bf16.mxu0 0
          %6827 = vmatpush1.bf16.msra.mxu0 %v6567
          %6828 = vmatprep.subr.bf16.mxu0 0
          %6829 = vmatpush1.bf16.msra.mxu0 %v6568
          %6830 = vmatprep.subr.bf16.mxu0 0
          %6831 = vmatpush1.bf16.msra.mxu0 %v6569
          %6832 = vmatprep.subr.bf16.mxu0 0
          %6833 = vmatpush1.bf16.msra.mxu0 %v6570
          %6834 = vmatprep.subr.bf16.mxu0 0
          %6835 = vmatpush1.bf16.msra.mxu0 %v6571
          %6836 = vmatprep.subr.bf16.mxu0 0
          %6837 = vmatpush1.bf16.msra.mxu0 %v6572
          %6838 = vmatprep.subr.bf16.mxu0 0
          %6839 = vmatpush1.bf16.msra.mxu0 %v6573
          %6840 = vmatprep.subr.bf16.mxu0 0
          %6841 = vmatpush1.bf16.msra.mxu0 %v6574
          %6842 = vmatprep.subr.bf16.mxu0 0
          %6843 = vmatpush1.bf16.msra.mxu0 %v6575
          %6844 = vmatprep.mubr.bf16.mxu0 %v5913
          %6845 = vmatmul.mubr.bf16.gmra.mrb[0].mxu0 %v5912
          %v6846 = vpop.f32.mrb[0].mxu0
          %v6847 = vadd.f32 %v6807, %v6846
          %v6848 = vpop.f32.mrb[0].mxu0
          %v6849 = vpop.f32.mrb[0].mxu0
          %v6850 = vpop.f32.mrb[0].mxu0
          %6851 = vdwg.mxu0
          %6852 = vmatprep.subr.bf16.mxu0 0
          %6853 = vmatpush1.bf16.msra.mxu0 %v6576
          %6854 = vmatprep.subr.bf16.mxu0 0
          %6855 = vmatpush1.bf16.msra.mxu0 %v6577
          %6856 = vmatprep.subr.bf16.mxu0 0
          %6857 = vmatpush1.bf16.msra.mxu0 %v6578
          %6858 = vmatprep.subr.bf16.mxu0 0
          %6859 = vmatpush1.bf16.msra.mxu0 %v6579
          %6860 = vmatprep.subr.bf16.mxu0 0
          %6861 = vmatpush1.bf16.msra.mxu0 %v6580
          %6862 = vmatprep.subr.bf16.mxu0 0
          %6863 = vmatpush1.bf16.msra.mxu0 %v6581
          %6864 = vmatprep.subr.bf16.mxu0 0
          %6865 = vmatpush1.bf16.msra.mxu0 %v6582
          %6866 = vmatprep.subr.bf16.mxu0 0
          %6867 = vmatpush1.bf16.msra.mxu0 %v6583
          %6868 = vmatprep.subr.bf16.mxu0 0
          %6869 = vmatpush1.bf16.msra.mxu0 %v6584
          %6870 = vmatprep.subr.bf16.mxu0 0
          %6871 = vmatpush1.bf16.msra.mxu0 %v6585
          %6872 = vmatprep.subr.bf16.mxu0 0
          %6873 = vmatpush1.bf16.msra.mxu0 %v6586
          %6874 = vmatprep.subr.bf16.mxu0 0
          %6875 = vmatpush1.bf16.msra.mxu0 %v6587
          %6876 = vmatprep.subr.bf16.mxu0 0
          %6877 = vmatpush1.bf16.msra.mxu0 %v6588
          %6878 = vmatprep.subr.bf16.mxu0 0
          %6879 = vmatpush1.bf16.msra.mxu0 %v6589
          %6880 = vmatprep.subr.bf16.mxu0 0
          %6881 = vmatpush1.bf16.msra.mxu0 %v6590
          %6882 = vmatprep.subr.bf16.mxu0 0
          %6883 = vmatpush1.bf16.msra.mxu0 %v6591
          %6884 = vmatprep.mubr.bf16.mxu0 %v5915
          %6885 = vmatmul.mubr.bf16.gmra.mrb[0].mxu0 %v5914
          %v6886 = vpop.f32.mrb[0].mxu0
          %v6887 = vadd.f32 %v6847, %v6886
          %v6888 = vpop.f32.mrb[0].mxu0
          %v6889 = vpop.f32.mrb[0].mxu0
          %v6890 = vpop.f32.mrb[0].mxu0
          %6891 = vdwg.mxu0
          %6892 = vmatprep.subr.bf16.mxu0 0
          %6893 = vmatpush1.bf16.msra.mxu0 %v6592
          %6894 = vmatprep.subr.bf16.mxu0 0
          %6895 = vmatpush1.bf16.msra.mxu0 %v6593
          %6896 = vmatprep.subr.bf16.mxu0 0
          %6897 = vmatpush1.bf16.msra.mxu0 %v6594
          %6898 = vmatprep.subr.bf16.mxu0 0
          %6899 = vmatpush1.bf16.msra.mxu0 %v6595
          %6900 = vmatprep.subr.bf16.mxu0 0
          %6901 = vmatpush1.bf16.msra.mxu0 %v6596
          %6902 = vmatprep.subr.bf16.mxu0 0
          %6903 = vmatpush1.bf16.msra.mxu0 %v6597
          %6904 = vmatprep.subr.bf16.mxu0 0
          %6905 = vmatpush1.bf16.msra.mxu0 %v6598
          %6906 = vmatprep.subr.bf16.mxu0 0
          %6907 = vmatpush1.bf16.msra.mxu0 %v6599
          %6908 = vmatprep.subr.bf16.mxu0 0
          %6909 = vmatpush1.bf16.msra.mxu0 %v6600
          %6910 = vmatprep.subr.bf16.mxu0 0
          %6911 = vmatpush1.bf16.msra.mxu0 %v6601
          %6912 = vmatprep.subr.bf16.mxu0 0
          %6913 = vmatpush1.bf16.msra.mxu0 %v6602
          %6914 = vmatprep.subr.bf16.mxu0 0
          %6915 = vmatpush1.bf16.msra.mxu0 %v6603
          %6916 = vmatprep.subr.bf16.mxu0 0
          %6917 = vmatpush1.bf16.msra.mxu0 %v6604
          %6918 = vmatprep.subr.bf16.mxu0 0
          %6919 = vmatpush1.bf16.msra.mxu0 %v6605
          %6920 = vmatprep.subr.bf16.mxu0 0
          %6921 = vmatpush1.bf16.msra.mxu0 %v6606
          %6922 = vmatprep.subr.bf16.mxu0 0
          %6923 = vmatpush1.bf16.msra.mxu0 %v6607
          %6924 = vmatprep.mubr.bf16.mxu0 %v5917
          %6925 = vmatmul.mubr.bf16.gmra.mrb[0].mxu0 %v5916
          %v6926 = vpop.f32.mrb[0].mxu0
          %v6927 = vadd.f32 %v6887, %v6926
          %v6928 = vpop.f32.mrb[0].mxu0
          %v6929 = vpop.f32.mrb[0].mxu0
          %v6930 = vpop.f32.mrb[0].mxu0
          %6931 = vdwg.mxu0
          %6932 = vmatprep.subr.bf16.mxu0 0
          %6933 = vmatpush1.bf16.msra.mxu0 %v6608
          %6934 = vmatprep.subr.bf16.mxu0 0
          %6935 = vmatpush1.bf16.msra.mxu0 %v6609
          %6936 = vmatprep.subr.bf16.mxu0 0
          %6937 = vmatpush1.bf16.msra.mxu0 %v6610
          %6938 = vmatprep.subr.bf16.mxu0 0
          %6939 = vmatpush1.bf16.msra.mxu0 %v6611
          %6940 = vmatprep.subr.bf16.mxu0 0
          %6941 = vmatpush1.bf16.msra.mxu0 %v6612
          %6942 = vmatprep.subr.bf16.mxu0 0
          %6943 = vmatpush1.bf16.msra.mxu0 %v6613
          %6944 = vmatprep.subr.bf16.mxu0 0
          %6945 = vmatpush1.bf16.msra.mxu0 %v6614
          %6946 = vmatprep.subr.bf16.mxu0 0
          %6947 = vmatpush1.bf16.msra.mxu0 %v6615
          %6948 = vmatprep.subr.bf16.mxu0 0
          %6949 = vmatpush1.bf16.msra.mxu0 %v6616
          %6950 = vmatprep.subr.bf16.mxu0 0
          %6951 = vmatpush1.bf16.msra.mxu0 %v6617
          %6952 = vmatprep.subr.bf16.mxu0 0
          %6953 = vmatpush1.bf16.msra.mxu0 %v6618
          %6954 = vmatprep.subr.bf16.mxu0 0
          %6955 = vmatpush1.bf16.msra.mxu0 %v6619
          %6956 = vmatprep.subr.bf16.mxu0 0
          %6957 = vmatpush1.bf16.msra.mxu0 %v6620
          %6958 = vmatprep.subr.bf16.mxu0 0
          %6959 = vmatpush1.bf16.msra.mxu0 %v6621
          %6960 = vmatprep.subr.bf16.mxu0 0
          %6961 = vmatpush1.bf16.msra.mxu0 %v6622
          %6962 = vmatprep.subr.bf16.mxu0 0
          %6963 = vmatpush1.bf16.msra.mxu0 %v6623
          %6964 = vmatprep.mubr.bf16.mxu0 %v5919
          %6965 = vmatmul.mubr.bf16.gmra.mrb[0].mxu0 %v5918
          %v6966 = vpop.f32.mrb[0].mxu0
          %v6967 = vadd.f32 %v6927, %v6966
          %v6968 = vpop.f32.mrb[0].mxu0
          %v6969 = vpop.f32.mrb[0].mxu0
          %v6970 = vpop.f32.mrb[0].mxu0
          %6971 = vdwg.mxu0
          %6972 = vmatprep.subr.bf16.mxu0 0
          %6973 = vmatpush1.bf16.msra.mxu0 %v6624
          %6974 = vmatprep.subr.bf16.mxu0 0
          %6975 = vmatpush1.bf16.msra.mxu0 %v6625
          %6976 = vmatprep.subr.bf16.mxu0 0
          %6977 = vmatpush1.bf16.msra.mxu0 %v6626
          %6978 = vmatprep.subr.bf16.mxu0 0
          %6979 = vmatpush1.bf16.msra.mxu0 %v6627
          %6980 = vmatprep.subr.bf16.mxu0 0
          %6981 = vmatpush1.bf16.msra.mxu0 0
          %6982 = vmatprep.subr.bf16.mxu0 0
          %6983 = vmatpush1.bf16.msra.mxu0 0
          %6984 = vmatprep.subr.bf16.mxu0 0
          %6985 = vmatpush1.bf16.msra.mxu0 0
          %6986 = vmatprep.subr.bf16.mxu0 0
          %6987 = vmatpush1.bf16.msra.mxu0 0
          %6988 = vmatprep.subr.bf16.mxu0 0
          %6989 = vmatpush1.bf16.msra.mxu0 0
          %6990 = vmatprep.subr.bf16.mxu0 0
          %6991 = vmatpush1.bf16.msra.mxu0 0
          %6992 = vmatprep.subr.bf16.mxu0 0
          %6993 = vmatpush1.bf16.msra.mxu0 0
          %6994 = vmatprep.subr.bf16.mxu0 0
          %6995 = vmatpush1.bf16.msra.mxu0 0
          %6996 = vmatprep.subr.bf16.mxu0 0
          %6997 = vmatpush1.bf16.msra.mxu0 0
          %6998 = vmatprep.subr.bf16.mxu0 0
          %6999 = vmatpush1.bf16.msra.mxu0 0
          %7000 = vmatprep.subr.bf16.mxu0 0
          %7001 = vmatpush1.bf16.msra.mxu0 0
          %7002 = vmatprep.subr.bf16.mxu0 0
          %7003 = vmatpush1.bf16.msra.mxu0 0
          %7004 = vmatprep.mubr.bf16.mxu0 0
          %7005 = vmatmul.mubr.bf16.gmra.mrb[0].mxu0 %v6730
          %v7006 = vpop.f32.mrb[0].mxu0
          %v7007 = vadd.f32 %v6967, %v7006
          %v7008 = vpop.f32.mrb[0].mxu0
          %v7009 = vpop.f32.mrb[0].mxu0
          %v7010 = vpop.f32.mrb[0].mxu0
          %7011 = vdwg.mxu0
          %v7012 = vld [vmem:[%s9] sm:$0xf]
          %v7013 = vld [vmem:[%s9 + $0x4] sm:$0xf]
          %v7014 = vld [vmem:[%s9 + $0x8] sm:$0xf]
          %v7015 = vld [vmem:[%s9 + $0xc] sm:$0xf]
          %v7016 = vld [vmem:[%s9 + $0x10] sm:$0xf]
          %v7017 = vld [vmem:[%s9 + $0x14] sm:$0xf]
          %v7018 = vld [vmem:[%s9 + $0x18] sm:$0xf]
          %v7019 = vld [vmem:[%s9 + $0x1c] sm:$0xf]
          %v7020 = vld [vmem:[%s9 + $0x20] sm:$0xf]
          %v7021 = vld [vmem:[%s9 + $0x24] sm:$0xf]
          %v7022 = vld [vmem:[%s9 + $0x28] sm:$0xf]
          %v7023 = vld [vmem:[%s9 + $0x2c] sm:$0xf]
          %v7024 = vld [vmem:[%s9 + $0x30] sm:$0xf]
          %v7025 = vld [vmem:[%s9 + $0x34] sm:$0xf]
          %v7026 = vld [vmem:[%s9 + $0x38] sm:$0xf]
          %v7027 = vld [vmem:[%s9 + $0x3c] sm:$0xf]
          %v7028 = vld [vmem:[%s9 + $0x40] sm:$0xf]
          %v7029 = vld [vmem:[%s9 + $0x44] sm:$0xf]
          %v7030 = vld [vmem:[%s9 + $0x48] sm:$0xf]
          %v7031 = vld [vmem:[%s9 + $0x4c] sm:$0xf]
          %v7032 = vld [vmem:[%s9 + $0x50] sm:$0xf]
          %v7033 = vld [vmem:[%s9 + $0x54] sm:$0xf]
          %v7034 = vld [vmem:[%s9 + $0x58] sm:$0xf]
          %v7035 = vld [vmem:[%s9 + $0x5c] sm:$0xf]
          %v7036 = vld [vmem:[%s9 + $0x60] sm:$0xf]
          %v7037 = vld [vmem:[%s9 + $0x64] sm:$0xf]
          %v7038 = vld [vmem:[%s9 + $0x68] sm:$0xf]
          %v7039 = vld [vmem:[%s9 + $0x6c] sm:$0xf]
          %v7040 = vld [vmem:[%s9 + $0x70] sm:$0xf]
          %v7041 = vld [vmem:[%s9 + $0x74] sm:$0xf]
          %v7042 = vld [vmem:[%s9 + $0x78] sm:$0xf]
          %v7043 = vld [vmem:[%s9 + $0x7c] sm:$0xf]
          %v7044 = vld [vmem:[%s9 + $0x80] sm:$0xf]
          %v7045 = vld [vmem:[%s9 + $0x84] sm:$0xf]
          %v7046 = vld [vmem:[%s9 + $0x88] sm:$0xf]
          %v7047 = vld [vmem:[%s9 + $0x8c] sm:$0xf]
          %v7048 = vld [vmem:[%s9 + $0x90] sm:$0xf]
          %v7049 = vld [vmem:[%s9 + $0x94] sm:$0xf]
          %v7050 = vld [vmem:[%s9 + $0x98] sm:$0xf]
          %v7051 = vld [vmem:[%s9 + $0x9c] sm:$0xf]
          %v7052 = vld [vmem:[%s9 + $0xa0] sm:$0xf]
          %v7053 = vld [vmem:[%s9 + $0xa4] sm:$0xf]
          %v7054 = vld [vmem:[%s9 + $0xa8] sm:$0xf]
          %v7055 = vld [vmem:[%s9 + $0xac] sm:$0xf]
          %v7056 = vld [vmem:[%s9 + $0xb0] sm:$0xf]
          %v7057 = vld [vmem:[%s9 + $0xb4] sm:$0xf]
          %v7058 = vld [vmem:[%s9 + $0xb8] sm:$0xf]
          %v7059 = vld [vmem:[%s9 + $0xbc] sm:$0xf]
          %v7060 = vld [vmem:[%s9 + $0xc0] sm:$0xf]
          %v7061 = vld [vmem:[%s9 + $0xc4] sm:$0xf]
          %v7062 = vld [vmem:[%s9 + $0xc8] sm:$0xf]
          %v7063 = vld [vmem:[%s9 + $0xcc] sm:$0xf]
          %v7064 = vld [vmem:[%s9 + $0xd0] sm:$0xf]
          %v7065 = vld [vmem:[%s9 + $0xd4] sm:$0xf]
          %v7066 = vld [vmem:[%s9 + $0xd8] sm:$0xf]
          %v7067 = vld [vmem:[%s9 + $0xdc] sm:$0xf]
          %v7068 = vld [vmem:[%s9 + $0xe0] sm:$0xf]
          %v7069 = vld [vmem:[%s9 + $0xe4] sm:$0xf]
          %v7070 = vld [vmem:[%s9 + $0xe8] sm:$0xf]
          %v7071 = vld [vmem:[%s9 + $0xec] sm:$0xf]
          %v7072 = vld [vmem:[%s9 + $0xf0] sm:$0xf]
          %v7073 = vld [vmem:[%s9 + $0xf4] sm:$0xf]
          %v7074 = vld [vmem:[%s9 + $0xf8] sm:$0xf]
          %v7075 = vld [vmem:[%s9 + $0xfc] sm:$0xf]
          %v7076 = vld [vmem:[%s9 + $0x100] sm:$0xf]
          %v7077 = vld [vmem:[%s9 + $0x104] sm:$0xf]
          %v7078 = vld [vmem:[%s9 + $0x108] sm:$0xf]
          %v7079 = vld [vmem:[%s9 + $0x10c] sm:$0xf]
          %v7080 = vld [vmem:[%s9 + $0x110] sm:$0xf]
          %v7081 = vld [vmem:[%s9 + $0x114] sm:$0xf]
          %v7082 = vld [vmem:[%s9 + $0x118] sm:$0xf]
          %v7083 = vld [vmem:[%s9 + $0x11c] sm:$0xf]
          %v7084 = vld [vmem:[%s9 + $0x120] sm:$0xf]
          %v7085 = vld [vmem:[%s9 + $0x124] sm:$0xf]
          %v7086 = vld [vmem:[%s9 + $0x128] sm:$0xf]
          %v7087 = vld [vmem:[%s9 + $0x12c] sm:$0xf]
          %v7088 = vld [vmem:[%s9 + $0x130] sm:$0xf]
          %v7089 = vld [vmem:[%s9 + $0x134] sm:$0xf]
          %v7090 = vld [vmem:[%s9 + $0x138] sm:$0xf]
          %v7091 = vld [vmem:[%s9 + $0x13c] sm:$0xf]
          %v7092 = vld [vmem:[%s9 + $0x140] sm:$0xf]
          %v7093 = vld [vmem:[%s9 + $0x144] sm:$0xf]
          %v7094 = vld [vmem:[%s9 + $0x148] sm:$0xf]
          %v7095 = vld [vmem:[%s9 + $0x14c] sm:$0xf]
          %v7096 = vld [vmem:[%s9 + $0x150] sm:$0xf]
          %v7097 = vld [vmem:[%s9 + $0x154] sm:$0xf]
          %v7098 = vld [vmem:[%s9 + $0x158] sm:$0xf]
          %v7099 = vld [vmem:[%s9 + $0x15c] sm:$0xf]
          %v7100 = vld [vmem:[%s9 + $0x160] sm:$0xf]
          %v7101 = vld [vmem:[%s9 + $0x164] sm:$0xf]
          %v7102 = vld [vmem:[%s9 + $0x168] sm:$0xf]
          %v7103 = vld [vmem:[%s9 + $0x16c] sm:$0xf]
          %v7104 = vld [vmem:[%s9 + $0x170] sm:$0xf]
          %v7105 = vld [vmem:[%s9 + $0x174] sm:$0xf]
          %v7106 = vld [vmem:[%s9 + $0x178] sm:$0xf]
          %v7107 = vld [vmem:[%s9 + $0x17c] sm:$0xf]
          %v7108 = vld [vmem:[%s9 + $0x180] sm:$0xf]
          %v7109 = vld [vmem:[%s9 + $0x184] sm:$0xf]
          %v7110 = vld [vmem:[%s9 + $0x188] sm:$0xf]
          %v7111 = vld [vmem:[%s9 + $0x18c] sm:$0xf]
          %v7112 = vld [vmem:[%s9 + $0x190] sm:$0xf]
          %v7113 = vld [vmem:[%s9 + $0x194] sm:$0xf]
          %v7114 = vld [vmem:[%s9 + $0x198] sm:$0xf]
          %v7115 = vld [vmem:[%s9 + $0x19c] sm:$0xf]
          %v7116 = vld [vmem:[%s9 + $0x1a0] sm:$0xf]
          %v7117 = vld [vmem:[%s9 + $0x1a4] sm:$0xf]
          %v7118 = vld [vmem:[%s9 + $0x1a8] sm:$0xf]
          %v7119 = vld [vmem:[%s9 + $0x1ac] sm:$0xf]
          %v7120 = vld [vmem:[%s9 + $0x1b0] sm:$0xf]
          %v7121 = vld [vmem:[%s9 + $0x1b4] sm:$0xf]
          %v7122 = vld [vmem:[%s9 + $0x1b8] sm:$0xf]
          %v7123 = vld [vmem:[%s9 + $0x1bc] sm:$0xf]
          %v7124 = vld [vmem:[%s9 + $0x1c0] sm:$0xf]
          %v7125 = vld [vmem:[%s9 + $0x1c4] sm:$0xf]
          %v7126 = vld [vmem:[%s9 + $0x1c8] sm:$0xf]
          %v7127 = vld [vmem:[%s9 + $0x1cc] sm:$0xf]
          %v7128 = vld [vmem:[%s9 + $0x1d0] sm:$0xf]
          %v7129 = vld [vmem:[%s9 + $0x1d4] sm:$0xf]
          %v7130 = vld [vmem:[%s9 + $0x1d8] sm:$0xf]
          %v7131 = vld [vmem:[%s9 + $0x1dc] sm:$0xf]
          %v7132 = vld [vmem:[%s9 + $0x1e0] sm:$0xf]
          %v7133 = vld [vmem:[%s9 + $0x1e4] sm:$0xf]
          %v7134 = vld [vmem:[%s9 + $0x1e8] sm:$0xf]
          %v7135 = vld [vmem:[%s9 + $0x1ec] sm:$0xf]
          %v7136 = vld [vmem:[%s9 + $0x1f0] sm:$0xf]
          %v7137 = vld [vmem:[%s9 + $0x1f4] sm:$0xf]
          %v7138 = vld [vmem:[%s9 + $0x1f8] sm:$0xf]
          %v7139 = vld [vmem:[%s9 + $0x1fc] sm:$0xf]
          %v7140 = vld [vmem:[%s9 + $0x200] sm:$0xf]
          %v7141 = vld [vmem:[%s9 + $0x204] sm:$0xf]
          %v7142 = vld [vmem:[%s9 + $0x208] sm:$0xf]
          %v7143 = vld [vmem:[%s9 + $0x20c] sm:$0xf]
          %v7144 = vld [vmem:[%s9 + $0x210] sm:$0xf]
          %v7145 = vld [vmem:[%s9 + $0x214] sm:$0xf]
          %v7146 = vld [vmem:[%s9 + $0x218] sm:$0xf]
          %v7147 = vld [vmem:[%s9 + $0x21c] sm:$0xf]
          %v7148 = vld [vmem:[%s9 + $0x220] sm:$0xf]
          %v7149 = vld [vmem:[%s9 + $0x224] sm:$0xf]
          %v7150 = vld [vmem:[%s9 + $0x228] sm:$0xf]
          %v7151 = vld [vmem:[%s9 + $0x22c] sm:$0xf]
          %v7152 = vld [vmem:[%s9 + $0x230] sm:$0xf]
          %v7153 = vld [vmem:[%s9 + $0x234] sm:$0xf]
          %v7154 = vld [vmem:[%s9 + $0x238] sm:$0xf]
          %v7155 = vld [vmem:[%s9 + $0x23c] sm:$0xf]
          %v7156 = vld [vmem:[%s9 + $0x240] sm:$0xf]
          %v7157 = vld [vmem:[%s9 + $0x244] sm:$0xf]
          %v7158 = vld [vmem:[%s9 + $0x248] sm:$0xf]
          %v7159 = vld [vmem:[%s9 + $0x24c] sm:$0xf]
          %v7160 = vld [vmem:[%s9 + $0x250] sm:$0xf]
          %v7161 = vld [vmem:[%s9 + $0x254] sm:$0xf]
          %v7162 = vld [vmem:[%s9 + $0x258] sm:$0xf]
          %v7163 = vld [vmem:[%s9 + $0x25c] sm:$0xf]
          %v7164 = vld [vmem:[%s9 + $0x260] sm:$0xf]
          %v7165 = vld [vmem:[%s9 + $0x264] sm:$0xf]
          %v7166 = vld [vmem:[%s9 + $0x268] sm:$0xf]
          %v7167 = vld [vmem:[%s9 + $0x26c] sm:$0xf]
          %v7168 = vld [vmem:[%s9 + $0x270] sm:$0xf]
          %v7169 = vld [vmem:[%s9 + $0x274] sm:$0xf]
          %v7170 = vld [vmem:[%s9 + $0x278] sm:$0xf]
          %v7171 = vld [vmem:[%s9 + $0x27c] sm:$0xf]
          %v7172 = vld [vmem:[%s9 + $0x280] sm:$0xf]
          %v7173 = vld [vmem:[%s9 + $0x284] sm:$0xf]
          %v7174 = vld [vmem:[%s9 + $0x288] sm:$0xf]
          %v7175 = vld [vmem:[%s9 + $0x28c] sm:$0xf]
          %v7176 = vld [vmem:[%s9 + $0x290] sm:$0xf]
          %v7177 = vld [vmem:[%s9 + $0x294] sm:$0xf]
          %v7178 = vld [vmem:[%s9 + $0x298] sm:$0xf]
          %v7179 = vld [vmem:[%s9 + $0x29c] sm:$0xf]
          %v7180 = vld [vmem:[%s9 + $0x2a0] sm:$0xf]
          %v7181 = vld [vmem:[%s9 + $0x2a4] sm:$0xf]
          %v7182 = vld [vmem:[%s9 + $0x2a8] sm:$0xf]
          %v7183 = vld [vmem:[%s9 + $0x2ac] sm:$0xf]
          %v7184 = vld [vmem:[%s9 + $0x2b0] sm:$0xf]
          %v7185 = vld [vmem:[%s9 + $0x2b4] sm:$0xf]
          %v7186 = vld [vmem:[%s9 + $0x2b8] sm:$0xf]
          %v7187 = vld [vmem:[%s9 + $0x2bc] sm:$0xf]
          %v7188 = vld [vmem:[%s9 + $0x2c0] sm:$0xf]
          %v7189 = vld [vmem:[%s9 + $0x2c4] sm:$0xf]
          %v7190 = vld [vmem:[%s9 + $0x2c8] sm:$0xf]
          %v7191 = vld [vmem:[%s9 + $0x2cc] sm:$0xf]
          %v7192 = vld [vmem:[%s9 + $0x2d0] sm:$0xf]
          %v7193 = vld [vmem:[%s9 + $0x2d4] sm:$0xf]
          %v7194 = vld [vmem:[%s9 + $0x2d8] sm:$0xf]
          %v7195 = vld [vmem:[%s9 + $0x2dc] sm:$0xf]
          %v7196 = vld [vmem:[%s9 + $0x2e0] sm:$0xf]
          %v7197 = vld [vmem:[%s9 + $0x2e4] sm:$0xf]
          %v7198 = vld [vmem:[%s9 + $0x2e8] sm:$0xf]
          %v7199 = vld [vmem:[%s9 + $0x2ec] sm:$0xf]
          %v7200 = vld [vmem:[%s9 + $0x2f0] sm:$0xf]
          %v7201 = vld [vmem:[%s9 + $0x2f4] sm:$0xf]
          %v7202 = vld [vmem:[%s9 + $0x2f8] sm:$0xf]
          %v7203 = vld [vmem:[%s9 + $0x2fc] sm:$0xf]
          %v7204 = vld [vmem:[%s9 + $0x300] sm:$0xf]
          %v7205 = vld [vmem:[%s9 + $0x304] sm:$0xf]
          %v7206 = vld [vmem:[%s9 + $0x308] sm:$0xf]
          %v7207 = vld [vmem:[%s9 + $0x30c] sm:$0xf]
          %v7208 = vld [vmem:[%s9 + $0x310] sm:$0xf]
          %v7209 = vld [vmem:[%s9 + $0x314] sm:$0xf]
          %v7210 = vld [vmem:[%s9 + $0x318] sm:$0xf]
          %v7211 = vld [vmem:[%s9 + $0x31c] sm:$0xf]
          %v7212 = vld [vmem:[%s10] sm:$0x1]
          %v7214 = vlaneseq
          %v7215 = vshrl.u32 %v7214, 7
          %v7216 = vsub.s32 0, %v7215
          %v7217 = vrot.slane %v7212, %v7216
          %v7419 = vunpack.c.l.b16 %v7012
          %v7420 = vunpack.c.l.b16 %v7013
          %v7421 = vunpack.c.l.b16 %v7014
          %v7422 = vunpack.c.l.b16 %v7015
          %v7423 = vunpack.c.l.b16 %v7016
          %v7424 = vunpack.c.l.b16 %v7017
          %v7425 = vunpack.c.l.b16 %v7018
          %v7426 = vunpack.c.l.b16 %v7019
          %v7427 = vunpack.c.l.b16 %v7020
          %v7428 = vunpack.c.l.b16 %v7021
          %v7429 = vunpack.c.l.b16 %v7022
          %v7430 = vunpack.c.l.b16 %v7023
          %v7431 = vunpack.c.l.b16 %v7024
          %v7432 = vunpack.c.l.b16 %v7025
          %v7433 = vunpack.c.l.b16 %v7026
          %v7434 = vunpack.c.l.b16 %v7027
          %v7435 = vunpack.c.l.b16 %v7028
          %v7436 = vunpack.c.l.b16 %v7029
          %v7437 = vunpack.c.l.b16 %v7030
          %v7438 = vunpack.c.l.b16 %v7031
          %v7439 = vunpack.c.l.b16 %v7032
          %v7440 = vunpack.c.l.b16 %v7033
          %v7441 = vunpack.c.l.b16 %v7034
          %v7442 = vunpack.c.l.b16 %v7035
          %v7443 = vunpack.c.l.b16 %v7036
          %v7444 = vunpack.c.l.b16 %v7037
          %v7445 = vunpack.c.l.b16 %v7038
          %v7446 = vunpack.c.l.b16 %v7039
          %v7447 = vunpack.c.l.b16 %v7040
          %v7448 = vunpack.c.l.b16 %v7041
          %v7449 = vunpack.c.l.b16 %v7042
          %v7450 = vunpack.c.l.b16 %v7043
          %v7451 = vunpack.c.l.b16 %v7044
          %v7452 = vunpack.c.l.b16 %v7045
          %v7453 = vunpack.c.l.b16 %v7046
          %v7454 = vunpack.c.l.b16 %v7047
          %v7455 = vunpack.c.l.b16 %v7048
          %v7456 = vunpack.c.l.b16 %v7049
          %v7457 = vunpack.c.l.b16 %v7050
          %v7458 = vunpack.c.l.b16 %v7051
          %v7459 = vunpack.c.l.b16 %v7052
          %v7460 = vunpack.c.l.b16 %v7053
          %v7461 = vunpack.c.l.b16 %v7054
          %v7462 = vunpack.c.l.b16 %v7055
          %v7463 = vunpack.c.l.b16 %v7056
          %v7464 = vunpack.c.l.b16 %v7057
          %v7465 = vunpack.c.l.b16 %v7058
          %v7466 = vunpack.c.l.b16 %v7059
          %v7467 = vunpack.c.l.b16 %v7060
          %v7468 = vunpack.c.l.b16 %v7061
          %v7469 = vunpack.c.l.b16 %v7062
          %v7470 = vunpack.c.l.b16 %v7063
          %v7471 = vunpack.c.l.b16 %v7064
          %v7472 = vunpack.c.l.b16 %v7065
          %v7473 = vunpack.c.l.b16 %v7066
          %v7474 = vunpack.c.l.b16 %v7067
          %v7475 = vunpack.c.l.b16 %v7068
          %v7476 = vunpack.c.l.b16 %v7069
          %v7477 = vunpack.c.l.b16 %v7070
          %v7478 = vunpack.c.l.b16 %v7071
          %v7479 = vunpack.c.l.b16 %v7072
          %v7480 = vunpack.c.l.b16 %v7073
          %v7481 = vunpack.c.l.b16 %v7074
          %v7482 = vunpack.c.l.b16 %v7075
          %v7483 = vunpack.c.l.b16 %v7076
          %v7484 = vunpack.c.l.b16 %v7077
          %v7485 = vunpack.c.l.b16 %v7078
          %v7486 = vunpack.c.l.b16 %v7079
          %v7487 = vunpack.c.l.b16 %v7080
          %v7488 = vunpack.c.l.b16 %v7081
          %v7489 = vunpack.c.l.b16 %v7082
          %v7490 = vunpack.c.l.b16 %v7083
          %v7491 = vunpack.c.l.b16 %v7084
          %v7492 = vunpack.c.l.b16 %v7085
          %v7493 = vunpack.c.l.b16 %v7086
          %v7494 = vunpack.c.l.b16 %v7087
          %v7495 = vunpack.c.l.b16 %v7088
          %v7496 = vunpack.c.l.b16 %v7089
          %v7497 = vunpack.c.l.b16 %v7090
          %v7498 = vunpack.c.l.b16 %v7091
          %v7499 = vunpack.c.l.b16 %v7092
          %v7500 = vunpack.c.l.b16 %v7093
          %v7501 = vunpack.c.l.b16 %v7094
          %v7502 = vunpack.c.l.b16 %v7095
          %v7503 = vunpack.c.l.b16 %v7096
          %v7504 = vunpack.c.l.b16 %v7097
          %v7505 = vunpack.c.l.b16 %v7098
          %v7506 = vunpack.c.l.b16 %v7099
          %v7507 = vunpack.c.l.b16 %v7100
          %v7508 = vunpack.c.l.b16 %v7101
          %v7509 = vunpack.c.l.b16 %v7102
          %v7510 = vunpack.c.l.b16 %v7103
          %v7511 = vunpack.c.l.b16 %v7104
          %v7512 = vunpack.c.l.b16 %v7105
          %v7513 = vunpack.c.l.b16 %v7106
          %v7514 = vunpack.c.l.b16 %v7107
          %v7515 = vunpack.c.l.b16 %v7108
          %v7516 = vunpack.c.l.b16 %v7109
          %v7517 = vunpack.c.l.b16 %v7110
          %v7518 = vunpack.c.l.b16 %v7111
          %v7519 = vunpack.c.l.b16 %v7112
          %v7520 = vunpack.c.l.b16 %v7113
          %v7521 = vunpack.c.l.b16 %v7114
          %v7522 = vunpack.c.l.b16 %v7115
          %v7523 = vunpack.c.l.b16 %v7116
          %v7524 = vunpack.c.l.b16 %v7117
          %v7525 = vunpack.c.l.b16 %v7118
          %v7526 = vunpack.c.l.b16 %v7119
          %v7527 = vunpack.c.l.b16 %v7120
          %v7528 = vunpack.c.l.b16 %v7121
          %v7529 = vunpack.c.l.b16 %v7122
          %v7530 = vunpack.c.l.b16 %v7123
          %v7531 = vunpack.c.l.b16 %v7124
          %v7532 = vunpack.c.l.b16 %v7125
          %v7533 = vunpack.c.l.b16 %v7126
          %v7534 = vunpack.c.l.b16 %v7127
          %v7535 = vunpack.c.l.b16 %v7128
          %v7536 = vunpack.c.l.b16 %v7129
          %v7537 = vunpack.c.l.b16 %v7130
          %v7538 = vunpack.c.l.b16 %v7131
          %v7539 = vunpack.c.l.b16 %v7132
          %v7540 = vunpack.c.l.b16 %v7133
          %v7541 = vunpack.c.l.b16 %v7134
          %v7542 = vunpack.c.l.b16 %v7135
          %v7543 = vunpack.c.l.b16 %v7136
          %v7544 = vunpack.c.l.b16 %v7137
          %v7545 = vunpack.c.l.b16 %v7138
          %v7546 = vunpack.c.l.b16 %v7139
          %v7547 = vunpack.c.l.b16 %v7140
          %v7548 = vunpack.c.l.b16 %v7141
          %v7549 = vunpack.c.l.b16 %v7142
          %v7550 = vunpack.c.l.b16 %v7143
          %v7551 = vunpack.c.l.b16 %v7144
          %v7552 = vunpack.c.l.b16 %v7145
          %v7553 = vunpack.c.l.b16 %v7146
          %v7554 = vunpack.c.l.b16 %v7147
          %v7555 = vunpack.c.l.b16 %v7148
          %v7556 = vunpack.c.l.b16 %v7149
          %v7557 = vunpack.c.l.b16 %v7150
          %v7558 = vunpack.c.l.b16 %v7151
          %v7559 = vunpack.c.l.b16 %v7152
          %v7560 = vunpack.c.l.b16 %v7153
          %v7561 = vunpack.c.l.b16 %v7154
          %v7562 = vunpack.c.l.b16 %v7155
          %v7563 = vunpack.c.l.b16 %v7156
          %v7564 = vunpack.c.l.b16 %v7157
          %v7565 = vunpack.c.l.b16 %v7158
          %v7566 = vunpack.c.l.b16 %v7159
          %v7567 = vunpack.c.l.b16 %v7160
          %v7568 = vunpack.c.l.b16 %v7161
          %v7569 = vunpack.c.l.b16 %v7162
          %v7570 = vunpack.c.l.b16 %v7163
          %v7571 = vunpack.c.l.b16 %v7164
          %v7572 = vunpack.c.l.b16 %v7165
          %v7573 = vunpack.c.l.b16 %v7166
          %v7574 = vunpack.c.l.b16 %v7167
          %v7575 = vunpack.c.l.b16 %v7168
          %v7576 = vunpack.c.l.b16 %v7169
          %v7577 = vunpack.c.l.b16 %v7170
          %v7578 = vunpack.c.l.b16 %v7171
          %v7579 = vunpack.c.l.b16 %v7172
          %v7580 = vunpack.c.l.b16 %v7173
          %v7581 = vunpack.c.l.b16 %v7174
          %v7582 = vunpack.c.l.b16 %v7175
          %v7583 = vunpack.c.l.b16 %v7176
          %v7584 = vunpack.c.l.b16 %v7177
          %v7585 = vunpack.c.l.b16 %v7178
          %v7586 = vunpack.c.l.b16 %v7179
          %v7587 = vunpack.c.l.b16 %v7180
          %v7588 = vunpack.c.l.b16 %v7181
          %v7589 = vunpack.c.l.b16 %v7182
          %v7590 = vunpack.c.l.b16 %v7183
          %v7591 = vunpack.c.l.b16 %v7184
          %v7592 = vunpack.c.l.b16 %v7185
          %v7593 = vunpack.c.l.b16 %v7186
          %v7594 = vunpack.c.l.b16 %v7187
          %v7595 = vunpack.c.l.b16 %v7188
          %v7596 = vunpack.c.l.b16 %v7189
          %v7597 = vunpack.c.l.b16 %v7190
          %v7598 = vunpack.c.l.b16 %v7191
          %v7599 = vunpack.c.l.b16 %v7192
          %v7600 = vunpack.c.l.b16 %v7193
          %v7601 = vunpack.c.l.b16 %v7194
          %v7602 = vunpack.c.l.b16 %v7195
          %v7603 = vunpack.c.l.b16 %v7196
          %v7604 = vunpack.c.l.b16 %v7197
          %v7605 = vunpack.c.l.b16 %v7198
          %v7606 = vunpack.c.l.b16 %v7199
          %v7607 = vunpack.c.l.b16 %v7200
          %v7608 = vunpack.c.l.b16 %v7201
          %v7609 = vunpack.c.l.b16 %v7202
          %v7610 = vunpack.c.l.b16 %v7203
          %v7611 = vunpack.c.l.b16 %v7204
          %v7612 = vunpack.c.l.b16 %v7205
          %v7613 = vunpack.c.l.b16 %v7206
          %v7614 = vunpack.c.l.b16 %v7207
          %v7615 = vunpack.c.l.b16 %v7208
          %v7616 = vunpack.c.l.b16 %v7209
          %v7617 = vunpack.c.l.b16 %v7210
          %v7618 = vunpack.c.l.b16 %v7211
          %v7619 = vpack.c.b16 %v7420, %v7419
          %v7620 = vpack.c.b16 %v7422, %v7421
          %v7621 = vpack.c.b16 %v7424, %v7423
          %v7622 = vpack.c.b16 %v7426, %v7425
          %v7623 = vpack.c.b16 %v7428, %v7427
          %v7624 = vpack.c.b16 %v7430, %v7429
          %v7625 = vpack.c.b16 %v7432, %v7431
          %v7626 = vpack.c.b16 %v7434, %v7433
          %v7627 = vpack.c.b16 %v7436, %v7435
          %v7628 = vpack.c.b16 %v7438, %v7437
          %v7629 = vpack.c.b16 %v7440, %v7439
          %v7630 = vpack.c.b16 %v7442, %v7441
          %v7631 = vpack.c.b16 %v7444, %v7443
          %v7632 = vpack.c.b16 %v7446, %v7445
          %v7633 = vpack.c.b16 %v7448, %v7447
          %v7634 = vpack.c.b16 %v7450, %v7449
          %v7635 = vpack.c.b16 %v7452, %v7451
          %v7636 = vpack.c.b16 %v7454, %v7453
          %v7637 = vpack.c.b16 %v7456, %v7455
          %v7638 = vpack.c.b16 %v7458, %v7457
          %v7639 = vpack.c.b16 %v7460, %v7459
          %v7640 = vpack.c.b16 %v7462, %v7461
          %v7641 = vpack.c.b16 %v7464, %v7463
          %v7642 = vpack.c.b16 %v7466, %v7465
          %v7643 = vpack.c.b16 %v7468, %v7467
          %v7644 = vpack.c.b16 %v7470, %v7469
          %v7645 = vpack.c.b16 %v7472, %v7471
          %v7646 = vpack.c.b16 %v7474, %v7473
          %v7647 = vpack.c.b16 %v7476, %v7475
          %v7648 = vpack.c.b16 %v7478, %v7477
          %v7649 = vpack.c.b16 %v7480, %v7479
          %v7650 = vpack.c.b16 %v7482, %v7481
          %v7651 = vpack.c.b16 %v7484, %v7483
          %v7652 = vpack.c.b16 %v7486, %v7485
          %v7653 = vpack.c.b16 %v7488, %v7487
          %v7654 = vpack.c.b16 %v7490, %v7489
          %v7655 = vpack.c.b16 %v7492, %v7491
          %v7656 = vpack.c.b16 %v7494, %v7493
          %v7657 = vpack.c.b16 %v7496, %v7495
          %v7658 = vpack.c.b16 %v7498, %v7497
          %v7659 = vpack.c.b16 %v7500, %v7499
          %v7660 = vpack.c.b16 %v7502, %v7501
          %v7661 = vpack.c.b16 %v7504, %v7503
          %v7662 = vpack.c.b16 %v7506, %v7505
          %v7663 = vpack.c.b16 %v7508, %v7507
          %v7664 = vpack.c.b16 %v7510, %v7509
          %v7665 = vpack.c.b16 %v7512, %v7511
          %v7666 = vpack.c.b16 %v7514, %v7513
          %v7667 = vpack.c.b16 %v7516, %v7515
          %v7668 = vpack.c.b16 %v7518, %v7517
          %v7669 = vpack.c.b16 %v7520, %v7519
          %v7670 = vpack.c.b16 %v7522, %v7521
          %v7671 = vpack.c.b16 %v7524, %v7523
          %v7672 = vpack.c.b16 %v7526, %v7525
          %v7673 = vpack.c.b16 %v7528, %v7527
          %v7674 = vpack.c.b16 %v7530, %v7529
          %v7675 = vpack.c.b16 %v7532, %v7531
          %v7676 = vpack.c.b16 %v7534, %v7533
          %v7677 = vpack.c.b16 %v7536, %v7535
          %v7678 = vpack.c.b16 %v7538, %v7537
          %v7679 = vpack.c.b16 %v7540, %v7539
          %v7680 = vpack.c.b16 %v7542, %v7541
          %v7681 = vpack.c.b16 %v7544, %v7543
          %v7682 = vpack.c.b16 %v7546, %v7545
          %v7683 = vpack.c.b16 %v7548, %v7547
          %v7684 = vpack.c.b16 %v7550, %v7549
          %v7685 = vpack.c.b16 %v7552, %v7551
          %v7686 = vpack.c.b16 %v7554, %v7553
          %v7687 = vpack.c.b16 %v7556, %v7555
          %v7688 = vpack.c.b16 %v7558, %v7557
          %v7689 = vpack.c.b16 %v7560, %v7559
          %v7690 = vpack.c.b16 %v7562, %v7561
          %v7691 = vpack.c.b16 %v7564, %v7563
          %v7692 = vpack.c.b16 %v7566, %v7565
          %v7693 = vpack.c.b16 %v7568, %v7567
          %v7694 = vpack.c.b16 %v7570, %v7569
          %v7695 = vpack.c.b16 %v7572, %v7571
          %v7696 = vpack.c.b16 %v7574, %v7573
          %v7697 = vpack.c.b16 %v7576, %v7575
          %v7698 = vpack.c.b16 %v7578, %v7577
          %v7699 = vpack.c.b16 %v7580, %v7579
          %v7700 = vpack.c.b16 %v7582, %v7581
          %v7701 = vpack.c.b16 %v7584, %v7583
          %v7702 = vpack.c.b16 %v7586, %v7585
          %v7703 = vpack.c.b16 %v7588, %v7587
          %v7704 = vpack.c.b16 %v7590, %v7589
          %v7705 = vpack.c.b16 %v7592, %v7591
          %v7706 = vpack.c.b16 %v7594, %v7593
          %v7707 = vpack.c.b16 %v7596, %v7595
          %v7708 = vpack.c.b16 %v7598, %v7597
          %v7709 = vpack.c.b16 %v7600, %v7599
          %v7710 = vpack.c.b16 %v7602, %v7601
          %v7711 = vpack.c.b16 %v7604, %v7603
          %v7712 = vpack.c.b16 %v7606, %v7605
          %v7713 = vpack.c.b16 %v7608, %v7607
          %v7714 = vpack.c.b16 %v7610, %v7609
          %v7715 = vpack.c.b16 %v7612, %v7611
          %v7716 = vpack.c.b16 %v7614, %v7613
          %v7717 = vpack.c.b16 %v7616, %v7615
          %v7718 = vpack.c.b16 %v7618, %v7617
          %7819 = vmatprep.subr.bf16.mxu0 0
          %7820 = vmatpush1.bf16.msra.mxu0 %v7619
          %7821 = vmatprep.subr.bf16.mxu0 0
          %7822 = vmatpush1.bf16.msra.mxu0 %v7620
          %7823 = vmatprep.subr.bf16.mxu0 0
          %7824 = vmatpush1.bf16.msra.mxu0 %v7621
          %7825 = vmatprep.subr.bf16.mxu0 0
          %7826 = vmatpush1.bf16.msra.mxu0 %v7622
          %7827 = vmatprep.subr.bf16.mxu0 0
          %7828 = vmatpush1.bf16.msra.mxu0 %v7623
          %7829 = vmatprep.subr.bf16.mxu0 0
          %7830 = vmatpush1.bf16.msra.mxu0 %v7624
          %7831 = vmatprep.subr.bf16.mxu0 0
          %7832 = vmatpush1.bf16.msra.mxu0 %v7625
          %7833 = vmatprep.subr.bf16.mxu0 0
          %7834 = vmatpush1.bf16.msra.mxu0 %v7626
          %7835 = vmatprep.subr.bf16.mxu0 0
          %7836 = vmatpush1.bf16.msra.mxu0 %v7627
          %7837 = vmatprep.subr.bf16.mxu0 0
          %7838 = vmatpush1.bf16.msra.mxu0 %v7628
          %7839 = vmatprep.subr.bf16.mxu0 0
          %7840 = vmatpush1.bf16.msra.mxu0 %v7629
          %7841 = vmatprep.subr.bf16.mxu0 0
          %7842 = vmatpush1.bf16.msra.mxu0 %v7630
          %7843 = vmatprep.subr.bf16.mxu0 0
          %7844 = vmatpush1.bf16.msra.mxu0 %v7631
          %7845 = vmatprep.subr.bf16.mxu0 0
          %7846 = vmatpush1.bf16.msra.mxu0 %v7632
          %7847 = vmatprep.subr.bf16.mxu0 0
          %7848 = vmatpush1.bf16.msra.mxu0 %v7633
          %7849 = vmatprep.subr.bf16.mxu0 0
          %7850 = vmatpush1.bf16.msra.mxu0 %v7634
          %7851 = vmatprep.mubr.bf16.mxu0 %v5909
          %7852 = vmatmul.mubr.bf16.gmra.mrb[0].mxu0 %v5908
          %v7853 = vpop.f32.mrb[0].mxu0
          %v7854 = vadd.f32 %v7217, %v7853
          %v7855 = vpop.f32.mrb[0].mxu0
          %v7856 = vpop.f32.mrb[0].mxu0
          %v7857 = vpop.f32.mrb[0].mxu0
          %7858 = vdwg.mxu0
          %7859 = vmatprep.subr.bf16.mxu0 0
          %7860 = vmatpush1.bf16.msra.mxu0 %v7635
          %7861 = vmatprep.subr.bf16.mxu0 0
          %7862 = vmatpush1.bf16.msra.mxu0 %v7636
          %7863 = vmatprep.subr.bf16.mxu0 0
          %7864 = vmatpush1.bf16.msra.mxu0 %v7637
          %7865 = vmatprep.subr.bf16.mxu0 0
          %7866 = vmatpush1.bf16.msra.mxu0 %v7638
          %7867 = vmatprep.subr.bf16.mxu0 0
          %7868 = vmatpush1.bf16.msra.mxu0 %v7639
          %7869 = vmatprep.subr.bf16.mxu0 0
          %7870 = vmatpush1.bf16.msra.mxu0 %v7640
          %7871 = vmatprep.subr.bf16.mxu0 0
          %7872 = vmatpush1.bf16.msra.mxu0 %v7641
          %7873 = vmatprep.subr.bf16.mxu0 0
          %7874 = vmatpush1.bf16.msra.mxu0 %v7642
          %7875 = vmatprep.subr.bf16.mxu0 0
          %7876 = vmatpush1.bf16.msra.mxu0 %v7643
          %7877 = vmatprep.subr.bf16.mxu0 0
          %7878 = vmatpush1.bf16.msra.mxu0 %v7644
          %7879 = vmatprep.subr.bf16.mxu0 0
          %7880 = vmatpush1.bf16.msra.mxu0 %v7645
          %7881 = vmatprep.subr.bf16.mxu0 0
          %7882 = vmatpush1.bf16.msra.mxu0 %v7646
          %7883 = vmatprep.subr.bf16.mxu0 0
          %7884 = vmatpush1.bf16.msra.mxu0 %v7647
          %7885 = vmatprep.subr.bf16.mxu0 0
          %7886 = vmatpush1.bf16.msra.mxu0 %v7648
          %7887 = vmatprep.subr.bf16.mxu0 0
          %7888 = vmatpush1.bf16.msra.mxu0 %v7649
          %7889 = vmatprep.subr.bf16.mxu0 0
          %7890 = vmatpush1.bf16.msra.mxu0 %v7650
          %7891 = vmatprep.mubr.bf16.mxu0 %v5911
          %7892 = vmatmul.mubr.bf16.gmra.mrb[0].mxu0 %v5910
          %v7893 = vpop.f32.mrb[0].mxu0
          %v7894 = vadd.f32 %v7854, %v7893
          %v7895 = vpop.f32.mrb[0].mxu0
          %v7896 = vpop.f32.mrb[0].mxu0
          %v7897 = vpop.f32.mrb[0].mxu0
          %7898 = vdwg.mxu0
          %7899 = vmatprep.subr.bf16.mxu0 0
          %7900 = vmatpush1.bf16.msra.mxu0 %v7651
          %7901 = vmatprep.subr.bf16.mxu0 0
          %7902 = vmatpush1.bf16.msra.mxu0 %v7652
          %7903 = vmatprep.subr.bf16.mxu0 0
          %7904 = vmatpush1.bf16.msra.mxu0 %v7653
          %7905 = vmatprep.subr.bf16.mxu0 0
          %7906 = vmatpush1.bf16.msra.mxu0 %v7654
          %7907 = vmatprep.subr.bf16.mxu0 0
          %7908 = vmatpush1.bf16.msra.mxu0 %v7655
          %7909 = vmatprep.subr.bf16.mxu0 0
          %7910 = vmatpush1.bf16.msra.mxu0 %v7656
          %7911 = vmatprep.subr.bf16.mxu0 0
          %7912 = vmatpush1.bf16.msra.mxu0 %v7657
          %7913 = vmatprep.subr.bf16.mxu0 0
          %7914 = vmatpush1.bf16.msra.mxu0 %v7658
          %7915 = vmatprep.subr.bf16.mxu0 0
          %7916 = vmatpush1.bf16.msra.mxu0 %v7659
          %7917 = vmatprep.subr.bf16.mxu0 0
          %7918 = vmatpush1.bf16.msra.mxu0 %v7660
          %7919 = vmatprep.subr.bf16.mxu0 0
          %7920 = vmatpush1.bf16.msra.mxu0 %v7661
          %7921 = vmatprep.subr.bf16.mxu0 0
          %7922 = vmatpush1.bf16.msra.mxu0 %v7662
          %7923 = vmatprep.subr.bf16.mxu0 0
          %7924 = vmatpush1.bf16.msra.mxu0 %v7663
          %7925 = vmatprep.subr.bf16.mxu0 0
          %7926 = vmatpush1.bf16.msra.mxu0 %v7664
          %7927 = vmatprep.subr.bf16.mxu0 0
          %7928 = vmatpush1.bf16.msra.mxu0 %v7665
          %7929 = vmatprep.subr.bf16.mxu0 0
          %7930 = vmatpush1.bf16.msra.mxu0 %v7666
          %7931 = vmatprep.mubr.bf16.mxu0 %v5913
          %7932 = vmatmul.mubr.bf16.gmra.mrb[0].mxu0 %v5912
          %v7933 = vpop.f32.mrb[0].mxu0
          %v7934 = vadd.f32 %v7894, %v7933
          %v7935 = vpop.f32.mrb[0].mxu0
          %v7936 = vpop.f32.mrb[0].mxu0
          %v7937 = vpop.f32.mrb[0].mxu0
          %7938 = vdwg.mxu0
          %7939 = vmatprep.subr.bf16.mxu0 0
          %7940 = vmatpush1.bf16.msra.mxu0 %v7667
          %7941 = vmatprep.subr.bf16.mxu0 0
          %7942 = vmatpush1.bf16.msra.mxu0 %v7668
          %7943 = vmatprep.subr.bf16.mxu0 0
          %7944 = vmatpush1.bf16.msra.mxu0 %v7669
          %7945 = vmatprep.subr.bf16.mxu0 0
          %7946 = vmatpush1.bf16.msra.mxu0 %v7670
          %7947 = vmatprep.subr.bf16.mxu0 0
          %7948 = vmatpush1.bf16.msra.mxu0 %v7671
          %7949 = vmatprep.subr.bf16.mxu0 0
          %7950 = vmatpush1.bf16.msra.mxu0 %v7672
          %7951 = vmatprep.subr.bf16.mxu0 0
          %7952 = vmatpush1.bf16.msra.mxu0 %v7673
          %7953 = vmatprep.subr.bf16.mxu0 0
          %7954 = vmatpush1.bf16.msra.mxu0 %v7674
          %7955 = vmatprep.subr.bf16.mxu0 0
          %7956 = vmatpush1.bf16.msra.mxu0 %v7675
          %7957 = vmatprep.subr.bf16.mxu0 0
          %7958 = vmatpush1.bf16.msra.mxu0 %v7676
          %7959 = vmatprep.subr.bf16.mxu0 0
          %7960 = vmatpush1.bf16.msra.mxu0 %v7677
          %7961 = vmatprep.subr.bf16.mxu0 0
          %7962 = vmatpush1.bf16.msra.mxu0 %v7678
          %7963 = vmatprep.subr.bf16.mxu0 0
          %7964 = vmatpush1.bf16.msra.mxu0 %v7679
          %7965 = vmatprep.subr.bf16.mxu0 0
          %7966 = vmatpush1.bf16.msra.mxu0 %v7680
          %7967 = vmatprep.subr.bf16.mxu0 0
          %7968 = vmatpush1.bf16.msra.mxu0 %v7681
          %7969 = vmatprep.subr.bf16.mxu0 0
          %7970 = vmatpush1.bf16.msra.mxu0 %v7682
          %7971 = vmatprep.mubr.bf16.mxu0 %v5915
          %7972 = vmatmul.mubr.bf16.gmra.mrb[0].mxu0 %v5914
          %v7973 = vpop.f32.mrb[0].mxu0
          %v7974 = vadd.f32 %v7934, %v7973
          %v7975 = vpop.f32.mrb[0].mxu0
          %v7976 = vpop.f32.mrb[0].mxu0
          %v7977 = vpop.f32.mrb[0].mxu0
          %7978 = vdwg.mxu0
          %7979 = vmatprep.subr.bf16.mxu0 0
          %7980 = vmatpush1.bf16.msra.mxu0 %v7683
          %7981 = vmatprep.subr.bf16.mxu0 0
          %7982 = vmatpush1.bf16.msra.mxu0 %v7684
          %7983 = vmatprep.subr.bf16.mxu0 0
          %7984 = vmatpush1.bf16.msra.mxu0 %v7685
          %7985 = vmatprep.subr.bf16.mxu0 0
          %7986 = vmatpush1.bf16.msra.mxu0 %v7686
          %7987 = vmatprep.subr.bf16.mxu0 0
          %7988 = vmatpush1.bf16.msra.mxu0 %v7687
          %7989 = vmatprep.subr.bf16.mxu0 0
          %7990 = vmatpush1.bf16.msra.mxu0 %v7688
          %7991 = vmatprep.subr.bf16.mxu0 0
          %7992 = vmatpush1.bf16.msra.mxu0 %v7689
          %7993 = vmatprep.subr.bf16.mxu0 0
          %7994 = vmatpush1.bf16.msra.mxu0 %v7690
          %7995 = vmatprep.subr.bf16.mxu0 0
          %7996 = vmatpush1.bf16.msra.mxu0 %v7691
          %7997 = vmatprep.subr.bf16.mxu0 0
          %7998 = vmatpush1.bf16.msra.mxu0 %v7692
          %7999 = vmatprep.subr.bf16.mxu0 0
          %8000 = vmatpush1.bf16.msra.mxu0 %v7693
          %8001 = vmatprep.subr.bf16.mxu0 0
          %8002 = vmatpush1.bf16.msra.mxu0 %v7694
          %8003 = vmatprep.subr.bf16.mxu0 0
          %8004 = vmatpush1.bf16.msra.mxu0 %v7695
          %8005 = vmatprep.subr.bf16.mxu0 0
          %8006 = vmatpush1.bf16.msra.mxu0 %v7696
          %8007 = vmatprep.subr.bf16.mxu0 0
          %8008 = vmatpush1.bf16.msra.mxu0 %v7697
          %8009 = vmatprep.subr.bf16.mxu0 0
          %8010 = vmatpush1.bf16.msra.mxu0 %v7698
          %8011 = vmatprep.mubr.bf16.mxu0 %v5917
          %8012 = vmatmul.mubr.bf16.gmra.mrb[0].mxu0 %v5916
          %v8013 = vpop.f32.mrb[0].mxu0
          %v8014 = vadd.f32 %v7974, %v8013
          %v8015 = vpop.f32.mrb[0].mxu0
          %v8016 = vpop.f32.mrb[0].mxu0
          %v8017 = vpop.f32.mrb[0].mxu0
          %8018 = vdwg.mxu0
          %8019 = vmatprep.subr.bf16.mxu0 0
          %8020 = vmatpush1.bf16.msra.mxu0 %v7699
          %8021 = vmatprep.subr.bf16.mxu0 0
          %8022 = vmatpush1.bf16.msra.mxu0 %v7700
          %8023 = vmatprep.subr.bf16.mxu0 0
          %8024 = vmatpush1.bf16.msra.mxu0 %v7701
          %8025 = vmatprep.subr.bf16.mxu0 0
          %8026 = vmatpush1.bf16.msra.mxu0 %v7702
          %8027 = vmatprep.subr.bf16.mxu0 0
          %8028 = vmatpush1.bf16.msra.mxu0 %v7703
          %8029 = vmatprep.subr.bf16.mxu0 0
          %8030 = vmatpush1.bf16.msra.mxu0 %v7704
          %8031 = vmatprep.subr.bf16.mxu0 0
          %8032 = vmatpush1.bf16.msra.mxu0 %v7705
          %8033 = vmatprep.subr.bf16.mxu0 0
          %8034 = vmatpush1.bf16.msra.mxu0 %v7706
          %8035 = vmatprep.subr.bf16.mxu0 0
          %8036 = vmatpush1.bf16.msra.mxu0 %v7707
          %8037 = vmatprep.subr.bf16.mxu0 0
          %8038 = vmatpush1.bf16.msra.mxu0 %v7708
          %8039 = vmatprep.subr.bf16.mxu0 0
          %8040 = vmatpush1.bf16.msra.mxu0 %v7709
          %8041 = vmatprep.subr.bf16.mxu0 0
          %8042 = vmatpush1.bf16.msra.mxu0 %v7710
          %8043 = vmatprep.subr.bf16.mxu0 0
          %8044 = vmatpush1.bf16.msra.mxu0 %v7711
          %8045 = vmatprep.subr.bf16.mxu0 0
          %8046 = vmatpush1.bf16.msra.mxu0 %v7712
          %8047 = vmatprep.subr.bf16.mxu0 0
          %8048 = vmatpush1.bf16.msra.mxu0 %v7713
          %8049 = vmatprep.subr.bf16.mxu0 0
          %8050 = vmatpush1.bf16.msra.mxu0 %v7714
          %8051 = vmatprep.mubr.bf16.mxu0 %v5919
          %8052 = vmatmul.mubr.bf16.gmra.mrb[0].mxu0 %v5918
          %v8053 = vpop.f32.mrb[0].mxu0
          %v8054 = vadd.f32 %v8014, %v8053
          %v8055 = vpop.f32.mrb[0].mxu0
          %v8056 = vpop.f32.mrb[0].mxu0
          %v8057 = vpop.f32.mrb[0].mxu0
          %8058 = vdwg.mxu0
          %8059 = vmatprep.subr.bf16.mxu0 0
          %8060 = vmatpush1.bf16.msra.mxu0 %v7715
          %8061 = vmatprep.subr.bf16.mxu0 0
          %8062 = vmatpush1.bf16.msra.mxu0 %v7716
          %8063 = vmatprep.subr.bf16.mxu0 0
          %8064 = vmatpush1.bf16.msra.mxu0 %v7717
          %8065 = vmatprep.subr.bf16.mxu0 0
          %8066 = vmatpush1.bf16.msra.mxu0 %v7718
          %8067 = vmatprep.subr.bf16.mxu0 0
          %8068 = vmatpush1.bf16.msra.mxu0 0
          %8069 = vmatprep.subr.bf16.mxu0 0
          %8070 = vmatpush1.bf16.msra.mxu0 0
          %8071 = vmatprep.subr.bf16.mxu0 0
          %8072 = vmatpush1.bf16.msra.mxu0 0
          %8073 = vmatprep.subr.bf16.mxu0 0
          %8074 = vmatpush1.bf16.msra.mxu0 0
          %8075 = vmatprep.subr.bf16.mxu0 0
          %8076 = vmatpush1.bf16.msra.mxu0 0
          %8077 = vmatprep.subr.bf16.mxu0 0
          %8078 = vmatpush1.bf16.msra.mxu0 0
          %8079 = vmatprep.subr.bf16.mxu0 0
          %8080 = vmatpush1.bf16.msra.mxu0 0
          %8081 = vmatprep.subr.bf16.mxu0 0
          %8082 = vmatpush1.bf16.msra.mxu0 0
          %8083 = vmatprep.subr.bf16.mxu0 0
          %8084 = vmatpush1.bf16.msra.mxu0 0
          %8085 = vmatprep.subr.bf16.mxu0 0
          %8086 = vmatpush1.bf16.msra.mxu0 0
          %8087 = vmatprep.subr.bf16.mxu0 0
          %8088 = vmatpush1.bf16.msra.mxu0 0
          %8089 = vmatprep.subr.bf16.mxu0 0
          %8090 = vmatpush1.bf16.msra.mxu0 0
          %8091 = vmatprep.mubr.bf16.mxu0 0
          %8092 = vmatmul.mubr.bf16.gmra.mrb[0].mxu0 %v6730
          %v8093 = vpop.f32.mrb[0].mxu0
          %v8094 = vadd.f32 %v8054, %v8093
          %v8095 = vpop.f32.mrb[0].mxu0
          %v8096 = vpop.f32.mrb[0].mxu0
          %v8097 = vpop.f32.mrb[0].mxu0
          %8098 = vdwg.mxu0
          %v8099 = vmul.f32 %v8094, 0.5
          %v8100 = vmul.f32 %v8099, 1.442695
          %v8101 = vpow.pop %v8100
          %v8102 = vld [vmem:[%s11] sm:$0x3]
          %v8103 = vmul.f32 %v8101, %v8102
          %v8104 = vadd.f32 %v7007, %v8103
          %vm8105 = vcmask 254976
          %8106 = vst.msk [vmem:[#allocation3] sm:$0x3] %vm8105, %v8104
          %s8107 = scalar_lea.vmem [#allocation3], 2
          %8108 = vst.msk [vmem:[%s8107] sm:$0x3] %vm8105, %v7007
          %s8109 = scalar_lea.vmem [#allocation3], 4
          %8110 = vst.msk [vmem:[%s8109] sm:$0x3] %vm8105, %v8094
        $region76: #{tpu_custom_call.1} parent=67 // pred_fallthru
          _
        // Predicated region
        $region77: #{tpu_custom_call.1} parent=67 // pred_check
          %p8111 = pneg %p299
        $region78: #{tpu_custom_call.1} parent=67 // pred_check_branch
          %8113 = sbr.rel (%p8111) target = $region80
        $region79: #{tpu_custom_call.1} parent=67 // pred_region
          %s8115 = ssub.s32 96, 96
          %8116 = vsyncadd [#allocation4], %s8115
          %s8117 = sshll.u32 [#allocation3], 4
          %s8118 = int_to_ptr.vmem [resolvable:$true] %s8117
          %8123 = dma.vmem_to_hbm [thread:$0]  %s8118, 96, %s12, [#allocation4], 32, 32, 2
        $region80: #{tpu_custom_call.1} parent=67 // pred_fallthru
          _
        // Predicated region
        $region81: #{tpu_custom_call.1} parent=67 // pred_check
          %p8124 = pneg %p299
        $region82: #{tpu_custom_call.1} parent=67 // pred_check_branch
          %8126 = sbr.rel (%p8124) target = $region84
        $region83: #{tpu_custom_call.1} parent=67 // pred_region
          %8127 = dma.done [#allocation4], 96
        $region84: #{tpu_custom_call.1} parent=67 // pred_fallthru
          _
      $region68: #{tpu_custom_call.1} parent=5 // pred_fallthru
        _
      %p8128 = scmp.le.s32.totalorder 2, %s19
      // Predicated region
      $region85: #{tpu_custom_call.1} parent=5 // pred_check
        %p8129 = pneg %p8128
      $region86: #{tpu_custom_call.1} parent=5 // pred_check_branch
        %8131 = sbr.rel (%p8129) target = $region88
      $region87: #{tpu_custom_call.1} parent=5 // pred_region
        %s8132 = ssub.s32 %s19, 2
      $region88: #{tpu_custom_call.1} parent=5 // pred_fallthru
        _
    $region6: #{tpu_custom_call.1} parent=1 // loop_footer
      %s23 = sadd.s32 1, %s19
    $region7: #{tpu_custom_call.1} parent=1 // loop_footer_branch
      %18 = sbr.rel target = $region3
    $region8: #{tpu_custom_call.1} parent=1 // loop_exit
      _
    %8133 = vsyncpa [#allocation4], 1
    %s8134 = scalar_lea.sflag [#allocation4], 1
    %8135 = vsyncpa %s8134, 1

</llo_original>
